<compile_context>
chip_gen: v6e
topology: v6e:2x2x1
jax: 0.10.0
libtpu: 0.0.40
codegen_flags: <defaults>
</compile_context>

<pallas_src>
import functools

import jax
import jax.numpy as jnp
from jax.experimental import pallas as pl
from jax.experimental.pallas import tpu as pltpu


_COMPUTE_DTYPE = jnp.bfloat16         # storage / MXU dtype (f32 accumulation)
_VMEM_LIMIT = 32 * 1024 * 1024        # safe on v5e/v6e (128 MiB) and v7x (64 MiB)


def _round_up(x, m):
    return ((x + m - 1) // m) * m


def _cparams(n_grid_dims):
    return pltpu.CompilerParams(
        dimension_semantics=("parallel",) * n_grid_dims,
        vmem_limit_bytes=_VMEM_LIMIT)


# ----------------------------------------------------------------------------
# Pallas kernels
# ----------------------------------------------------------------------------
def _gemm_bias_act_kernel(x_ref, w_ref, b_ref, o_ref, *, relu):
    """o = act(x @ w + bias).  x:(bm,K) bf16, w:(K,N) bf16 (BN scale folded),
    b:(1,N) f32.  Accumulation in f32 on the MXU."""
    acc = jnp.dot(x_ref[...], w_ref[...], preferred_element_type=jnp.float32)
    y = acc + b_ref[...]
    if relu:
        y = jnp.maximum(y, 0.0)
    o_ref[...] = y.astype(o_ref.dtype)


def _dw_s1_img_kernel(x_ref, w_ref, b_ref, o_ref, *, d, relu):
    """Depthwise 3x3, stride 1, dilation d.  One whole padded image per grid
    step.  x:(1,Hp,Wp,C) bf16, w:(9,1,C) f32 (BN scale folded), b:(1,C) f32,
    o:(1,Ho,Wo,C).  Accumulate in f32 (v5e has no bf16 VPU)."""
    Ho, Wo, C = o_ref.shape[1], o_ref.shape[2], o_ref.shape[3]
    x = x_ref[0]                                        # (Hp, Wp, C)
    acc = jnp.zeros((Ho, Wo, C), jnp.float32)
    for ki in range(3):
        rows = x[ki * d:ki * d + Ho]                    # (Ho, Wp, C)
        for kj in range(3):
            tap = rows[:, kj * d:kj * d + Wo, :].astype(jnp.float32)
            acc = acc + tap * w_ref[ki * 3 + kj]
    y = acc + b_ref[...]
    if relu:
        y = jnp.maximum(y, 0.0)
    o_ref[0] = y.astype(o_ref.dtype)


def _dw_s2_img_kernel(xee_ref, xeo_ref, xoe_ref, xoo_ref, w_ref, b_ref, o_ref,
                      *, relu):
    """Depthwise 3x3, stride 2 (dilation 1).  Inputs are the four row/column
    even/odd phase splits of the padded image (done in the wrapper), so every
    in-kernel slice is contiguous.  Tap (ki,kj) of output (ho,wo) lives at
    padded (2*ho+ki, 2*wo+kj) -> phase (ki%2, kj%2), offset (ki//2, kj//2)."""
    Ho, Wo, C = o_ref.shape[1], o_ref.shape[2], o_ref.shape[3]
    phases = ((xee_ref[0], xeo_ref[0]), (xoe_ref[0], xoo_ref[0]))
    acc = jnp.zeros((Ho, Wo, C), jnp.float32)
    for ki in range(3):
        rp, ro = ki % 2, ki // 2
        for kj in range(3):
            cp, co = kj % 2, kj // 2
            tap = phases[rp][cp][ro:ro + Ho, co:co + Wo, :].astype(jnp.float32)
            acc = acc + tap * w_ref[ki * 3 + kj]
    y = acc + b_ref[...]
    if relu:
        y = jnp.maximum(y, 0.0)
    o_ref[0] = y.astype(o_ref.dtype)


def _max_s2_img_kernel(xee_ref, xeo_ref, xoe_ref, xoo_ref, o_ref):
    """MaxPool 3x3 stride 2 pad 1: elementwise max of the 9 taps over the
    whole image, same phase-split scheme as _dw_s2_img_kernel."""
    Ho, Wo = o_ref.shape[1], o_ref.shape[2]
    phases = ((xee_ref[0], xeo_ref[0]), (xoe_ref[0], xoo_ref[0]))
    m = None
    for ki in range(3):
        rp, ro = ki % 2, ki // 2
        for kj in range(3):
            cp, co = kj % 2, kj // 2
            tap = phases[rp][cp][ro:ro + Ho, co:co + Wo, :]
            m = tap if m is None else jnp.maximum(m, tap)
    o_ref[0] = m.astype(o_ref.dtype)


# ----------------------------------------------------------------------------
# Kernel wrappers
# ----------------------------------------------------------------------------
def gemm_bias_act(x2d, w2d, bias, relu, block_m=512):
    """Fused (bf16 MXU) GEMM + bias + optional ReLU, tiled over rows."""
    M, K = x2d.shape
    _, N = w2d.shape
    Ma = _round_up(M, 16)                 # bf16 sublane packing
    if Ma <= block_m:
        # small problem: still split into 2 parallel steps for v7x megacore
        bm = _round_up((Ma + 1) // 2, 16) if Ma >= 32 else Ma
    else:
        bm = block_m
    Mp = _round_up(M, bm)

    x2d = x2d.astype(_COMPUTE_DTYPE)
    if Mp != M:
        x2d = jnp.pad(x2d, ((0, Mp - M), (0, 0)))

    out = pl.pallas_call(
        functools.partial(_gemm_bias_act_kernel, relu=relu),
        out_shape=jax.ShapeDtypeStruct((Mp, N), _COMPUTE_DTYPE),
        grid=(Mp // bm,),
        in_specs=[
            pl.BlockSpec((bm, K), lambda i: (i, 0)),
            pl.BlockSpec((K, N), lambda i: (0, 0)),
            pl.BlockSpec((1, N), lambda i: (0, 0)),
        ],
        out_specs=pl.BlockSpec((bm, N), lambda i: (i, 0)),
        compiler_params=_cparams(1),
    )(x2d, w2d.astype(_COMPUTE_DTYPE), bias.reshape(1, N).astype(jnp.float32))
    return out[:M] if Mp != M else out


def _phase_split(xp):
    """(N,Hp,Wp,C) -> 4 arrays: (row even/odd) x (col even/odd)."""
    return (xp[:, 0::2, 0::2, :], xp[:, 0::2, 1::2, :],
            xp[:, 1::2, 0::2, :], xp[:, 1::2, 1::2, :])


# ----------------------------------------------------------------------------
# JAX glue: conv / depthwise / maxpool layers (NHWC)
# ----------------------------------------------------------------------------
def _out_size(h, k, stride, pad, dil):
    return (h + 2 * pad - dil * (k - 1) - 1) // stride + 1


def _window_slices(x, k, stride, pad, dil, pad_value=0.0):
    """x:(N,H,W,C) -> (k*k, N, Ho, Wo, C) shifted/strided windows.
    Only used for conv1's im2col (3 input channels -> negligible traffic)."""
    N, H, W, C = x.shape
    Ho = _out_size(H, k, stride, pad, dil)
    Wo = _out_size(W, k, stride, pad, dil)
    xp = jnp.pad(x, ((0, 0), (pad, pad), (pad, pad), (0, 0)),
                 constant_values=pad_value)
    wins = []
    for ki in range(k):
        for kj in range(k):
            i0, j0 = ki * dil, kj * dil
            win = jax.lax.slice(
                xp,
                (0, i0, j0, 0),
                (N, i0 + (Ho - 1) * stride + 1, j0 + (Wo - 1) * stride + 1, C),
                (1, stride, stride, 1),
            )
            wins.append(win)
    return jnp.stack(wins, axis=0), Ho, Wo


def conv_bn_act(x, w, bn, stride=1, pad=0, dil=1, relu=True):
    """Dense conv (PyTorch weight layout (Cout,Cin,k,k)) + BN + optional ReLU.
    BN scale is folded into the GEMM weight columns."""
    Cout, Cin, k, _ = w.shape
    N, H, W, C = x.shape
    scale, bias = bn
    if k == 1 and stride == 1 and pad == 0:
        patches = x.reshape(N * H * W, C)
        Ho, Wo = H, W
        wmat = w.reshape(Cout, Cin).T
    else:
        wins, Ho, Wo = _window_slices(x, k, stride, pad, dil)
        patches = jnp.transpose(wins, (1, 2, 3, 0, 4)).reshape(N * Ho * Wo, k * k * Cin)
        wmat = jnp.transpose(w, (2, 3, 1, 0)).reshape(k * k * Cin, Cout)
    wmat = wmat * scale[None, :]               # fold BN scale into weights
    out = gemm_bias_act(patches, wmat, bias, relu)
    return out.reshape(N, Ho, Wo, Cout)


def dwconv_bn_act(x, w, bn, stride=1, pad=1, dil=1, relu=False):
    """Depthwise 3x3 conv (weight (C,1,3,3)) + BN + optional ReLU.
    Whole-image-per-batch Pallas kernel; padded feature map DMA'd once."""
    N, H, W, C = x.shape
    scale, bias = bn
    w9 = (w.reshape(C, 9).T * scale[None, :]).reshape(9, 1, C).astype(jnp.float32)
    b = bias.reshape(1, C).astype(jnp.float32)

    xb = x.astype(_COMPUTE_DTYPE)
    xp = jnp.pad(xb, ((0, 0), (pad, pad), (pad, pad), (0, 0)))
    Hp, Wp = H + 2 * pad, W + 2 * pad

    if stride == 1:
        Ho, Wo = Hp - 2 * dil, Wp - 2 * dil
        kernel = functools.partial(_dw_s1_img_kernel, d=dil, relu=relu)
        in_specs = [pl.BlockSpec((1, Hp, Wp, C), lambda n: (n, 0, 0, 0)),
                    pl.BlockSpec((9, 1, C), lambda n: (0, 0, 0)),
                    pl.BlockSpec((1, C), lambda n: (0, 0))]
        operands = (xp, w9, b)
    else:
        assert stride == 2 and dil == 1, "stride-2 blocks in this net are undilated"
        Ho = (H + 2 * pad - 3) // 2 + 1
        Wo = (W + 2 * pad - 3) // 2 + 1
        phases = _phase_split(xp)
        kernel = functools.partial(_dw_s2_img_kernel, relu=relu)
        in_specs = ([pl.BlockSpec((1,) + p.shape[1:], lambda n: (n, 0, 0, 0))
                     for p in phases]
                    + [pl.BlockSpec((9, 1, C), lambda n: (0, 0, 0)),
                       pl.BlockSpec((1, C), lambda n: (0, 0))])
        operands = phases + (w9, b)

    return pl.pallas_call(
        kernel,
        out_shape=jax.ShapeDtypeStruct((N, Ho, Wo, C), _COMPUTE_DTYPE),
        grid=(N,),
        in_specs=in_specs,
        out_specs=pl.BlockSpec((1, Ho, Wo, C), lambda n: (n, 0, 0, 0)),
        compiler_params=_cparams(1),
    )(*operands)


def maxpool3x3_s2(x):
    """MaxPool 3x3 stride 2 pad 1, whole-image / phase-split scheme."""
    N, H, W, C = x.shape
    xb = x.astype(_COMPUTE_DTYPE)
    xp = jnp.pad(xb, ((0, 0), (1, 1), (1, 1), (0, 0)),
                 constant_values=-jnp.inf)
    Ho = (H - 1) // 2 + 1
    Wo = (W - 1) // 2 + 1
    phases = _phase_split(xp)
    in_specs = [pl.BlockSpec((1,) + p.shape[1:], lambda n: (n, 0, 0, 0))
                for p in phases]
    return pl.pallas_call(
        _max_s2_img_kernel,
        out_shape=jax.ShapeDtypeStruct((N, Ho, Wo, C), _COMPUTE_DTYPE),
        grid=(N,),
        in_specs=in_specs,
        out_specs=pl.BlockSpec((1, Ho, Wo, C), lambda n: (n, 0, 0, 0)),
        compiler_params=_cparams(1),
    )(*phases)


def channel_shuffle(x, groups=2):
    N, H, W, C = x.shape
    x = x.reshape(N, H, W, groups, C // groups)
    x = jnp.transpose(x, (0, 1, 2, 4, 3))
    return x.reshape(N, H, W, C)


# ----------------------------------------------------------------------------
# ShuffleNetV2 blocks / full forward
# ----------------------------------------------------------------------------
def inverted_residual(x, p):
    stride, dil = p["stride"], p["dilation"]
    if not p["is_down"]:
        C = x.shape[-1]
        x1, x2 = x[..., : C // 2], x[..., C // 2:]
        b2 = conv_bn_act(x2, p["pw1_w"], p["pw1_bn"], relu=True)
        b2 = dwconv_bn_act(b2, p["dw_w"], p["dw_bn"], stride=1, pad=dil, dil=dil, relu=False)
        b2 = conv_bn_act(b2, p["pw2_w"], p["pw2_bn"], relu=True)
        out = jnp.concatenate([x1, b2], axis=-1)
    else:
        b1 = dwconv_bn_act(x, p["b1_dw_w"], p["b1_dw_bn"], stride=stride, pad=dil, dil=dil, relu=False)
        b1 = conv_bn_act(b1, p["b1_pw_w"], p["b1_pw_bn"], relu=True)
        b2 = conv_bn_act(x, p["pw1_w"], p["pw1_bn"], relu=True)
        b2 = dwconv_bn_act(b2, p["dw_w"], p["dw_bn"], stride=stride, pad=dil, dil=dil, relu=False)
        b2 = conv_bn_act(b2, p["pw2_w"], p["pw2_bn"], relu=True)
        out = jnp.concatenate([b1, b2], axis=-1)
    return channel_shuffle(out, 2)


def shufflenet_backend_forward(params, x_nchw):
    x = jnp.transpose(x_nchw.astype(jnp.float32), (0, 2, 3, 1))   # NCHW -> NHWC
    x = conv_bn_act(x, params["conv1_w"], params["conv1_bn"], stride=2, pad=1, relu=True)
    low = maxpool3x3_s2(x)                        # low_features (stride 4, 24 ch)
    h = low
    for stage in params["stages"]:                # high_features
        for blk in stage:
            h = inverted_residual(h, blk)
    h = conv_bn_act(h, params["conv5_w"], params["conv5_bn"], relu=True)
    # back to PyTorch NCHW convention, f32 at the module boundary
    low_nchw = jnp.transpose(low.astype(jnp.float32), (0, 3, 1, 2))
    high_nchw = jnp.transpose(h.astype(jnp.float32), (0, 3, 1, 2))
    return low_nchw, high_nchw


# ----------------------------------------------------------------------------
# Deterministic parameter initialization (no checkpoint loading)
# ----------------------------------------------------------------------------
class KeyGen:
    def __init__(self, key):
        self.key = key

    def __call__(self):
        self.key, sub = jax.random.split(self.key)
        return sub


def _conv_w(key, cout, cin, k):
    fan_in = cin * k * k
    return jax.random.normal(key, (cout, cin, k, k), jnp.float32) / jnp.sqrt(float(fan_in))


def _bn(key, c, eps=1e-5):
    k1, k2 = jax.random.split(key)
    gamma = 1.0 + 0.1 * jax.random.normal(k1, (c,), jnp.float32)
    beta = 0.1 * jax.random.normal(k2, (c,), jnp.float32)
    mean = jnp.zeros((c,), jnp.float32)
    var = jnp.ones((c,), jnp.float32)
    scale = gamma / jnp.sqrt(var + eps)
    bias = beta - mean * scale
    return scale, bias


def _init_block(kg, inp, oup, is_down, stride, dilation):
    branch = oup // 2
    p = {"is_down": is_down, "stride": stride, "dilation": dilation}
    if is_down:
        p["b1_dw_w"] = _conv_w(kg(), inp, 1, 3)
        p["b1_dw_bn"] = _bn(kg(), inp)
        p["b1_pw_w"] = _conv_w(kg(), branch, inp, 1)
        p["b1_pw_bn"] = _bn(kg(), branch)
        c_in2 = inp
    else:
        c_in2 = inp // 2
    p["pw1_w"] = _conv_w(kg(), branch, c_in2, 1)
    p["pw1_bn"] = _bn(kg(), branch)
    p["dw_w"] = _conv_w(kg(), branch, 1, 3)
    p["dw_bn"] = _bn(kg(), branch)
    p["pw2_w"] = _conv_w(kg(), branch, branch, 1)
    p["pw2_bn"] = _bn(kg(), branch)
    return p


def init_params(key, width_mult=1.0, output_stride=16, stages_repeats=(4, 8, 4)):
    cfg = {0.5: [48, 96, 192, 1024], 1.0: [116, 232, 464, 1024],
           1.5: [176, 352, 704, 1024], 2.0: [244, 488, 976, 2048]}
    out_chs = cfg[width_mult]
    kg = KeyGen(key)
    params = {"conv1_w": _conv_w(kg(), 24, 3, 3), "conv1_bn": _bn(kg(), 24)}

    current_stride, dilation, inp = 4, 1, 24
    stages = []
    for reps, oup in zip(stages_repeats, out_chs[:3]):
        if current_stride < output_stride:
            stride = 2
            current_stride *= 2
        else:  # keep resolution, dilate instead (output_stride control)
            stride = 1
            dilation *= 2
        blocks = [_init_block(kg, inp, oup, True, stride, dilation)]
        for _ in range(reps - 1):
            blocks.append(_init_block(kg, oup, oup, False, 1, dilation))
        stages.append(blocks)
        inp = oup
    params["stages"] = stages
    params["conv5_w"] = _conv_w(kg(), out_chs[3], inp, 1)
    params["conv5_bn"] = _bn(kg(), out_chs[3])
    params["lastconv_channel"] = out_chs[3]
    params["interconv_channel"] = 24
    return params


# ----------------------------------------------------------------------------
if __name__ == "__main__":
    key = jax.random.PRNGKey(0)
    pkey, xkey = jax.random.split(key)

    # TODO(synk): canonical shufflenet_v2 uses stages_repeats=(4, 8, 4); reduced
    # repeat counts and width_mult=0.5 here to keep the synthetic test small/fast.
    params = init_params(pkey, width_mult=0.5, output_stride=16,
                         stages_repeats=(2, 3, 2))

    x = jax.random.normal(xkey, (2, 3, 64, 64), jnp.float32)  # NCHW, RGB input

    fwd = jax.jit(lambda inp: shufflenet_backend_forward(params, inp))
    low, high = fwd(x)
    jax.block_until_ready((low, high))

    assert low.shape == (2, params["interconv_channel"], 16, 16), low.shape
    assert high.shape == (2, params["lastconv_channel"], 4, 4), high.shape
    assert jnp.all(jnp.isfinite(low)) and jnp.all(jnp.isfinite(high))
    print("KERNEL_OK")
</pallas_src>

<mosaic_0001>
module attributes {stable_mosaic.version = 11 : i64} {
  func.func @_gemm_bias_act_kernel(%arg0: i32, %arg1: memref<512x27xbf16, #tpu.memory_space<vmem>>, %arg2: memref<27x24xbf16, #tpu.memory_space<vmem>>, %arg3: memref<1x24xf32, #tpu.memory_space<vmem>>, %arg4: memref<512x24xbf16, #tpu.memory_space<vmem>>) attributes {dimension_semantics = [#tpu.dimension_semantics<parallel>], iteration_bounds = array<i64: 4>, scalar_prefetch = 0 : i64, scratch_operands = 0 : i64, tpu.core_type = #tpu.core_type<tc>, window_params = [{transform_indices = @transform_0, window_bounds = array<i64: 512, 27>}, {pipeline_mode = #tpu.pipeline_mode<synchronous>, transform_indices = @transform_1, window_bounds = array<i64: 27, 24>}, {pipeline_mode = #tpu.pipeline_mode<synchronous>, transform_indices = @transform_2, window_bounds = array<i64: 1, 24>}, {transform_indices = @transform_3, window_bounds = array<i64: 512, 24>}]} {
    %c0 = arith.constant 0 : index
    %c0_0 = arith.constant 0 : index
    %0 = vector.load %arg1[%c0, %c0_0] : memref<512x27xbf16, #tpu.memory_space<vmem>>, vector<512x27xbf16>
    %c0_1 = arith.constant 0 : index
    %c0_2 = arith.constant 0 : index
    %1 = vector.load %arg2[%c0_1, %c0_2] : memref<27x24xbf16, #tpu.memory_space<vmem>>, vector<27x24xbf16>
    %cst = arith.constant dense<0.000000e+00> : vector<512x24xf32>
    %2 = tpu.matmul %0, %1, %cst {dimension_numbers = #tpu.dot_dimension_numbers<[1], [0], [0], [1], [0, 0, 1, 1], [], []>} : vector<512x27xbf16>, vector<27x24xbf16>, vector<512x24xf32> -> vector<512x24xf32>
    %c0_3 = arith.constant 0 : index
    %c0_4 = arith.constant 0 : index
    %3 = vector.load %arg3[%c0_3, %c0_4] : memref<1x24xf32, #tpu.memory_space<vmem>>, vector<1x24xf32>
    %4 = vector.broadcast %3 : vector<1x24xf32> to vector<512x24xf32>
    %5 = arith.addf %2, %4 : vector<512x24xf32>
    %cst_5 = arith.constant 0.000000e+00 : f32
    %6 = vector.broadcast %cst_5 : f32 to vector<512x24xf32>
    %7 = arith.maximumf %5, %6 : vector<512x24xf32>
    %8 = arith.truncf %7 : vector<512x24xf32> to vector<512x24xbf16>
    %c0_6 = arith.constant 0 : index
    %c0_7 = arith.constant 0 : index
    %9 = vector.load %arg4[%c0_6, %c0_7] : memref<512x24xbf16, #tpu.memory_space<vmem>>, vector<512x24xbf16>
    tpu.vector_store %arg4[%c0_6, %c0_7], %8 {strides = array<i32>} : memref<512x24xbf16, #tpu.memory_space<vmem>>, vector<512x24xbf16>,
    return
  }
  func.func @transform_0(%arg0: i32) -> (i32, i32) {
    %c0_i32 = arith.constant 0 : i32
    %c0_i32_0 = arith.constant 0 : i32
    return %arg0, %c0_i32 : i32, i32
  }
  func.func @transform_1(%arg0: i32) -> (i32, i32) {
    %c0_i32 = arith.constant 0 : i32
    %c0_i32_0 = arith.constant 0 : i32
    %c0_i32_1 = arith.constant 0 : i32
    return %c0_i32, %c0_i32_0 : i32, i32
  }
  func.func @transform_2(%arg0: i32) -> (i32, i32) {
    %c0_i32 = arith.constant 0 : i32
    %c0_i32_0 = arith.constant 0 : i32
    %c0_i32_1 = arith.constant 0 : i32
    return %c0_i32, %c0_i32_0 : i32, i32
  }
  func.func @transform_3(%arg0: i32) -> (i32, i32) {
    %c0_i32 = arith.constant 0 : i32
    %c0_i32_0 = arith.constant 0 : i32
    return %arg0, %c0_i32 : i32, i32
  }
}

module attributes {stable_mosaic.version = 11 : i64} {
  func.func @_max_s2_img_kernel(%arg0: i32, %arg1: memref<1x17x17x24xbf16, #tpu.memory_space<vmem>>, %arg2: memref<1x17x17x24xbf16, #tpu.memory_space<vmem>>, %arg3: memref<1x17x17x24xbf16, #tpu.memory_space<vmem>>, %arg4: memref<1x17x17x24xbf16, #tpu.memory_space<vmem>>, %arg5: memref<1x16x16x24xbf16, #tpu.memory_space<vmem>>) attributes {dimension_semantics = [#tpu.dimension_semantics<parallel>], iteration_bounds = array<i64: 2>, scalar_prefetch = 0 : i64, scratch_operands = 0 : i64, tpu.core_type = #tpu.core_type<tc>, window_params = [{transform_indices = @transform_0, window_bounds = array<i64: 1, 17, 17, 24>}, {transform_indices = @transform_1, window_bounds = array<i64: 1, 17, 17, 24>}, {transform_indices = @transform_2, window_bounds = array<i64: 1, 17, 17, 24>}, {transform_indices = @transform_3, window_bounds = array<i64: 1, 17, 17, 24>}, {transform_indices = @transform_4, window_bounds = array<i64: 1, 16, 16, 24>}]} {
    %c0 = arith.constant 0 : index
    %c0_0 = arith.constant 0 : index
    %c0_1 = arith.constant 0 : index
    %c0_2 = arith.constant 0 : index
    %0 = vector.load %arg1[%c0, %c0_0, %c0_1, %c0_2] : memref<1x17x17x24xbf16, #tpu.memory_space<vmem>>, vector<1x17x17x24xbf16>
    %1 = vector.shape_cast %0 : vector<1x17x17x24xbf16> to vector<17x17x24xbf16>
    %c0_3 = arith.constant 0 : index
    %c0_4 = arith.constant 0 : index
    %c0_5 = arith.constant 0 : index
    %c0_6 = arith.constant 0 : index
    %2 = vector.load %arg2[%c0_3, %c0_4, %c0_5, %c0_6] : memref<1x17x17x24xbf16, #tpu.memory_space<vmem>>, vector<1x17x17x24xbf16>
    %3 = vector.shape_cast %2 : vector<1x17x17x24xbf16> to vector<17x17x24xbf16>
    %c0_7 = arith.constant 0 : index
    %c0_8 = arith.constant 0 : index
    %c0_9 = arith.constant 0 : index
    %c0_10 = arith.constant 0 : index
    %4 = vector.load %arg3[%c0_7, %c0_8, %c0_9, %c0_10] : memref<1x17x17x24xbf16, #tpu.memory_space<vmem>>, vector<1x17x17x24xbf16>
    %5 = vector.shape_cast %4 : vector<1x17x17x24xbf16> to vector<17x17x24xbf16>
    %c0_11 = arith.constant 0 : index
    %c0_12 = arith.constant 0 : index
    %c0_13 = arith.constant 0 : index
    %c0_14 = arith.constant 0 : index
    %6 = vector.load %arg4[%c0_11, %c0_12, %c0_13, %c0_14] : memref<1x17x17x24xbf16, #tpu.memory_space<vmem>>, vector<1x17x17x24xbf16>
    %7 = vector.shape_cast %6 : vector<1x17x17x24xbf16> to vector<17x17x24xbf16>
    %8 = vector.extract_strided_slice %1 {offsets = [0, 0, 0], sizes = [16, 16, 24], strides = [1, 1, 1]} : vector<17x17x24xbf16> to vector<16x16x24xbf16>
    %9 = vector.extract_strided_slice %3 {offsets = [0, 0, 0], sizes = [16, 16, 24], strides = [1, 1, 1]} : vector<17x17x24xbf16> to vector<16x16x24xbf16>
    %10 = arith.maximumf %8, %9 : vector<16x16x24xbf16>
    %11 = vector.extract_strided_slice %1 {offsets = [0, 1, 0], sizes = [16, 16, 24], strides = [1, 1, 1]} : vector<17x17x24xbf16> to vector<16x16x24xbf16>
    %12 = arith.maximumf %10, %11 : vector<16x16x24xbf16>
    %13 = vector.extract_strided_slice %5 {offsets = [0, 0, 0], sizes = [16, 16, 24], strides = [1, 1, 1]} : vector<17x17x24xbf16> to vector<16x16x24xbf16>
    %14 = arith.maximumf %12, %13 : vector<16x16x24xbf16>
    %15 = vector.extract_strided_slice %7 {offsets = [0, 0, 0], sizes = [16, 16, 24], strides = [1, 1, 1]} : vector<17x17x24xbf16> to vector<16x16x24xbf16>
    %16 = arith.maximumf %14, %15 : vector<16x16x24xbf16>
    %17 = vector.extract_strided_slice %5 {offsets = [0, 1, 0], sizes = [16, 16, 24], strides = [1, 1, 1]} : vector<17x17x24xbf16> to vector<16x16x24xbf16>
    %18 = arith.maximumf %16, %17 : vector<16x16x24xbf16>
    %19 = vector.extract_strided_slice %1 {offsets = [1, 0, 0], sizes = [16, 16, 24], strides = [1, 1, 1]} : vector<17x17x24xbf16> to vector<16x16x24xbf16>
    %20 = arith.maximumf %18, %19 : vector<16x16x24xbf16>
    %21 = vector.extract_strided_slice %3 {offsets = [1, 0, 0], sizes = [16, 16, 24], strides = [1, 1, 1]} : vector<17x17x24xbf16> to vector<16x16x24xbf16>
    %22 = arith.maximumf %20, %21 : vector<16x16x24xbf16>
    %23 = vector.extract_strided_slice %1 {offsets = [1, 1, 0], sizes = [16, 16, 24], strides = [1, 1, 1]} : vector<17x17x24xbf16> to vector<16x16x24xbf16>
    %24 = arith.maximumf %22, %23 : vector<16x16x24xbf16>
    %c0_15 = arith.constant 0 : index
    %c0_16 = arith.constant 0 : index
    %c0_17 = arith.constant 0 : index
    %c0_18 = arith.constant 0 : index
    %25 = vector.load %arg5[%c0_15, %c0_16, %c0_17, %c0_18] : memref<1x16x16x24xbf16, #tpu.memory_space<vmem>>, vector<1x16x16x24xbf16>
    %26 = vector.shape_cast %25 : vector<1x16x16x24xbf16> to vector<16x16x24xbf16>
    %27 = vector.shape_cast %24 : vector<16x16x24xbf16> to vector<1x16x16x24xbf16>
    tpu.vector_store %arg5[%c0_15, %c0_16, %c0_17, %c0_18], %27 {strides = array<i32>} : memref<1x16x16x24xbf16, #tpu.memory_space<vmem>>, vector<1x16x16x24xbf16>,
    return
  }
  func.func @transform_0(%arg0: i32) -> (i32, i32, i32, i32) {
    %c0_i32 = arith.constant 0 : i32
    %c0_i32_0 = arith.constant 0 : i32
    %c0_i32_1 = arith.constant 0 : i32
    %c0_i32_2 = arith.constant 0 : i32
    return %arg0, %c0_i32, %c0_i32_0, %c0_i32_1 : i32, i32, i32, i32
  }
  func.func @transform_1(%arg0: i32) -> (i32, i32, i32, i32) {
    %c0_i32 = arith.constant 0 : i32
    %c0_i32_0 = arith.constant 0 : i32
    %c0_i32_1 = arith.constant 0 : i32
    %c0_i32_2 = arith.constant 0 : i32
    return %arg0, %c0_i32, %c0_i32_0, %c0_i32_1 : i32, i32, i32, i32
  }
  func.func @transform_2(%arg0: i32) -> (i32, i32, i32, i32) {
    %c0_i32 = arith.constant 0 : i32
    %c0_i32_0 = arith.constant 0 : i32
    %c0_i32_1 = arith.constant 0 : i32
    %c0_i32_2 = arith.constant 0 : i32
    return %arg0, %c0_i32, %c0_i32_0, %c0_i32_1 : i32, i32, i32, i32
  }
  func.func @transform_3(%arg0: i32) -> (i32, i32, i32, i32) {
    %c0_i32 = arith.constant 0 : i32
    %c0_i32_0 = arith.constant 0 : i32
    %c0_i32_1 = arith.constant 0 : i32
    %c0_i32_2 = arith.constant 0 : i32
    return %arg0, %c0_i32, %c0_i32_0, %c0_i32_1 : i32, i32, i32, i32
  }
  func.func @transform_4(%arg0: i32) -> (i32, i32, i32, i32) {
    %c0_i32 = arith.constant 0 : i32
    %c0_i32_0 = arith.constant 0 : i32
    %c0_i32_1 = arith.constant 0 : i32
    %c0_i32_2 = arith.constant 0 : i32
    return %arg0, %c0_i32, %c0_i32_0, %c0_i32_1 : i32, i32, i32, i32
  }
}

module attributes {stable_mosaic.version = 11 : i64} {
  func.func @_gemm_bias_act_kernel(%arg0: i32, %arg1: memref<256x24xbf16, #tpu.memory_space<vmem>>, %arg2: memref<24x24xbf16, #tpu.memory_space<vmem>>, %arg3: memref<1x24xf32, #tpu.memory_space<vmem>>, %arg4: memref<256x24xbf16, #tpu.memory_space<vmem>>) attributes {dimension_semantics = [#tpu.dimension_semantics<parallel>], iteration_bounds = array<i64: 2>, scalar_prefetch = 0 : i64, scratch_operands = 0 : i64, tpu.core_type = #tpu.core_type<tc>, window_params = [{transform_indices = @transform_0, window_bounds = array<i64: 256, 24>}, {pipeline_mode = #tpu.pipeline_mode<synchronous>, transform_indices = @transform_1, window_bounds = array<i64: 24, 24>}, {pipeline_mode = #tpu.pipeline_mode<synchronous>, transform_indices = @transform_2, window_bounds = array<i64: 1, 24>}, {transform_indices = @transform_3, window_bounds = array<i64: 256, 24>}]} {
    %c0 = arith.constant 0 : index
    %c0_0 = arith.constant 0 : index
    %0 = vector.load %arg1[%c0, %c0_0] : memref<256x24xbf16, #tpu.memory_space<vmem>>, vector<256x24xbf16>
    %c0_1 = arith.constant 0 : index
    %c0_2 = arith.constant 0 : index
    %1 = vector.load %arg2[%c0_1, %c0_2] : memref<24x24xbf16, #tpu.memory_space<vmem>>, vector<24x24xbf16>
    %cst = arith.constant dense<0.000000e+00> : vector<256x24xf32>
    %2 = tpu.matmul %0, %1, %cst {dimension_numbers = #tpu.dot_dimension_numbers<[1], [0], [0], [1], [0, 0, 1, 1], [], []>} : vector<256x24xbf16>, vector<24x24xbf16>, vector<256x24xf32> -> vector<256x24xf32>
    %c0_3 = arith.constant 0 : index
    %c0_4 = arith.constant 0 : index
    %3 = vector.load %arg3[%c0_3, %c0_4] : memref<1x24xf32, #tpu.memory_space<vmem>>, vector<1x24xf32>
    %4 = vector.broadcast %3 : vector<1x24xf32> to vector<256x24xf32>
    %5 = arith.addf %2, %4 : vector<256x24xf32>
    %cst_5 = arith.constant 0.000000e+00 : f32
    %6 = vector.broadcast %cst_5 : f32 to vector<256x24xf32>
    %7 = arith.maximumf %5, %6 : vector<256x24xf32>
    %8 = arith.truncf %7 : vector<256x24xf32> to vector<256x24xbf16>
    %c0_6 = arith.constant 0 : index
    %c0_7 = arith.constant 0 : index
    %9 = vector.load %arg4[%c0_6, %c0_7] : memref<256x24xbf16, #tpu.memory_space<vmem>>, vector<256x24xbf16>
    tpu.vector_store %arg4[%c0_6, %c0_7], %8 {strides = array<i32>} : memref<256x24xbf16, #tpu.memory_space<vmem>>, vector<256x24xbf16>,
    return
  }
  func.func @transform_0(%arg0: i32) -> (i32, i32) {
    %c0_i32 = arith.constant 0 : i32
    %c0_i32_0 = arith.constant 0 : i32
    return %arg0, %c0_i32 : i32, i32
  }
  func.func @transform_1(%arg0: i32) -> (i32, i32) {
    %c0_i32 = arith.constant 0 : i32
    %c0_i32_0 = arith.constant 0 : i32
    %c0_i32_1 = arith.constant 0 : i32
    return %c0_i32, %c0_i32_0 : i32, i32
  }
  func.func @transform_2(%arg0: i32) -> (i32, i32) {
    %c0_i32 = arith.constant 0 : i32
    %c0_i32_0 = arith.constant 0 : i32
    %c0_i32_1 = arith.constant 0 : i32
    return %c0_i32, %c0_i32_0 : i32, i32
  }
  func.func @transform_3(%arg0: i32) -> (i32, i32) {
    %c0_i32 = arith.constant 0 : i32
    %c0_i32_0 = arith.constant 0 : i32
    return %arg0, %c0_i32 : i32, i32
  }
}

module attributes {stable_mosaic.version = 11 : i64} {
  func.func @_gemm_bias_act_kernel(%arg0: i32, %arg1: memref<64x24xbf16, #tpu.memory_space<vmem>>, %arg2: memref<24x24xbf16, #tpu.memory_space<vmem>>, %arg3: memref<1x24xf32, #tpu.memory_space<vmem>>, %arg4: memref<64x24xbf16, #tpu.memory_space<vmem>>) attributes {dimension_semantics = [#tpu.dimension_semantics<parallel>], iteration_bounds = array<i64: 2>, scalar_prefetch = 0 : i64, scratch_operands = 0 : i64, tpu.core_type = #tpu.core_type<tc>, window_params = [{transform_indices = @transform_0, window_bounds = array<i64: 64, 24>}, {pipeline_mode = #tpu.pipeline_mode<synchronous>, transform_indices = @transform_1, window_bounds = array<i64: 24, 24>}, {pipeline_mode = #tpu.pipeline_mode<synchronous>, transform_indices = @transform_2, window_bounds = array<i64: 1, 24>}, {transform_indices = @transform_3, window_bounds = array<i64: 64, 24>}]} {
    %c0 = arith.constant 0 : index
    %c0_0 = arith.constant 0 : index
    %0 = vector.load %arg1[%c0, %c0_0] : memref<64x24xbf16, #tpu.memory_space<vmem>>, vector<64x24xbf16>
    %c0_1 = arith.constant 0 : index
    %c0_2 = arith.constant 0 : index
    %1 = vector.load %arg2[%c0_1, %c0_2] : memref<24x24xbf16, #tpu.memory_space<vmem>>, vector<24x24xbf16>
    %cst = arith.constant dense<0.000000e+00> : vector<64x24xf32>
    %2 = tpu.matmul %0, %1, %cst {dimension_numbers = #tpu.dot_dimension_numbers<[1], [0], [0], [1], [0, 0, 1, 1], [], []>} : vector<64x24xbf16>, vector<24x24xbf16>, vector<64x24xf32> -> vector<64x24xf32>
    %c0_3 = arith.constant 0 : index
    %c0_4 = arith.constant 0 : index
    %3 = vector.load %arg3[%c0_3, %c0_4] : memref<1x24xf32, #tpu.memory_space<vmem>>, vector<1x24xf32>
    %4 = vector.broadcast %3 : vector<1x24xf32> to vector<64x24xf32>
    %5 = arith.addf %2, %4 : vector<64x24xf32>
    %cst_5 = arith.constant 0.000000e+00 : f32
    %6 = vector.broadcast %cst_5 : f32 to vector<64x24xf32>
    %7 = arith.maximumf %5, %6 : vector<64x24xf32>
    %8 = arith.truncf %7 : vector<64x24xf32> to vector<64x24xbf16>
    %c0_6 = arith.constant 0 : index
    %c0_7 = arith.constant 0 : index
    %9 = vector.load %arg4[%c0_6, %c0_7] : memref<64x24xbf16, #tpu.memory_space<vmem>>, vector<64x24xbf16>
    tpu.vector_store %arg4[%c0_6, %c0_7], %8 {strides = array<i32>} : memref<64x24xbf16, #tpu.memory_space<vmem>>, vector<64x24xbf16>,
    return
  }
  func.func @transform_0(%arg0: i32) -> (i32, i32) {
    %c0_i32 = arith.constant 0 : i32
    %c0_i32_0 = arith.constant 0 : i32
    return %arg0, %c0_i32 : i32, i32
  }
  func.func @transform_1(%arg0: i32) -> (i32, i32) {
    %c0_i32 = arith.constant 0 : i32
    %c0_i32_0 = arith.constant 0 : i32
    %c0_i32_1 = arith.constant 0 : i32
    return %c0_i32, %c0_i32_0 : i32, i32
  }
  func.func @transform_2(%arg0: i32) -> (i32, i32) {
    %c0_i32 = arith.constant 0 : i32
    %c0_i32_0 = arith.constant 0 : i32
    %c0_i32_1 = arith.constant 0 : i32
    return %c0_i32, %c0_i32_0 : i32, i32
  }
  func.func @transform_3(%arg0: i32) -> (i32, i32) {
    %c0_i32 = arith.constant 0 : i32
    %c0_i32_0 = arith.constant 0 : i32
    return %arg0, %c0_i32 : i32, i32
  }
}

module attributes {stable_mosaic.version = 11 : i64} {
  func.func @_dw_s2_img_kernel(%arg0: i32, %arg1: memref<1x9x9x24xbf16, #tpu.memory_space<vmem>>, %arg2: memref<1x9x9x24xbf16, #tpu.memory_space<vmem>>, %arg3: memref<1x9x9x24xbf16, #tpu.memory_space<vmem>>, %arg4: memref<1x9x9x24xbf16, #tpu.memory_space<vmem>>, %arg5: memref<9x1x24xf32, #tpu.memory_space<vmem>>, %arg6: memref<1x24xf32, #tpu.memory_space<vmem>>, %arg7: memref<1x8x8x24xbf16, #tpu.memory_space<vmem>>) attributes {dimension_semantics = [#tpu.dimension_semantics<parallel>], iteration_bounds = array<i64: 2>, scalar_prefetch = 0 : i64, scratch_operands = 0 : i64, tpu.core_type = #tpu.core_type<tc>, window_params = [{transform_indices = @transform_0, window_bounds = array<i64: 1, 9, 9, 24>}, {transform_indices = @transform_1, window_bounds = array<i64: 1, 9, 9, 24>}, {transform_indices = @transform_2, window_bounds = array<i64: 1, 9, 9, 24>}, {transform_indices = @transform_3, window_bounds = array<i64: 1, 9, 9, 24>}, {pipeline_mode = #tpu.pipeline_mode<synchronous>, transform_indices = @transform_4, window_bounds = array<i64: 9, 1, 24>}, {pipeline_mode = #tpu.pipeline_mode<synchronous>, transform_indices = @transform_5, window_bounds = array<i64: 1, 24>}, {transform_indices = @transform_6, window_bounds = array<i64: 1, 8, 8, 24>}]} {
    %c0 = arith.constant 0 : index
    %c0_0 = arith.constant 0 : index
    %c0_1 = arith.constant 0 : index
    %c0_2 = arith.constant 0 : index
    %0 = vector.load %arg1[%c0, %c0_0, %c0_1, %c0_2] : memref<1x9x9x24xbf16, #tpu.memory_space<vmem>>, vector<1x9x9x24xbf16>
    %1 = vector.shape_cast %0 : vector<1x9x9x24xbf16> to vector<9x9x24xbf16>
    %c0_3 = arith.constant 0 : index
    %c0_4 = arith.constant 0 : index
    %c0_5 = arith.constant 0 : index
    %c0_6 = arith.constant 0 : index
    %2 = vector.load %arg2[%c0_3, %c0_4, %c0_5, %c0_6] : memref<1x9x9x24xbf16, #tpu.memory_space<vmem>>, vector<1x9x9x24xbf16>
    %3 = vector.shape_cast %2 : vector<1x9x9x24xbf16> to vector<9x9x24xbf16>
    %c0_7 = arith.constant 0 : index
    %c0_8 = arith.constant 0 : index
    %c0_9 = arith.constant 0 : index
    %c0_10 = arith.constant 0 : index
    %4 = vector.load %arg3[%c0_7, %c0_8, %c0_9, %c0_10] : memref<1x9x9x24xbf16, #tpu.memory_space<vmem>>, vector<1x9x9x24xbf16>
    %5 = vector.shape_cast %4 : vector<1x9x9x24xbf16> to vector<9x9x24xbf16>
    %c0_11 = arith.constant 0 : index
    %c0_12 = arith.constant 0 : index
    %c0_13 = arith.constant 0 : index
    %c0_14 = arith.constant 0 : index
    %6 = vector.load %arg4[%c0_11, %c0_12, %c0_13, %c0_14] : memref<1x9x9x24xbf16, #tpu.memory_space<vmem>>, vector<1x9x9x24xbf16>
    %7 = vector.shape_cast %6 : vector<1x9x9x24xbf16> to vector<9x9x24xbf16>
    %cst = arith.constant 0.000000e+00 : f32
    %8 = vector.broadcast %cst : f32 to vector<8x8x24xf32>
    %9 = vector.extract_strided_slice %1 {offsets = [0, 0, 0], sizes = [8, 8, 24], strides = [1, 1, 1]} : vector<9x9x24xbf16> to vector<8x8x24xbf16>
    %10 = arith.extf %9 : vector<8x8x24xbf16> to vector<8x8x24xf32>
    %c0_15 = arith.constant 0 : index
    %c0_16 = arith.constant 0 : index
    %c0_17 = arith.constant 0 : index
    %11 = vector.load %arg5[%c0_15, %c0_16, %c0_17] : memref<9x1x24xf32, #tpu.memory_space<vmem>>, vector<1x1x24xf32>
    %12 = vector.shape_cast %11 : vector<1x1x24xf32> to vector<1x24xf32>
    %13 = vector.shape_cast %12 : vector<1x24xf32> to vector<1x1x24xf32>
    %14 = vector.broadcast %13 : vector<1x1x24xf32> to vector<8x8x24xf32>
    %15 = arith.mulf %10, %14 : vector<8x8x24xf32>
    %16 = arith.addf %8, %15 : vector<8x8x24xf32>
    %17 = vector.extract_strided_slice %3 {offsets = [0, 0, 0], sizes = [8, 8, 24], strides = [1, 1, 1]} : vector<9x9x24xbf16> to vector<8x8x24xbf16>
    %18 = arith.extf %17 : vector<8x8x24xbf16> to vector<8x8x24xf32>
    %c1 = arith.constant 1 : index
    %c0_18 = arith.constant 0 : index
    %c0_19 = arith.constant 0 : index
    %19 = vector.load %arg5[%c1, %c0_18, %c0_19] : memref<9x1x24xf32, #tpu.memory_space<vmem>>, vector<1x1x24xf32>
    %20 = vector.shape_cast %19 : vector<1x1x24xf32> to vector<1x24xf32>
    %21 = vector.shape_cast %20 : vector<1x24xf32> to vector<1x1x24xf32>
    %22 = vector.broadcast %21 : vector<1x1x24xf32> to vector<8x8x24xf32>
    %23 = arith.mulf %18, %22 : vector<8x8x24xf32>
    %24 = arith.addf %16, %23 : vector<8x8x24xf32>
    %25 = vector.extract_strided_slice %1 {offsets = [0, 1, 0], sizes = [8, 8, 24], strides = [1, 1, 1]} : vector<9x9x24xbf16> to vector<8x8x24xbf16>
    %26 = arith.extf %25 : vector<8x8x24xbf16> to vector<8x8x24xf32>
    %c2 = arith.constant 2 : index
    %c0_20 = arith.constant 0 : index
    %c0_21 = arith.constant 0 : index
    %27 = vector.load %arg5[%c2, %c0_20, %c0_21] : memref<9x1x24xf32, #tpu.memory_space<vmem>>, vector<1x1x24xf32>
    %28 = vector.shape_cast %27 : vector<1x1x24xf32> to vector<1x24xf32>
    %29 = vector.shape_cast %28 : vector<1x24xf32> to vector<1x1x24xf32>
    %30 = vector.broadcast %29 : vector<1x1x24xf32> to vector<8x8x24xf32>
    %31 = arith.mulf %26, %30 : vector<8x8x24xf32>
    %32 = arith.addf %24, %31 : vector<8x8x24xf32>
    %33 = vector.extract_strided_slice %5 {offsets = [0, 0, 0], sizes = [8, 8, 24], strides = [1, 1, 1]} : vector<9x9x24xbf16> to vector<8x8x24xbf16>
    %34 = arith.extf %33 : vector<8x8x24xbf16> to vector<8x8x24xf32>
    %c3 = arith.constant 3 : index
    %c0_22 = arith.constant 0 : index
    %c0_23 = arith.constant 0 : index
    %35 = vector.load %arg5[%c3, %c0_22, %c0_23] : memref<9x1x24xf32, #tpu.memory_space<vmem>>, vector<1x1x24xf32>
    %36 = vector.shape_cast %35 : vector<1x1x24xf32> to vector<1x24xf32>
    %37 = vector.shape_cast %36 : vector<1x24xf32> to vector<1x1x24xf32>
    %38 = vector.broadcast %37 : vector<1x1x24xf32> to vector<8x8x24xf32>
    %39 = arith.mulf %34, %38 : vector<8x8x24xf32>
    %40 = arith.addf %32, %39 : vector<8x8x24xf32>
    %41 = vector.extract_strided_slice %7 {offsets = [0, 0, 0], sizes = [8, 8, 24], strides = [1, 1, 1]} : vector<9x9x24xbf16> to vector<8x8x24xbf16>
    %42 = arith.extf %41 : vector<8x8x24xbf16> to vector<8x8x24xf32>
    %c4 = arith.constant 4 : index
    %c0_24 = arith.constant 0 : index
    %c0_25 = arith.constant 0 : index
    %43 = vector.load %arg5[%c4, %c0_24, %c0_25] : memref<9x1x24xf32, #tpu.memory_space<vmem>>, vector<1x1x24xf32>
    %44 = vector.shape_cast %43 : vector<1x1x24xf32> to vector<1x24xf32>
    %45 = vector.shape_cast %44 : vector<1x24xf32> to vector<1x1x24xf32>
    %46 = vector.broadcast %45 : vector<1x1x24xf32> to vector<8x8x24xf32>
    %47 = arith.mulf %42, %46 : vector<8x8x24xf32>
    %48 = arith.addf %40, %47 : vector<8x8x24xf32>
    %49 = vector.extract_strided_slice %5 {offsets = [0, 1, 0], sizes = [8, 8, 24], strides = [1, 1, 1]} : vector<9x9x24xbf16> to vector<8x8x24xbf16>
    %50 = arith.extf %49 : vector<8x8x24xbf16> to vector<8x8x24xf32>
    %c5 = arith.constant 5 : index
    %c0_26 = arith.constant 0 : index
    %c0_27 = arith.constant 0 : index
    %51 = vector.load %arg5[%c5, %c0_26, %c0_27] : memref<9x1x24xf32, #tpu.memory_space<vmem>>, vector<1x1x24xf32>
    %52 = vector.shape_cast %51 : vector<1x1x24xf32> to vector<1x24xf32>
    %53 = vector.shape_cast %52 : vector<1x24xf32> to vector<1x1x24xf32>
    %54 = vector.broadcast %53 : vector<1x1x24xf32> to vector<8x8x24xf32>
    %55 = arith.mulf %50, %54 : vector<8x8x24xf32>
    %56 = arith.addf %48, %55 : vector<8x8x24xf32>
    %57 = vector.extract_strided_slice %1 {offsets = [1, 0, 0], sizes = [8, 8, 24], strides = [1, 1, 1]} : vector<9x9x24xbf16> to vector<8x8x24xbf16>
    %58 = arith.extf %57 : vector<8x8x24xbf16> to vector<8x8x24xf32>
    %c6 = arith.constant 6 : index
    %c0_28 = arith.constant 0 : index
    %c0_29 = arith.constant 0 : index
    %59 = vector.load %arg5[%c6, %c0_28, %c0_29] : memref<9x1x24xf32, #tpu.memory_space<vmem>>, vector<1x1x24xf32>
    %60 = vector.shape_cast %59 : vector<1x1x24xf32> to vector<1x24xf32>
    %61 = vector.shape_cast %60 : vector<1x24xf32> to vector<1x1x24xf32>
    %62 = vector.broadcast %61 : vector<1x1x24xf32> to vector<8x8x24xf32>
    %63 = arith.mulf %58, %62 : vector<8x8x24xf32>
    %64 = arith.addf %56, %63 : vector<8x8x24xf32>
    %65 = vector.extract_strided_slice %3 {offsets = [1, 0, 0], sizes = [8, 8, 24], strides = [1, 1, 1]} : vector<9x9x24xbf16> to vector<8x8x24xbf16>
    %66 = arith.extf %65 : vector<8x8x24xbf16> to vector<8x8x24xf32>
    %c7 = arith.constant 7 : index
    %c0_30 = arith.constant 0 : index
    %c0_31 = arith.constant 0 : index
    %67 = vector.load %arg5[%c7, %c0_30, %c0_31] : memref<9x1x24xf32, #tpu.memory_space<vmem>>, vector<1x1x24xf32>
    %68 = vector.shape_cast %67 : vector<1x1x24xf32> to vector<1x24xf32>
    %69 = vector.shape_cast %68 : vector<1x24xf32> to vector<1x1x24xf32>
    %70 = vector.broadcast %69 : vector<1x1x24xf32> to vector<8x8x24xf32>
    %71 = arith.mulf %66, %70 : vector<8x8x24xf32>
    %72 = arith.addf %64, %71 : vector<8x8x24xf32>
    %73 = vector.extract_strided_slice %1 {offsets = [1, 1, 0], sizes = [8, 8, 24], strides = [1, 1, 1]} : vector<9x9x24xbf16> to vector<8x8x24xbf16>
    %74 = arith.extf %73 : vector<8x8x24xbf16> to vector<8x8x24xf32>
    %c8 = arith.constant 8 : index
    %c0_32 = arith.constant 0 : index
    %c0_33 = arith.constant 0 : index
    %75 = vector.load %arg5[%c8, %c0_32, %c0_33] : memref<9x1x24xf32, #tpu.memory_space<vmem>>, vector<1x1x24xf32>
    %76 = vector.shape_cast %75 : vector<1x1x24xf32> to vector<1x24xf32>
    %77 = vector.shape_cast %76 : vector<1x24xf32> to vector<1x1x24xf32>
    %78 = vector.broadcast %77 : vector<1x1x24xf32> to vector<8x8x24xf32>
    %79 = arith.mulf %74, %78 : vector<8x8x24xf32>
    %80 = arith.addf %72, %79 : vector<8x8x24xf32>
    %c0_34 = arith.constant 0 : index
    %c0_35 = arith.constant 0 : index
    %81 = vector.load %arg6[%c0_34, %c0_35] : memref<1x24xf32, #tpu.memory_space<vmem>>, vector<1x24xf32>
    %82 = vector.shape_cast %81 : vector<1x24xf32> to vector<1x1x24xf32>
    %83 = vector.broadcast %82 : vector<1x1x24xf32> to vector<8x8x24xf32>
    %84 = arith.addf %80, %83 : vector<8x8x24xf32>
    %85 = arith.truncf %84 : vector<8x8x24xf32> to vector<8x8x24xbf16>
    %c0_36 = arith.constant 0 : index
    %c0_37 = arith.constant 0 : index
    %c0_38 = arith.constant 0 : index
    %c0_39 = arith.constant 0 : index
    %86 = vector.load %arg7[%c0_36, %c0_37, %c0_38, %c0_39] : memref<1x8x8x24xbf16, #tpu.memory_space<vmem>>, vector<1x8x8x24xbf16>
    %87 = vector.shape_cast %86 : vector<1x8x8x24xbf16> to vector<8x8x24xbf16>
    %88 = vector.shape_cast %85 : vector<8x8x24xbf16> to vector<1x8x8x24xbf16>
    tpu.vector_store %arg7[%c0_36, %c0_37, %c0_38, %c0_39], %88 {strides = array<i32>} : memref<1x8x8x24xbf16, #tpu.memory_space<vmem>>, vector<1x8x8x24xbf16>,
    return
  }
  func.func @transform_0(%arg0: i32) -> (i32, i32, i32, i32) {
    %c0_i32 = arith.constant 0 : i32
    %c0_i32_0 = arith.constant 0 : i32
    %c0_i32_1 = arith.constant 0 : i32
    %c0_i32_2 = arith.constant 0 : i32
    return %arg0, %c0_i32, %c0_i32_0, %c0_i32_1 : i32, i32, i32, i32
  }
  func.func @transform_1(%arg0: i32) -> (i32, i32, i32, i32) {
    %c0_i32 = arith.constant 0 : i32
    %c0_i32_0 = arith.constant 0 : i32
    %c0_i32_1 = arith.constant 0 : i32
    %c0_i32_2 = arith.constant 0 : i32
    return %arg0, %c0_i32, %c0_i32_0, %c0_i32_1 : i32, i32, i32, i32
  }
  func.func @transform_2(%arg0: i32) -> (i32, i32, i32, i32) {
    %c0_i32 = arith.constant 0 : i32
    %c0_i32_0 = arith.constant 0 : i32
    %c0_i32_1 = arith.constant 0 : i32
    %c0_i32_2 = arith.constant 0 : i32
    return %arg0, %c0_i32, %c0_i32_0, %c0_i32_1 : i32, i32, i32, i32
  }
  func.func @transform_3(%arg0: i32) -> (i32, i32, i32, i32) {
    %c0_i32 = arith.constant 0 : i32
    %c0_i32_0 = arith.constant 0 : i32
    %c0_i32_1 = arith.constant 0 : i32
    %c0_i32_2 = arith.constant 0 : i32
    return %arg0, %c0_i32, %c0_i32_0, %c0_i32_1 : i32, i32, i32, i32
  }
  func.func @transform_4(%arg0: i32) -> (i32, i32, i32) {
    %c0_i32 = arith.constant 0 : i32
    %c0_i32_0 = arith.constant 0 : i32
    %c0_i32_1 = arith.constant 0 : i32
    %c0_i32_2 = arith.constant 0 : i32
    return %c0_i32, %c0_i32_0, %c0_i32_1 : i32, i32, i32
  }
  func.func @transform_5(%arg0: i32) -> (i32, i32) {
    %c0_i32 = arith.constant 0 : i32
    %c0_i32_0 = arith.constant 0 : i32
    %c0_i32_1 = arith.constant 0 : i32
    return %c0_i32, %c0_i32_0 : i32, i32
  }
  func.func @transform_6(%arg0: i32) -> (i32, i32, i32, i32) {
    %c0_i32 = arith.constant 0 : i32
    %c0_i32_0 = arith.constant 0 : i32
    %c0_i32_1 = arith.constant 0 : i32
    %c0_i32_2 = arith.constant 0 : i32
    return %arg0, %c0_i32, %c0_i32_0, %c0_i32_1 : i32, i32, i32, i32
  }
}

module attributes {stable_mosaic.version = 11 : i64} {
  func.func @_dw_s1_img_kernel(%arg0: i32, %arg1: memref<1x10x10x24xbf16, #tpu.memory_space<vmem>>, %arg2: memref<9x1x24xf32, #tpu.memory_space<vmem>>, %arg3: memref<1x24xf32, #tpu.memory_space<vmem>>, %arg4: memref<1x8x8x24xbf16, #tpu.memory_space<vmem>>) attributes {dimension_semantics = [#tpu.dimension_semantics<parallel>], iteration_bounds = array<i64: 2>, scalar_prefetch = 0 : i64, scratch_operands = 0 : i64, tpu.core_type = #tpu.core_type<tc>, window_params = [{transform_indices = @transform_0, window_bounds = array<i64: 1, 10, 10, 24>}, {pipeline_mode = #tpu.pipeline_mode<synchronous>, transform_indices = @transform_1, window_bounds = array<i64: 9, 1, 24>}, {pipeline_mode = #tpu.pipeline_mode<synchronous>, transform_indices = @transform_2, window_bounds = array<i64: 1, 24>}, {transform_indices = @transform_3, window_bounds = array<i64: 1, 8, 8, 24>}]} {
    %c0 = arith.constant 0 : index
    %c0_0 = arith.constant 0 : index
    %c0_1 = arith.constant 0 : index
    %c0_2 = arith.constant 0 : index
    %0 = vector.load %arg1[%c0, %c0_0, %c0_1, %c0_2] : memref<1x10x10x24xbf16, #tpu.memory_space<vmem>>, vector<1x10x10x24xbf16>
    %1 = vector.shape_cast %0 : vector<1x10x10x24xbf16> to vector<10x10x24xbf16>
    %cst = arith.constant 0.000000e+00 : f32
    %2 = vector.broadcast %cst : f32 to vector<8x8x24xf32>
    %3 = vector.extract_strided_slice %1 {offsets = [0, 0, 0], sizes = [8, 10, 24], strides = [1, 1, 1]} : vector<10x10x24xbf16> to vector<8x10x24xbf16>
    %4 = vector.extract_strided_slice %3 {offsets = [0, 0, 0], sizes = [8, 8, 24], strides = [1, 1, 1]} : vector<8x10x24xbf16> to vector<8x8x24xbf16>
    %5 = arith.extf %4 : vector<8x8x24xbf16> to vector<8x8x24xf32>
    %c0_3 = arith.constant 0 : index
    %c0_4 = arith.constant 0 : index
    %c0_5 = arith.constant 0 : index
    %6 = vector.load %arg2[%c0_3, %c0_4, %c0_5] : memref<9x1x24xf32, #tpu.memory_space<vmem>>, vector<1x1x24xf32>
    %7 = vector.shape_cast %6 : vector<1x1x24xf32> to vector<1x24xf32>
    %8 = vector.shape_cast %7 : vector<1x24xf32> to vector<1x1x24xf32>
    %9 = vector.broadcast %8 : vector<1x1x24xf32> to vector<8x8x24xf32>
    %10 = arith.mulf %5, %9 : vector<8x8x24xf32>
    %11 = arith.addf %2, %10 : vector<8x8x24xf32>
    %12 = vector.extract_strided_slice %3 {offsets = [0, 1, 0], sizes = [8, 8, 24], strides = [1, 1, 1]} : vector<8x10x24xbf16> to vector<8x8x24xbf16>
    %13 = arith.extf %12 : vector<8x8x24xbf16> to vector<8x8x24xf32>
    %c1 = arith.constant 1 : index
    %c0_6 = arith.constant 0 : index
    %c0_7 = arith.constant 0 : index
    %14 = vector.load %arg2[%c1, %c0_6, %c0_7] : memref<9x1x24xf32, #tpu.memory_space<vmem>>, vector<1x1x24xf32>
    %15 = vector.shape_cast %14 : vector<1x1x24xf32> to vector<1x24xf32>
    %16 = vector.shape_cast %15 : vector<1x24xf32> to vector<1x1x24xf32>
    %17 = vector.broadcast %16 : vector<1x1x24xf32> to vector<8x8x24xf32>
    %18 = arith.mulf %13, %17 : vector<8x8x24xf32>
    %19 = arith.addf %11, %18 : vector<8x8x24xf32>
    %20 = vector.extract_strided_slice %3 {offsets = [0, 2, 0], sizes = [8, 8, 24], strides = [1, 1, 1]} : vector<8x10x24xbf16> to vector<8x8x24xbf16>
    %21 = arith.extf %20 : vector<8x8x24xbf16> to vector<8x8x24xf32>
    %c2 = arith.constant 2 : index
    %c0_8 = arith.constant 0 : index
    %c0_9 = arith.constant 0 : index
    %22 = vector.load %arg2[%c2, %c0_8, %c0_9] : memref<9x1x24xf32, #tpu.memory_space<vmem>>, vector<1x1x24xf32>
    %23 = vector.shape_cast %22 : vector<1x1x24xf32> to vector<1x24xf32>
    %24 = vector.shape_cast %23 : vector<1x24xf32> to vector<1x1x24xf32>
    %25 = vector.broadcast %24 : vector<1x1x24xf32> to vector<8x8x24xf32>
    %26 = arith.mulf %21, %25 : vector<8x8x24xf32>
    %27 = arith.addf %19, %26 : vector<8x8x24xf32>
    %28 = vector.extract_strided_slice %1 {offsets = [1, 0, 0], sizes = [8, 10, 24], strides = [1, 1, 1]} : vector<10x10x24xbf16> to vector<8x10x24xbf16>
    %29 = vector.extract_strided_slice %28 {offsets = [0, 0, 0], sizes = [8, 8, 24], strides = [1, 1, 1]} : vector<8x10x24xbf16> to vector<8x8x24xbf16>
    %30 = arith.extf %29 : vector<8x8x24xbf16> to vector<8x8x24xf32>
    %c3 = arith.constant 3 : index
    %c0_10 = arith.constant 0 : index
    %c0_11 = arith.constant 0 : index
    %31 = vector.load %arg2[%c3, %c0_10, %c0_11] : memref<9x1x24xf32, #tpu.memory_space<vmem>>, vector<1x1x24xf32>
    %32 = vector.shape_cast %31 : vector<1x1x24xf32> to vector<1x24xf32>
    %33 = vector.shape_cast %32 : vector<1x24xf32> to vector<1x1x24xf32>
    %34 = vector.broadcast %33 : vector<1x1x24xf32> to vector<8x8x24xf32>
    %35 = arith.mulf %30, %34 : vector<8x8x24xf32>
    %36 = arith.addf %27, %35 : vector<8x8x24xf32>
    %37 = vector.extract_strided_slice %28 {offsets = [0, 1, 0], sizes = [8, 8, 24], strides = [1, 1, 1]} : vector<8x10x24xbf16> to vector<8x8x24xbf16>
    %38 = arith.extf %37 : vector<8x8x24xbf16> to vector<8x8x24xf32>
    %c4 = arith.constant 4 : index
    %c0_12 = arith.constant 0 : index
    %c0_13 = arith.constant 0 : index
    %39 = vector.load %arg2[%c4, %c0_12, %c0_13] : memref<9x1x24xf32, #tpu.memory_space<vmem>>, vector<1x1x24xf32>
    %40 = vector.shape_cast %39 : vector<1x1x24xf32> to vector<1x24xf32>
    %41 = vector.shape_cast %40 : vector<1x24xf32> to vector<1x1x24xf32>
    %42 = vector.broadcast %41 : vector<1x1x24xf32> to vector<8x8x24xf32>
    %43 = arith.mulf %38, %42 : vector<8x8x24xf32>
    %44 = arith.addf %36, %43 : vector<8x8x24xf32>
    %45 = vector.extract_strided_slice %28 {offsets = [0, 2, 0], sizes = [8, 8, 24], strides = [1, 1, 1]} : vector<8x10x24xbf16> to vector<8x8x24xbf16>
    %46 = arith.extf %45 : vector<8x8x24xbf16> to vector<8x8x24xf32>
    %c5 = arith.constant 5 : index
    %c0_14 = arith.constant 0 : index
    %c0_15 = arith.constant 0 : index
    %47 = vector.load %arg2[%c5, %c0_14, %c0_15] : memref<9x1x24xf32, #tpu.memory_space<vmem>>, vector<1x1x24xf32>
    %48 = vector.shape_cast %47 : vector<1x1x24xf32> to vector<1x24xf32>
    %49 = vector.shape_cast %48 : vector<1x24xf32> to vector<1x1x24xf32>
    %50 = vector.broadcast %49 : vector<1x1x24xf32> to vector<8x8x24xf32>
    %51 = arith.mulf %46, %50 : vector<8x8x24xf32>
    %52 = arith.addf %44, %51 : vector<8x8x24xf32>
    %53 = vector.extract_strided_slice %1 {offsets = [2, 0, 0], sizes = [8, 10, 24], strides = [1, 1, 1]} : vector<10x10x24xbf16> to vector<8x10x24xbf16>
    %54 = vector.extract_strided_slice %53 {offsets = [0, 0, 0], sizes = [8, 8, 24], strides = [1, 1, 1]} : vector<8x10x24xbf16> to vector<8x8x24xbf16>
    %55 = arith.extf %54 : vector<8x8x24xbf16> to vector<8x8x24xf32>
    %c6 = arith.constant 6 : index
    %c0_16 = arith.constant 0 : index
    %c0_17 = arith.constant 0 : index
    %56 = vector.load %arg2[%c6, %c0_16, %c0_17] : memref<9x1x24xf32, #tpu.memory_space<vmem>>, vector<1x1x24xf32>
    %57 = vector.shape_cast %56 : vector<1x1x24xf32> to vector<1x24xf32>
    %58 = vector.shape_cast %57 : vector<1x24xf32> to vector<1x1x24xf32>
    %59 = vector.broadcast %58 : vector<1x1x24xf32> to vector<8x8x24xf32>
    %60 = arith.mulf %55, %59 : vector<8x8x24xf32>
    %61 = arith.addf %52, %60 : vector<8x8x24xf32>
    %62 = vector.extract_strided_slice %53 {offsets = [0, 1, 0], sizes = [8, 8, 24], strides = [1, 1, 1]} : vector<8x10x24xbf16> to vector<8x8x24xbf16>
    %63 = arith.extf %62 : vector<8x8x24xbf16> to vector<8x8x24xf32>
    %c7 = arith.constant 7 : index
    %c0_18 = arith.constant 0 : index
    %c0_19 = arith.constant 0 : index
    %64 = vector.load %arg2[%c7, %c0_18, %c0_19] : memref<9x1x24xf32, #tpu.memory_space<vmem>>, vector<1x1x24xf32>
    %65 = vector.shape_cast %64 : vector<1x1x24xf32> to vector<1x24xf32>
    %66 = vector.shape_cast %65 : vector<1x24xf32> to vector<1x1x24xf32>
    %67 = vector.broadcast %66 : vector<1x1x24xf32> to vector<8x8x24xf32>
    %68 = arith.mulf %63, %67 : vector<8x8x24xf32>
    %69 = arith.addf %61, %68 : vector<8x8x24xf32>
    %70 = vector.extract_strided_slice %53 {offsets = [0, 2, 0], sizes = [8, 8, 24], strides = [1, 1, 1]} : vector<8x10x24xbf16> to vector<8x8x24xbf16>
    %71 = arith.extf %70 : vector<8x8x24xbf16> to vector<8x8x24xf32>
    %c8 = arith.constant 8 : index
    %c0_20 = arith.constant 0 : index
    %c0_21 = arith.constant 0 : index
    %72 = vector.load %arg2[%c8, %c0_20, %c0_21] : memref<9x1x24xf32, #tpu.memory_space<vmem>>, vector<1x1x24xf32>
    %73 = vector.shape_cast %72 : vector<1x1x24xf32> to vector<1x24xf32>
    %74 = vector.shape_cast %73 : vector<1x24xf32> to vector<1x1x24xf32>
    %75 = vector.broadcast %74 : vector<1x1x24xf32> to vector<8x8x24xf32>
    %76 = arith.mulf %71, %75 : vector<8x8x24xf32>
    %77 = arith.addf %69, %76 : vector<8x8x24xf32>
    %c0_22 = arith.constant 0 : index
    %c0_23 = arith.constant 0 : index
    %78 = vector.load %arg3[%c0_22, %c0_23] : memref<1x24xf32, #tpu.memory_space<vmem>>, vector<1x24xf32>
    %79 = vector.shape_cast %78 : vector<1x24xf32> to vector<1x1x24xf32>
    %80 = vector.broadcast %79 : vector<1x1x24xf32> to vector<8x8x24xf32>
    %81 = arith.addf %77, %80 : vector<8x8x24xf32>
    %82 = arith.truncf %81 : vector<8x8x24xf32> to vector<8x8x24xbf16>
    %c0_24 = arith.constant 0 : index
    %c0_25 = arith.constant 0 : index
    %c0_26 = arith.constant 0 : index
    %c0_27 = arith.constant 0 : index
    %83 = vector.load %arg4[%c0_24, %c0_25, %c0_26, %c0_27] : memref<1x8x8x24xbf16, #tpu.memory_space<vmem>>, vector<1x8x8x24xbf16>
    %84 = vector.shape_cast %83 : vector<1x8x8x24xbf16> to vector<8x8x24xbf16>
    %85 = vector.shape_cast %82 : vector<8x8x24xbf16> to vector<1x8x8x24xbf16>
    tpu.vector_store %arg4[%c0_24, %c0_25, %c0_26, %c0_27], %85 {strides = array<i32>} : memref<1x8x8x24xbf16, #tpu.memory_space<vmem>>, vector<1x8x8x24xbf16>,
    return
  }
  func.func @transform_0(%arg0: i32) -> (i32, i32, i32, i32) {
    %c0_i32 = arith.constant 0 : i32
    %c0_i32_0 = arith.constant 0 : i32
    %c0_i32_1 = arith.constant 0 : i32
    %c0_i32_2 = arith.constant 0 : i32
    return %arg0, %c0_i32, %c0_i32_0, %c0_i32_1 : i32, i32, i32, i32
  }
  func.func @transform_1(%arg0: i32) -> (i32, i32, i32) {
    %c0_i32 = arith.constant 0 : i32
    %c0_i32_0 = arith.constant 0 : i32
    %c0_i32_1 = arith.constant 0 : i32
    %c0_i32_2 = arith.constant 0 : i32
    return %c0_i32, %c0_i32_0, %c0_i32_1 : i32, i32, i32
  }
  func.func @transform_2(%arg0: i32) -> (i32, i32) {
    %c0_i32 = arith.constant 0 : i32
    %c0_i32_0 = arith.constant 0 : i32
    %c0_i32_1 = arith.constant 0 : i32
    return %c0_i32, %c0_i32_0 : i32, i32
  }
  func.func @transform_3(%arg0: i32) -> (i32, i32, i32, i32) {
    %c0_i32 = arith.constant 0 : i32
    %c0_i32_0 = arith.constant 0 : i32
    %c0_i32_1 = arith.constant 0 : i32
    %c0_i32_2 = arith.constant 0 : i32
    return %arg0, %c0_i32, %c0_i32_0, %c0_i32_1 : i32, i32, i32, i32
  }
}

module attributes {stable_mosaic.version = 11 : i64} {
  func.func @_gemm_bias_act_kernel(%arg0: i32, %arg1: memref<64x48xbf16, #tpu.memory_space<vmem>>, %arg2: memref<48x48xbf16, #tpu.memory_space<vmem>>, %arg3: memref<1x48xf32, #tpu.memory_space<vmem>>, %arg4: memref<64x48xbf16, #tpu.memory_space<vmem>>) attributes {dimension_semantics = [#tpu.dimension_semantics<parallel>], iteration_bounds = array<i64: 2>, scalar_prefetch = 0 : i64, scratch_operands = 0 : i64, tpu.core_type = #tpu.core_type<tc>, window_params = [{transform_indices = @transform_0, window_bounds = array<i64: 64, 48>}, {pipeline_mode = #tpu.pipeline_mode<synchronous>, transform_indices = @transform_1, window_bounds = array<i64: 48, 48>}, {pipeline_mode = #tpu.pipeline_mode<synchronous>, transform_indices = @transform_2, window_bounds = array<i64: 1, 48>}, {transform_indices = @transform_3, window_bounds = array<i64: 64, 48>}]} {
    %c0 = arith.constant 0 : index
    %c0_0 = arith.constant 0 : index
    %0 = vector.load %arg1[%c0, %c0_0] : memref<64x48xbf16, #tpu.memory_space<vmem>>, vector<64x48xbf16>
    %c0_1 = arith.constant 0 : index
    %c0_2 = arith.constant 0 : index
    %1 = vector.load %arg2[%c0_1, %c0_2] : memref<48x48xbf16, #tpu.memory_space<vmem>>, vector<48x48xbf16>
    %cst = arith.constant dense<0.000000e+00> : vector<64x48xf32>
    %2 = tpu.matmul %0, %1, %cst {dimension_numbers = #tpu.dot_dimension_numbers<[1], [0], [0], [1], [0, 0, 1, 1], [], []>} : vector<64x48xbf16>, vector<48x48xbf16>, vector<64x48xf32> -> vector<64x48xf32>
    %c0_3 = arith.constant 0 : index
    %c0_4 = arith.constant 0 : index
    %3 = vector.load %arg3[%c0_3, %c0_4] : memref<1x48xf32, #tpu.memory_space<vmem>>, vector<1x48xf32>
    %4 = vector.broadcast %3 : vector<1x48xf32> to vector<64x48xf32>
    %5 = arith.addf %2, %4 : vector<64x48xf32>
    %cst_5 = arith.constant 0.000000e+00 : f32
    %6 = vector.broadcast %cst_5 : f32 to vector<64x48xf32>
    %7 = arith.maximumf %5, %6 : vector<64x48xf32>
    %8 = arith.truncf %7 : vector<64x48xf32> to vector<64x48xbf16>
    %c0_6 = arith.constant 0 : index
    %c0_7 = arith.constant 0 : index
    %9 = vector.load %arg4[%c0_6, %c0_7] : memref<64x48xbf16, #tpu.memory_space<vmem>>, vector<64x48xbf16>
    tpu.vector_store %arg4[%c0_6, %c0_7], %8 {strides = array<i32>} : memref<64x48xbf16, #tpu.memory_space<vmem>>, vector<64x48xbf16>,
    return
  }
  func.func @transform_0(%arg0: i32) -> (i32, i32) {
    %c0_i32 = arith.constant 0 : i32
    %c0_i32_0 = arith.constant 0 : i32
    return %arg0, %c0_i32 : i32, i32
  }
  func.func @transform_1(%arg0: i32) -> (i32, i32) {
    %c0_i32 = arith.constant 0 : i32
    %c0_i32_0 = arith.constant 0 : i32
    %c0_i32_1 = arith.constant 0 : i32
    return %c0_i32, %c0_i32_0 : i32, i32
  }
  func.func @transform_2(%arg0: i32) -> (i32, i32) {
    %c0_i32 = arith.constant 0 : i32
    %c0_i32_0 = arith.constant 0 : i32
    %c0_i32_1 = arith.constant 0 : i32
    return %c0_i32, %c0_i32_0 : i32, i32
  }
  func.func @transform_3(%arg0: i32) -> (i32, i32) {
    %c0_i32 = arith.constant 0 : i32
    %c0_i32_0 = arith.constant 0 : i32
    return %arg0, %c0_i32 : i32, i32
  }
}

module attributes {stable_mosaic.version = 11 : i64} {
  func.func @_dw_s2_img_kernel(%arg0: i32, %arg1: memref<1x5x5x48xbf16, #tpu.memory_space<vmem>>, %arg2: memref<1x5x5x48xbf16, #tpu.memory_space<vmem>>, %arg3: memref<1x5x5x48xbf16, #tpu.memory_space<vmem>>, %arg4: memref<1x5x5x48xbf16, #tpu.memory_space<vmem>>, %arg5: memref<9x1x48xf32, #tpu.memory_space<vmem>>, %arg6: memref<1x48xf32, #tpu.memory_space<vmem>>, %arg7: memref<1x4x4x48xbf16, #tpu.memory_space<vmem>>) attributes {dimension_semantics = [#tpu.dimension_semantics<parallel>], iteration_bounds = array<i64: 2>, scalar_prefetch = 0 : i64, scratch_operands = 0 : i64, tpu.core_type = #tpu.core_type<tc>, window_params = [{transform_indices = @transform_0, window_bounds = array<i64: 1, 5, 5, 48>}, {transform_indices = @transform_1, window_bounds = array<i64: 1, 5, 5, 48>}, {transform_indices = @transform_2, window_bounds = array<i64: 1, 5, 5, 48>}, {transform_indices = @transform_3, window_bounds = array<i64: 1, 5, 5, 48>}, {pipeline_mode = #tpu.pipeline_mode<synchronous>, transform_indices = @transform_4, window_bounds = array<i64: 9, 1, 48>}, {pipeline_mode = #tpu.pipeline_mode<synchronous>, transform_indices = @transform_5, window_bounds = array<i64: 1, 48>}, {transform_indices = @transform_6, window_bounds = array<i64: 1, 4, 4, 48>}]} {
    %c0 = arith.constant 0 : index
    %c0_0 = arith.constant 0 : index
    %c0_1 = arith.constant 0 : index
    %c0_2 = arith.constant 0 : index
    %0 = vector.load %arg1[%c0, %c0_0, %c0_1, %c0_2] : memref<1x5x5x48xbf16, #tpu.memory_space<vmem>>, vector<1x5x5x48xbf16>
    %1 = vector.shape_cast %0 : vector<1x5x5x48xbf16> to vector<5x5x48xbf16>
    %c0_3 = arith.constant 0 : index
    %c0_4 = arith.constant 0 : index
    %c0_5 = arith.constant 0 : index
    %c0_6 = arith.constant 0 : index
    %2 = vector.load %arg2[%c0_3, %c0_4, %c0_5, %c0_6] : memref<1x5x5x48xbf16, #tpu.memory_space<vmem>>, vector<1x5x5x48xbf16>
    %3 = vector.shape_cast %2 : vector<1x5x5x48xbf16> to vector<5x5x48xbf16>
    %c0_7 = arith.constant 0 : index
    %c0_8 = arith.constant 0 : index
    %c0_9 = arith.constant 0 : index
    %c0_10 = arith.constant 0 : index
    %4 = vector.load %arg3[%c0_7, %c0_8, %c0_9, %c0_10] : memref<1x5x5x48xbf16, #tpu.memory_space<vmem>>, vector<1x5x5x48xbf16>
    %5 = vector.shape_cast %4 : vector<1x5x5x48xbf16> to vector<5x5x48xbf16>
    %c0_11 = arith.constant 0 : index
    %c0_12 = arith.constant 0 : index
    %c0_13 = arith.constant 0 : index
    %c0_14 = arith.constant 0 : index
    %6 = vector.load %arg4[%c0_11, %c0_12, %c0_13, %c0_14] : memref<1x5x5x48xbf16, #tpu.memory_space<vmem>>, vector<1x5x5x48xbf16>
    %7 = vector.shape_cast %6 : vector<1x5x5x48xbf16> to vector<5x5x48xbf16>
    %cst = arith.constant 0.000000e+00 : f32
    %8 = vector.broadcast %cst : f32 to vector<4x4x48xf32>
    %9 = vector.extract_strided_slice %1 {offsets = [0, 0, 0], sizes = [4, 4, 48], strides = [1, 1, 1]} : vector<5x5x48xbf16> to vector<4x4x48xbf16>
    %10 = arith.extf %9 : vector<4x4x48xbf16> to vector<4x4x48xf32>
    %c0_15 = arith.constant 0 : index
    %c0_16 = arith.constant 0 : index
    %c0_17 = arith.constant 0 : index
    %11 = vector.load %arg5[%c0_15, %c0_16, %c0_17] : memref<9x1x48xf32, #tpu.memory_space<vmem>>, vector<1x1x48xf32>
    %12 = vector.shape_cast %11 : vector<1x1x48xf32> to vector<1x48xf32>
    %13 = vector.shape_cast %12 : vector<1x48xf32> to vector<1x1x48xf32>
    %14 = vector.broadcast %13 : vector<1x1x48xf32> to vector<4x4x48xf32>
    %15 = arith.mulf %10, %14 : vector<4x4x48xf32>
    %16 = arith.addf %8, %15 : vector<4x4x48xf32>
    %17 = vector.extract_strided_slice %3 {offsets = [0, 0, 0], sizes = [4, 4, 48], strides = [1, 1, 1]} : vector<5x5x48xbf16> to vector<4x4x48xbf16>
    %18 = arith.extf %17 : vector<4x4x48xbf16> to vector<4x4x48xf32>
    %c1 = arith.constant 1 : index
    %c0_18 = arith.constant 0 : index
    %c0_19 = arith.constant 0 : index
    %19 = vector.load %arg5[%c1, %c0_18, %c0_19] : memref<9x1x48xf32, #tpu.memory_space<vmem>>, vector<1x1x48xf32>
    %20 = vector.shape_cast %19 : vector<1x1x48xf32> to vector<1x48xf32>
    %21 = vector.shape_cast %20 : vector<1x48xf32> to vector<1x1x48xf32>
    %22 = vector.broadcast %21 : vector<1x1x48xf32> to vector<4x4x48xf32>
    %23 = arith.mulf %18, %22 : vector<4x4x48xf32>
    %24 = arith.addf %16, %23 : vector<4x4x48xf32>
    %25 = vector.extract_strided_slice %1 {offsets = [0, 1, 0], sizes = [4, 4, 48], strides = [1, 1, 1]} : vector<5x5x48xbf16> to vector<4x4x48xbf16>
    %26 = arith.extf %25 : vector<4x4x48xbf16> to vector<4x4x48xf32>
    %c2 = arith.constant 2 : index
    %c0_20 = arith.constant 0 : index
    %c0_21 = arith.constant 0 : index
    %27 = vector.load %arg5[%c2, %c0_20, %c0_21] : memref<9x1x48xf32, #tpu.memory_space<vmem>>, vector<1x1x48xf32>
    %28 = vector.shape_cast %27 : vector<1x1x48xf32> to vector<1x48xf32>
    %29 = vector.shape_cast %28 : vector<1x48xf32> to vector<1x1x48xf32>
    %30 = vector.broadcast %29 : vector<1x1x48xf32> to vector<4x4x48xf32>
    %31 = arith.mulf %26, %30 : vector<4x4x48xf32>
    %32 = arith.addf %24, %31 : vector<4x4x48xf32>
    %33 = vector.extract_strided_slice %5 {offsets = [0, 0, 0], sizes = [4, 4, 48], strides = [1, 1, 1]} : vector<5x5x48xbf16> to vector<4x4x48xbf16>
    %34 = arith.extf %33 : vector<4x4x48xbf16> to vector<4x4x48xf32>
    %c3 = arith.constant 3 : index
    %c0_22 = arith.constant 0 : index
    %c0_23 = arith.constant 0 : index
    %35 = vector.load %arg5[%c3, %c0_22, %c0_23] : memref<9x1x48xf32, #tpu.memory_space<vmem>>, vector<1x1x48xf32>
    %36 = vector.shape_cast %35 : vector<1x1x48xf32> to vector<1x48xf32>
    %37 = vector.shape_cast %36 : vector<1x48xf32> to vector<1x1x48xf32>
    %38 = vector.broadcast %37 : vector<1x1x48xf32> to vector<4x4x48xf32>
    %39 = arith.mulf %34, %38 : vector<4x4x48xf32>
    %40 = arith.addf %32, %39 : vector<4x4x48xf32>
    %41 = vector.extract_strided_slice %7 {offsets = [0, 0, 0], sizes = [4, 4, 48], strides = [1, 1, 1]} : vector<5x5x48xbf16> to vector<4x4x48xbf16>
    %42 = arith.extf %41 : vector<4x4x48xbf16> to vector<4x4x48xf32>
    %c4 = arith.constant 4 : index
    %c0_24 = arith.constant 0 : index
    %c0_25 = arith.constant 0 : index
    %43 = vector.load %arg5[%c4, %c0_24, %c0_25] : memref<9x1x48xf32, #tpu.memory_space<vmem>>, vector<1x1x48xf32>
    %44 = vector.shape_cast %43 : vector<1x1x48xf32> to vector<1x48xf32>
    %45 = vector.shape_cast %44 : vector<1x48xf32> to vector<1x1x48xf32>
    %46 = vector.broadcast %45 : vector<1x1x48xf32> to vector<4x4x48xf32>
    %47 = arith.mulf %42, %46 : vector<4x4x48xf32>
    %48 = arith.addf %40, %47 : vector<4x4x48xf32>
    %49 = vector.extract_strided_slice %5 {offsets = [0, 1, 0], sizes = [4, 4, 48], strides = [1, 1, 1]} : vector<5x5x48xbf16> to vector<4x4x48xbf16>
    %50 = arith.extf %49 : vector<4x4x48xbf16> to vector<4x4x48xf32>
    %c5 = arith.constant 5 : index
    %c0_26 = arith.constant 0 : index
    %c0_27 = arith.constant 0 : index
    %51 = vector.load %arg5[%c5, %c0_26, %c0_27] : memref<9x1x48xf32, #tpu.memory_space<vmem>>, vector<1x1x48xf32>
    %52 = vector.shape_cast %51 : vector<1x1x48xf32> to vector<1x48xf32>
    %53 = vector.shape_cast %52 : vector<1x48xf32> to vector<1x1x48xf32>
    %54 = vector.broadcast %53 : vector<1x1x48xf32> to vector<4x4x48xf32>
    %55 = arith.mulf %50, %54 : vector<4x4x48xf32>
    %56 = arith.addf %48, %55 : vector<4x4x48xf32>
    %57 = vector.extract_strided_slice %1 {offsets = [1, 0, 0], sizes = [4, 4, 48], strides = [1, 1, 1]} : vector<5x5x48xbf16> to vector<4x4x48xbf16>
    %58 = arith.extf %57 : vector<4x4x48xbf16> to vector<4x4x48xf32>
    %c6 = arith.constant 6 : index
    %c0_28 = arith.constant 0 : index
    %c0_29 = arith.constant 0 : index
    %59 = vector.load %arg5[%c6, %c0_28, %c0_29] : memref<9x1x48xf32, #tpu.memory_space<vmem>>, vector<1x1x48xf32>
    %60 = vector.shape_cast %59 : vector<1x1x48xf32> to vector<1x48xf32>
    %61 = vector.shape_cast %60 : vector<1x48xf32> to vector<1x1x48xf32>
    %62 = vector.broadcast %61 : vector<1x1x48xf32> to vector<4x4x48xf32>
    %63 = arith.mulf %58, %62 : vector<4x4x48xf32>
    %64 = arith.addf %56, %63 : vector<4x4x48xf32>
    %65 = vector.extract_strided_slice %3 {offsets = [1, 0, 0], sizes = [4, 4, 48], strides = [1, 1, 1]} : vector<5x5x48xbf16> to vector<4x4x48xbf16>
    %66 = arith.extf %65 : vector<4x4x48xbf16> to vector<4x4x48xf32>
    %c7 = arith.constant 7 : index
    %c0_30 = arith.constant 0 : index
    %c0_31 = arith.constant 0 : index
    %67 = vector.load %arg5[%c7, %c0_30, %c0_31] : memref<9x1x48xf32, #tpu.memory_space<vmem>>, vector<1x1x48xf32>
    %68 = vector.shape_cast %67 : vector<1x1x48xf32> to vector<1x48xf32>
    %69 = vector.shape_cast %68 : vector<1x48xf32> to vector<1x1x48xf32>
    %70 = vector.broadcast %69 : vector<1x1x48xf32> to vector<4x4x48xf32>
    %71 = arith.mulf %66, %70 : vector<4x4x48xf32>
    %72 = arith.addf %64, %71 : vector<4x4x48xf32>
    %73 = vector.extract_strided_slice %1 {offsets = [1, 1, 0], sizes = [4, 4, 48], strides = [1, 1, 1]} : vector<5x5x48xbf16> to vector<4x4x48xbf16>
    %74 = arith.extf %73 : vector<4x4x48xbf16> to vector<4x4x48xf32>
    %c8 = arith.constant 8 : index
    %c0_32 = arith.constant 0 : index
    %c0_33 = arith.constant 0 : index
    %75 = vector.load %arg5[%c8, %c0_32, %c0_33] : memref<9x1x48xf32, #tpu.memory_space<vmem>>, vector<1x1x48xf32>
    %76 = vector.shape_cast %75 : vector<1x1x48xf32> to vector<1x48xf32>
    %77 = vector.shape_cast %76 : vector<1x48xf32> to vector<1x1x48xf32>
    %78 = vector.broadcast %77 : vector<1x1x48xf32> to vector<4x4x48xf32>
    %79 = arith.mulf %74, %78 : vector<4x4x48xf32>
    %80 = arith.addf %72, %79 : vector<4x4x48xf32>
    %c0_34 = arith.constant 0 : index
    %c0_35 = arith.constant 0 : index
    %81 = vector.load %arg6[%c0_34, %c0_35] : memref<1x48xf32, #tpu.memory_space<vmem>>, vector<1x48xf32>
    %82 = vector.shape_cast %81 : vector<1x48xf32> to vector<1x1x48xf32>
    %83 = vector.broadcast %82 : vector<1x1x48xf32> to vector<4x4x48xf32>
    %84 = arith.addf %80, %83 : vector<4x4x48xf32>
    %85 = arith.truncf %84 : vector<4x4x48xf32> to vector<4x4x48xbf16>
    %c0_36 = arith.constant 0 : index
    %c0_37 = arith.constant 0 : index
    %c0_38 = arith.constant 0 : index
    %c0_39 = arith.constant 0 : index
    %86 = vector.load %arg7[%c0_36, %c0_37, %c0_38, %c0_39] : memref<1x4x4x48xbf16, #tpu.memory_space<vmem>>, vector<1x4x4x48xbf16>
    %87 = vector.shape_cast %86 : vector<1x4x4x48xbf16> to vector<4x4x48xbf16>
    %88 = vector.shape_cast %85 : vector<4x4x48xbf16> to vector<1x4x4x48xbf16>
    tpu.vector_store %arg7[%c0_36, %c0_37, %c0_38, %c0_39], %88 {strides = array<i32>} : memref<1x4x4x48xbf16, #tpu.memory_space<vmem>>, vector<1x4x4x48xbf16>,
    return
  }
  func.func @transform_0(%arg0: i32) -> (i32, i32, i32, i32) {
    %c0_i32 = arith.constant 0 : i32
    %c0_i32_0 = arith.constant 0 : i32
    %c0_i32_1 = arith.constant 0 : i32
    %c0_i32_2 = arith.constant 0 : i32
    return %arg0, %c0_i32, %c0_i32_0, %c0_i32_1 : i32, i32, i32, i32
  }
  func.func @transform_1(%arg0: i32) -> (i32, i32, i32, i32) {
    %c0_i32 = arith.constant 0 : i32
    %c0_i32_0 = arith.constant 0 : i32
    %c0_i32_1 = arith.constant 0 : i32
    %c0_i32_2 = arith.constant 0 : i32
    return %arg0, %c0_i32, %c0_i32_0, %c0_i32_1 : i32, i32, i32, i32
  }
  func.func @transform_2(%arg0: i32) -> (i32, i32, i32, i32) {
    %c0_i32 = arith.constant 0 : i32
    %c0_i32_0 = arith.constant 0 : i32
    %c0_i32_1 = arith.constant 0 : i32
    %c0_i32_2 = arith.constant 0 : i32
    return %arg0, %c0_i32, %c0_i32_0, %c0_i32_1 : i32, i32, i32, i32
  }
  func.func @transform_3(%arg0: i32) -> (i32, i32, i32, i32) {
    %c0_i32 = arith.constant 0 : i32
    %c0_i32_0 = arith.constant 0 : i32
    %c0_i32_1 = arith.constant 0 : i32
    %c0_i32_2 = arith.constant 0 : i32
    return %arg0, %c0_i32, %c0_i32_0, %c0_i32_1 : i32, i32, i32, i32
  }
  func.func @transform_4(%arg0: i32) -> (i32, i32, i32) {
    %c0_i32 = arith.constant 0 : i32
    %c0_i32_0 = arith.constant 0 : i32
    %c0_i32_1 = arith.constant 0 : i32
    %c0_i32_2 = arith.constant 0 : i32
    return %c0_i32, %c0_i32_0, %c0_i32_1 : i32, i32, i32
  }
  func.func @transform_5(%arg0: i32) -> (i32, i32) {
    %c0_i32 = arith.constant 0 : i32
    %c0_i32_0 = arith.constant 0 : i32
    %c0_i32_1 = arith.constant 0 : i32
    return %c0_i32, %c0_i32_0 : i32, i32
  }
  func.func @transform_6(%arg0: i32) -> (i32, i32, i32, i32) {
    %c0_i32 = arith.constant 0 : i32
    %c0_i32_0 = arith.constant 0 : i32
    %c0_i32_1 = arith.constant 0 : i32
    %c0_i32_2 = arith.constant 0 : i32
    return %arg0, %c0_i32, %c0_i32_0, %c0_i32_1 : i32, i32, i32, i32
  }
}

module attributes {stable_mosaic.version = 11 : i64} {
  func.func @_gemm_bias_act_kernel(%arg0: i32, %arg1: memref<16x48xbf16, #tpu.memory_space<vmem>>, %arg2: memref<48x48xbf16, #tpu.memory_space<vmem>>, %arg3: memref<1x48xf32, #tpu.memory_space<vmem>>, %arg4: memref<16x48xbf16, #tpu.memory_space<vmem>>) attributes {dimension_semantics = [#tpu.dimension_semantics<parallel>], iteration_bounds = array<i64: 2>, scalar_prefetch = 0 : i64, scratch_operands = 0 : i64, tpu.core_type = #tpu.core_type<tc>, window_params = [{transform_indices = @transform_0, window_bounds = array<i64: 16, 48>}, {pipeline_mode = #tpu.pipeline_mode<synchronous>, transform_indices = @transform_1, window_bounds = array<i64: 48, 48>}, {pipeline_mode = #tpu.pipeline_mode<synchronous>, transform_indices = @transform_2, window_bounds = array<i64: 1, 48>}, {transform_indices = @transform_3, window_bounds = array<i64: 16, 48>}]} {
    %c0 = arith.constant 0 : index
    %c0_0 = arith.constant 0 : index
    %0 = vector.load %arg1[%c0, %c0_0] : memref<16x48xbf16, #tpu.memory_space<vmem>>, vector<16x48xbf16>
    %c0_1 = arith.constant 0 : index
    %c0_2 = arith.constant 0 : index
    %1 = vector.load %arg2[%c0_1, %c0_2] : memref<48x48xbf16, #tpu.memory_space<vmem>>, vector<48x48xbf16>
    %cst = arith.constant dense<0.000000e+00> : vector<16x48xf32>
    %2 = tpu.matmul %0, %1, %cst {dimension_numbers = #tpu.dot_dimension_numbers<[1], [0], [0], [1], [0, 0, 1, 1], [], []>} : vector<16x48xbf16>, vector<48x48xbf16>, vector<16x48xf32> -> vector<16x48xf32>
    %c0_3 = arith.constant 0 : index
    %c0_4 = arith.constant 0 : index
    %3 = vector.load %arg3[%c0_3, %c0_4] : memref<1x48xf32, #tpu.memory_space<vmem>>, vector<1x48xf32>
    %4 = vector.broadcast %3 : vector<1x48xf32> to vector<16x48xf32>
    %5 = arith.addf %2, %4 : vector<16x48xf32>
    %cst_5 = arith.constant 0.000000e+00 : f32
    %6 = vector.broadcast %cst_5 : f32 to vector<16x48xf32>
    %7 = arith.maximumf %5, %6 : vector<16x48xf32>
    %8 = arith.truncf %7 : vector<16x48xf32> to vector<16x48xbf16>
    %c0_6 = arith.constant 0 : index
    %c0_7 = arith.constant 0 : index
    %9 = vector.load %arg4[%c0_6, %c0_7] : memref<16x48xbf16, #tpu.memory_space<vmem>>, vector<16x48xbf16>
    tpu.vector_store %arg4[%c0_6, %c0_7], %8 {strides = array<i32>} : memref<16x48xbf16, #tpu.memory_space<vmem>>, vector<16x48xbf16>,
    return
  }
  func.func @transform_0(%arg0: i32) -> (i32, i32) {
    %c0_i32 = arith.constant 0 : i32
    %c0_i32_0 = arith.constant 0 : i32
    return %arg0, %c0_i32 : i32, i32
  }
  func.func @transform_1(%arg0: i32) -> (i32, i32) {
    %c0_i32 = arith.constant 0 : i32
    %c0_i32_0 = arith.constant 0 : i32
    %c0_i32_1 = arith.constant 0 : i32
    return %c0_i32, %c0_i32_0 : i32, i32
  }
  func.func @transform_2(%arg0: i32) -> (i32, i32) {
    %c0_i32 = arith.constant 0 : i32
    %c0_i32_0 = arith.constant 0 : i32
    %c0_i32_1 = arith.constant 0 : i32
    return %c0_i32, %c0_i32_0 : i32, i32
  }
  func.func @transform_3(%arg0: i32) -> (i32, i32) {
    %c0_i32 = arith.constant 0 : i32
    %c0_i32_0 = arith.constant 0 : i32
    return %arg0, %c0_i32 : i32, i32
  }
}

module attributes {stable_mosaic.version = 11 : i64} {
  func.func @_dw_s1_img_kernel(%arg0: i32, %arg1: memref<1x6x6x48xbf16, #tpu.memory_space<vmem>>, %arg2: memref<9x1x48xf32, #tpu.memory_space<vmem>>, %arg3: memref<1x48xf32, #tpu.memory_space<vmem>>, %arg4: memref<1x4x4x48xbf16, #tpu.memory_space<vmem>>) attributes {dimension_semantics = [#tpu.dimension_semantics<parallel>], iteration_bounds = array<i64: 2>, scalar_prefetch = 0 : i64, scratch_operands = 0 : i64, tpu.core_type = #tpu.core_type<tc>, window_params = [{transform_indices = @transform_0, window_bounds = array<i64: 1, 6, 6, 48>}, {pipeline_mode = #tpu.pipeline_mode<synchronous>, transform_indices = @transform_1, window_bounds = array<i64: 9, 1, 48>}, {pipeline_mode = #tpu.pipeline_mode<synchronous>, transform_indices = @transform_2, window_bounds = array<i64: 1, 48>}, {transform_indices = @transform_3, window_bounds = array<i64: 1, 4, 4, 48>}]} {
    %c0 = arith.constant 0 : index
    %c0_0 = arith.constant 0 : index
    %c0_1 = arith.constant 0 : index
    %c0_2 = arith.constant 0 : index
    %0 = vector.load %arg1[%c0, %c0_0, %c0_1, %c0_2] : memref<1x6x6x48xbf16, #tpu.memory_space<vmem>>, vector<1x6x6x48xbf16>
    %1 = vector.shape_cast %0 : vector<1x6x6x48xbf16> to vector<6x6x48xbf16>
    %cst = arith.constant 0.000000e+00 : f32
    %2 = vector.broadcast %cst : f32 to vector<4x4x48xf32>
    %3 = vector.extract_strided_slice %1 {offsets = [0, 0, 0], sizes = [4, 6, 48], strides = [1, 1, 1]} : vector<6x6x48xbf16> to vector<4x6x48xbf16>
    %4 = vector.extract_strided_slice %3 {offsets = [0, 0, 0], sizes = [4, 4, 48], strides = [1, 1, 1]} : vector<4x6x48xbf16> to vector<4x4x48xbf16>
    %5 = arith.extf %4 : vector<4x4x48xbf16> to vector<4x4x48xf32>
    %c0_3 = arith.constant 0 : index
    %c0_4 = arith.constant 0 : index
    %c0_5 = arith.constant 0 : index
    %6 = vector.load %arg2[%c0_3, %c0_4, %c0_5] : memref<9x1x48xf32, #tpu.memory_space<vmem>>, vector<1x1x48xf32>
    %7 = vector.shape_cast %6 : vector<1x1x48xf32> to vector<1x48xf32>
    %8 = vector.shape_cast %7 : vector<1x48xf32> to vector<1x1x48xf32>
    %9 = vector.broadcast %8 : vector<1x1x48xf32> to vector<4x4x48xf32>
    %10 = arith.mulf %5, %9 : vector<4x4x48xf32>
    %11 = arith.addf %2, %10 : vector<4x4x48xf32>
    %12 = vector.extract_strided_slice %3 {offsets = [0, 1, 0], sizes = [4, 4, 48], strides = [1, 1, 1]} : vector<4x6x48xbf16> to vector<4x4x48xbf16>
    %13 = arith.extf %12 : vector<4x4x48xbf16> to vector<4x4x48xf32>
    %c1 = arith.constant 1 : index
    %c0_6 = arith.constant 0 : index
    %c0_7 = arith.constant 0 : index
    %14 = vector.load %arg2[%c1, %c0_6, %c0_7] : memref<9x1x48xf32, #tpu.memory_space<vmem>>, vector<1x1x48xf32>
    %15 = vector.shape_cast %14 : vector<1x1x48xf32> to vector<1x48xf32>
    %16 = vector.shape_cast %15 : vector<1x48xf32> to vector<1x1x48xf32>
    %17 = vector.broadcast %16 : vector<1x1x48xf32> to vector<4x4x48xf32>
    %18 = arith.mulf %13, %17 : vector<4x4x48xf32>
    %19 = arith.addf %11, %18 : vector<4x4x48xf32>
    %20 = vector.extract_strided_slice %3 {offsets = [0, 2, 0], sizes = [4, 4, 48], strides = [1, 1, 1]} : vector<4x6x48xbf16> to vector<4x4x48xbf16>
    %21 = arith.extf %20 : vector<4x4x48xbf16> to vector<4x4x48xf32>
    %c2 = arith.constant 2 : index
    %c0_8 = arith.constant 0 : index
    %c0_9 = arith.constant 0 : index
    %22 = vector.load %arg2[%c2, %c0_8, %c0_9] : memref<9x1x48xf32, #tpu.memory_space<vmem>>, vector<1x1x48xf32>
    %23 = vector.shape_cast %22 : vector<1x1x48xf32> to vector<1x48xf32>
    %24 = vector.shape_cast %23 : vector<1x48xf32> to vector<1x1x48xf32>
    %25 = vector.broadcast %24 : vector<1x1x48xf32> to vector<4x4x48xf32>
    %26 = arith.mulf %21, %25 : vector<4x4x48xf32>
    %27 = arith.addf %19, %26 : vector<4x4x48xf32>
    %28 = vector.extract_strided_slice %1 {offsets = [1, 0, 0], sizes = [4, 6, 48], strides = [1, 1, 1]} : vector<6x6x48xbf16> to vector<4x6x48xbf16>
    %29 = vector.extract_strided_slice %28 {offsets = [0, 0, 0], sizes = [4, 4, 48], strides = [1, 1, 1]} : vector<4x6x48xbf16> to vector<4x4x48xbf16>
    %30 = arith.extf %29 : vector<4x4x48xbf16> to vector<4x4x48xf32>
    %c3 = arith.constant 3 : index
    %c0_10 = arith.constant 0 : index
    %c0_11 = arith.constant 0 : index
    %31 = vector.load %arg2[%c3, %c0_10, %c0_11] : memref<9x1x48xf32, #tpu.memory_space<vmem>>, vector<1x1x48xf32>
    %32 = vector.shape_cast %31 : vector<1x1x48xf32> to vector<1x48xf32>
    %33 = vector.shape_cast %32 : vector<1x48xf32> to vector<1x1x48xf32>
    %34 = vector.broadcast %33 : vector<1x1x48xf32> to vector<4x4x48xf32>
    %35 = arith.mulf %30, %34 : vector<4x4x48xf32>
    %36 = arith.addf %27, %35 : vector<4x4x48xf32>
    %37 = vector.extract_strided_slice %28 {offsets = [0, 1, 0], sizes = [4, 4, 48], strides = [1, 1, 1]} : vector<4x6x48xbf16> to vector<4x4x48xbf16>
    %38 = arith.extf %37 : vector<4x4x48xbf16> to vector<4x4x48xf32>
    %c4 = arith.constant 4 : index
    %c0_12 = arith.constant 0 : index
    %c0_13 = arith.constant 0 : index
    %39 = vector.load %arg2[%c4, %c0_12, %c0_13] : memref<9x1x48xf32, #tpu.memory_space<vmem>>, vector<1x1x48xf32>
    %40 = vector.shape_cast %39 : vector<1x1x48xf32> to vector<1x48xf32>
    %41 = vector.shape_cast %40 : vector<1x48xf32> to vector<1x1x48xf32>
    %42 = vector.broadcast %41 : vector<1x1x48xf32> to vector<4x4x48xf32>
    %43 = arith.mulf %38, %42 : vector<4x4x48xf32>
    %44 = arith.addf %36, %43 : vector<4x4x48xf32>
    %45 = vector.extract_strided_slice %28 {offsets = [0, 2, 0], sizes = [4, 4, 48], strides = [1, 1, 1]} : vector<4x6x48xbf16> to vector<4x4x48xbf16>
    %46 = arith.extf %45 : vector<4x4x48xbf16> to vector<4x4x48xf32>
    %c5 = arith.constant 5 : index
    %c0_14 = arith.constant 0 : index
    %c0_15 = arith.constant 0 : index
    %47 = vector.load %arg2[%c5, %c0_14, %c0_15] : memref<9x1x48xf32, #tpu.memory_space<vmem>>, vector<1x1x48xf32>
    %48 = vector.shape_cast %47 : vector<1x1x48xf32> to vector<1x48xf32>
    %49 = vector.shape_cast %48 : vector<1x48xf32> to vector<1x1x48xf32>
    %50 = vector.broadcast %49 : vector<1x1x48xf32> to vector<4x4x48xf32>
    %51 = arith.mulf %46, %50 : vector<4x4x48xf32>
    %52 = arith.addf %44, %51 : vector<4x4x48xf32>
    %53 = vector.extract_strided_slice %1 {offsets = [2, 0, 0], sizes = [4, 6, 48], strides = [1, 1, 1]} : vector<6x6x48xbf16> to vector<4x6x48xbf16>
    %54 = vector.extract_strided_slice %53 {offsets = [0, 0, 0], sizes = [4, 4, 48], strides = [1, 1, 1]} : vector<4x6x48xbf16> to vector<4x4x48xbf16>
    %55 = arith.extf %54 : vector<4x4x48xbf16> to vector<4x4x48xf32>
    %c6 = arith.constant 6 : index
    %c0_16 = arith.constant 0 : index
    %c0_17 = arith.constant 0 : index
    %56 = vector.load %arg2[%c6, %c0_16, %c0_17] : memref<9x1x48xf32, #tpu.memory_space<vmem>>, vector<1x1x48xf32>
    %57 = vector.shape_cast %56 : vector<1x1x48xf32> to vector<1x48xf32>
    %58 = vector.shape_cast %57 : vector<1x48xf32> to vector<1x1x48xf32>
    %59 = vector.broadcast %58 : vector<1x1x48xf32> to vector<4x4x48xf32>
    %60 = arith.mulf %55, %59 : vector<4x4x48xf32>
    %61 = arith.addf %52, %60 : vector<4x4x48xf32>
    %62 = vector.extract_strided_slice %53 {offsets = [0, 1, 0], sizes = [4, 4, 48], strides = [1, 1, 1]} : vector<4x6x48xbf16> to vector<4x4x48xbf16>
    %63 = arith.extf %62 : vector<4x4x48xbf16> to vector<4x4x48xf32>
    %c7 = arith.constant 7 : index
    %c0_18 = arith.constant 0 : index
    %c0_19 = arith.constant 0 : index
    %64 = vector.load %arg2[%c7, %c0_18, %c0_19] : memref<9x1x48xf32, #tpu.memory_space<vmem>>, vector<1x1x48xf32>
    %65 = vector.shape_cast %64 : vector<1x1x48xf32> to vector<1x48xf32>
    %66 = vector.shape_cast %65 : vector<1x48xf32> to vector<1x1x48xf32>
    %67 = vector.broadcast %66 : vector<1x1x48xf32> to vector<4x4x48xf32>
    %68 = arith.mulf %63, %67 : vector<4x4x48xf32>
    %69 = arith.addf %61, %68 : vector<4x4x48xf32>
    %70 = vector.extract_strided_slice %53 {offsets = [0, 2, 0], sizes = [4, 4, 48], strides = [1, 1, 1]} : vector<4x6x48xbf16> to vector<4x4x48xbf16>
    %71 = arith.extf %70 : vector<4x4x48xbf16> to vector<4x4x48xf32>
    %c8 = arith.constant 8 : index
    %c0_20 = arith.constant 0 : index
    %c0_21 = arith.constant 0 : index
    %72 = vector.load %arg2[%c8, %c0_20, %c0_21] : memref<9x1x48xf32, #tpu.memory_space<vmem>>, vector<1x1x48xf32>
    %73 = vector.shape_cast %72 : vector<1x1x48xf32> to vector<1x48xf32>
    %74 = vector.shape_cast %73 : vector<1x48xf32> to vector<1x1x48xf32>
    %75 = vector.broadcast %74 : vector<1x1x48xf32> to vector<4x4x48xf32>
    %76 = arith.mulf %71, %75 : vector<4x4x48xf32>
    %77 = arith.addf %69, %76 : vector<4x4x48xf32>
    %c0_22 = arith.constant 0 : index
    %c0_23 = arith.constant 0 : index
    %78 = vector.load %arg3[%c0_22, %c0_23] : memref<1x48xf32, #tpu.memory_space<vmem>>, vector<1x48xf32>
    %79 = vector.shape_cast %78 : vector<1x48xf32> to vector<1x1x48xf32>
    %80 = vector.broadcast %79 : vector<1x1x48xf32> to vector<4x4x48xf32>
    %81 = arith.addf %77, %80 : vector<4x4x48xf32>
    %82 = arith.truncf %81 : vector<4x4x48xf32> to vector<4x4x48xbf16>
    %c0_24 = arith.constant 0 : index
    %c0_25 = arith.constant 0 : index
    %c0_26 = arith.constant 0 : index
    %c0_27 = arith.constant 0 : index
    %83 = vector.load %arg4[%c0_24, %c0_25, %c0_26, %c0_27] : memref<1x4x4x48xbf16, #tpu.memory_space<vmem>>, vector<1x4x4x48xbf16>
    %84 = vector.shape_cast %83 : vector<1x4x4x48xbf16> to vector<4x4x48xbf16>
    %85 = vector.shape_cast %82 : vector<4x4x48xbf16> to vector<1x4x4x48xbf16>
    tpu.vector_store %arg4[%c0_24, %c0_25, %c0_26, %c0_27], %85 {strides = array<i32>} : memref<1x4x4x48xbf16, #tpu.memory_space<vmem>>, vector<1x4x4x48xbf16>,
    return
  }
  func.func @transform_0(%arg0: i32) -> (i32, i32, i32, i32) {
    %c0_i32 = arith.constant 0 : i32
    %c0_i32_0 = arith.constant 0 : i32
    %c0_i32_1 = arith.constant 0 : i32
    %c0_i32_2 = arith.constant 0 : i32
    return %arg0, %c0_i32, %c0_i32_0, %c0_i32_1 : i32, i32, i32, i32
  }
  func.func @transform_1(%arg0: i32) -> (i32, i32, i32) {
    %c0_i32 = arith.constant 0 : i32
    %c0_i32_0 = arith.constant 0 : i32
    %c0_i32_1 = arith.constant 0 : i32
    %c0_i32_2 = arith.constant 0 : i32
    return %c0_i32, %c0_i32_0, %c0_i32_1 : i32, i32, i32
  }
  func.func @transform_2(%arg0: i32) -> (i32, i32) {
    %c0_i32 = arith.constant 0 : i32
    %c0_i32_0 = arith.constant 0 : i32
    %c0_i32_1 = arith.constant 0 : i32
    return %c0_i32, %c0_i32_0 : i32, i32
  }
  func.func @transform_3(%arg0: i32) -> (i32, i32, i32, i32) {
    %c0_i32 = arith.constant 0 : i32
    %c0_i32_0 = arith.constant 0 : i32
    %c0_i32_1 = arith.constant 0 : i32
    %c0_i32_2 = arith.constant 0 : i32
    return %arg0, %c0_i32, %c0_i32_0, %c0_i32_1 : i32, i32, i32, i32
  }
}

module attributes {stable_mosaic.version = 11 : i64} {
  func.func @_gemm_bias_act_kernel(%arg0: i32, %arg1: memref<16x96xbf16, #tpu.memory_space<vmem>>, %arg2: memref<96x96xbf16, #tpu.memory_space<vmem>>, %arg3: memref<1x96xf32, #tpu.memory_space<vmem>>, %arg4: memref<16x96xbf16, #tpu.memory_space<vmem>>) attributes {dimension_semantics = [#tpu.dimension_semantics<parallel>], iteration_bounds = array<i64: 2>, scalar_prefetch = 0 : i64, scratch_operands = 0 : i64, tpu.core_type = #tpu.core_type<tc>, window_params = [{transform_indices = @transform_0, window_bounds = array<i64: 16, 96>}, {pipeline_mode = #tpu.pipeline_mode<synchronous>, transform_indices = @transform_1, window_bounds = array<i64: 96, 96>}, {pipeline_mode = #tpu.pipeline_mode<synchronous>, transform_indices = @transform_2, window_bounds = array<i64: 1, 96>}, {transform_indices = @transform_3, window_bounds = array<i64: 16, 96>}]} {
    %c0 = arith.constant 0 : index
    %c0_0 = arith.constant 0 : index
    %0 = vector.load %arg1[%c0, %c0_0] : memref<16x96xbf16, #tpu.memory_space<vmem>>, vector<16x96xbf16>
    %c0_1 = arith.constant 0 : index
    %c0_2 = arith.constant 0 : index
    %1 = vector.load %arg2[%c0_1, %c0_2] : memref<96x96xbf16, #tpu.memory_space<vmem>>, vector<96x96xbf16>
    %cst = arith.constant dense<0.000000e+00> : vector<16x96xf32>
    %2 = tpu.matmul %0, %1, %cst {dimension_numbers = #tpu.dot_dimension_numbers<[1], [0], [0], [1], [0, 0, 1, 1], [], []>} : vector<16x96xbf16>, vector<96x96xbf16>, vector<16x96xf32> -> vector<16x96xf32>
    %c0_3 = arith.constant 0 : index
    %c0_4 = arith.constant 0 : index
    %3 = vector.load %arg3[%c0_3, %c0_4] : memref<1x96xf32, #tpu.memory_space<vmem>>, vector<1x96xf32>
    %4 = vector.broadcast %3 : vector<1x96xf32> to vector<16x96xf32>
    %5 = arith.addf %2, %4 : vector<16x96xf32>
    %cst_5 = arith.constant 0.000000e+00 : f32
    %6 = vector.broadcast %cst_5 : f32 to vector<16x96xf32>
    %7 = arith.maximumf %5, %6 : vector<16x96xf32>
    %8 = arith.truncf %7 : vector<16x96xf32> to vector<16x96xbf16>
    %c0_6 = arith.constant 0 : index
    %c0_7 = arith.constant 0 : index
    %9 = vector.load %arg4[%c0_6, %c0_7] : memref<16x96xbf16, #tpu.memory_space<vmem>>, vector<16x96xbf16>
    tpu.vector_store %arg4[%c0_6, %c0_7], %8 {strides = array<i32>} : memref<16x96xbf16, #tpu.memory_space<vmem>>, vector<16x96xbf16>,
    return
  }
  func.func @transform_0(%arg0: i32) -> (i32, i32) {
    %c0_i32 = arith.constant 0 : i32
    %c0_i32_0 = arith.constant 0 : i32
    return %arg0, %c0_i32 : i32, i32
  }
  func.func @transform_1(%arg0: i32) -> (i32, i32) {
    %c0_i32 = arith.constant 0 : i32
    %c0_i32_0 = arith.constant 0 : i32
    %c0_i32_1 = arith.constant 0 : i32
    return %c0_i32, %c0_i32_0 : i32, i32
  }
  func.func @transform_2(%arg0: i32) -> (i32, i32) {
    %c0_i32 = arith.constant 0 : i32
    %c0_i32_0 = arith.constant 0 : i32
    %c0_i32_1 = arith.constant 0 : i32
    return %c0_i32, %c0_i32_0 : i32, i32
  }
  func.func @transform_3(%arg0: i32) -> (i32, i32) {
    %c0_i32 = arith.constant 0 : i32
    %c0_i32_0 = arith.constant 0 : i32
    return %arg0, %c0_i32 : i32, i32
  }
}

module attributes {stable_mosaic.version = 11 : i64} {
  func.func @_dw_s1_img_kernel(%arg0: i32, %arg1: memref<1x8x8x96xbf16, #tpu.memory_space<vmem>>, %arg2: memref<9x1x96xf32, #tpu.memory_space<vmem>>, %arg3: memref<1x96xf32, #tpu.memory_space<vmem>>, %arg4: memref<1x4x4x96xbf16, #tpu.memory_space<vmem>>) attributes {dimension_semantics = [#tpu.dimension_semantics<parallel>], iteration_bounds = array<i64: 2>, scalar_prefetch = 0 : i64, scratch_operands = 0 : i64, tpu.core_type = #tpu.core_type<tc>, window_params = [{transform_indices = @transform_0, window_bounds = array<i64: 1, 8, 8, 96>}, {pipeline_mode = #tpu.pipeline_mode<synchronous>, transform_indices = @transform_1, window_bounds = array<i64: 9, 1, 96>}, {pipeline_mode = #tpu.pipeline_mode<synchronous>, transform_indices = @transform_2, window_bounds = array<i64: 1, 96>}, {transform_indices = @transform_3, window_bounds = array<i64: 1, 4, 4, 96>}]} {
    %c0 = arith.constant 0 : index
    %c0_0 = arith.constant 0 : index
    %c0_1 = arith.constant 0 : index
    %c0_2 = arith.constant 0 : index
    %0 = vector.load %arg1[%c0, %c0_0, %c0_1, %c0_2] : memref<1x8x8x96xbf16, #tpu.memory_space<vmem>>, vector<1x8x8x96xbf16>
    %1 = vector.shape_cast %0 : vector<1x8x8x96xbf16> to vector<8x8x96xbf16>
    %cst = arith.constant 0.000000e+00 : f32
    %2 = vector.broadcast %cst : f32 to vector<4x4x96xf32>
    %3 = vector.extract_strided_slice %1 {offsets = [0, 0, 0], sizes = [4, 8, 96], strides = [1, 1, 1]} : vector<8x8x96xbf16> to vector<4x8x96xbf16>
    %4 = vector.extract_strided_slice %3 {offsets = [0, 0, 0], sizes = [4, 4, 96], strides = [1, 1, 1]} : vector<4x8x96xbf16> to vector<4x4x96xbf16>
    %5 = arith.extf %4 : vector<4x4x96xbf16> to vector<4x4x96xf32>
    %c0_3 = arith.constant 0 : index
    %c0_4 = arith.constant 0 : index
    %c0_5 = arith.constant 0 : index
    %6 = vector.load %arg2[%c0_3, %c0_4, %c0_5] : memref<9x1x96xf32, #tpu.memory_space<vmem>>, vector<1x1x96xf32>
    %7 = vector.shape_cast %6 : vector<1x1x96xf32> to vector<1x96xf32>
    %8 = vector.shape_cast %7 : vector<1x96xf32> to vector<1x1x96xf32>
    %9 = vector.broadcast %8 : vector<1x1x96xf32> to vector<4x4x96xf32>
    %10 = arith.mulf %5, %9 : vector<4x4x96xf32>
    %11 = arith.addf %2, %10 : vector<4x4x96xf32>
    %12 = vector.extract_strided_slice %3 {offsets = [0, 2, 0], sizes = [4, 4, 96], strides = [1, 1, 1]} : vector<4x8x96xbf16> to vector<4x4x96xbf16>
    %13 = arith.extf %12 : vector<4x4x96xbf16> to vector<4x4x96xf32>
    %c1 = arith.constant 1 : index
    %c0_6 = arith.constant 0 : index
    %c0_7 = arith.constant 0 : index
    %14 = vector.load %arg2[%c1, %c0_6, %c0_7] : memref<9x1x96xf32, #tpu.memory_space<vmem>>, vector<1x1x96xf32>
    %15 = vector.shape_cast %14 : vector<1x1x96xf32> to vector<1x96xf32>
    %16 = vector.shape_cast %15 : vector<1x96xf32> to vector<1x1x96xf32>
    %17 = vector.broadcast %16 : vector<1x1x96xf32> to vector<4x4x96xf32>
    %18 = arith.mulf %13, %17 : vector<4x4x96xf32>
    %19 = arith.addf %11, %18 : vector<4x4x96xf32>
    %20 = vector.extract_strided_slice %3 {offsets = [0, 4, 0], sizes = [4, 4, 96], strides = [1, 1, 1]} : vector<4x8x96xbf16> to vector<4x4x96xbf16>
    %21 = arith.extf %20 : vector<4x4x96xbf16> to vector<4x4x96xf32>
    %c2 = arith.constant 2 : index
    %c0_8 = arith.constant 0 : index
    %c0_9 = arith.constant 0 : index
    %22 = vector.load %arg2[%c2, %c0_8, %c0_9] : memref<9x1x96xf32, #tpu.memory_space<vmem>>, vector<1x1x96xf32>
    %23 = vector.shape_cast %22 : vector<1x1x96xf32> to vector<1x96xf32>
    %24 = vector.shape_cast %23 : vector<1x96xf32> to vector<1x1x96xf32>
    %25 = vector.broadcast %24 : vector<1x1x96xf32> to vector<4x4x96xf32>
    %26 = arith.mulf %21, %25 : vector<4x4x96xf32>
    %27 = arith.addf %19, %26 : vector<4x4x96xf32>
    %28 = vector.extract_strided_slice %1 {offsets = [2, 0, 0], sizes = [4, 8, 96], strides = [1, 1, 1]} : vector<8x8x96xbf16> to vector<4x8x96xbf16>
    %29 = vector.extract_strided_slice %28 {offsets = [0, 0, 0], sizes = [4, 4, 96], strides = [1, 1, 1]} : vector<4x8x96xbf16> to vector<4x4x96xbf16>
    %30 = arith.extf %29 : vector<4x4x96xbf16> to vector<4x4x96xf32>
    %c3 = arith.constant 3 : index
    %c0_10 = arith.constant 0 : index
    %c0_11 = arith.constant 0 : index
    %31 = vector.load %arg2[%c3, %c0_10, %c0_11] : memref<9x1x96xf32, #tpu.memory_space<vmem>>, vector<1x1x96xf32>
    %32 = vector.shape_cast %31 : vector<1x1x96xf32> to vector<1x96xf32>
    %33 = vector.shape_cast %32 : vector<1x96xf32> to vector<1x1x96xf32>
    %34 = vector.broadcast %33 : vector<1x1x96xf32> to vector<4x4x96xf32>
    %35 = arith.mulf %30, %34 : vector<4x4x96xf32>
    %36 = arith.addf %27, %35 : vector<4x4x96xf32>
    %37 = vector.extract_strided_slice %28 {offsets = [0, 2, 0], sizes = [4, 4, 96], strides = [1, 1, 1]} : vector<4x8x96xbf16> to vector<4x4x96xbf16>
    %38 = arith.extf %37 : vector<4x4x96xbf16> to vector<4x4x96xf32>
    %c4 = arith.constant 4 : index
    %c0_12 = arith.constant 0 : index
    %c0_13 = arith.constant 0 : index
    %39 = vector.load %arg2[%c4, %c0_12, %c0_13] : memref<9x1x96xf32, #tpu.memory_space<vmem>>, vector<1x1x96xf32>
    %40 = vector.shape_cast %39 : vector<1x1x96xf32> to vector<1x96xf32>
    %41 = vector.shape_cast %40 : vector<1x96xf32> to vector<1x1x96xf32>
    %42 = vector.broadcast %41 : vector<1x1x96xf32> to vector<4x4x96xf32>
    %43 = arith.mulf %38, %42 : vector<4x4x96xf32>
    %44 = arith.addf %36, %43 : vector<4x4x96xf32>
    %45 = vector.extract_strided_slice %28 {offsets = [0, 4, 0], sizes = [4, 4, 96], strides = [1, 1, 1]} : vector<4x8x96xbf16> to vector<4x4x96xbf16>
    %46 = arith.extf %45 : vector<4x4x96xbf16> to vector<4x4x96xf32>
    %c5 = arith.constant 5 : index
    %c0_14 = arith.constant 0 : index
    %c0_15 = arith.constant 0 : index
    %47 = vector.load %arg2[%c5, %c0_14, %c0_15] : memref<9x1x96xf32, #tpu.memory_space<vmem>>, vector<1x1x96xf32>
    %48 = vector.shape_cast %47 : vector<1x1x96xf32> to vector<1x96xf32>
    %49 = vector.shape_cast %48 : vector<1x96xf32> to vector<1x1x96xf32>
    %50 = vector.broadcast %49 : vector<1x1x96xf32> to vector<4x4x96xf32>
    %51 = arith.mulf %46, %50 : vector<4x4x96xf32>
    %52 = arith.addf %44, %51 : vector<4x4x96xf32>
    %53 = vector.extract_strided_slice %1 {offsets = [4, 0, 0], sizes = [4, 8, 96], strides = [1, 1, 1]} : vector<8x8x96xbf16> to vector<4x8x96xbf16>
    %54 = vector.extract_strided_slice %53 {offsets = [0, 0, 0], sizes = [4, 4, 96], strides = [1, 1, 1]} : vector<4x8x96xbf16> to vector<4x4x96xbf16>
    %55 = arith.extf %54 : vector<4x4x96xbf16> to vector<4x4x96xf32>
    %c6 = arith.constant 6 : index
    %c0_16 = arith.constant 0 : index
    %c0_17 = arith.constant 0 : index
    %56 = vector.load %arg2[%c6, %c0_16, %c0_17] : memref<9x1x96xf32, #tpu.memory_space<vmem>>, vector<1x1x96xf32>
    %57 = vector.shape_cast %56 : vector<1x1x96xf32> to vector<1x96xf32>
    %58 = vector.shape_cast %57 : vector<1x96xf32> to vector<1x1x96xf32>
    %59 = vector.broadcast %58 : vector<1x1x96xf32> to vector<4x4x96xf32>
    %60 = arith.mulf %55, %59 : vector<4x4x96xf32>
    %61 = arith.addf %52, %60 : vector<4x4x96xf32>
    %62 = vector.extract_strided_slice %53 {offsets = [0, 2, 0], sizes = [4, 4, 96], strides = [1, 1, 1]} : vector<4x8x96xbf16> to vector<4x4x96xbf16>
    %63 = arith.extf %62 : vector<4x4x96xbf16> to vector<4x4x96xf32>
    %c7 = arith.constant 7 : index
    %c0_18 = arith.constant 0 : index
    %c0_19 = arith.constant 0 : index
    %64 = vector.load %arg2[%c7, %c0_18, %c0_19] : memref<9x1x96xf32, #tpu.memory_space<vmem>>, vector<1x1x96xf32>
    %65 = vector.shape_cast %64 : vector<1x1x96xf32> to vector<1x96xf32>
    %66 = vector.shape_cast %65 : vector<1x96xf32> to vector<1x1x96xf32>
    %67 = vector.broadcast %66 : vector<1x1x96xf32> to vector<4x4x96xf32>
    %68 = arith.mulf %63, %67 : vector<4x4x96xf32>
    %69 = arith.addf %61, %68 : vector<4x4x96xf32>
    %70 = vector.extract_strided_slice %53 {offsets = [0, 4, 0], sizes = [4, 4, 96], strides = [1, 1, 1]} : vector<4x8x96xbf16> to vector<4x4x96xbf16>
    %71 = arith.extf %70 : vector<4x4x96xbf16> to vector<4x4x96xf32>
    %c8 = arith.constant 8 : index
    %c0_20 = arith.constant 0 : index
    %c0_21 = arith.constant 0 : index
    %72 = vector.load %arg2[%c8, %c0_20, %c0_21] : memref<9x1x96xf32, #tpu.memory_space<vmem>>, vector<1x1x96xf32>
    %73 = vector.shape_cast %72 : vector<1x1x96xf32> to vector<1x96xf32>
    %74 = vector.shape_cast %73 : vector<1x96xf32> to vector<1x1x96xf32>
    %75 = vector.broadcast %74 : vector<1x1x96xf32> to vector<4x4x96xf32>
    %76 = arith.mulf %71, %75 : vector<4x4x96xf32>
    %77 = arith.addf %69, %76 : vector<4x4x96xf32>
    %c0_22 = arith.constant 0 : index
    %c0_23 = arith.constant 0 : index
    %78 = vector.load %arg3[%c0_22, %c0_23] : memref<1x96xf32, #tpu.memory_space<vmem>>, vector<1x96xf32>
    %79 = vector.shape_cast %78 : vector<1x96xf32> to vector<1x1x96xf32>
    %80 = vector.broadcast %79 : vector<1x1x96xf32> to vector<4x4x96xf32>
    %81 = arith.addf %77, %80 : vector<4x4x96xf32>
    %82 = arith.truncf %81 : vector<4x4x96xf32> to vector<4x4x96xbf16>
    %c0_24 = arith.constant 0 : index
    %c0_25 = arith.constant 0 : index
    %c0_26 = arith.constant 0 : index
    %c0_27 = arith.constant 0 : index
    %83 = vector.load %arg4[%c0_24, %c0_25, %c0_26, %c0_27] : memref<1x4x4x96xbf16, #tpu.memory_space<vmem>>, vector<1x4x4x96xbf16>
    %84 = vector.shape_cast %83 : vector<1x4x4x96xbf16> to vector<4x4x96xbf16>
    %85 = vector.shape_cast %82 : vector<4x4x96xbf16> to vector<1x4x4x96xbf16>
    tpu.vector_store %arg4[%c0_24, %c0_25, %c0_26, %c0_27], %85 {strides = array<i32>} : memref<1x4x4x96xbf16, #tpu.memory_space<vmem>>, vector<1x4x4x96xbf16>,
    return
  }
  func.func @transform_0(%arg0: i32) -> (i32, i32, i32, i32) {
    %c0_i32 = arith.constant 0 : i32
    %c0_i32_0 = arith.constant 0 : i32
    %c0_i32_1 = arith.constant 0 : i32
    %c0_i32_2 = arith.constant 0 : i32
    return %arg0, %c0_i32, %c0_i32_0, %c0_i32_1 : i32, i32, i32, i32
  }
  func.func @transform_1(%arg0: i32) -> (i32, i32, i32) {
    %c0_i32 = arith.constant 0 : i32
    %c0_i32_0 = arith.constant 0 : i32
    %c0_i32_1 = arith.constant 0 : i32
    %c0_i32_2 = arith.constant 0 : i32
    return %c0_i32, %c0_i32_0, %c0_i32_1 : i32, i32, i32
  }
  func.func @transform_2(%arg0: i32) -> (i32, i32) {
    %c0_i32 = arith.constant 0 : i32
    %c0_i32_0 = arith.constant 0 : i32
    %c0_i32_1 = arith.constant 0 : i32
    return %c0_i32, %c0_i32_0 : i32, i32
  }
  func.func @transform_3(%arg0: i32) -> (i32, i32, i32, i32) {
    %c0_i32 = arith.constant 0 : i32
    %c0_i32_0 = arith.constant 0 : i32
    %c0_i32_1 = arith.constant 0 : i32
    %c0_i32_2 = arith.constant 0 : i32
    return %arg0, %c0_i32, %c0_i32_0, %c0_i32_1 : i32, i32, i32, i32
  }
}

module attributes {stable_mosaic.version = 11 : i64} {
  func.func @_gemm_bias_act_kernel(%arg0: i32, %arg1: memref<16x192xbf16, #tpu.memory_space<vmem>>, %arg2: memref<192x1024xbf16, #tpu.memory_space<vmem>>, %arg3: memref<1x1024xf32, #tpu.memory_space<vmem>>, %arg4: memref<16x1024xbf16, #tpu.memory_space<vmem>>) attributes {dimension_semantics = [#tpu.dimension_semantics<parallel>], iteration_bounds = array<i64: 2>, scalar_prefetch = 0 : i64, scratch_operands = 0 : i64, tpu.core_type = #tpu.core_type<tc>, window_params = [{transform_indices = @transform_0, window_bounds = array<i64: 16, 192>}, {pipeline_mode = #tpu.pipeline_mode<synchronous>, transform_indices = @transform_1, window_bounds = array<i64: 192, 1024>}, {pipeline_mode = #tpu.pipeline_mode<synchronous>, transform_indices = @transform_2, window_bounds = array<i64: 1, 1024>}, {transform_indices = @transform_3, window_bounds = array<i64: 16, 1024>}]} {
    %c0 = arith.constant 0 : index
    %c0_0 = arith.constant 0 : index
    %0 = vector.load %arg1[%c0, %c0_0] : memref<16x192xbf16, #tpu.memory_space<vmem>>, vector<16x192xbf16>
    %c0_1 = arith.constant 0 : index
    %c0_2 = arith.constant 0 : index
    %1 = vector.load %arg2[%c0_1, %c0_2] : memref<192x1024xbf16, #tpu.memory_space<vmem>>, vector<192x1024xbf16>
    %cst = arith.constant dense<0.000000e+00> : vector<16x1024xf32>
    %2 = tpu.matmul %0, %1, %cst {dimension_numbers = #tpu.dot_dimension_numbers<[1], [0], [0], [1], [0, 0, 1, 1], [], []>} : vector<16x192xbf16>, vector<192x1024xbf16>, vector<16x1024xf32> -> vector<16x1024xf32>
    %c0_3 = arith.constant 0 : index
    %c0_4 = arith.constant 0 : index
    %3 = vector.load %arg3[%c0_3, %c0_4] : memref<1x1024xf32, #tpu.memory_space<vmem>>, vector<1x1024xf32>
    %4 = vector.broadcast %3 : vector<1x1024xf32> to vector<16x1024xf32>
    %5 = arith.addf %2, %4 : vector<16x1024xf32>
    %cst_5 = arith.constant 0.000000e+00 : f32
    %6 = vector.broadcast %cst_5 : f32 to vector<16x1024xf32>
    %7 = arith.maximumf %5, %6 : vector<16x1024xf32>
    %8 = arith.truncf %7 : vector<16x1024xf32> to vector<16x1024xbf16>
    %c0_6 = arith.constant 0 : index
    %c0_7 = arith.constant 0 : index
    %9 = vector.load %arg4[%c0_6, %c0_7] : memref<16x1024xbf16, #tpu.memory_space<vmem>>, vector<16x1024xbf16>
    tpu.vector_store %arg4[%c0_6, %c0_7], %8 {strides = array<i32>} : memref<16x1024xbf16, #tpu.memory_space<vmem>>, vector<16x1024xbf16>,
    return
  }
  func.func @transform_0(%arg0: i32) -> (i32, i32) {
    %c0_i32 = arith.constant 0 : i32
    %c0_i32_0 = arith.constant 0 : i32
    return %arg0, %c0_i32 : i32, i32
  }
  func.func @transform_1(%arg0: i32) -> (i32, i32) {
    %c0_i32 = arith.constant 0 : i32
    %c0_i32_0 = arith.constant 0 : i32
    %c0_i32_1 = arith.constant 0 : i32
    return %c0_i32, %c0_i32_0 : i32, i32
  }
  func.func @transform_2(%arg0: i32) -> (i32, i32) {
    %c0_i32 = arith.constant 0 : i32
    %c0_i32_0 = arith.constant 0 : i32
    %c0_i32_1 = arith.constant 0 : i32
    return %c0_i32, %c0_i32_0 : i32, i32
  }
  func.func @transform_3(%arg0: i32) -> (i32, i32) {
    %c0_i32 = arith.constant 0 : i32
    %c0_i32_0 = arith.constant 0 : i32
    return %arg0, %c0_i32 : i32, i32
  }
}

</mosaic_0001>

<llo_original>
// kernel: _lambda_.30
$region0: #{_lambda_.30}
  #allocation0 [shape = 'u32[]', space=smem, size = 0x4, offset = 0x4, fixed_abs, tag = 'smem constant byte address 0x4 - core index']
  #allocation1 [shape = 'u32[144,128]{1,0:T(1,128)}', space=vmem, size = 0x12000, scoped, tag = 'internal scratch']
  %s0 = inlined_call_operand.vmem [shape: bf16[2048,27], index: 0, kind: input, shape index: {}]
  %s1 = inlined_call_operand.vmem [shape: bf16[27,24], index: 1, kind: input, shape index: {}]
  %s2 = inlined_call_operand.vmem [shape: f32[1,24], index: 2, kind: input, shape index: {}]
  %s3 = inlined_call_operand.vmem [shape: bf16[2048,24], index: 3, kind: output, shape index: {}]
  %s4 = sld [smem:[#allocation0]]
  $region45: #{_lambda_.30} parent=0
    _
  %s6 = ssub.s32 1, %s4
  %s7 = scalar_select 0, %s6, %s4
  loop: start=0, step=1, limit=6
  $region2: #{_lambda_.30} parent=0 // loop_pre_header
    _
  $region3: #{_lambda_.30} parent=0 // loop_header
    %s9 = sphi 0, %s13
    %p10 = scmp.ge.s32.totalorder %s9, 6
    %s19 = sphi 0, %s21
    %s22 = sphi 0, %s19
    %s23 = sphi 0, %s22
    %s39 = sphi 0, %s23
    %s43 = sphi 0, %s43
    %s45 = sphi 0, %s43
    %s46 = sphi 0, %s45
    %s60 = sphi 0, %s46
    %s64 = sphi 0, %s64
    %s66 = sphi 0, %s64
    %s67 = sphi 0, %s66
    %s81 = sphi 0, %s67
    %s87 = sphi 0, %s89
    %s90 = sphi 0, %s87
    %s91 = sphi 0, %s90
    %s107 = sphi 0, %s91
  $region4: #{_lambda_.30} parent=0 // loop_header_branch
    %12 = sbr.rel (%p10) target = $region8
  $region5: #{_lambda_.30} parent=0 // loop_body
    %s14 = ssub.s32 %s9, 1
    %s15 = ssub.s32 %s9, 2
    %s16 = sadd.s32 %s9, 1
    %s17 = ssub.s32 %s9, %s16
    %p18 = scmp.eq.s32.totalorder %s17, 0
    %s20 = sadd.s32 %s19, 1
    %s21 = scalar_select %p18, %s19, %s20
    %p24 = pneg %p18
    %p25 = scmp.eq.s32.totalorder %s9, 3
    %p26 = por %p24, %p25
    %p27 = scmp.ne.s32.totalorder %s19, %s22
    %p28 = scmp.eq.s32.totalorder %s9, 0
    %p29 = por %p27, %p28
    %p30 = scmp.ne.s32.totalorder %s19, %s22
    %p31 = scmp.eq.s32.totalorder %s14, 3
    %p32 = por %p30, %p31
    %p33 = scmp.ne.s32.totalorder %s22, %s23
    %p34 = scmp.eq.s32.totalorder %s14, 0
    %p35 = por %p33, %p34
    %p36 = scmp.ne.s32.totalorder %s22, %s23
    %p37 = scmp.eq.s32.totalorder %s15, 3
    %p38 = por %p36, %p37
    %p40 = scmp.ne.s32.totalorder %s23, %s39
    %p41 = scmp.eq.s32.totalorder %s15, 0
    %p42 = por %p40, %p41
    %s44 = sadd.s32 %s43, 1
    %p47 = scmp.eq.s32.totalorder %s9, 3
    %p48 = scmp.ne.s32.totalorder %s43, %s45
    %p49 = scmp.eq.s32.totalorder %s9, 0
    %p50 = por %p48, %p49
    %p51 = scmp.ne.s32.totalorder %s43, %s45
    %p52 = scmp.eq.s32.totalorder %s14, 3
    %p53 = por %p51, %p52
    %p54 = scmp.ne.s32.totalorder %s45, %s46
    %p55 = scmp.eq.s32.totalorder %s14, 0
    %p56 = por %p54, %p55
    %p57 = scmp.ne.s32.totalorder %s45, %s46
    %p58 = scmp.eq.s32.totalorder %s15, 3
    %p59 = por %p57, %p58
    %p61 = scmp.ne.s32.totalorder %s46, %s60
    %p62 = scmp.eq.s32.totalorder %s15, 0
    %p63 = por %p61, %p62
    %s65 = sadd.s32 %s64, 1
    %p68 = scmp.eq.s32.totalorder %s9, 3
    %p69 = scmp.ne.s32.totalorder %s64, %s66
    %p70 = scmp.eq.s32.totalorder %s9, 0
    %p71 = por %p69, %p70
    %p72 = scmp.ne.s32.totalorder %s64, %s66
    %p73 = scmp.eq.s32.totalorder %s14, 3
    %p74 = por %p72, %p73
    %p75 = scmp.ne.s32.totalorder %s66, %s67
    %p76 = scmp.eq.s32.totalorder %s14, 0
    %p77 = por %p75, %p76
    %p78 = scmp.ne.s32.totalorder %s66, %s67
    %p79 = scmp.eq.s32.totalorder %s15, 3
    %p80 = por %p78, %p79
    %p82 = scmp.ne.s32.totalorder %s67, %s81
    %p83 = scmp.eq.s32.totalorder %s15, 0
    %p84 = por %p82, %p83
    %s85 = ssub.s32 %s9, %s16
    %p86 = scmp.eq.s32.totalorder %s85, 0
    %s88 = sadd.s32 %s87, 1
    %s89 = scalar_select %p86, %s87, %s88
    %p92 = pneg %p86
    %p93 = scmp.eq.s32.totalorder %s9, 3
    %p94 = por %p92, %p93
    %p95 = scmp.ne.s32.totalorder %s87, %s90
    %p96 = scmp.eq.s32.totalorder %s9, 0
    %p97 = por %p95, %p96
    %p98 = scmp.ne.s32.totalorder %s87, %s90
    %p99 = scmp.eq.s32.totalorder %s14, 3
    %p100 = por %p98, %p99
    %p101 = scmp.ne.s32.totalorder %s90, %s91
    %p102 = scmp.eq.s32.totalorder %s14, 0
    %p103 = por %p101, %p102
    %p104 = scmp.ne.s32.totalorder %s90, %s91
    %p105 = scmp.eq.s32.totalorder %s15, 3
    %p106 = por %p104, %p105
    %p108 = scmp.ne.s32.totalorder %s91, %s107
    %p109 = scmp.eq.s32.totalorder %s15, 0
    %p110 = por %p108, %p109
    %p111 = scmp.le.s32.totalorder 1, %s9
    %p112 = scmp.lt.s32.totalorder %s9, 5
    %p113 = pnand %p111, %p112
    %p114 = pneg %p113
    // Predicated region
    $region9: #{_lambda_.30} parent=5 // pred_check
      _
    $region10: #{_lambda_.30} parent=5 // pred_check_branch
      %116 = sbr.rel (%p113) target = $region12
    $region11: #{_lambda_.30} parent=5 // pred_region
      %s117 = ssub.s32 %s9, 1
      // Predicated region
      $region13: #{_lambda_.30} parent=11 // pred_check
        %p118 = pneg %p56
      $region14: #{_lambda_.30} parent=11 // pred_check_branch
        %120 = sbr.rel (%p118) target = $region16
      $region15: #{_lambda_.30} parent=11 // pred_region
        _
      $region16: #{_lambda_.30} parent=11 // pred_fallthru
        _
      // Predicated region
      $region17: #{_lambda_.30} parent=11 // pred_check
        %p121 = pneg %p77
      $region18: #{_lambda_.30} parent=11 // pred_check_branch
        %123 = sbr.rel (%p121) target = $region20
      $region19: #{_lambda_.30} parent=11 // pred_region
        _
      $region20: #{_lambda_.30} parent=11 // pred_fallthru
        _
    $region12: #{_lambda_.30} parent=5 // pred_fallthru
      _
    %p124 = scmp.lt.s32.totalorder %s9, 4
    // Predicated region
    $region21: #{_lambda_.30} parent=5 // pred_check
      %p125 = pneg %p124
    $region22: #{_lambda_.30} parent=5 // pred_check_branch
      %127 = sbr.rel (%p125) target = $region24
    $region23: #{_lambda_.30} parent=5 // pred_region
      // Predicated region
      $region25: #{_lambda_.30} parent=23 // pred_check
        %p128 = pneg %p29
      $region26: #{_lambda_.30} parent=23 // pred_check_branch
        %130 = sbr.rel (%p128) target = $region28
      $region27: #{_lambda_.30} parent=23 // pred_region
        %s131 = smul.u32 64, %s9
        %p132 = scmp.lt.s32.totalorder %s131, 255
        %s133 = scalar_select %p132, %s131, 255
        %s134 = smul.addr %s133, 4
        %s135 = scalar_lea.vmem %s0, %s134
        %s136 = smul.u32 64, %s9
      $region28: #{_lambda_.30} parent=23 // pred_fallthru
        _
    $region24: #{_lambda_.30} parent=5 // pred_fallthru
      _
    %p137 = scmp.le.s32.totalorder 1, %s9
    %p138 = scmp.lt.s32.totalorder %s9, 5
    %p139 = pnand %p137, %p138
    %p140 = pneg %p139
    // Predicated region
    $region29: #{_lambda_.30} parent=5 // pred_check
      _
    $region30: #{_lambda_.30} parent=5 // pred_check_branch
      %142 = sbr.rel (%p139) target = $region32
    $region31: #{_lambda_.30} parent=5 // pred_region
      %s143 = ssub.s32 %s9, 1
      %s144 = smul.u32 64, %s14
      %p145 = scmp.lt.s32.totalorder %s144, 255
      %s146 = scalar_select %p145, %s144, 255
      %s147 = smul.addr %s146, 4
      %s148 = scalar_lea.vmem %s0, %s147
      %p149 = pneg %p35
      %p150 = pneg %p32
      %p151 = pneg %p56
      %p152 = pneg %p53
      %p153 = pneg %p77
      %p154 = pneg %p74
      %p155 = pneg %p103
      %p156 = pneg %p100
      %s157 = smul.u32 64, %s14
      %p158 = scmp.lt.s32.totalorder %s157, 255
      %s159 = scalar_select %p158, %s157, 255
      %s160 = smul.addr %s159, 4
      %s161 = scalar_lea.vmem %s3, %s160
      %s162 = smul.u32 64, %s14
      %p163 = scmp.lt.s32.totalorder %s162, 255
      %s164 = scalar_select %p163, %s162, 255
      %s165 = smul.addr %s164, 4
      %s166 = scalar_lea.vmem %s0, %s165
      %s167 = smul.u32 64, %s14
      %s168 = smul.u32 64, %s14
      %p169 = scmp.lt.s32.totalorder %s168, 255
      %s170 = scalar_select %p169, %s168, 255
      %s171 = smul.addr %s170, 4
      %s172 = scalar_lea.vmem %s3, %s171
      %s173 = smul.u32 64, %s14
      %v175 = vld [vmem:[%s166] sm:$0xf]
      %v176 = vld [vmem:[%s166 + $0x4] sm:$0xf]
      %v177 = vld [vmem:[%s166 + $0x8] sm:$0xf]
      %v178 = vld [vmem:[%s166 + $0xc] sm:$0xf]
      %v179 = vld [vmem:[%s166 + $0x10] sm:$0xf]
      %v180 = vld [vmem:[%s166 + $0x14] sm:$0xf]
      %v181 = vld [vmem:[%s166 + $0x18] sm:$0xf]
      %v182 = vld [vmem:[%s166 + $0x1c] sm:$0xf]
      %v183 = vld [vmem:[%s166 + $0x20] sm:$0xf]
      %v184 = vld [vmem:[%s166 + $0x24] sm:$0xf]
      %v185 = vld [vmem:[%s166 + $0x28] sm:$0xf]
      %v186 = vld [vmem:[%s166 + $0x2c] sm:$0xf]
      %v187 = vld [vmem:[%s166 + $0x30] sm:$0xf]
      %v188 = vld [vmem:[%s166 + $0x34] sm:$0xf]
      %v189 = vld [vmem:[%s166 + $0x38] sm:$0xf]
      %v190 = vld [vmem:[%s166 + $0x3c] sm:$0xf]
      %v191 = vld [vmem:[%s166 + $0x40] sm:$0xf]
      %v192 = vld [vmem:[%s166 + $0x44] sm:$0xf]
      %v193 = vld [vmem:[%s166 + $0x48] sm:$0xf]
      %v194 = vld [vmem:[%s166 + $0x4c] sm:$0xf]
      %v195 = vld [vmem:[%s166 + $0x50] sm:$0xf]
      %v196 = vld [vmem:[%s166 + $0x54] sm:$0xf]
      %v197 = vld [vmem:[%s166 + $0x58] sm:$0xf]
      %v198 = vld [vmem:[%s166 + $0x5c] sm:$0xf]
      %v199 = vld [vmem:[%s166 + $0x60] sm:$0xf]
      %v200 = vld [vmem:[%s166 + $0x64] sm:$0xf]
      %v201 = vld [vmem:[%s166 + $0x68] sm:$0xf]
      %v202 = vld [vmem:[%s166 + $0x6c] sm:$0xf]
      %v203 = vld [vmem:[%s166 + $0x70] sm:$0xf]
      %v204 = vld [vmem:[%s166 + $0x74] sm:$0xf]
      %v205 = vld [vmem:[%s166 + $0x78] sm:$0xf]
      %v206 = vld [vmem:[%s166 + $0x7c] sm:$0xf]
      %v207 = vld [vmem:[%s166 + $0x80] sm:$0xf]
      %v208 = vld [vmem:[%s166 + $0x84] sm:$0xf]
      %v209 = vld [vmem:[%s166 + $0x88] sm:$0xf]
      %v210 = vld [vmem:[%s166 + $0x8c] sm:$0xf]
      %v211 = vld [vmem:[%s166 + $0x90] sm:$0xf]
      %v212 = vld [vmem:[%s166 + $0x94] sm:$0xf]
      %v213 = vld [vmem:[%s166 + $0x98] sm:$0xf]
      %v214 = vld [vmem:[%s166 + $0x9c] sm:$0xf]
      %v215 = vld [vmem:[%s166 + $0xa0] sm:$0xf]
      %v216 = vld [vmem:[%s166 + $0xa4] sm:$0xf]
      %v217 = vld [vmem:[%s166 + $0xa8] sm:$0xf]
      %v218 = vld [vmem:[%s166 + $0xac] sm:$0xf]
      %v219 = vld [vmem:[%s166 + $0xb0] sm:$0xf]
      %v220 = vld [vmem:[%s166 + $0xb4] sm:$0xf]
      %v221 = vld [vmem:[%s166 + $0xb8] sm:$0xf]
      %v222 = vld [vmem:[%s166 + $0xbc] sm:$0xf]
      %v223 = vld [vmem:[%s166 + $0xc0] sm:$0xf]
      %v224 = vld [vmem:[%s166 + $0xc4] sm:$0xf]
      %v225 = vld [vmem:[%s166 + $0xc8] sm:$0xf]
      %v226 = vld [vmem:[%s166 + $0xcc] sm:$0xf]
      %v227 = vld [vmem:[%s166 + $0xd0] sm:$0xf]
      %v228 = vld [vmem:[%s166 + $0xd4] sm:$0xf]
      %v229 = vld [vmem:[%s166 + $0xd8] sm:$0xf]
      %v230 = vld [vmem:[%s166 + $0xdc] sm:$0xf]
      %v231 = vld [vmem:[%s166 + $0xe0] sm:$0xf]
      %v232 = vld [vmem:[%s166 + $0xe4] sm:$0xf]
      %v233 = vld [vmem:[%s166 + $0xe8] sm:$0xf]
      %v234 = vld [vmem:[%s166 + $0xec] sm:$0xf]
      %v235 = vld [vmem:[%s166 + $0xf0] sm:$0xf]
      %v236 = vld [vmem:[%s166 + $0xf4] sm:$0xf]
      %v237 = vld [vmem:[%s166 + $0xf8] sm:$0xf]
      %v238 = vld [vmem:[%s166 + $0xfc] sm:$0xf]
      %v239 = vld [vmem:[%s1] sm:$0xf]
      %v240 = vld [vmem:[%s1 + $0x4] sm:$0xf]
      %v241 = vld [vmem:[%s1 + $0x8] sm:$0xf]
      %v242 = vld [vmem:[%s1 + $0xc] sm:$0x3]
      %v243 = vld [vmem:[%s2] sm:$0x1]
      %v245 = vlaneseq
      %v246 = vshrl.u32 %v245, 7
      %v247 = vsub.s32 0, %v246
      %v248 = vrot.slane %v243, %v247
      %v314 = vunpack.c.l.b16 %v175
      %v315 = vunpack.c.l.b16 %v176
      %v316 = vunpack.c.l.b16 %v177
      %v317 = vunpack.c.l.b16 %v178
      %v318 = vunpack.c.l.b16 %v179
      %v319 = vunpack.c.l.b16 %v180
      %v320 = vunpack.c.l.b16 %v181
      %v321 = vunpack.c.l.b16 %v182
      %v322 = vunpack.c.l.b16 %v183
      %v323 = vunpack.c.l.b16 %v184
      %v324 = vunpack.c.l.b16 %v185
      %v325 = vunpack.c.l.b16 %v186
      %v326 = vunpack.c.l.b16 %v187
      %v327 = vunpack.c.l.b16 %v188
      %v328 = vunpack.c.l.b16 %v189
      %v329 = vunpack.c.l.b16 %v190
      %v330 = vunpack.c.l.b16 %v191
      %v331 = vunpack.c.l.b16 %v192
      %v332 = vunpack.c.l.b16 %v193
      %v333 = vunpack.c.l.b16 %v194
      %v334 = vunpack.c.l.b16 %v195
      %v335 = vunpack.c.l.b16 %v196
      %v336 = vunpack.c.l.b16 %v197
      %v337 = vunpack.c.l.b16 %v198
      %v338 = vunpack.c.l.b16 %v199
      %v339 = vunpack.c.l.b16 %v200
      %v340 = vunpack.c.l.b16 %v201
      %v341 = vunpack.c.l.b16 %v202
      %v342 = vunpack.c.l.b16 %v203
      %v343 = vunpack.c.l.b16 %v204
      %v344 = vunpack.c.l.b16 %v205
      %v345 = vunpack.c.l.b16 %v206
      %v346 = vunpack.c.l.b16 %v207
      %v347 = vunpack.c.l.b16 %v208
      %v348 = vunpack.c.l.b16 %v209
      %v349 = vunpack.c.l.b16 %v210
      %v350 = vunpack.c.l.b16 %v211
      %v351 = vunpack.c.l.b16 %v212
      %v352 = vunpack.c.l.b16 %v213
      %v353 = vunpack.c.l.b16 %v214
      %v354 = vunpack.c.l.b16 %v215
      %v355 = vunpack.c.l.b16 %v216
      %v356 = vunpack.c.l.b16 %v217
      %v357 = vunpack.c.l.b16 %v218
      %v358 = vunpack.c.l.b16 %v219
      %v359 = vunpack.c.l.b16 %v220
      %v360 = vunpack.c.l.b16 %v221
      %v361 = vunpack.c.l.b16 %v222
      %v362 = vunpack.c.l.b16 %v223
      %v363 = vunpack.c.l.b16 %v224
      %v364 = vunpack.c.l.b16 %v225
      %v365 = vunpack.c.l.b16 %v226
      %v366 = vunpack.c.l.b16 %v227
      %v367 = vunpack.c.l.b16 %v228
      %v368 = vunpack.c.l.b16 %v229
      %v369 = vunpack.c.l.b16 %v230
      %v370 = vunpack.c.l.b16 %v231
      %v371 = vunpack.c.l.b16 %v232
      %v372 = vunpack.c.l.b16 %v233
      %v373 = vunpack.c.l.b16 %v234
      %v374 = vunpack.c.l.b16 %v235
      %v375 = vunpack.c.l.b16 %v236
      %v376 = vunpack.c.l.b16 %v237
      %v377 = vunpack.c.l.b16 %v238
      %v378 = vpack.c.b16 %v315, %v314
      %v379 = vpack.c.b16 %v317, %v316
      %v380 = vpack.c.b16 %v319, %v318
      %v381 = vpack.c.b16 %v321, %v320
      %v382 = vpack.c.b16 %v323, %v322
      %v383 = vpack.c.b16 %v325, %v324
      %v384 = vpack.c.b16 %v327, %v326
      %v385 = vpack.c.b16 %v329, %v328
      %v386 = vpack.c.b16 %v331, %v330
      %v387 = vpack.c.b16 %v333, %v332
      %v388 = vpack.c.b16 %v335, %v334
      %v389 = vpack.c.b16 %v337, %v336
      %v390 = vpack.c.b16 %v339, %v338
      %v391 = vpack.c.b16 %v341, %v340
      %v392 = vpack.c.b16 %v343, %v342
      %v393 = vpack.c.b16 %v345, %v344
      %v394 = vpack.c.b16 %v347, %v346
      %v395 = vpack.c.b16 %v349, %v348
      %v396 = vpack.c.b16 %v351, %v350
      %v397 = vpack.c.b16 %v353, %v352
      %v398 = vpack.c.b16 %v355, %v354
      %v399 = vpack.c.b16 %v357, %v356
      %v400 = vpack.c.b16 %v359, %v358
      %v401 = vpack.c.b16 %v361, %v360
      %v402 = vpack.c.b16 %v363, %v362
      %v403 = vpack.c.b16 %v365, %v364
      %v404 = vpack.c.b16 %v367, %v366
      %v405 = vpack.c.b16 %v369, %v368
      %v406 = vpack.c.b16 %v371, %v370
      %v407 = vpack.c.b16 %v373, %v372
      %v408 = vpack.c.b16 %v375, %v374
      %v409 = vpack.c.b16 %v377, %v376
      %v414 = vunpack.c.l.b16 %v239
      %v415 = vunpack.c.l.b16 %v240
      %v416 = vunpack.c.l.b16 %v241
      %v417 = vunpack.c.l.b16 %v242
      %v418 = vpack.c.b16 %v415, %v414
      %v419 = vpack.c.b16 %v417, %v416
      %vm421 = vcmask 220160
      %v423 = vsel %vm421, %v378, 0
      %v426 = vsel %vm421, %v379, 0
      %v429 = vsel %vm421, %v380, 0
      %v432 = vsel %vm421, %v381, 0
      %v435 = vsel %vm421, %v382, 0
      %v438 = vsel %vm421, %v383, 0
      %v441 = vsel %vm421, %v384, 0
      %v444 = vsel %vm421, %v385, 0
      %v447 = vsel %vm421, %v386, 0
      %v450 = vsel %vm421, %v387, 0
      %v453 = vsel %vm421, %v388, 0
      %v456 = vsel %vm421, %v389, 0
      %v459 = vsel %vm421, %v390, 0
      %v462 = vsel %vm421, %v391, 0
      %v465 = vsel %vm421, %v392, 0
      %v468 = vsel %vm421, %v393, 0
      %v471 = vsel %vm421, %v394, 0
      %v474 = vsel %vm421, %v395, 0
      %v477 = vsel %vm421, %v396, 0
      %v480 = vsel %vm421, %v397, 0
      %v483 = vsel %vm421, %v398, 0
      %v486 = vsel %vm421, %v399, 0
      %v489 = vsel %vm421, %v400, 0
      %v492 = vsel %vm421, %v401, 0
      %v495 = vsel %vm421, %v402, 0
      %v498 = vsel %vm421, %v403, 0
      %v501 = vsel %vm421, %v404, 0
      %v504 = vsel %vm421, %v405, 0
      %v507 = vsel %vm421, %v406, 0
      %v510 = vsel %vm421, %v407, 0
      %v513 = vsel %vm421, %v408, 0
      %v516 = vsel %vm421, %v409, 0
      %vm518 = vcmask 1044480
      %vm519 = vcmask 1045504
      %v520 = vsel %vm518, 4294967295, 65535
      %v521 = vsel %vm519, %v520, 0
      %v523 = vand.u32 %v419, %v521
      %525 = vmatprep.subr.bf16.mxu0 0
      %526 = vmatpush1.bf16.msra.mxu0 0
      %527 = vmatprep.subr.bf16.mxu0 0
      %528 = vmatpush1.bf16.msra.mxu0 0
      %529 = vmatprep.subr.bf16.mxu0 0
      %530 = vmatpush1.bf16.msra.mxu0 0
      %531 = vmatprep.subr.bf16.mxu0 0
      %532 = vmatpush1.bf16.msra.mxu0 0
      %533 = vmatprep.subr.bf16.mxu0 0
      %534 = vmatpush1.bf16.msra.mxu0 0
      %535 = vmatprep.subr.bf16.mxu0 0
      %536 = vmatpush1.bf16.msra.mxu0 0
      %537 = vmatprep.subr.bf16.mxu0 0
      %538 = vmatpush1.bf16.msra.mxu0 %v523
      %539 = vmatprep.subr.bf16.mxu0 0
      %540 = vmatpush1.bf16.msra.mxu0 %v418
      %541 = vmatprep.subr.bf16.mxu0 0
      %542 = vmatpush2.bf16.msra.mxu0 0
      %543 = vmatprep.subr.bf16.mxu0 0
      %544 = vmatpush2.bf16.msra.mxu0 0
      %545 = vmatprep.subr.bf16.mxu0 0
      %546 = vmatpush2.bf16.msra.mxu0 0
      %547 = vmatprep.subr.bf16.mxu0 0
      %548 = vmatpush2.bf16.msra.mxu0 0
      %549 = vmatprep.subr.bf16.mxu0 0
      %550 = vmatpush2.bf16.msra.mxu0 0
      %551 = vmatprep.subr.bf16.mxu0 0
      %552 = vmatpush2.bf16.msra.mxu0 0
      %553 = vmatprep.subr.bf16.mxu0 0
      %554 = vmatpush2.bf16.msra.mxu0 0
      %555 = vmatprep.subr.bf16.mxu0 0
      %556 = vmatpush2.bf16.msra.mxu0 0
      %557 = vmatprep.mubr.bf16.mxu0 0
      %558 = vmatmul.mubr.bf16.gmra.mxu0 %v423
      %v559 = vpop.f32.mrf.mxu0
      %v560 = vadd.f32 %v248, %v559
      %v561 = vpop.f32.mrf.mxu0
      %v562 = vpop.f32.mrf.mxu0
      %v563 = vadd.f32 %v248, %v562
      %v564 = vpop.f32.mrf.mxu0
      %565 = vmatprep.mubr.bf16.mxu0 0
      %566 = vmatmul.mubr.bf16.gmra.mxu0 %v426
      %v567 = vpop.f32.mrf.mxu0
      %v568 = vadd.f32 %v248, %v567
      %v569 = vpop.f32.mrf.mxu0
      %v570 = vpop.f32.mrf.mxu0
      %v571 = vadd.f32 %v248, %v570
      %v572 = vpop.f32.mrf.mxu0
      %573 = vmatprep.mubr.bf16.mxu0 0
      %574 = vmatmul.mubr.bf16.gmra.mxu0 %v429
      %v575 = vpop.f32.mrf.mxu0
      %v576 = vadd.f32 %v248, %v575
      %v577 = vpop.f32.mrf.mxu0
      %v578 = vpop.f32.mrf.mxu0
      %v579 = vadd.f32 %v248, %v578
      %v580 = vpop.f32.mrf.mxu0
      %581 = vmatprep.mubr.bf16.mxu0 0
      %582 = vmatmul.mubr.bf16.gmra.mxu0 %v432
      %v583 = vpop.f32.mrf.mxu0
      %v584 = vadd.f32 %v248, %v583
      %v585 = vpop.f32.mrf.mxu0
      %v586 = vpop.f32.mrf.mxu0
      %v587 = vadd.f32 %v248, %v586
      %v588 = vpop.f32.mrf.mxu0
      %589 = vmatprep.mubr.bf16.mxu0 0
      %590 = vmatmul.mubr.bf16.gmra.mxu0 %v435
      %v591 = vpop.f32.mrf.mxu0
      %v592 = vadd.f32 %v248, %v591
      %v593 = vpop.f32.mrf.mxu0
      %v594 = vpop.f32.mrf.mxu0
      %v595 = vadd.f32 %v248, %v594
      %v596 = vpop.f32.mrf.mxu0
      %597 = vmatprep.mubr.bf16.mxu0 0
      %598 = vmatmul.mubr.bf16.gmra.mxu0 %v438
      %v599 = vpop.f32.mrf.mxu0
      %v600 = vadd.f32 %v248, %v599
      %v601 = vpop.f32.mrf.mxu0
      %v602 = vpop.f32.mrf.mxu0
      %v603 = vadd.f32 %v248, %v602
      %v604 = vpop.f32.mrf.mxu0
      %605 = vmatprep.mubr.bf16.mxu0 0
      %606 = vmatmul.mubr.bf16.gmra.mxu0 %v441
      %v607 = vpop.f32.mrf.mxu0
      %v608 = vadd.f32 %v248, %v607
      %v609 = vpop.f32.mrf.mxu0
      %v610 = vpop.f32.mrf.mxu0
      %v611 = vadd.f32 %v248, %v610
      %v612 = vpop.f32.mrf.mxu0
      %613 = vmatprep.mubr.bf16.mxu0 0
      %614 = vmatmul.mubr.bf16.gmra.mxu0 %v444
      %v615 = vpop.f32.mrf.mxu0
      %v616 = vadd.f32 %v248, %v615
      %v617 = vpop.f32.mrf.mxu0
      %v618 = vpop.f32.mrf.mxu0
      %v619 = vadd.f32 %v248, %v618
      %v620 = vpop.f32.mrf.mxu0
      %621 = vmatprep.mubr.bf16.mxu0 0
      %622 = vmatmul.mubr.bf16.gmra.mxu0 %v447
      %v623 = vpop.f32.mrf.mxu0
      %v624 = vadd.f32 %v248, %v623
      %v625 = vpop.f32.mrf.mxu0
      %v626 = vpop.f32.mrf.mxu0
      %v627 = vadd.f32 %v248, %v626
      %v628 = vpop.f32.mrf.mxu0
      %629 = vmatprep.mubr.bf16.mxu0 0
      %630 = vmatmul.mubr.bf16.gmra.mxu0 %v450
      %v631 = vpop.f32.mrf.mxu0
      %v632 = vadd.f32 %v248, %v631
      %v633 = vpop.f32.mrf.mxu0
      %v634 = vpop.f32.mrf.mxu0
      %v635 = vadd.f32 %v248, %v634
      %v636 = vpop.f32.mrf.mxu0
      %637 = vmatprep.mubr.bf16.mxu0 0
      %638 = vmatmul.mubr.bf16.gmra.mxu0 %v453
      %v639 = vpop.f32.mrf.mxu0
      %v640 = vadd.f32 %v248, %v639
      %v641 = vpop.f32.mrf.mxu0
      %v642 = vpop.f32.mrf.mxu0
      %v643 = vadd.f32 %v248, %v642
      %v644 = vpop.f32.mrf.mxu0
      %645 = vmatprep.mubr.bf16.mxu0 0
      %646 = vmatmul.mubr.bf16.gmra.mxu0 %v456
      %v647 = vpop.f32.mrf.mxu0
      %v648 = vadd.f32 %v248, %v647
      %v649 = vpop.f32.mrf.mxu0
      %v650 = vpop.f32.mrf.mxu0
      %v651 = vadd.f32 %v248, %v650
      %v652 = vpop.f32.mrf.mxu0
      %653 = vmatprep.mubr.bf16.mxu0 0
      %654 = vmatmul.mubr.bf16.gmra.mxu0 %v459
      %v655 = vpop.f32.mrf.mxu0
      %v656 = vadd.f32 %v248, %v655
      %v657 = vpop.f32.mrf.mxu0
      %v658 = vpop.f32.mrf.mxu0
      %v659 = vadd.f32 %v248, %v658
      %v660 = vpop.f32.mrf.mxu0
      %661 = vmatprep.mubr.bf16.mxu0 0
      %662 = vmatmul.mubr.bf16.gmra.mxu0 %v462
      %v663 = vpop.f32.mrf.mxu0
      %v664 = vadd.f32 %v248, %v663
      %v665 = vpop.f32.mrf.mxu0
      %v666 = vpop.f32.mrf.mxu0
      %v667 = vadd.f32 %v248, %v666
      %v668 = vpop.f32.mrf.mxu0
      %669 = vmatprep.mubr.bf16.mxu0 0
      %670 = vmatmul.mubr.bf16.gmra.mxu0 %v465
      %v671 = vpop.f32.mrf.mxu0
      %v672 = vadd.f32 %v248, %v671
      %v673 = vpop.f32.mrf.mxu0
      %v674 = vpop.f32.mrf.mxu0
      %v675 = vadd.f32 %v248, %v674
      %v676 = vpop.f32.mrf.mxu0
      %677 = vmatprep.mubr.bf16.mxu0 0
      %678 = vmatmul.mubr.bf16.gmra.mxu0 %v468
      %v679 = vpop.f32.mrf.mxu0
      %v680 = vadd.f32 %v248, %v679
      %v681 = vpop.f32.mrf.mxu0
      %v682 = vpop.f32.mrf.mxu0
      %v683 = vadd.f32 %v248, %v682
      %v684 = vpop.f32.mrf.mxu0
      %685 = vmatprep.mubr.bf16.mxu0 0
      %686 = vmatmul.mubr.bf16.gmra.mxu0 %v471
      %v687 = vpop.f32.mrf.mxu0
      %v688 = vadd.f32 %v248, %v687
      %v689 = vpop.f32.mrf.mxu0
      %v690 = vpop.f32.mrf.mxu0
      %v691 = vadd.f32 %v248, %v690
      %v692 = vpop.f32.mrf.mxu0
      %693 = vmatprep.mubr.bf16.mxu0 0
      %694 = vmatmul.mubr.bf16.gmra.mxu0 %v474
      %v695 = vpop.f32.mrf.mxu0
      %v696 = vadd.f32 %v248, %v695
      %v697 = vpop.f32.mrf.mxu0
      %v698 = vpop.f32.mrf.mxu0
      %v699 = vadd.f32 %v248, %v698
      %v700 = vpop.f32.mrf.mxu0
      %701 = vmatprep.mubr.bf16.mxu0 0
      %702 = vmatmul.mubr.bf16.gmra.mxu0 %v477
      %v703 = vpop.f32.mrf.mxu0
      %v704 = vadd.f32 %v248, %v703
      %v705 = vpop.f32.mrf.mxu0
      %v706 = vpop.f32.mrf.mxu0
      %v707 = vadd.f32 %v248, %v706
      %v708 = vpop.f32.mrf.mxu0
      %709 = vmatprep.mubr.bf16.mxu0 0
      %710 = vmatmul.mubr.bf16.gmra.mxu0 %v480
      %v711 = vpop.f32.mrf.mxu0
      %v712 = vadd.f32 %v248, %v711
      %v713 = vpop.f32.mrf.mxu0
      %v714 = vpop.f32.mrf.mxu0
      %v715 = vadd.f32 %v248, %v714
      %v716 = vpop.f32.mrf.mxu0
      %717 = vmatprep.mubr.bf16.mxu0 0
      %718 = vmatmul.mubr.bf16.gmra.mxu0 %v483
      %v719 = vpop.f32.mrf.mxu0
      %v720 = vadd.f32 %v248, %v719
      %v721 = vpop.f32.mrf.mxu0
      %v722 = vpop.f32.mrf.mxu0
      %v723 = vadd.f32 %v248, %v722
      %v724 = vpop.f32.mrf.mxu0
      %725 = vmatprep.mubr.bf16.mxu0 0
      %726 = vmatmul.mubr.bf16.gmra.mxu0 %v486
      %v727 = vpop.f32.mrf.mxu0
      %v728 = vadd.f32 %v248, %v727
      %v729 = vpop.f32.mrf.mxu0
      %v730 = vpop.f32.mrf.mxu0
      %v731 = vadd.f32 %v248, %v730
      %v732 = vpop.f32.mrf.mxu0
      %733 = vmatprep.mubr.bf16.mxu0 0
      %734 = vmatmul.mubr.bf16.gmra.mxu0 %v489
      %v735 = vpop.f32.mrf.mxu0
      %v736 = vadd.f32 %v248, %v735
      %v737 = vpop.f32.mrf.mxu0
      %v738 = vpop.f32.mrf.mxu0
      %v739 = vadd.f32 %v248, %v738
      %v740 = vpop.f32.mrf.mxu0
      %741 = vmatprep.mubr.bf16.mxu0 0
      %742 = vmatmul.mubr.bf16.gmra.mxu0 %v492
      %v743 = vpop.f32.mrf.mxu0
      %v744 = vadd.f32 %v248, %v743
      %v745 = vpop.f32.mrf.mxu0
      %v746 = vpop.f32.mrf.mxu0
      %v747 = vadd.f32 %v248, %v746
      %v748 = vpop.f32.mrf.mxu0
      %749 = vmatprep.mubr.bf16.mxu0 0
      %750 = vmatmul.mubr.bf16.gmra.mxu0 %v495
      %v751 = vpop.f32.mrf.mxu0
      %v752 = vadd.f32 %v248, %v751
      %v753 = vpop.f32.mrf.mxu0
      %v754 = vpop.f32.mrf.mxu0
      %v755 = vadd.f32 %v248, %v754
      %v756 = vpop.f32.mrf.mxu0
      %757 = vmatprep.mubr.bf16.mxu0 0
      %758 = vmatmul.mubr.bf16.gmra.mxu0 %v498
      %v759 = vpop.f32.mrf.mxu0
      %v760 = vadd.f32 %v248, %v759
      %v761 = vpop.f32.mrf.mxu0
      %v762 = vpop.f32.mrf.mxu0
      %v763 = vadd.f32 %v248, %v762
      %v764 = vpop.f32.mrf.mxu0
      %765 = vmatprep.mubr.bf16.mxu0 0
      %766 = vmatmul.mubr.bf16.gmra.mxu0 %v501
      %v767 = vpop.f32.mrf.mxu0
      %v768 = vadd.f32 %v248, %v767
      %v769 = vpop.f32.mrf.mxu0
      %v770 = vpop.f32.mrf.mxu0
      %v771 = vadd.f32 %v248, %v770
      %v772 = vpop.f32.mrf.mxu0
      %773 = vmatprep.mubr.bf16.mxu0 0
      %774 = vmatmul.mubr.bf16.gmra.mxu0 %v504
      %v775 = vpop.f32.mrf.mxu0
      %v776 = vadd.f32 %v248, %v775
      %v777 = vpop.f32.mrf.mxu0
      %v778 = vpop.f32.mrf.mxu0
      %v779 = vadd.f32 %v248, %v778
      %v780 = vpop.f32.mrf.mxu0
      %781 = vmatprep.mubr.bf16.mxu0 0
      %782 = vmatmul.mubr.bf16.gmra.mxu0 %v507
      %v783 = vpop.f32.mrf.mxu0
      %v784 = vadd.f32 %v248, %v783
      %v785 = vpop.f32.mrf.mxu0
      %v786 = vpop.f32.mrf.mxu0
      %v787 = vadd.f32 %v248, %v786
      %v788 = vpop.f32.mrf.mxu0
      %789 = vmatprep.mubr.bf16.mxu0 0
      %790 = vmatmul.mubr.bf16.gmra.mxu0 %v510
      %v791 = vpop.f32.mrf.mxu0
      %v792 = vadd.f32 %v248, %v791
      %v793 = vpop.f32.mrf.mxu0
      %v794 = vpop.f32.mrf.mxu0
      %v795 = vadd.f32 %v248, %v794
      %v796 = vpop.f32.mrf.mxu0
      %797 = vmatprep.mubr.bf16.mxu0 0
      %798 = vmatmul.mubr.bf16.gmra.mxu0 %v513
      %v799 = vpop.f32.mrf.mxu0
      %v800 = vadd.f32 %v248, %v799
      %v801 = vpop.f32.mrf.mxu0
      %v802 = vpop.f32.mrf.mxu0
      %v803 = vadd.f32 %v248, %v802
      %v804 = vpop.f32.mrf.mxu0
      %805 = vmatprep.mubr.bf16.mxu0 0
      %806 = vmatmul.mubr.bf16.gmra.mxu0 %v516
      %v807 = vpop.f32.mrf.mxu0
      %v808 = vadd.f32 %v248, %v807
      %v809 = vpop.f32.mrf.mxu0
      %v810 = vpop.f32.mrf.mxu0
      %v811 = vadd.f32 %v248, %v810
      %v812 = vpop.f32.mrf.mxu0
      %813 = vdwg.mxu0
      %v814 = vmax.f32 %v560, 0.0
      %v815 = vmax.f32 %v563, 0.0
      %v816 = vmax.f32 %v568, 0.0
      %v817 = vmax.f32 %v571, 0.0
      %v818 = vmax.f32 %v576, 0.0
      %v819 = vmax.f32 %v579, 0.0
      %v820 = vmax.f32 %v584, 0.0
      %v821 = vmax.f32 %v587, 0.0
      %v822 = vmax.f32 %v592, 0.0
      %v823 = vmax.f32 %v595, 0.0
      %v824 = vmax.f32 %v600, 0.0
      %v825 = vmax.f32 %v603, 0.0
      %v826 = vmax.f32 %v608, 0.0
      %v827 = vmax.f32 %v611, 0.0
      %v828 = vmax.f32 %v616, 0.0
      %v829 = vmax.f32 %v619, 0.0
      %v830 = vmax.f32 %v624, 0.0
      %v831 = vmax.f32 %v627, 0.0
      %v832 = vmax.f32 %v632, 0.0
      %v833 = vmax.f32 %v635, 0.0
      %v834 = vmax.f32 %v640, 0.0
      %v835 = vmax.f32 %v643, 0.0
      %v836 = vmax.f32 %v648, 0.0
      %v837 = vmax.f32 %v651, 0.0
      %v838 = vmax.f32 %v656, 0.0
      %v839 = vmax.f32 %v659, 0.0
      %v840 = vmax.f32 %v664, 0.0
      %v841 = vmax.f32 %v667, 0.0
      %v842 = vmax.f32 %v672, 0.0
      %v843 = vmax.f32 %v675, 0.0
      %v844 = vmax.f32 %v680, 0.0
      %v845 = vmax.f32 %v683, 0.0
      %v846 = vmax.f32 %v688, 0.0
      %v847 = vmax.f32 %v691, 0.0
      %v848 = vmax.f32 %v696, 0.0
      %v849 = vmax.f32 %v699, 0.0
      %v850 = vmax.f32 %v704, 0.0
      %v851 = vmax.f32 %v707, 0.0
      %v852 = vmax.f32 %v712, 0.0
      %v853 = vmax.f32 %v715, 0.0
      %v854 = vmax.f32 %v720, 0.0
      %v855 = vmax.f32 %v723, 0.0
      %v856 = vmax.f32 %v728, 0.0
      %v857 = vmax.f32 %v731, 0.0
      %v858 = vmax.f32 %v736, 0.0
      %v859 = vmax.f32 %v739, 0.0
      %v860 = vmax.f32 %v744, 0.0
      %v861 = vmax.f32 %v747, 0.0
      %v862 = vmax.f32 %v752, 0.0
      %v863 = vmax.f32 %v755, 0.0
      %v864 = vmax.f32 %v760, 0.0
      %v865 = vmax.f32 %v763, 0.0
      %v866 = vmax.f32 %v768, 0.0
      %v867 = vmax.f32 %v771, 0.0
      %v868 = vmax.f32 %v776, 0.0
      %v869 = vmax.f32 %v779, 0.0
      %v870 = vmax.f32 %v784, 0.0
      %v871 = vmax.f32 %v787, 0.0
      %v872 = vmax.f32 %v792, 0.0
      %v873 = vmax.f32 %v795, 0.0
      %v874 = vmax.f32 %v800, 0.0
      %v875 = vmax.f32 %v803, 0.0
      %v876 = vmax.f32 %v808, 0.0
      %v877 = vmax.f32 %v811, 0.0
      %v878 = vpack.c.bf16 %v815, %v814
      %v879 = vpack.c.bf16 %v817, %v816
      %v880 = vpack.c.bf16 %v819, %v818
      %v881 = vpack.c.bf16 %v821, %v820
      %v882 = vpack.c.bf16 %v823, %v822
      %v883 = vpack.c.bf16 %v825, %v824
      %v884 = vpack.c.bf16 %v827, %v826
      %v885 = vpack.c.bf16 %v829, %v828
      %v886 = vpack.c.bf16 %v831, %v830
      %v887 = vpack.c.bf16 %v833, %v832
      %v888 = vpack.c.bf16 %v835, %v834
      %v889 = vpack.c.bf16 %v837, %v836
      %v890 = vpack.c.bf16 %v839, %v838
      %v891 = vpack.c.bf16 %v841, %v840
      %v892 = vpack.c.bf16 %v843, %v842
      %v893 = vpack.c.bf16 %v845, %v844
      %v894 = vpack.c.bf16 %v847, %v846
      %v895 = vpack.c.bf16 %v849, %v848
      %v896 = vpack.c.bf16 %v851, %v850
      %v897 = vpack.c.bf16 %v853, %v852
      %v898 = vpack.c.bf16 %v855, %v854
      %v899 = vpack.c.bf16 %v857, %v856
      %v900 = vpack.c.bf16 %v859, %v858
      %v901 = vpack.c.bf16 %v861, %v860
      %v902 = vpack.c.bf16 %v863, %v862
      %v903 = vpack.c.bf16 %v865, %v864
      %v904 = vpack.c.bf16 %v867, %v866
      %v905 = vpack.c.bf16 %v869, %v868
      %v906 = vpack.c.bf16 %v871, %v870
      %v907 = vpack.c.bf16 %v873, %v872
      %v908 = vpack.c.bf16 %v875, %v874
      %v909 = vpack.c.bf16 %v877, %v876
      %v942 = vunpack.c.l.b16 %v878
      %v943 = vunpack.c.h.b16 %v878
      %v944 = vunpack.c.l.b16 %v879
      %v945 = vunpack.c.h.b16 %v879
      %v946 = vunpack.c.l.b16 %v880
      %v947 = vunpack.c.h.b16 %v880
      %v948 = vunpack.c.l.b16 %v881
      %v949 = vunpack.c.h.b16 %v881
      %v950 = vunpack.c.l.b16 %v882
      %v951 = vunpack.c.h.b16 %v882
      %v952 = vunpack.c.l.b16 %v883
      %v953 = vunpack.c.h.b16 %v883
      %v954 = vunpack.c.l.b16 %v884
      %v955 = vunpack.c.h.b16 %v884
      %v956 = vunpack.c.l.b16 %v885
      %v957 = vunpack.c.h.b16 %v885
      %v958 = vunpack.c.l.b16 %v886
      %v959 = vunpack.c.h.b16 %v886
      %v960 = vunpack.c.l.b16 %v887
      %v961 = vunpack.c.h.b16 %v887
      %v962 = vunpack.c.l.b16 %v888
      %v963 = vunpack.c.h.b16 %v888
      %v964 = vunpack.c.l.b16 %v889
      %v965 = vunpack.c.h.b16 %v889
      %v966 = vunpack.c.l.b16 %v890
      %v967 = vunpack.c.h.b16 %v890
      %v968 = vunpack.c.l.b16 %v891
      %v969 = vunpack.c.h.b16 %v891
      %v970 = vunpack.c.l.b16 %v892
      %v971 = vunpack.c.h.b16 %v892
      %v972 = vunpack.c.l.b16 %v893
      %v973 = vunpack.c.h.b16 %v893
      %v974 = vunpack.c.l.b16 %v894
      %v975 = vunpack.c.h.b16 %v894
      %v976 = vunpack.c.l.b16 %v895
      %v977 = vunpack.c.h.b16 %v895
      %v978 = vunpack.c.l.b16 %v896
      %v979 = vunpack.c.h.b16 %v896
      %v980 = vunpack.c.l.b16 %v897
      %v981 = vunpack.c.h.b16 %v897
      %v982 = vunpack.c.l.b16 %v898
      %v983 = vunpack.c.h.b16 %v898
      %v984 = vunpack.c.l.b16 %v899
      %v985 = vunpack.c.h.b16 %v899
      %v986 = vunpack.c.l.b16 %v900
      %v987 = vunpack.c.h.b16 %v900
      %v988 = vunpack.c.l.b16 %v901
      %v989 = vunpack.c.h.b16 %v901
      %v990 = vunpack.c.l.b16 %v902
      %v991 = vunpack.c.h.b16 %v902
      %v992 = vunpack.c.l.b16 %v903
      %v993 = vunpack.c.h.b16 %v903
      %v994 = vunpack.c.l.b16 %v904
      %v995 = vunpack.c.h.b16 %v904
      %v996 = vunpack.c.l.b16 %v905
      %v997 = vunpack.c.h.b16 %v905
      %v998 = vunpack.c.l.b16 %v906
      %v999 = vunpack.c.h.b16 %v906
      %v1000 = vunpack.c.l.b16 %v907
      %v1001 = vunpack.c.h.b16 %v907
      %v1002 = vunpack.c.l.b16 %v908
      %v1003 = vunpack.c.h.b16 %v908
      %v1004 = vunpack.c.l.b16 %v909
      %v1005 = vunpack.c.h.b16 %v909
      %v1006 = vpack.c.b16 %v942, %v942
      %v1007 = vpack.c.b16 %v943, %v943
      %v1008 = vpack.c.b16 %v944, %v944
      %v1009 = vpack.c.b16 %v945, %v945
      %v1010 = vpack.c.b16 %v946, %v946
      %v1011 = vpack.c.b16 %v947, %v947
      %v1012 = vpack.c.b16 %v948, %v948
      %v1013 = vpack.c.b16 %v949, %v949
      %v1014 = vpack.c.b16 %v950, %v950
      %v1015 = vpack.c.b16 %v951, %v951
      %v1016 = vpack.c.b16 %v952, %v952
      %v1017 = vpack.c.b16 %v953, %v953
      %v1018 = vpack.c.b16 %v954, %v954
      %v1019 = vpack.c.b16 %v955, %v955
      %v1020 = vpack.c.b16 %v956, %v956
      %v1021 = vpack.c.b16 %v957, %v957
      %v1022 = vpack.c.b16 %v958, %v958
      %v1023 = vpack.c.b16 %v959, %v959
      %v1024 = vpack.c.b16 %v960, %v960
      %v1025 = vpack.c.b16 %v961, %v961
      %v1026 = vpack.c.b16 %v962, %v962
      %v1027 = vpack.c.b16 %v963, %v963
      %v1028 = vpack.c.b16 %v964, %v964
      %v1029 = vpack.c.b16 %v965, %v965
      %v1030 = vpack.c.b16 %v966, %v966
      %v1031 = vpack.c.b16 %v967, %v967
      %v1032 = vpack.c.b16 %v968, %v968
      %v1033 = vpack.c.b16 %v969, %v969
      %v1034 = vpack.c.b16 %v970, %v970
      %v1035 = vpack.c.b16 %v971, %v971
      %v1036 = vpack.c.b16 %v972, %v972
      %v1037 = vpack.c.b16 %v973, %v973
      %v1038 = vpack.c.b16 %v974, %v974
      %v1039 = vpack.c.b16 %v975, %v975
      %v1040 = vpack.c.b16 %v976, %v976
      %v1041 = vpack.c.b16 %v977, %v977
      %v1042 = vpack.c.b16 %v978, %v978
      %v1043 = vpack.c.b16 %v979, %v979
      %v1044 = vpack.c.b16 %v980, %v980
      %v1045 = vpack.c.b16 %v981, %v981
      %v1046 = vpack.c.b16 %v982, %v982
      %v1047 = vpack.c.b16 %v983, %v983
      %v1048 = vpack.c.b16 %v984, %v984
      %v1049 = vpack.c.b16 %v985, %v985
      %v1050 = vpack.c.b16 %v986, %v986
      %v1051 = vpack.c.b16 %v987, %v987
      %v1052 = vpack.c.b16 %v988, %v988
      %v1053 = vpack.c.b16 %v989, %v989
      %v1054 = vpack.c.b16 %v990, %v990
      %v1055 = vpack.c.b16 %v991, %v991
      %v1056 = vpack.c.b16 %v992, %v992
      %v1057 = vpack.c.b16 %v993, %v993
      %v1058 = vpack.c.b16 %v994, %v994
      %v1059 = vpack.c.b16 %v995, %v995
      %v1060 = vpack.c.b16 %v996, %v996
      %v1061 = vpack.c.b16 %v997, %v997
      %v1062 = vpack.c.b16 %v998, %v998
      %v1063 = vpack.c.b16 %v999, %v999
      %v1064 = vpack.c.b16 %v1000, %v1000
      %v1065 = vpack.c.b16 %v1001, %v1001
      %v1066 = vpack.c.b16 %v1002, %v1002
      %v1067 = vpack.c.b16 %v1003, %v1003
      %v1068 = vpack.c.b16 %v1004, %v1004
      %v1069 = vpack.c.b16 %v1005, %v1005
      %vm1134 = vcmask 191488
      %1135 = vst.msk [vmem:[%s172] sm:$0xf] %vm1134, %v1006
      %1136 = vst.msk [vmem:[%s172 + $0x4] sm:$0xf] %vm1134, %v1007
      %1137 = vst.msk [vmem:[%s172 + $0x8] sm:$0xf] %vm1134, %v1008
      %1138 = vst.msk [vmem:[%s172 + $0xc] sm:$0xf] %vm1134, %v1009
      %1139 = vst.msk [vmem:[%s172 + $0x10] sm:$0xf] %vm1134, %v1010
      %1140 = vst.msk [vmem:[%s172 + $0x14] sm:$0xf] %vm1134, %v1011
      %1141 = vst.msk [vmem:[%s172 + $0x18] sm:$0xf] %vm1134, %v1012
      %1142 = vst.msk [vmem:[%s172 + $0x1c] sm:$0xf] %vm1134, %v1013
      %1143 = vst.msk [vmem:[%s172 + $0x20] sm:$0xf] %vm1134, %v1014
      %1144 = vst.msk [vmem:[%s172 + $0x24] sm:$0xf] %vm1134, %v1015
      %1145 = vst.msk [vmem:[%s172 + $0x28] sm:$0xf] %vm1134, %v1016
      %1146 = vst.msk [vmem:[%s172 + $0x2c] sm:$0xf] %vm1134, %v1017
      %1147 = vst.msk [vmem:[%s172 + $0x30] sm:$0xf] %vm1134, %v1018
      %1148 = vst.msk [vmem:[%s172 + $0x34] sm:$0xf] %vm1134, %v1019
      %1149 = vst.msk [vmem:[%s172 + $0x38] sm:$0xf] %vm1134, %v1020
      %1150 = vst.msk [vmem:[%s172 + $0x3c] sm:$0xf] %vm1134, %v1021
      %1151 = vst.msk [vmem:[%s172 + $0x40] sm:$0xf] %vm1134, %v1022
      %1152 = vst.msk [vmem:[%s172 + $0x44] sm:$0xf] %vm1134, %v1023
      %1153 = vst.msk [vmem:[%s172 + $0x48] sm:$0xf] %vm1134, %v1024
      %1154 = vst.msk [vmem:[%s172 + $0x4c] sm:$0xf] %vm1134, %v1025
      %1155 = vst.msk [vmem:[%s172 + $0x50] sm:$0xf] %vm1134, %v1026
      %1156 = vst.msk [vmem:[%s172 + $0x54] sm:$0xf] %vm1134, %v1027
      %1157 = vst.msk [vmem:[%s172 + $0x58] sm:$0xf] %vm1134, %v1028
      %1158 = vst.msk [vmem:[%s172 + $0x5c] sm:$0xf] %vm1134, %v1029
      %1159 = vst.msk [vmem:[%s172 + $0x60] sm:$0xf] %vm1134, %v1030
      %1160 = vst.msk [vmem:[%s172 + $0x64] sm:$0xf] %vm1134, %v1031
      %1161 = vst.msk [vmem:[%s172 + $0x68] sm:$0xf] %vm1134, %v1032
      %1162 = vst.msk [vmem:[%s172 + $0x6c] sm:$0xf] %vm1134, %v1033
      %1163 = vst.msk [vmem:[%s172 + $0x70] sm:$0xf] %vm1134, %v1034
      %1164 = vst.msk [vmem:[%s172 + $0x74] sm:$0xf] %vm1134, %v1035
      %1165 = vst.msk [vmem:[%s172 + $0x78] sm:$0xf] %vm1134, %v1036
      %1166 = vst.msk [vmem:[%s172 + $0x7c] sm:$0xf] %vm1134, %v1037
      %1167 = vst.msk [vmem:[%s172 + $0x80] sm:$0xf] %vm1134, %v1038
      %1168 = vst.msk [vmem:[%s172 + $0x84] sm:$0xf] %vm1134, %v1039
      %1169 = vst.msk [vmem:[%s172 + $0x88] sm:$0xf] %vm1134, %v1040
      %1170 = vst.msk [vmem:[%s172 + $0x8c] sm:$0xf] %vm1134, %v1041
      %1171 = vst.msk [vmem:[%s172 + $0x90] sm:$0xf] %vm1134, %v1042
      %1172 = vst.msk [vmem:[%s172 + $0x94] sm:$0xf] %vm1134, %v1043
      %1173 = vst.msk [vmem:[%s172 + $0x98] sm:$0xf] %vm1134, %v1044
      %1174 = vst.msk [vmem:[%s172 + $0x9c] sm:$0xf] %vm1134, %v1045
      %1175 = vst.msk [vmem:[%s172 + $0xa0] sm:$0xf] %vm1134, %v1046
      %1176 = vst.msk [vmem:[%s172 + $0xa4] sm:$0xf] %vm1134, %v1047
      %1177 = vst.msk [vmem:[%s172 + $0xa8] sm:$0xf] %vm1134, %v1048
      %1178 = vst.msk [vmem:[%s172 + $0xac] sm:$0xf] %vm1134, %v1049
      %1179 = vst.msk [vmem:[%s172 + $0xb0] sm:$0xf] %vm1134, %v1050
      %1180 = vst.msk [vmem:[%s172 + $0xb4] sm:$0xf] %vm1134, %v1051
      %1181 = vst.msk [vmem:[%s172 + $0xb8] sm:$0xf] %vm1134, %v1052
      %1182 = vst.msk [vmem:[%s172 + $0xbc] sm:$0xf] %vm1134, %v1053
      %1183 = vst.msk [vmem:[%s172 + $0xc0] sm:$0xf] %vm1134, %v1054
      %1184 = vst.msk [vmem:[%s172 + $0xc4] sm:$0xf] %vm1134, %v1055
      %1185 = vst.msk [vmem:[%s172 + $0xc8] sm:$0xf] %vm1134, %v1056
      %1186 = vst.msk [vmem:[%s172 + $0xcc] sm:$0xf] %vm1134, %v1057
      %1187 = vst.msk [vmem:[%s172 + $0xd0] sm:$0xf] %vm1134, %v1058
      %1188 = vst.msk [vmem:[%s172 + $0xd4] sm:$0xf] %vm1134, %v1059
      %1189 = vst.msk [vmem:[%s172 + $0xd8] sm:$0xf] %vm1134, %v1060
      %1190 = vst.msk [vmem:[%s172 + $0xdc] sm:$0xf] %vm1134, %v1061
      %1191 = vst.msk [vmem:[%s172 + $0xe0] sm:$0xf] %vm1134, %v1062
      %1192 = vst.msk [vmem:[%s172 + $0xe4] sm:$0xf] %vm1134, %v1063
      %1193 = vst.msk [vmem:[%s172 + $0xe8] sm:$0xf] %vm1134, %v1064
      %1194 = vst.msk [vmem:[%s172 + $0xec] sm:$0xf] %vm1134, %v1065
      %1195 = vst.msk [vmem:[%s172 + $0xf0] sm:$0xf] %vm1134, %v1066
      %1196 = vst.msk [vmem:[%s172 + $0xf4] sm:$0xf] %vm1134, %v1067
      %1197 = vst.msk [vmem:[%s172 + $0xf8] sm:$0xf] %vm1134, %v1068
      %1198 = vst.msk [vmem:[%s172 + $0xfc] sm:$0xf] %vm1134, %v1069
      %s1199 = smul.u32 64, %s14
      %p1200 = scmp.lt.s32.totalorder %s1199, 255
      %s1201 = scalar_select %p1200, %s1199, 255
      %s1202 = smul.addr %s1201, 4
      %s1203 = scalar_lea.vmem %s3, %s1202
      // Predicated region
      $region33: #{_lambda_.30} parent=31 // pred_check
        %p1204 = pneg %p100
      $region34: #{_lambda_.30} parent=31 // pred_check_branch
        %1206 = sbr.rel (%p1204) target = $region36
      $region35: #{_lambda_.30} parent=31 // pred_region
        %s1207 = smul.u32 64, %s14
      $region36: #{_lambda_.30} parent=31 // pred_fallthru
        _
    $region32: #{_lambda_.30} parent=5 // pred_fallthru
      _
    %p1208 = scmp.le.s32.totalorder 2, %s9
    // Predicated region
    $region37: #{_lambda_.30} parent=5 // pred_check
      %p1209 = pneg %p1208
    $region38: #{_lambda_.30} parent=5 // pred_check_branch
      %1211 = sbr.rel (%p1209) target = $region40
    $region39: #{_lambda_.30} parent=5 // pred_region
      %s1212 = ssub.s32 %s9, 2
      // Predicated region
      $region41: #{_lambda_.30} parent=39 // pred_check
        %p1213 = pneg %p106
      $region42: #{_lambda_.30} parent=39 // pred_check_branch
        %1215 = sbr.rel (%p1213) target = $region44
      $region43: #{_lambda_.30} parent=39 // pred_region
        %s1216 = smul.u32 64, %s15
        %p1217 = scmp.lt.s32.totalorder %s1216, 255
        %s1218 = scalar_select %p1217, %s1216, 255
        %s1219 = smul.addr %s1218, 4
        %s1220 = scalar_lea.vmem %s3, %s1219
      $region44: #{_lambda_.30} parent=39 // pred_fallthru
        _
    $region40: #{_lambda_.30} parent=5 // pred_fallthru
      _
  $region6: #{_lambda_.30} parent=0 // loop_footer
    %s13 = sadd.s32 1, %s9
  $region7: #{_lambda_.30} parent=0 // loop_footer_branch
    %8 = sbr.rel target = $region3
  $region8: #{_lambda_.30} parent=0 // loop_exit
    _

// kernel: _lambda_.34
$region0: #{_lambda_.34}
  #allocation0 [shape = 'u32[]', space=smem, size = 0x4, offset = 0x4, fixed_abs, tag = 'smem constant byte address 0x4 - core index']
  #allocation1 [shape = 'u32[144,128]{1,0:T(1,128)}', space=vmem, size = 0x12000, scoped, tag = 'internal scratch']
  %s0 = inlined_call_operand.vmem [shape: bf16[512,24], index: 0, kind: input, shape index: {}]
  %s1 = inlined_call_operand.vmem [shape: bf16[24,24], index: 1, kind: input, shape index: {}]
  %s2 = inlined_call_operand.vmem [shape: f32[1,24], index: 2, kind: input, shape index: {}]
  %s3 = inlined_call_operand.vmem [shape: bf16[512,24], index: 3, kind: output, shape index: {}]
  %s4 = sld [smem:[#allocation0]]
  $region45: #{_lambda_.34} parent=0
    _
  %s6 = ssub.s32 1, %s4
  %s7 = scalar_select 0, %s6, %s4
  loop: start=0, step=1, limit=4
  $region2: #{_lambda_.34} parent=0 // loop_pre_header
    _
  $region3: #{_lambda_.34} parent=0 // loop_header
    %s9 = sphi 0, %s13
    %p10 = scmp.ge.s32.totalorder %s9, 4
    %s19 = sphi 0, %s21
    %s22 = sphi 0, %s19
    %s23 = sphi 0, %s22
    %s39 = sphi 0, %s23
    %s43 = sphi 0, %s43
    %s45 = sphi 0, %s43
    %s46 = sphi 0, %s45
    %s60 = sphi 0, %s46
    %s64 = sphi 0, %s64
    %s66 = sphi 0, %s64
    %s67 = sphi 0, %s66
    %s81 = sphi 0, %s67
    %s87 = sphi 0, %s89
    %s90 = sphi 0, %s87
    %s91 = sphi 0, %s90
    %s107 = sphi 0, %s91
  $region4: #{_lambda_.34} parent=0 // loop_header_branch
    %12 = sbr.rel (%p10) target = $region8
  $region5: #{_lambda_.34} parent=0 // loop_body
    %s14 = ssub.s32 %s9, 1
    %s15 = ssub.s32 %s9, 2
    %s16 = sadd.s32 %s9, 1
    %s17 = ssub.s32 %s9, %s16
    %p18 = scmp.eq.s32.totalorder %s17, 0
    %s20 = sadd.s32 %s19, 1
    %s21 = scalar_select %p18, %s19, %s20
    %p24 = pneg %p18
    %p25 = scmp.eq.s32.totalorder %s9, 1
    %p26 = por %p24, %p25
    %p27 = scmp.ne.s32.totalorder %s19, %s22
    %p28 = scmp.eq.s32.totalorder %s9, 0
    %p29 = por %p27, %p28
    %p30 = scmp.ne.s32.totalorder %s19, %s22
    %p31 = scmp.eq.s32.totalorder %s14, 1
    %p32 = por %p30, %p31
    %p33 = scmp.ne.s32.totalorder %s22, %s23
    %p34 = scmp.eq.s32.totalorder %s14, 0
    %p35 = por %p33, %p34
    %p36 = scmp.ne.s32.totalorder %s22, %s23
    %p37 = scmp.eq.s32.totalorder %s15, 1
    %p38 = por %p36, %p37
    %p40 = scmp.ne.s32.totalorder %s23, %s39
    %p41 = scmp.eq.s32.totalorder %s15, 0
    %p42 = por %p40, %p41
    %s44 = sadd.s32 %s43, 1
    %p47 = scmp.eq.s32.totalorder %s9, 1
    %p48 = scmp.ne.s32.totalorder %s43, %s45
    %p49 = scmp.eq.s32.totalorder %s9, 0
    %p50 = por %p48, %p49
    %p51 = scmp.ne.s32.totalorder %s43, %s45
    %p52 = scmp.eq.s32.totalorder %s14, 1
    %p53 = por %p51, %p52
    %p54 = scmp.ne.s32.totalorder %s45, %s46
    %p55 = scmp.eq.s32.totalorder %s14, 0
    %p56 = por %p54, %p55
    %p57 = scmp.ne.s32.totalorder %s45, %s46
    %p58 = scmp.eq.s32.totalorder %s15, 1
    %p59 = por %p57, %p58
    %p61 = scmp.ne.s32.totalorder %s46, %s60
    %p62 = scmp.eq.s32.totalorder %s15, 0
    %p63 = por %p61, %p62
    %s65 = sadd.s32 %s64, 1
    %p68 = scmp.eq.s32.totalorder %s9, 1
    %p69 = scmp.ne.s32.totalorder %s64, %s66
    %p70 = scmp.eq.s32.totalorder %s9, 0
    %p71 = por %p69, %p70
    %p72 = scmp.ne.s32.totalorder %s64, %s66
    %p73 = scmp.eq.s32.totalorder %s14, 1
    %p74 = por %p72, %p73
    %p75 = scmp.ne.s32.totalorder %s66, %s67
    %p76 = scmp.eq.s32.totalorder %s14, 0
    %p77 = por %p75, %p76
    %p78 = scmp.ne.s32.totalorder %s66, %s67
    %p79 = scmp.eq.s32.totalorder %s15, 1
    %p80 = por %p78, %p79
    %p82 = scmp.ne.s32.totalorder %s67, %s81
    %p83 = scmp.eq.s32.totalorder %s15, 0
    %p84 = por %p82, %p83
    %s85 = ssub.s32 %s9, %s16
    %p86 = scmp.eq.s32.totalorder %s85, 0
    %s88 = sadd.s32 %s87, 1
    %s89 = scalar_select %p86, %s87, %s88
    %p92 = pneg %p86
    %p93 = scmp.eq.s32.totalorder %s9, 1
    %p94 = por %p92, %p93
    %p95 = scmp.ne.s32.totalorder %s87, %s90
    %p96 = scmp.eq.s32.totalorder %s9, 0
    %p97 = por %p95, %p96
    %p98 = scmp.ne.s32.totalorder %s87, %s90
    %p99 = scmp.eq.s32.totalorder %s14, 1
    %p100 = por %p98, %p99
    %p101 = scmp.ne.s32.totalorder %s90, %s91
    %p102 = scmp.eq.s32.totalorder %s14, 0
    %p103 = por %p101, %p102
    %p104 = scmp.ne.s32.totalorder %s90, %s91
    %p105 = scmp.eq.s32.totalorder %s15, 1
    %p106 = por %p104, %p105
    %p108 = scmp.ne.s32.totalorder %s91, %s107
    %p109 = scmp.eq.s32.totalorder %s15, 0
    %p110 = por %p108, %p109
    %p111 = scmp.le.s32.totalorder 1, %s9
    %p112 = scmp.lt.s32.totalorder %s9, 3
    %p113 = pnand %p111, %p112
    %p114 = pneg %p113
    // Predicated region
    $region9: #{_lambda_.34} parent=5 // pred_check
      _
    $region10: #{_lambda_.34} parent=5 // pred_check_branch
      %116 = sbr.rel (%p113) target = $region12
    $region11: #{_lambda_.34} parent=5 // pred_region
      %s117 = ssub.s32 %s9, 1
      // Predicated region
      $region13: #{_lambda_.34} parent=11 // pred_check
        %p118 = pneg %p56
      $region14: #{_lambda_.34} parent=11 // pred_check_branch
        %120 = sbr.rel (%p118) target = $region16
      $region15: #{_lambda_.34} parent=11 // pred_region
        _
      $region16: #{_lambda_.34} parent=11 // pred_fallthru
        _
      // Predicated region
      $region17: #{_lambda_.34} parent=11 // pred_check
        %p121 = pneg %p77
      $region18: #{_lambda_.34} parent=11 // pred_check_branch
        %123 = sbr.rel (%p121) target = $region20
      $region19: #{_lambda_.34} parent=11 // pred_region
        _
      $region20: #{_lambda_.34} parent=11 // pred_fallthru
        _
    $region12: #{_lambda_.34} parent=5 // pred_fallthru
      _
    %p124 = scmp.lt.s32.totalorder %s9, 2
    // Predicated region
    $region21: #{_lambda_.34} parent=5 // pred_check
      %p125 = pneg %p124
    $region22: #{_lambda_.34} parent=5 // pred_check_branch
      %127 = sbr.rel (%p125) target = $region24
    $region23: #{_lambda_.34} parent=5 // pred_region
      // Predicated region
      $region25: #{_lambda_.34} parent=23 // pred_check
        %p128 = pneg %p29
      $region26: #{_lambda_.34} parent=23 // pred_check_branch
        %130 = sbr.rel (%p128) target = $region28
      $region27: #{_lambda_.34} parent=23 // pred_region
        %s131 = smul.u32 32, %s9
        %p132 = scmp.lt.s32.totalorder %s131, 63
        %s133 = scalar_select %p132, %s131, 63
        %s134 = smul.addr %s133, 4
        %s135 = scalar_lea.vmem %s0, %s134
        %s136 = smul.u32 32, %s9
      $region28: #{_lambda_.34} parent=23 // pred_fallthru
        _
    $region24: #{_lambda_.34} parent=5 // pred_fallthru
      _
    %p137 = scmp.le.s32.totalorder 1, %s9
    %p138 = scmp.lt.s32.totalorder %s9, 3
    %p139 = pnand %p137, %p138
    %p140 = pneg %p139
    // Predicated region
    $region29: #{_lambda_.34} parent=5 // pred_check
      _
    $region30: #{_lambda_.34} parent=5 // pred_check_branch
      %142 = sbr.rel (%p139) target = $region32
    $region31: #{_lambda_.34} parent=5 // pred_region
      %s143 = ssub.s32 %s9, 1
      %s144 = smul.u32 32, %s14
      %p145 = scmp.lt.s32.totalorder %s144, 63
      %s146 = scalar_select %p145, %s144, 63
      %s147 = smul.addr %s146, 4
      %s148 = scalar_lea.vmem %s0, %s147
      %p149 = pneg %p35
      %p150 = pneg %p32
      %p151 = pneg %p56
      %p152 = pneg %p53
      %p153 = pneg %p77
      %p154 = pneg %p74
      %p155 = pneg %p103
      %p156 = pneg %p100
      %s157 = smul.u32 32, %s14
      %p158 = scmp.lt.s32.totalorder %s157, 63
      %s159 = scalar_select %p158, %s157, 63
      %s160 = smul.addr %s159, 4
      %s161 = scalar_lea.vmem %s3, %s160
      %s162 = smul.u32 32, %s14
      %p163 = scmp.lt.s32.totalorder %s162, 63
      %s164 = scalar_select %p163, %s162, 63
      %s165 = smul.addr %s164, 4
      %s166 = scalar_lea.vmem %s0, %s165
      %s167 = smul.u32 32, %s14
      %s168 = smul.u32 32, %s14
      %p169 = scmp.lt.s32.totalorder %s168, 63
      %s170 = scalar_select %p169, %s168, 63
      %s171 = smul.addr %s170, 4
      %s172 = scalar_lea.vmem %s3, %s171
      %s173 = smul.u32 32, %s14
      %v175 = vld [vmem:[%s166] sm:$0xf]
      %v176 = vld [vmem:[%s166 + $0x4] sm:$0xf]
      %v177 = vld [vmem:[%s166 + $0x8] sm:$0xf]
      %v178 = vld [vmem:[%s166 + $0xc] sm:$0xf]
      %v179 = vld [vmem:[%s166 + $0x10] sm:$0xf]
      %v180 = vld [vmem:[%s166 + $0x14] sm:$0xf]
      %v181 = vld [vmem:[%s166 + $0x18] sm:$0xf]
      %v182 = vld [vmem:[%s166 + $0x1c] sm:$0xf]
      %v183 = vld [vmem:[%s166 + $0x20] sm:$0xf]
      %v184 = vld [vmem:[%s166 + $0x24] sm:$0xf]
      %v185 = vld [vmem:[%s166 + $0x28] sm:$0xf]
      %v186 = vld [vmem:[%s166 + $0x2c] sm:$0xf]
      %v187 = vld [vmem:[%s166 + $0x30] sm:$0xf]
      %v188 = vld [vmem:[%s166 + $0x34] sm:$0xf]
      %v189 = vld [vmem:[%s166 + $0x38] sm:$0xf]
      %v190 = vld [vmem:[%s166 + $0x3c] sm:$0xf]
      %v191 = vld [vmem:[%s166 + $0x40] sm:$0xf]
      %v192 = vld [vmem:[%s166 + $0x44] sm:$0xf]
      %v193 = vld [vmem:[%s166 + $0x48] sm:$0xf]
      %v194 = vld [vmem:[%s166 + $0x4c] sm:$0xf]
      %v195 = vld [vmem:[%s166 + $0x50] sm:$0xf]
      %v196 = vld [vmem:[%s166 + $0x54] sm:$0xf]
      %v197 = vld [vmem:[%s166 + $0x58] sm:$0xf]
      %v198 = vld [vmem:[%s166 + $0x5c] sm:$0xf]
      %v199 = vld [vmem:[%s166 + $0x60] sm:$0xf]
      %v200 = vld [vmem:[%s166 + $0x64] sm:$0xf]
      %v201 = vld [vmem:[%s166 + $0x68] sm:$0xf]
      %v202 = vld [vmem:[%s166 + $0x6c] sm:$0xf]
      %v203 = vld [vmem:[%s166 + $0x70] sm:$0xf]
      %v204 = vld [vmem:[%s166 + $0x74] sm:$0xf]
      %v205 = vld [vmem:[%s166 + $0x78] sm:$0xf]
      %v206 = vld [vmem:[%s166 + $0x7c] sm:$0xf]
      %v207 = vld [vmem:[%s1] sm:$0xf]
      %v208 = vld [vmem:[%s1 + $0x4] sm:$0xf]
      %v209 = vld [vmem:[%s1 + $0x8] sm:$0xf]
      %v210 = vld [vmem:[%s2] sm:$0x1]
      %v212 = vlaneseq
      %v213 = vshrl.u32 %v212, 7
      %v214 = vsub.s32 0, %v213
      %v215 = vrot.slane %v210, %v214
      %v249 = vunpack.c.l.b16 %v175
      %v250 = vunpack.c.l.b16 %v176
      %v251 = vunpack.c.l.b16 %v177
      %v252 = vunpack.c.l.b16 %v178
      %v253 = vunpack.c.l.b16 %v179
      %v254 = vunpack.c.l.b16 %v180
      %v255 = vunpack.c.l.b16 %v181
      %v256 = vunpack.c.l.b16 %v182
      %v257 = vunpack.c.l.b16 %v183
      %v258 = vunpack.c.l.b16 %v184
      %v259 = vunpack.c.l.b16 %v185
      %v260 = vunpack.c.l.b16 %v186
      %v261 = vunpack.c.l.b16 %v187
      %v262 = vunpack.c.l.b16 %v188
      %v263 = vunpack.c.l.b16 %v189
      %v264 = vunpack.c.l.b16 %v190
      %v265 = vunpack.c.l.b16 %v191
      %v266 = vunpack.c.l.b16 %v192
      %v267 = vunpack.c.l.b16 %v193
      %v268 = vunpack.c.l.b16 %v194
      %v269 = vunpack.c.l.b16 %v195
      %v270 = vunpack.c.l.b16 %v196
      %v271 = vunpack.c.l.b16 %v197
      %v272 = vunpack.c.l.b16 %v198
      %v273 = vunpack.c.l.b16 %v199
      %v274 = vunpack.c.l.b16 %v200
      %v275 = vunpack.c.l.b16 %v201
      %v276 = vunpack.c.l.b16 %v202
      %v277 = vunpack.c.l.b16 %v203
      %v278 = vunpack.c.l.b16 %v204
      %v279 = vunpack.c.l.b16 %v205
      %v280 = vunpack.c.l.b16 %v206
      %v281 = vpack.c.b16 %v250, %v249
      %v282 = vpack.c.b16 %v252, %v251
      %v283 = vpack.c.b16 %v254, %v253
      %v284 = vpack.c.b16 %v256, %v255
      %v285 = vpack.c.b16 %v258, %v257
      %v286 = vpack.c.b16 %v260, %v259
      %v287 = vpack.c.b16 %v262, %v261
      %v288 = vpack.c.b16 %v264, %v263
      %v289 = vpack.c.b16 %v266, %v265
      %v290 = vpack.c.b16 %v268, %v267
      %v291 = vpack.c.b16 %v270, %v269
      %v292 = vpack.c.b16 %v272, %v271
      %v293 = vpack.c.b16 %v274, %v273
      %v294 = vpack.c.b16 %v276, %v275
      %v295 = vpack.c.b16 %v278, %v277
      %v296 = vpack.c.b16 %v280, %v279
      %v300 = vunpack.c.l.b16 %v207
      %v301 = vunpack.c.l.b16 %v208
      %v302 = vunpack.c.l.b16 %v209
      %v303 = vpack.c.b16 %v301, %v300
      %v304 = vpack.c.b16 %v302, %v302
      %vm306 = vcmask 195584
      %v308 = vsel %vm306, %v281, 0
      %v311 = vsel %vm306, %v282, 0
      %v314 = vsel %vm306, %v283, 0
      %v317 = vsel %vm306, %v284, 0
      %v320 = vsel %vm306, %v285, 0
      %v323 = vsel %vm306, %v286, 0
      %v326 = vsel %vm306, %v287, 0
      %v329 = vsel %vm306, %v288, 0
      %v332 = vsel %vm306, %v289, 0
      %v335 = vsel %vm306, %v290, 0
      %v338 = vsel %vm306, %v291, 0
      %v341 = vsel %vm306, %v292, 0
      %v344 = vsel %vm306, %v293, 0
      %v347 = vsel %vm306, %v294, 0
      %v350 = vsel %vm306, %v295, 0
      %v353 = vsel %vm306, %v296, 0
      %vm355 = vcmask 1043456
      %v357 = vsel %vm355, %v304, 0
      %359 = vmatprep.subr.bf16.mxu0 0
      %360 = vmatpush1.bf16.msra.mxu0 0
      %361 = vmatprep.subr.bf16.mxu0 0
      %362 = vmatpush1.bf16.msra.mxu0 0
      %363 = vmatprep.subr.bf16.mxu0 0
      %364 = vmatpush1.bf16.msra.mxu0 0
      %365 = vmatprep.subr.bf16.mxu0 0
      %366 = vmatpush1.bf16.msra.mxu0 0
      %367 = vmatprep.subr.bf16.mxu0 0
      %368 = vmatpush1.bf16.msra.mxu0 0
      %369 = vmatprep.subr.bf16.mxu0 0
      %370 = vmatpush1.bf16.msra.mxu0 0
      %371 = vmatprep.subr.bf16.mxu0 0
      %372 = vmatpush1.bf16.msra.mxu0 %v357
      %373 = vmatprep.subr.bf16.mxu0 0
      %374 = vmatpush1.bf16.msra.mxu0 %v303
      %375 = vmatprep.subr.bf16.mxu0 0
      %376 = vmatpush2.bf16.msra.mxu0 0
      %377 = vmatprep.subr.bf16.mxu0 0
      %378 = vmatpush2.bf16.msra.mxu0 0
      %379 = vmatprep.subr.bf16.mxu0 0
      %380 = vmatpush2.bf16.msra.mxu0 0
      %381 = vmatprep.subr.bf16.mxu0 0
      %382 = vmatpush2.bf16.msra.mxu0 0
      %383 = vmatprep.subr.bf16.mxu0 0
      %384 = vmatpush2.bf16.msra.mxu0 0
      %385 = vmatprep.subr.bf16.mxu0 0
      %386 = vmatpush2.bf16.msra.mxu0 0
      %387 = vmatprep.subr.bf16.mxu0 0
      %388 = vmatpush2.bf16.msra.mxu0 0
      %389 = vmatprep.subr.bf16.mxu0 0
      %390 = vmatpush2.bf16.msra.mxu0 0
      %391 = vmatprep.mubr.bf16.mxu0 0
      %392 = vmatmul.mubr.bf16.gmra.mxu0 %v308
      %v393 = vpop.f32.mrf.mxu0
      %v394 = vadd.f32 %v215, %v393
      %v395 = vpop.f32.mrf.mxu0
      %v396 = vpop.f32.mrf.mxu0
      %v397 = vadd.f32 %v215, %v396
      %v398 = vpop.f32.mrf.mxu0
      %399 = vmatprep.mubr.bf16.mxu0 0
      %400 = vmatmul.mubr.bf16.gmra.mxu0 %v311
      %v401 = vpop.f32.mrf.mxu0
      %v402 = vadd.f32 %v215, %v401
      %v403 = vpop.f32.mrf.mxu0
      %v404 = vpop.f32.mrf.mxu0
      %v405 = vadd.f32 %v215, %v404
      %v406 = vpop.f32.mrf.mxu0
      %407 = vmatprep.mubr.bf16.mxu0 0
      %408 = vmatmul.mubr.bf16.gmra.mxu0 %v314
      %v409 = vpop.f32.mrf.mxu0
      %v410 = vadd.f32 %v215, %v409
      %v411 = vpop.f32.mrf.mxu0
      %v412 = vpop.f32.mrf.mxu0
      %v413 = vadd.f32 %v215, %v412
      %v414 = vpop.f32.mrf.mxu0
      %415 = vmatprep.mubr.bf16.mxu0 0
      %416 = vmatmul.mubr.bf16.gmra.mxu0 %v317
      %v417 = vpop.f32.mrf.mxu0
      %v418 = vadd.f32 %v215, %v417
      %v419 = vpop.f32.mrf.mxu0
      %v420 = vpop.f32.mrf.mxu0
      %v421 = vadd.f32 %v215, %v420
      %v422 = vpop.f32.mrf.mxu0
      %423 = vmatprep.mubr.bf16.mxu0 0
      %424 = vmatmul.mubr.bf16.gmra.mxu0 %v320
      %v425 = vpop.f32.mrf.mxu0
      %v426 = vadd.f32 %v215, %v425
      %v427 = vpop.f32.mrf.mxu0
      %v428 = vpop.f32.mrf.mxu0
      %v429 = vadd.f32 %v215, %v428
      %v430 = vpop.f32.mrf.mxu0
      %431 = vmatprep.mubr.bf16.mxu0 0
      %432 = vmatmul.mubr.bf16.gmra.mxu0 %v323
      %v433 = vpop.f32.mrf.mxu0
      %v434 = vadd.f32 %v215, %v433
      %v435 = vpop.f32.mrf.mxu0
      %v436 = vpop.f32.mrf.mxu0
      %v437 = vadd.f32 %v215, %v436
      %v438 = vpop.f32.mrf.mxu0
      %439 = vmatprep.mubr.bf16.mxu0 0
      %440 = vmatmul.mubr.bf16.gmra.mxu0 %v326
      %v441 = vpop.f32.mrf.mxu0
      %v442 = vadd.f32 %v215, %v441
      %v443 = vpop.f32.mrf.mxu0
      %v444 = vpop.f32.mrf.mxu0
      %v445 = vadd.f32 %v215, %v444
      %v446 = vpop.f32.mrf.mxu0
      %447 = vmatprep.mubr.bf16.mxu0 0
      %448 = vmatmul.mubr.bf16.gmra.mxu0 %v329
      %v449 = vpop.f32.mrf.mxu0
      %v450 = vadd.f32 %v215, %v449
      %v451 = vpop.f32.mrf.mxu0
      %v452 = vpop.f32.mrf.mxu0
      %v453 = vadd.f32 %v215, %v452
      %v454 = vpop.f32.mrf.mxu0
      %455 = vmatprep.mubr.bf16.mxu0 0
      %456 = vmatmul.mubr.bf16.gmra.mxu0 %v332
      %v457 = vpop.f32.mrf.mxu0
      %v458 = vadd.f32 %v215, %v457
      %v459 = vpop.f32.mrf.mxu0
      %v460 = vpop.f32.mrf.mxu0
      %v461 = vadd.f32 %v215, %v460
      %v462 = vpop.f32.mrf.mxu0
      %463 = vmatprep.mubr.bf16.mxu0 0
      %464 = vmatmul.mubr.bf16.gmra.mxu0 %v335
      %v465 = vpop.f32.mrf.mxu0
      %v466 = vadd.f32 %v215, %v465
      %v467 = vpop.f32.mrf.mxu0
      %v468 = vpop.f32.mrf.mxu0
      %v469 = vadd.f32 %v215, %v468
      %v470 = vpop.f32.mrf.mxu0
      %471 = vmatprep.mubr.bf16.mxu0 0
      %472 = vmatmul.mubr.bf16.gmra.mxu0 %v338
      %v473 = vpop.f32.mrf.mxu0
      %v474 = vadd.f32 %v215, %v473
      %v475 = vpop.f32.mrf.mxu0
      %v476 = vpop.f32.mrf.mxu0
      %v477 = vadd.f32 %v215, %v476
      %v478 = vpop.f32.mrf.mxu0
      %479 = vmatprep.mubr.bf16.mxu0 0
      %480 = vmatmul.mubr.bf16.gmra.mxu0 %v341
      %v481 = vpop.f32.mrf.mxu0
      %v482 = vadd.f32 %v215, %v481
      %v483 = vpop.f32.mrf.mxu0
      %v484 = vpop.f32.mrf.mxu0
      %v485 = vadd.f32 %v215, %v484
      %v486 = vpop.f32.mrf.mxu0
      %487 = vmatprep.mubr.bf16.mxu0 0
      %488 = vmatmul.mubr.bf16.gmra.mxu0 %v344
      %v489 = vpop.f32.mrf.mxu0
      %v490 = vadd.f32 %v215, %v489
      %v491 = vpop.f32.mrf.mxu0
      %v492 = vpop.f32.mrf.mxu0
      %v493 = vadd.f32 %v215, %v492
      %v494 = vpop.f32.mrf.mxu0
      %495 = vmatprep.mubr.bf16.mxu0 0
      %496 = vmatmul.mubr.bf16.gmra.mxu0 %v347
      %v497 = vpop.f32.mrf.mxu0
      %v498 = vadd.f32 %v215, %v497
      %v499 = vpop.f32.mrf.mxu0
      %v500 = vpop.f32.mrf.mxu0
      %v501 = vadd.f32 %v215, %v500
      %v502 = vpop.f32.mrf.mxu0
      %503 = vmatprep.mubr.bf16.mxu0 0
      %504 = vmatmul.mubr.bf16.gmra.mxu0 %v350
      %v505 = vpop.f32.mrf.mxu0
      %v506 = vadd.f32 %v215, %v505
      %v507 = vpop.f32.mrf.mxu0
      %v508 = vpop.f32.mrf.mxu0
      %v509 = vadd.f32 %v215, %v508
      %v510 = vpop.f32.mrf.mxu0
      %511 = vmatprep.mubr.bf16.mxu0 0
      %512 = vmatmul.mubr.bf16.gmra.mxu0 %v353
      %v513 = vpop.f32.mrf.mxu0
      %v514 = vadd.f32 %v215, %v513
      %v515 = vpop.f32.mrf.mxu0
      %v516 = vpop.f32.mrf.mxu0
      %v517 = vadd.f32 %v215, %v516
      %v518 = vpop.f32.mrf.mxu0
      %519 = vdwg.mxu0
      %v520 = vmax.f32 %v394, 0.0
      %v521 = vmax.f32 %v397, 0.0
      %v522 = vmax.f32 %v402, 0.0
      %v523 = vmax.f32 %v405, 0.0
      %v524 = vmax.f32 %v410, 0.0
      %v525 = vmax.f32 %v413, 0.0
      %v526 = vmax.f32 %v418, 0.0
      %v527 = vmax.f32 %v421, 0.0
      %v528 = vmax.f32 %v426, 0.0
      %v529 = vmax.f32 %v429, 0.0
      %v530 = vmax.f32 %v434, 0.0
      %v531 = vmax.f32 %v437, 0.0
      %v532 = vmax.f32 %v442, 0.0
      %v533 = vmax.f32 %v445, 0.0
      %v534 = vmax.f32 %v450, 0.0
      %v535 = vmax.f32 %v453, 0.0
      %v536 = vmax.f32 %v458, 0.0
      %v537 = vmax.f32 %v461, 0.0
      %v538 = vmax.f32 %v466, 0.0
      %v539 = vmax.f32 %v469, 0.0
      %v540 = vmax.f32 %v474, 0.0
      %v541 = vmax.f32 %v477, 0.0
      %v542 = vmax.f32 %v482, 0.0
      %v543 = vmax.f32 %v485, 0.0
      %v544 = vmax.f32 %v490, 0.0
      %v545 = vmax.f32 %v493, 0.0
      %v546 = vmax.f32 %v498, 0.0
      %v547 = vmax.f32 %v501, 0.0
      %v548 = vmax.f32 %v506, 0.0
      %v549 = vmax.f32 %v509, 0.0
      %v550 = vmax.f32 %v514, 0.0
      %v551 = vmax.f32 %v517, 0.0
      %v552 = vpack.c.bf16 %v521, %v520
      %v553 = vpack.c.bf16 %v523, %v522
      %v554 = vpack.c.bf16 %v525, %v524
      %v555 = vpack.c.bf16 %v527, %v526
      %v556 = vpack.c.bf16 %v529, %v528
      %v557 = vpack.c.bf16 %v531, %v530
      %v558 = vpack.c.bf16 %v533, %v532
      %v559 = vpack.c.bf16 %v535, %v534
      %v560 = vpack.c.bf16 %v537, %v536
      %v561 = vpack.c.bf16 %v539, %v538
      %v562 = vpack.c.bf16 %v541, %v540
      %v563 = vpack.c.bf16 %v543, %v542
      %v564 = vpack.c.bf16 %v545, %v544
      %v565 = vpack.c.bf16 %v547, %v546
      %v566 = vpack.c.bf16 %v549, %v548
      %v567 = vpack.c.bf16 %v551, %v550
      %v584 = vunpack.c.l.b16 %v552
      %v585 = vunpack.c.h.b16 %v552
      %v586 = vunpack.c.l.b16 %v553
      %v587 = vunpack.c.h.b16 %v553
      %v588 = vunpack.c.l.b16 %v554
      %v589 = vunpack.c.h.b16 %v554
      %v590 = vunpack.c.l.b16 %v555
      %v591 = vunpack.c.h.b16 %v555
      %v592 = vunpack.c.l.b16 %v556
      %v593 = vunpack.c.h.b16 %v556
      %v594 = vunpack.c.l.b16 %v557
      %v595 = vunpack.c.h.b16 %v557
      %v596 = vunpack.c.l.b16 %v558
      %v597 = vunpack.c.h.b16 %v558
      %v598 = vunpack.c.l.b16 %v559
      %v599 = vunpack.c.h.b16 %v559
      %v600 = vunpack.c.l.b16 %v560
      %v601 = vunpack.c.h.b16 %v560
      %v602 = vunpack.c.l.b16 %v561
      %v603 = vunpack.c.h.b16 %v561
      %v604 = vunpack.c.l.b16 %v562
      %v605 = vunpack.c.h.b16 %v562
      %v606 = vunpack.c.l.b16 %v563
      %v607 = vunpack.c.h.b16 %v563
      %v608 = vunpack.c.l.b16 %v564
      %v609 = vunpack.c.h.b16 %v564
      %v610 = vunpack.c.l.b16 %v565
      %v611 = vunpack.c.h.b16 %v565
      %v612 = vunpack.c.l.b16 %v566
      %v613 = vunpack.c.h.b16 %v566
      %v614 = vunpack.c.l.b16 %v567
      %v615 = vunpack.c.h.b16 %v567
      %v616 = vpack.c.b16 %v584, %v584
      %v617 = vpack.c.b16 %v585, %v585
      %v618 = vpack.c.b16 %v586, %v586
      %v619 = vpack.c.b16 %v587, %v587
      %v620 = vpack.c.b16 %v588, %v588
      %v621 = vpack.c.b16 %v589, %v589
      %v622 = vpack.c.b16 %v590, %v590
      %v623 = vpack.c.b16 %v591, %v591
      %v624 = vpack.c.b16 %v592, %v592
      %v625 = vpack.c.b16 %v593, %v593
      %v626 = vpack.c.b16 %v594, %v594
      %v627 = vpack.c.b16 %v595, %v595
      %v628 = vpack.c.b16 %v596, %v596
      %v629 = vpack.c.b16 %v597, %v597
      %v630 = vpack.c.b16 %v598, %v598
      %v631 = vpack.c.b16 %v599, %v599
      %v632 = vpack.c.b16 %v600, %v600
      %v633 = vpack.c.b16 %v601, %v601
      %v634 = vpack.c.b16 %v602, %v602
      %v635 = vpack.c.b16 %v603, %v603
      %v636 = vpack.c.b16 %v604, %v604
      %v637 = vpack.c.b16 %v605, %v605
      %v638 = vpack.c.b16 %v606, %v606
      %v639 = vpack.c.b16 %v607, %v607
      %v640 = vpack.c.b16 %v608, %v608
      %v641 = vpack.c.b16 %v609, %v609
      %v642 = vpack.c.b16 %v610, %v610
      %v643 = vpack.c.b16 %v611, %v611
      %v644 = vpack.c.b16 %v612, %v612
      %v645 = vpack.c.b16 %v613, %v613
      %v646 = vpack.c.b16 %v614, %v614
      %v647 = vpack.c.b16 %v615, %v615
      %vm680 = vcmask 191488
      %681 = vst.msk [vmem:[%s172] sm:$0xf] %vm680, %v616
      %682 = vst.msk [vmem:[%s172 + $0x4] sm:$0xf] %vm680, %v617
      %683 = vst.msk [vmem:[%s172 + $0x8] sm:$0xf] %vm680, %v618
      %684 = vst.msk [vmem:[%s172 + $0xc] sm:$0xf] %vm680, %v619
      %685 = vst.msk [vmem:[%s172 + $0x10] sm:$0xf] %vm680, %v620
      %686 = vst.msk [vmem:[%s172 + $0x14] sm:$0xf] %vm680, %v621
      %687 = vst.msk [vmem:[%s172 + $0x18] sm:$0xf] %vm680, %v622
      %688 = vst.msk [vmem:[%s172 + $0x1c] sm:$0xf] %vm680, %v623
      %689 = vst.msk [vmem:[%s172 + $0x20] sm:$0xf] %vm680, %v624
      %690 = vst.msk [vmem:[%s172 + $0x24] sm:$0xf] %vm680, %v625
      %691 = vst.msk [vmem:[%s172 + $0x28] sm:$0xf] %vm680, %v626
      %692 = vst.msk [vmem:[%s172 + $0x2c] sm:$0xf] %vm680, %v627
      %693 = vst.msk [vmem:[%s172 + $0x30] sm:$0xf] %vm680, %v628
      %694 = vst.msk [vmem:[%s172 + $0x34] sm:$0xf] %vm680, %v629
      %695 = vst.msk [vmem:[%s172 + $0x38] sm:$0xf] %vm680, %v630
      %696 = vst.msk [vmem:[%s172 + $0x3c] sm:$0xf] %vm680, %v631
      %697 = vst.msk [vmem:[%s172 + $0x40] sm:$0xf] %vm680, %v632
      %698 = vst.msk [vmem:[%s172 + $0x44] sm:$0xf] %vm680, %v633
      %699 = vst.msk [vmem:[%s172 + $0x48] sm:$0xf] %vm680, %v634
      %700 = vst.msk [vmem:[%s172 + $0x4c] sm:$0xf] %vm680, %v635
      %701 = vst.msk [vmem:[%s172 + $0x50] sm:$0xf] %vm680, %v636
      %702 = vst.msk [vmem:[%s172 + $0x54] sm:$0xf] %vm680, %v637
      %703 = vst.msk [vmem:[%s172 + $0x58] sm:$0xf] %vm680, %v638
      %704 = vst.msk [vmem:[%s172 + $0x5c] sm:$0xf] %vm680, %v639
      %705 = vst.msk [vmem:[%s172 + $0x60] sm:$0xf] %vm680, %v640
      %706 = vst.msk [vmem:[%s172 + $0x64] sm:$0xf] %vm680, %v641
      %707 = vst.msk [vmem:[%s172 + $0x68] sm:$0xf] %vm680, %v642
      %708 = vst.msk [vmem:[%s172 + $0x6c] sm:$0xf] %vm680, %v643
      %709 = vst.msk [vmem:[%s172 + $0x70] sm:$0xf] %vm680, %v644
      %710 = vst.msk [vmem:[%s172 + $0x74] sm:$0xf] %vm680, %v645
      %711 = vst.msk [vmem:[%s172 + $0x78] sm:$0xf] %vm680, %v646
      %712 = vst.msk [vmem:[%s172 + $0x7c] sm:$0xf] %vm680, %v647
      %s713 = smul.u32 32, %s14
      %p714 = scmp.lt.s32.totalorder %s713, 63
      %s715 = scalar_select %p714, %s713, 63
      %s716 = smul.addr %s715, 4
      %s717 = scalar_lea.vmem %s3, %s716
      // Predicated region
      $region33: #{_lambda_.34} parent=31 // pred_check
        %p718 = pneg %p100
      $region34: #{_lambda_.34} parent=31 // pred_check_branch
        %720 = sbr.rel (%p718) target = $region36
      $region35: #{_lambda_.34} parent=31 // pred_region
        %s721 = smul.u32 32, %s14
      $region36: #{_lambda_.34} parent=31 // pred_fallthru
        _
    $region32: #{_lambda_.34} parent=5 // pred_fallthru
      _
    %p722 = scmp.le.s32.totalorder 2, %s9
    // Predicated region
    $region37: #{_lambda_.34} parent=5 // pred_check
      %p723 = pneg %p722
    $region38: #{_lambda_.34} parent=5 // pred_check_branch
      %725 = sbr.rel (%p723) target = $region40
    $region39: #{_lambda_.34} parent=5 // pred_region
      %s726 = ssub.s32 %s9, 2
      // Predicated region
      $region41: #{_lambda_.34} parent=39 // pred_check
        %p727 = pneg %p106
      $region42: #{_lambda_.34} parent=39 // pred_check_branch
        %729 = sbr.rel (%p727) target = $region44
      $region43: #{_lambda_.34} parent=39 // pred_region
        %s730 = smul.u32 32, %s15
        %p731 = scmp.lt.s32.totalorder %s730, 63
        %s732 = scalar_select %p731, %s730, 63
        %s733 = smul.addr %s732, 4
        %s734 = scalar_lea.vmem %s3, %s733
      $region44: #{_lambda_.34} parent=39 // pred_fallthru
        _
    $region40: #{_lambda_.34} parent=5 // pred_fallthru
      _
  $region6: #{_lambda_.34} parent=0 // loop_footer
    %s13 = sadd.s32 1, %s9
  $region7: #{_lambda_.34} parent=0 // loop_footer_branch
    %8 = sbr.rel target = $region3
  $region8: #{_lambda_.34} parent=0 // loop_exit
    _

// kernel: _lambda_.31
$region0: #{_lambda_.31}
  #allocation0 [shape = 'u32[]', space=smem, size = 0x4, offset = 0x4, fixed_abs, tag = 'smem constant byte address 0x4 - core index']
  #allocation1 [shape = 'u32[144,128]{1,0:T(1,128)}', space=vmem, size = 0x12000, scoped, tag = 'internal scratch']
  %s0 = inlined_call_operand.vmem [shape: bf16[2,17,17,24], index: 0, kind: input, shape index: {}]
  %s1 = inlined_call_operand.vmem [shape: bf16[2,17,17,24], index: 1, kind: input, shape index: {}]
  %s2 = inlined_call_operand.vmem [shape: bf16[2,17,17,24], index: 2, kind: input, shape index: {}]
  %s3 = inlined_call_operand.vmem [shape: bf16[2,17,17,24], index: 3, kind: input, shape index: {}]
  %s4 = inlined_call_operand.vmem [shape: bf16[2,16,16,24], index: 4, kind: output, shape index: {}]
  %s5 = sld [smem:[#allocation0]]
  $region49: #{_lambda_.31} parent=0
    _
  %s7 = ssub.s32 1, %s5
  %s8 = scalar_select 0, %s7, %s5
  loop: start=0, step=1, limit=4
  $region2: #{_lambda_.31} parent=0 // loop_pre_header
    _
  $region3: #{_lambda_.31} parent=0 // loop_header
    %s10 = sphi 0, %s14
    %p11 = scmp.ge.s32.totalorder %s10, 4
    %s20 = sphi 0, %s22
    %s23 = sphi 0, %s20
    %s24 = sphi 0, %s23
    %s40 = sphi 0, %s24
    %s46 = sphi 0, %s48
    %s49 = sphi 0, %s46
    %s50 = sphi 0, %s49
    %s66 = sphi 0, %s50
    %s72 = sphi 0, %s74
    %s75 = sphi 0, %s72
    %s76 = sphi 0, %s75
    %s92 = sphi 0, %s76
    %s98 = sphi 0, %s100
    %s101 = sphi 0, %s98
    %s102 = sphi 0, %s101
    %s118 = sphi 0, %s102
    %s124 = sphi 0, %s126
    %s127 = sphi 0, %s124
    %s128 = sphi 0, %s127
    %s144 = sphi 0, %s128
  $region4: #{_lambda_.31} parent=0 // loop_header_branch
    %13 = sbr.rel (%p11) target = $region8
  $region5: #{_lambda_.31} parent=0 // loop_body
    %s15 = ssub.s32 %s10, 1
    %s16 = ssub.s32 %s10, 2
    %s17 = sadd.s32 %s10, 1
    %s18 = ssub.s32 %s10, %s17
    %p19 = scmp.eq.s32.totalorder %s18, 0
    %s21 = sadd.s32 %s20, 1
    %s22 = scalar_select %p19, %s20, %s21
    %p25 = pneg %p19
    %p26 = scmp.eq.s32.totalorder %s10, 1
    %p27 = por %p25, %p26
    %p28 = scmp.ne.s32.totalorder %s20, %s23
    %p29 = scmp.eq.s32.totalorder %s10, 0
    %p30 = por %p28, %p29
    %p31 = scmp.ne.s32.totalorder %s20, %s23
    %p32 = scmp.eq.s32.totalorder %s15, 1
    %p33 = por %p31, %p32
    %p34 = scmp.ne.s32.totalorder %s23, %s24
    %p35 = scmp.eq.s32.totalorder %s15, 0
    %p36 = por %p34, %p35
    %p37 = scmp.ne.s32.totalorder %s23, %s24
    %p38 = scmp.eq.s32.totalorder %s16, 1
    %p39 = por %p37, %p38
    %p41 = scmp.ne.s32.totalorder %s24, %s40
    %p42 = scmp.eq.s32.totalorder %s16, 0
    %p43 = por %p41, %p42
    %s44 = ssub.s32 %s10, %s17
    %p45 = scmp.eq.s32.totalorder %s44, 0
    %s47 = sadd.s32 %s46, 1
    %s48 = scalar_select %p45, %s46, %s47
    %p51 = pneg %p45
    %p52 = scmp.eq.s32.totalorder %s10, 1
    %p53 = por %p51, %p52
    %p54 = scmp.ne.s32.totalorder %s46, %s49
    %p55 = scmp.eq.s32.totalorder %s10, 0
    %p56 = por %p54, %p55
    %p57 = scmp.ne.s32.totalorder %s46, %s49
    %p58 = scmp.eq.s32.totalorder %s15, 1
    %p59 = por %p57, %p58
    %p60 = scmp.ne.s32.totalorder %s49, %s50
    %p61 = scmp.eq.s32.totalorder %s15, 0
    %p62 = por %p60, %p61
    %p63 = scmp.ne.s32.totalorder %s49, %s50
    %p64 = scmp.eq.s32.totalorder %s16, 1
    %p65 = por %p63, %p64
    %p67 = scmp.ne.s32.totalorder %s50, %s66
    %p68 = scmp.eq.s32.totalorder %s16, 0
    %p69 = por %p67, %p68
    %s70 = ssub.s32 %s10, %s17
    %p71 = scmp.eq.s32.totalorder %s70, 0
    %s73 = sadd.s32 %s72, 1
    %s74 = scalar_select %p71, %s72, %s73
    %p77 = pneg %p71
    %p78 = scmp.eq.s32.totalorder %s10, 1
    %p79 = por %p77, %p78
    %p80 = scmp.ne.s32.totalorder %s72, %s75
    %p81 = scmp.eq.s32.totalorder %s10, 0
    %p82 = por %p80, %p81
    %p83 = scmp.ne.s32.totalorder %s72, %s75
    %p84 = scmp.eq.s32.totalorder %s15, 1
    %p85 = por %p83, %p84
    %p86 = scmp.ne.s32.totalorder %s75, %s76
    %p87 = scmp.eq.s32.totalorder %s15, 0
    %p88 = por %p86, %p87
    %p89 = scmp.ne.s32.totalorder %s75, %s76
    %p90 = scmp.eq.s32.totalorder %s16, 1
    %p91 = por %p89, %p90
    %p93 = scmp.ne.s32.totalorder %s76, %s92
    %p94 = scmp.eq.s32.totalorder %s16, 0
    %p95 = por %p93, %p94
    %s96 = ssub.s32 %s10, %s17
    %p97 = scmp.eq.s32.totalorder %s96, 0
    %s99 = sadd.s32 %s98, 1
    %s100 = scalar_select %p97, %s98, %s99
    %p103 = pneg %p97
    %p104 = scmp.eq.s32.totalorder %s10, 1
    %p105 = por %p103, %p104
    %p106 = scmp.ne.s32.totalorder %s98, %s101
    %p107 = scmp.eq.s32.totalorder %s10, 0
    %p108 = por %p106, %p107
    %p109 = scmp.ne.s32.totalorder %s98, %s101
    %p110 = scmp.eq.s32.totalorder %s15, 1
    %p111 = por %p109, %p110
    %p112 = scmp.ne.s32.totalorder %s101, %s102
    %p113 = scmp.eq.s32.totalorder %s15, 0
    %p114 = por %p112, %p113
    %p115 = scmp.ne.s32.totalorder %s101, %s102
    %p116 = scmp.eq.s32.totalorder %s16, 1
    %p117 = por %p115, %p116
    %p119 = scmp.ne.s32.totalorder %s102, %s118
    %p120 = scmp.eq.s32.totalorder %s16, 0
    %p121 = por %p119, %p120
    %s122 = ssub.s32 %s10, %s17
    %p123 = scmp.eq.s32.totalorder %s122, 0
    %s125 = sadd.s32 %s124, 1
    %s126 = scalar_select %p123, %s124, %s125
    %p129 = pneg %p123
    %p130 = scmp.eq.s32.totalorder %s10, 1
    %p131 = por %p129, %p130
    %p132 = scmp.ne.s32.totalorder %s124, %s127
    %p133 = scmp.eq.s32.totalorder %s10, 0
    %p134 = por %p132, %p133
    %p135 = scmp.ne.s32.totalorder %s124, %s127
    %p136 = scmp.eq.s32.totalorder %s15, 1
    %p137 = por %p135, %p136
    %p138 = scmp.ne.s32.totalorder %s127, %s128
    %p139 = scmp.eq.s32.totalorder %s15, 0
    %p140 = por %p138, %p139
    %p141 = scmp.ne.s32.totalorder %s127, %s128
    %p142 = scmp.eq.s32.totalorder %s16, 1
    %p143 = por %p141, %p142
    %p145 = scmp.ne.s32.totalorder %s128, %s144
    %p146 = scmp.eq.s32.totalorder %s16, 0
    %p147 = por %p145, %p146
    %p148 = scmp.le.s32.totalorder 1, %s10
    %p149 = scmp.lt.s32.totalorder %s10, 3
    %p150 = pnand %p148, %p149
    %p151 = pneg %p150
    // Predicated region
    $region9: #{_lambda_.31} parent=5 // pred_check
      _
    $region10: #{_lambda_.31} parent=5 // pred_check_branch
      %153 = sbr.rel (%p150) target = $region12
    $region11: #{_lambda_.31} parent=5 // pred_region
      %s154 = ssub.s32 %s10, 1
    $region12: #{_lambda_.31} parent=5 // pred_fallthru
      _
    %p155 = scmp.lt.s32.totalorder %s10, 2
    // Predicated region
    $region13: #{_lambda_.31} parent=5 // pred_check
      %p156 = pneg %p155
    $region14: #{_lambda_.31} parent=5 // pred_check_branch
      %158 = sbr.rel (%p156) target = $region16
    $region15: #{_lambda_.31} parent=5 // pred_region
      // Predicated region
      $region17: #{_lambda_.31} parent=15 // pred_check
        %p159 = pneg %p30
      $region18: #{_lambda_.31} parent=15 // pred_check_branch
        %161 = sbr.rel (%p159) target = $region20
      $region19: #{_lambda_.31} parent=15 // pred_region
        %p162 = scmp.lt.s32.totalorder %s10, 1
        %s163 = scalar_select %p162, %s10, 1
        %s164 = smul.addr %s163, 51
        %s165 = smul.addr %s164, 4
        %s166 = scalar_lea.vmem %s0, %s165
      $region20: #{_lambda_.31} parent=15 // pred_fallthru
        _
      // Predicated region
      $region21: #{_lambda_.31} parent=15 // pred_check
        %p167 = pneg %p56
      $region22: #{_lambda_.31} parent=15 // pred_check_branch
        %169 = sbr.rel (%p167) target = $region24
      $region23: #{_lambda_.31} parent=15 // pred_region
        %p170 = scmp.lt.s32.totalorder %s10, 1
        %s171 = scalar_select %p170, %s10, 1
        %s172 = smul.addr %s171, 51
        %s173 = smul.addr %s172, 4
        %s174 = scalar_lea.vmem %s1, %s173
      $region24: #{_lambda_.31} parent=15 // pred_fallthru
        _
      // Predicated region
      $region25: #{_lambda_.31} parent=15 // pred_check
        %p175 = pneg %p82
      $region26: #{_lambda_.31} parent=15 // pred_check_branch
        %177 = sbr.rel (%p175) target = $region28
      $region27: #{_lambda_.31} parent=15 // pred_region
        %p178 = scmp.lt.s32.totalorder %s10, 1
        %s179 = scalar_select %p178, %s10, 1
        %s180 = smul.addr %s179, 51
        %s181 = smul.addr %s180, 4
        %s182 = scalar_lea.vmem %s2, %s181
      $region28: #{_lambda_.31} parent=15 // pred_fallthru
        _
      // Predicated region
      $region29: #{_lambda_.31} parent=15 // pred_check
        %p183 = pneg %p108
      $region30: #{_lambda_.31} parent=15 // pred_check_branch
        %185 = sbr.rel (%p183) target = $region32
      $region31: #{_lambda_.31} parent=15 // pred_region
        %p186 = scmp.lt.s32.totalorder %s10, 1
        %s187 = scalar_select %p186, %s10, 1
        %s188 = smul.addr %s187, 51
        %s189 = smul.addr %s188, 4
        %s190 = scalar_lea.vmem %s3, %s189
      $region32: #{_lambda_.31} parent=15 // pred_fallthru
        _
    $region16: #{_lambda_.31} parent=5 // pred_fallthru
      _
    %p191 = scmp.le.s32.totalorder 1, %s10
    %p192 = scmp.lt.s32.totalorder %s10, 3
    %p193 = pnand %p191, %p192
    %p194 = pneg %p193
    // Predicated region
    $region33: #{_lambda_.31} parent=5 // pred_check
      _
    $region34: #{_lambda_.31} parent=5 // pred_check_branch
      %196 = sbr.rel (%p193) target = $region36
    $region35: #{_lambda_.31} parent=5 // pred_region
      %s197 = ssub.s32 %s10, 1
      %p198 = scmp.lt.s32.totalorder %s15, 1
      %s199 = scalar_select %p198, %s15, 1
      %s200 = smul.addr %s199, 51
      %s201 = smul.addr %s200, 4
      %s202 = scalar_lea.vmem %s0, %s201
      %p203 = pneg %p36
      %p204 = pneg %p33
      %p205 = scmp.lt.s32.totalorder %s15, 1
      %s206 = scalar_select %p205, %s15, 1
      %s207 = smul.addr %s206, 51
      %s208 = smul.addr %s207, 4
      %s209 = scalar_lea.vmem %s1, %s208
      %p210 = pneg %p62
      %p211 = pneg %p59
      %p212 = scmp.lt.s32.totalorder %s15, 1
      %s213 = scalar_select %p212, %s15, 1
      %s214 = smul.addr %s213, 51
      %s215 = smul.addr %s214, 4
      %s216 = scalar_lea.vmem %s2, %s215
      %p217 = pneg %p88
      %p218 = pneg %p85
      %p219 = scmp.lt.s32.totalorder %s15, 1
      %s220 = scalar_select %p219, %s15, 1
      %s221 = smul.addr %s220, 51
      %s222 = smul.addr %s221, 4
      %s223 = scalar_lea.vmem %s3, %s222
      %p224 = pneg %p114
      %p225 = pneg %p111
      %p226 = pneg %p140
      %p227 = pneg %p137
      %p228 = scmp.lt.s32.totalorder %s15, 1
      %s229 = scalar_select %p228, %s15, 1
      %s230 = smul.addr %s229, 32
      %s231 = smul.addr %s230, 4
      %s232 = scalar_lea.vmem %s4, %s231
      %p233 = scmp.lt.s32.totalorder %s15, 1
      %s234 = scalar_select %p233, %s15, 1
      %s235 = smul.addr %s234, 51
      %s236 = smul.addr %s235, 4
      %s237 = scalar_lea.vmem %s0, %s236
      %p238 = scmp.lt.s32.totalorder %s15, 1
      %s239 = scalar_select %p238, %s15, 1
      %s240 = smul.addr %s239, 51
      %s241 = smul.addr %s240, 4
      %s242 = scalar_lea.vmem %s1, %s241
      %p243 = scmp.lt.s32.totalorder %s15, 1
      %s244 = scalar_select %p243, %s15, 1
      %s245 = smul.addr %s244, 51
      %s246 = smul.addr %s245, 4
      %s247 = scalar_lea.vmem %s2, %s246
      %p248 = scmp.lt.s32.totalorder %s15, 1
      %s249 = scalar_select %p248, %s15, 1
      %s250 = smul.addr %s249, 51
      %s251 = smul.addr %s250, 4
      %s252 = scalar_lea.vmem %s3, %s251
      %p253 = scmp.lt.s32.totalorder %s15, 1
      %s254 = scalar_select %p253, %s15, 1
      %s255 = smul.addr %s254, 32
      %s256 = smul.addr %s255, 4
      %s257 = scalar_lea.vmem %s4, %s256
      %v258 = vld [vmem:[%s237] sm:$0xf]
      %v259 = vld [vmem:[%s237 + $0x4] sm:$0xf]
      %v260 = vld [vmem:[%s237 + $0x8] sm:$0x1]
      %v261 = vld [vmem:[%s237 + $0xc] sm:$0xf]
      %v262 = vld [vmem:[%s237 + $0x10] sm:$0xf]
      %v263 = vld [vmem:[%s237 + $0x14] sm:$0x1]
      %v264 = vld [vmem:[%s237 + $0x18] sm:$0xf]
      %v265 = vld [vmem:[%s237 + $0x1c] sm:$0xf]
      %v266 = vld [vmem:[%s237 + $0x20] sm:$0x1]
      %v267 = vld [vmem:[%s237 + $0x24] sm:$0xf]
      %v268 = vld [vmem:[%s237 + $0x28] sm:$0xf]
      %v269 = vld [vmem:[%s237 + $0x2c] sm:$0x1]
      %v270 = vld [vmem:[%s237 + $0x30] sm:$0xf]
      %v271 = vld [vmem:[%s237 + $0x34] sm:$0xf]
      %v272 = vld [vmem:[%s237 + $0x38] sm:$0x1]
      %v273 = vld [vmem:[%s237 + $0x3c] sm:$0xf]
      %v274 = vld [vmem:[%s237 + $0x40] sm:$0xf]
      %v275 = vld [vmem:[%s237 + $0x44] sm:$0x1]
      %v276 = vld [vmem:[%s237 + $0x48] sm:$0xf]
      %v277 = vld [vmem:[%s237 + $0x4c] sm:$0xf]
      %v278 = vld [vmem:[%s237 + $0x50] sm:$0x1]
      %v279 = vld [vmem:[%s237 + $0x54] sm:$0xf]
      %v280 = vld [vmem:[%s237 + $0x58] sm:$0xf]
      %v281 = vld [vmem:[%s237 + $0x5c] sm:$0x1]
      %v282 = vld [vmem:[%s237 + $0x60] sm:$0xf]
      %v283 = vld [vmem:[%s237 + $0x64] sm:$0xf]
      %v284 = vld [vmem:[%s237 + $0x68] sm:$0x1]
      %v285 = vld [vmem:[%s237 + $0x6c] sm:$0xf]
      %v286 = vld [vmem:[%s237 + $0x70] sm:$0xf]
      %v287 = vld [vmem:[%s237 + $0x74] sm:$0x1]
      %v288 = vld [vmem:[%s237 + $0x78] sm:$0xf]
      %v289 = vld [vmem:[%s237 + $0x7c] sm:$0xf]
      %v290 = vld [vmem:[%s237 + $0x80] sm:$0x1]
      %v291 = vld [vmem:[%s237 + $0x84] sm:$0xf]
      %v292 = vld [vmem:[%s237 + $0x88] sm:$0xf]
      %v293 = vld [vmem:[%s237 + $0x8c] sm:$0x1]
      %v294 = vld [vmem:[%s237 + $0x90] sm:$0xf]
      %v295 = vld [vmem:[%s237 + $0x94] sm:$0xf]
      %v296 = vld [vmem:[%s237 + $0x98] sm:$0x1]
      %v297 = vld [vmem:[%s237 + $0x9c] sm:$0xf]
      %v298 = vld [vmem:[%s237 + $0xa0] sm:$0xf]
      %v299 = vld [vmem:[%s237 + $0xa4] sm:$0x1]
      %v300 = vld [vmem:[%s237 + $0xa8] sm:$0xf]
      %v301 = vld [vmem:[%s237 + $0xac] sm:$0xf]
      %v302 = vld [vmem:[%s237 + $0xb0] sm:$0x1]
      %v303 = vld [vmem:[%s237 + $0xb4] sm:$0xf]
      %v304 = vld [vmem:[%s237 + $0xb8] sm:$0xf]
      %v305 = vld [vmem:[%s237 + $0xbc] sm:$0x1]
      %v306 = vld [vmem:[%s237 + $0xc0] sm:$0xf]
      %v307 = vld [vmem:[%s237 + $0xc4] sm:$0xf]
      %v308 = vld [vmem:[%s237 + $0xc8] sm:$0x1]
      %v309 = vld [vmem:[%s242] sm:$0xf]
      %v310 = vld [vmem:[%s242 + $0x4] sm:$0xf]
      %v311 = vld [vmem:[%s242 + $0xc] sm:$0xf]
      %v312 = vld [vmem:[%s242 + $0x10] sm:$0xf]
      %v313 = vld [vmem:[%s242 + $0x18] sm:$0xf]
      %v314 = vld [vmem:[%s242 + $0x1c] sm:$0xf]
      %v315 = vld [vmem:[%s242 + $0x24] sm:$0xf]
      %v316 = vld [vmem:[%s242 + $0x28] sm:$0xf]
      %v317 = vld [vmem:[%s242 + $0x30] sm:$0xf]
      %v318 = vld [vmem:[%s242 + $0x34] sm:$0xf]
      %v319 = vld [vmem:[%s242 + $0x3c] sm:$0xf]
      %v320 = vld [vmem:[%s242 + $0x40] sm:$0xf]
      %v321 = vld [vmem:[%s242 + $0x48] sm:$0xf]
      %v322 = vld [vmem:[%s242 + $0x4c] sm:$0xf]
      %v323 = vld [vmem:[%s242 + $0x54] sm:$0xf]
      %v324 = vld [vmem:[%s242 + $0x58] sm:$0xf]
      %v325 = vld [vmem:[%s242 + $0x60] sm:$0xf]
      %v326 = vld [vmem:[%s242 + $0x64] sm:$0xf]
      %v327 = vld [vmem:[%s242 + $0x6c] sm:$0xf]
      %v328 = vld [vmem:[%s242 + $0x70] sm:$0xf]
      %v329 = vld [vmem:[%s242 + $0x78] sm:$0xf]
      %v330 = vld [vmem:[%s242 + $0x7c] sm:$0xf]
      %v331 = vld [vmem:[%s242 + $0x84] sm:$0xf]
      %v332 = vld [vmem:[%s242 + $0x88] sm:$0xf]
      %v333 = vld [vmem:[%s242 + $0x90] sm:$0xf]
      %v334 = vld [vmem:[%s242 + $0x94] sm:$0xf]
      %v335 = vld [vmem:[%s242 + $0x9c] sm:$0xf]
      %v336 = vld [vmem:[%s242 + $0xa0] sm:$0xf]
      %v337 = vld [vmem:[%s242 + $0xa8] sm:$0xf]
      %v338 = vld [vmem:[%s242 + $0xac] sm:$0xf]
      %v339 = vld [vmem:[%s242 + $0xb4] sm:$0xf]
      %v340 = vld [vmem:[%s242 + $0xb8] sm:$0xf]
      %v341 = vld [vmem:[%s242 + $0xc0] sm:$0xf]
      %v342 = vld [vmem:[%s242 + $0xc4] sm:$0xf]
      %v343 = vld [vmem:[%s247] sm:$0xf]
      %v344 = vld [vmem:[%s247 + $0x4] sm:$0xf]
      %v345 = vld [vmem:[%s247 + $0x8] sm:$0x1]
      %v346 = vld [vmem:[%s247 + $0xc] sm:$0xf]
      %v347 = vld [vmem:[%s247 + $0x10] sm:$0xf]
      %v348 = vld [vmem:[%s247 + $0x14] sm:$0x1]
      %v349 = vld [vmem:[%s247 + $0x18] sm:$0xf]
      %v350 = vld [vmem:[%s247 + $0x1c] sm:$0xf]
      %v351 = vld [vmem:[%s247 + $0x20] sm:$0x1]
      %v352 = vld [vmem:[%s247 + $0x24] sm:$0xf]
      %v353 = vld [vmem:[%s247 + $0x28] sm:$0xf]
      %v354 = vld [vmem:[%s247 + $0x2c] sm:$0x1]
      %v355 = vld [vmem:[%s247 + $0x30] sm:$0xf]
      %v356 = vld [vmem:[%s247 + $0x34] sm:$0xf]
      %v357 = vld [vmem:[%s247 + $0x38] sm:$0x1]
      %v358 = vld [vmem:[%s247 + $0x3c] sm:$0xf]
      %v359 = vld [vmem:[%s247 + $0x40] sm:$0xf]
      %v360 = vld [vmem:[%s247 + $0x44] sm:$0x1]
      %v361 = vld [vmem:[%s247 + $0x48] sm:$0xf]
      %v362 = vld [vmem:[%s247 + $0x4c] sm:$0xf]
      %v363 = vld [vmem:[%s247 + $0x50] sm:$0x1]
      %v364 = vld [vmem:[%s247 + $0x54] sm:$0xf]
      %v365 = vld [vmem:[%s247 + $0x58] sm:$0xf]
      %v366 = vld [vmem:[%s247 + $0x5c] sm:$0x1]
      %v367 = vld [vmem:[%s247 + $0x60] sm:$0xf]
      %v368 = vld [vmem:[%s247 + $0x64] sm:$0xf]
      %v369 = vld [vmem:[%s247 + $0x68] sm:$0x1]
      %v370 = vld [vmem:[%s247 + $0x6c] sm:$0xf]
      %v371 = vld [vmem:[%s247 + $0x70] sm:$0xf]
      %v372 = vld [vmem:[%s247 + $0x74] sm:$0x1]
      %v373 = vld [vmem:[%s247 + $0x78] sm:$0xf]
      %v374 = vld [vmem:[%s247 + $0x7c] sm:$0xf]
      %v375 = vld [vmem:[%s247 + $0x80] sm:$0x1]
      %v376 = vld [vmem:[%s247 + $0x84] sm:$0xf]
      %v377 = vld [vmem:[%s247 + $0x88] sm:$0xf]
      %v378 = vld [vmem:[%s247 + $0x8c] sm:$0x1]
      %v379 = vld [vmem:[%s247 + $0x90] sm:$0xf]
      %v380 = vld [vmem:[%s247 + $0x94] sm:$0xf]
      %v381 = vld [vmem:[%s247 + $0x98] sm:$0x1]
      %v382 = vld [vmem:[%s247 + $0x9c] sm:$0xf]
      %v383 = vld [vmem:[%s247 + $0xa0] sm:$0xf]
      %v384 = vld [vmem:[%s247 + $0xa4] sm:$0x1]
      %v385 = vld [vmem:[%s247 + $0xa8] sm:$0xf]
      %v386 = vld [vmem:[%s247 + $0xac] sm:$0xf]
      %v387 = vld [vmem:[%s247 + $0xb0] sm:$0x1]
      %v388 = vld [vmem:[%s247 + $0xb4] sm:$0xf]
      %v389 = vld [vmem:[%s247 + $0xb8] sm:$0xf]
      %v390 = vld [vmem:[%s247 + $0xbc] sm:$0x1]
      %v391 = vld [vmem:[%s252] sm:$0xf]
      %v392 = vld [vmem:[%s252 + $0x4] sm:$0xf]
      %v393 = vld [vmem:[%s252 + $0xc] sm:$0xf]
      %v394 = vld [vmem:[%s252 + $0x10] sm:$0xf]
      %v395 = vld [vmem:[%s252 + $0x18] sm:$0xf]
      %v396 = vld [vmem:[%s252 + $0x1c] sm:$0xf]
      %v397 = vld [vmem:[%s252 + $0x24] sm:$0xf]
      %v398 = vld [vmem:[%s252 + $0x28] sm:$0xf]
      %v399 = vld [vmem:[%s252 + $0x30] sm:$0xf]
      %v400 = vld [vmem:[%s252 + $0x34] sm:$0xf]
      %v401 = vld [vmem:[%s252 + $0x3c] sm:$0xf]
      %v402 = vld [vmem:[%s252 + $0x40] sm:$0xf]
      %v403 = vld [vmem:[%s252 + $0x48] sm:$0xf]
      %v404 = vld [vmem:[%s252 + $0x4c] sm:$0xf]
      %v405 = vld [vmem:[%s252 + $0x54] sm:$0xf]
      %v406 = vld [vmem:[%s252 + $0x58] sm:$0xf]
      %v407 = vld [vmem:[%s252 + $0x60] sm:$0xf]
      %v408 = vld [vmem:[%s252 + $0x64] sm:$0xf]
      %v409 = vld [vmem:[%s252 + $0x6c] sm:$0xf]
      %v410 = vld [vmem:[%s252 + $0x70] sm:$0xf]
      %v411 = vld [vmem:[%s252 + $0x78] sm:$0xf]
      %v412 = vld [vmem:[%s252 + $0x7c] sm:$0xf]
      %v413 = vld [vmem:[%s252 + $0x84] sm:$0xf]
      %v414 = vld [vmem:[%s252 + $0x88] sm:$0xf]
      %v415 = vld [vmem:[%s252 + $0x90] sm:$0xf]
      %v416 = vld [vmem:[%s252 + $0x94] sm:$0xf]
      %v417 = vld [vmem:[%s252 + $0x9c] sm:$0xf]
      %v418 = vld [vmem:[%s252 + $0xa0] sm:$0xf]
      %v419 = vld [vmem:[%s252 + $0xa8] sm:$0xf]
      %v420 = vld [vmem:[%s252 + $0xac] sm:$0xf]
      %v421 = vld [vmem:[%s252 + $0xb4] sm:$0xf]
      %v422 = vld [vmem:[%s252 + $0xb8] sm:$0xf]
      %v423 = vmax.bf16 %v258, %v309
      %v424 = vmax.bf16 %v259, %v310
      %v425 = vmax.bf16 %v261, %v311
      %v426 = vmax.bf16 %v262, %v312
      %v427 = vmax.bf16 %v264, %v313
      %v428 = vmax.bf16 %v265, %v314
      %v429 = vmax.bf16 %v267, %v315
      %v430 = vmax.bf16 %v268, %v316
      %v431 = vmax.bf16 %v270, %v317
      %v432 = vmax.bf16 %v271, %v318
      %v433 = vmax.bf16 %v273, %v319
      %v434 = vmax.bf16 %v274, %v320
      %v435 = vmax.bf16 %v276, %v321
      %v436 = vmax.bf16 %v277, %v322
      %v437 = vmax.bf16 %v279, %v323
      %v438 = vmax.bf16 %v280, %v324
      %v439 = vmax.bf16 %v282, %v325
      %v440 = vmax.bf16 %v283, %v326
      %v441 = vmax.bf16 %v285, %v327
      %v442 = vmax.bf16 %v286, %v328
      %v443 = vmax.bf16 %v288, %v329
      %v444 = vmax.bf16 %v289, %v330
      %v445 = vmax.bf16 %v291, %v331
      %v446 = vmax.bf16 %v292, %v332
      %v447 = vmax.bf16 %v294, %v333
      %v448 = vmax.bf16 %v295, %v334
      %v449 = vmax.bf16 %v297, %v335
      %v450 = vmax.bf16 %v298, %v336
      %v451 = vmax.bf16 %v300, %v337
      %v452 = vmax.bf16 %v301, %v338
      %v453 = vmax.bf16 %v303, %v339
      %v454 = vmax.bf16 %v304, %v340
      %vm455 = vsmask.f32 3328
      %vm456 = vsmask.f32 7440
      %vm457 = vmor %vm455, %vm456
      %v459 = vshrl.u32 %v258, 16
      %v461 = vrot.slane %v459, 4
      %v462 = vshll.u32 %v258, 16
      %v464 = vrot.slane %v462, 5
      %v465 = vor.u32 %v461, %v464
      %v466 = vrot.slane %v465, 4
      %v468 = vshll.u32 %v259, 16
      %v470 = vrot.slane %v468, 5
      %v471 = vsel %vm457, %v466, %v470
      %v472 = vshrl.u32 %v259, 16
      %v474 = vrot.slane %v472, 4
      %v475 = vor.u32 %v474, %v470
      %v476 = vrot.slane %v475, 4
      %v478 = vshll.u32 %v260, 16
      %v480 = vrot.slane %v478, 5
      %v481 = vsel %vm457, %v476, %v480
      %v483 = vshrl.u32 %v261, 16
      %v485 = vrot.slane %v483, 4
      %v486 = vshll.u32 %v261, 16
      %v488 = vrot.slane %v486, 5
      %v489 = vor.u32 %v485, %v488
      %v490 = vrot.slane %v489, 4
      %v492 = vshll.u32 %v262, 16
      %v494 = vrot.slane %v492, 5
      %v495 = vsel %vm457, %v490, %v494
      %v496 = vshrl.u32 %v262, 16
      %v498 = vrot.slane %v496, 4
      %v499 = vor.u32 %v498, %v494
      %v500 = vrot.slane %v499, 4
      %v502 = vshll.u32 %v263, 16
      %v504 = vrot.slane %v502, 5
      %v505 = vsel %vm457, %v500, %v504
      %v507 = vshrl.u32 %v264, 16
      %v509 = vrot.slane %v507, 4
      %v510 = vshll.u32 %v264, 16
      %v512 = vrot.slane %v510, 5
      %v513 = vor.u32 %v509, %v512
      %v514 = vrot.slane %v513, 4
      %v516 = vshll.u32 %v265, 16
      %v518 = vrot.slane %v516, 5
      %v519 = vsel %vm457, %v514, %v518
      %v520 = vshrl.u32 %v265, 16
      %v522 = vrot.slane %v520, 4
      %v523 = vor.u32 %v522, %v518
      %v524 = vrot.slane %v523, 4
      %v526 = vshll.u32 %v266, 16
      %v528 = vrot.slane %v526, 5
      %v529 = vsel %vm457, %v524, %v528
      %v531 = vshrl.u32 %v267, 16
      %v533 = vrot.slane %v531, 4
      %v534 = vshll.u32 %v267, 16
      %v536 = vrot.slane %v534, 5
      %v537 = vor.u32 %v533, %v536
      %v538 = vrot.slane %v537, 4
      %v540 = vshll.u32 %v268, 16
      %v542 = vrot.slane %v540, 5
      %v543 = vsel %vm457, %v538, %v542
      %v544 = vshrl.u32 %v268, 16
      %v546 = vrot.slane %v544, 4
      %v547 = vor.u32 %v546, %v542
      %v548 = vrot.slane %v547, 4
      %v550 = vshll.u32 %v269, 16
      %v552 = vrot.slane %v550, 5
      %v553 = vsel %vm457, %v548, %v552
      %v555 = vshrl.u32 %v270, 16
      %v557 = vrot.slane %v555, 4
      %v558 = vshll.u32 %v270, 16
      %v560 = vrot.slane %v558, 5
      %v561 = vor.u32 %v557, %v560
      %v562 = vrot.slane %v561, 4
      %v564 = vshll.u32 %v271, 16
      %v566 = vrot.slane %v564, 5
      %v567 = vsel %vm457, %v562, %v566
      %v568 = vshrl.u32 %v271, 16
      %v570 = vrot.slane %v568, 4
      %v571 = vor.u32 %v570, %v566
      %v572 = vrot.slane %v571, 4
      %v574 = vshll.u32 %v272, 16
      %v576 = vrot.slane %v574, 5
      %v577 = vsel %vm457, %v572, %v576
      %v579 = vshrl.u32 %v273, 16
      %v581 = vrot.slane %v579, 4
      %v582 = vshll.u32 %v273, 16
      %v584 = vrot.slane %v582, 5
      %v585 = vor.u32 %v581, %v584
      %v586 = vrot.slane %v585, 4
      %v588 = vshll.u32 %v274, 16
      %v590 = vrot.slane %v588, 5
      %v591 = vsel %vm457, %v586, %v590
      %v592 = vshrl.u32 %v274, 16
      %v594 = vrot.slane %v592, 4
      %v595 = vor.u32 %v594, %v590
      %v596 = vrot.slane %v595, 4
      %v598 = vshll.u32 %v275, 16
      %v600 = vrot.slane %v598, 5
      %v601 = vsel %vm457, %v596, %v600
      %v603 = vshrl.u32 %v276, 16
      %v605 = vrot.slane %v603, 4
      %v606 = vshll.u32 %v276, 16
      %v608 = vrot.slane %v606, 5
      %v609 = vor.u32 %v605, %v608
      %v610 = vrot.slane %v609, 4
      %v612 = vshll.u32 %v277, 16
      %v614 = vrot.slane %v612, 5
      %v615 = vsel %vm457, %v610, %v614
      %v616 = vshrl.u32 %v277, 16
      %v618 = vrot.slane %v616, 4
      %v619 = vor.u32 %v618, %v614
      %v620 = vrot.slane %v619, 4
      %v622 = vshll.u32 %v278, 16
      %v624 = vrot.slane %v622, 5
      %v625 = vsel %vm457, %v620, %v624
      %v627 = vshrl.u32 %v279, 16
      %v629 = vrot.slane %v627, 4
      %v630 = vshll.u32 %v279, 16
      %v632 = vrot.slane %v630, 5
      %v633 = vor.u32 %v629, %v632
      %v634 = vrot.slane %v633, 4
      %v636 = vshll.u32 %v280, 16
      %v638 = vrot.slane %v636, 5
      %v639 = vsel %vm457, %v634, %v638
      %v640 = vshrl.u32 %v280, 16
      %v642 = vrot.slane %v640, 4
      %v643 = vor.u32 %v642, %v638
      %v644 = vrot.slane %v643, 4
      %v646 = vshll.u32 %v281, 16
      %v648 = vrot.slane %v646, 5
      %v649 = vsel %vm457, %v644, %v648
      %v651 = vshrl.u32 %v282, 16
      %v653 = vrot.slane %v651, 4
      %v654 = vshll.u32 %v282, 16
      %v656 = vrot.slane %v654, 5
      %v657 = vor.u32 %v653, %v656
      %v658 = vrot.slane %v657, 4
      %v660 = vshll.u32 %v283, 16
      %v662 = vrot.slane %v660, 5
      %v663 = vsel %vm457, %v658, %v662
      %v664 = vshrl.u32 %v283, 16
      %v666 = vrot.slane %v664, 4
      %v667 = vor.u32 %v666, %v662
      %v668 = vrot.slane %v667, 4
      %v670 = vshll.u32 %v284, 16
      %v672 = vrot.slane %v670, 5
      %v673 = vsel %vm457, %v668, %v672
      %v675 = vshrl.u32 %v285, 16
      %v677 = vrot.slane %v675, 4
      %v678 = vshll.u32 %v285, 16
      %v680 = vrot.slane %v678, 5
      %v681 = vor.u32 %v677, %v680
      %v682 = vrot.slane %v681, 4
      %v684 = vshll.u32 %v286, 16
      %v686 = vrot.slane %v684, 5
      %v687 = vsel %vm457, %v682, %v686
      %v688 = vshrl.u32 %v286, 16
      %v690 = vrot.slane %v688, 4
      %v691 = vor.u32 %v690, %v686
      %v692 = vrot.slane %v691, 4
      %v694 = vshll.u32 %v287, 16
      %v696 = vrot.slane %v694, 5
      %v697 = vsel %vm457, %v692, %v696
      %v699 = vshrl.u32 %v288, 16
      %v701 = vrot.slane %v699, 4
      %v702 = vshll.u32 %v288, 16
      %v704 = vrot.slane %v702, 5
      %v705 = vor.u32 %v701, %v704
      %v706 = vrot.slane %v705, 4
      %v708 = vshll.u32 %v289, 16
      %v710 = vrot.slane %v708, 5
      %v711 = vsel %vm457, %v706, %v710
      %v712 = vshrl.u32 %v289, 16
      %v714 = vrot.slane %v712, 4
      %v715 = vor.u32 %v714, %v710
      %v716 = vrot.slane %v715, 4
      %v718 = vshll.u32 %v290, 16
      %v720 = vrot.slane %v718, 5
      %v721 = vsel %vm457, %v716, %v720
      %v723 = vshrl.u32 %v291, 16
      %v725 = vrot.slane %v723, 4
      %v726 = vshll.u32 %v291, 16
      %v728 = vrot.slane %v726, 5
      %v729 = vor.u32 %v725, %v728
      %v730 = vrot.slane %v729, 4
      %v732 = vshll.u32 %v292, 16
      %v734 = vrot.slane %v732, 5
      %v735 = vsel %vm457, %v730, %v734
      %v736 = vshrl.u32 %v292, 16
      %v738 = vrot.slane %v736, 4
      %v739 = vor.u32 %v738, %v734
      %v740 = vrot.slane %v739, 4
      %v742 = vshll.u32 %v293, 16
      %v744 = vrot.slane %v742, 5
      %v745 = vsel %vm457, %v740, %v744
      %v747 = vshrl.u32 %v294, 16
      %v749 = vrot.slane %v747, 4
      %v750 = vshll.u32 %v294, 16
      %v752 = vrot.slane %v750, 5
      %v753 = vor.u32 %v749, %v752
      %v754 = vrot.slane %v753, 4
      %v756 = vshll.u32 %v295, 16
      %v758 = vrot.slane %v756, 5
      %v759 = vsel %vm457, %v754, %v758
      %v760 = vshrl.u32 %v295, 16
      %v762 = vrot.slane %v760, 4
      %v763 = vor.u32 %v762, %v758
      %v764 = vrot.slane %v763, 4
      %v766 = vshll.u32 %v296, 16
      %v768 = vrot.slane %v766, 5
      %v769 = vsel %vm457, %v764, %v768
      %v771 = vshrl.u32 %v297, 16
      %v773 = vrot.slane %v771, 4
      %v774 = vshll.u32 %v297, 16
      %v776 = vrot.slane %v774, 5
      %v777 = vor.u32 %v773, %v776
      %v778 = vrot.slane %v777, 4
      %v780 = vshll.u32 %v298, 16
      %v782 = vrot.slane %v780, 5
      %v783 = vsel %vm457, %v778, %v782
      %v784 = vshrl.u32 %v298, 16
      %v786 = vrot.slane %v784, 4
      %v787 = vor.u32 %v786, %v782
      %v788 = vrot.slane %v787, 4
      %v790 = vshll.u32 %v299, 16
      %v792 = vrot.slane %v790, 5
      %v793 = vsel %vm457, %v788, %v792
      %v795 = vshrl.u32 %v300, 16
      %v797 = vrot.slane %v795, 4
      %v798 = vshll.u32 %v300, 16
      %v800 = vrot.slane %v798, 5
      %v801 = vor.u32 %v797, %v800
      %v802 = vrot.slane %v801, 4
      %v804 = vshll.u32 %v301, 16
      %v806 = vrot.slane %v804, 5
      %v807 = vsel %vm457, %v802, %v806
      %v808 = vshrl.u32 %v301, 16
      %v810 = vrot.slane %v808, 4
      %v811 = vor.u32 %v810, %v806
      %v812 = vrot.slane %v811, 4
      %v814 = vshll.u32 %v302, 16
      %v816 = vrot.slane %v814, 5
      %v817 = vsel %vm457, %v812, %v816
      %v819 = vshrl.u32 %v303, 16
      %v821 = vrot.slane %v819, 4
      %v822 = vshll.u32 %v303, 16
      %v824 = vrot.slane %v822, 5
      %v825 = vor.u32 %v821, %v824
      %v826 = vrot.slane %v825, 4
      %v828 = vshll.u32 %v304, 16
      %v830 = vrot.slane %v828, 5
      %v831 = vsel %vm457, %v826, %v830
      %v832 = vshrl.u32 %v304, 16
      %v834 = vrot.slane %v832, 4
      %v835 = vor.u32 %v834, %v830
      %v836 = vrot.slane %v835, 4
      %v838 = vshll.u32 %v305, 16
      %v840 = vrot.slane %v838, 5
      %v841 = vsel %vm457, %v836, %v840
      %v874 = vmax.bf16 %v423, %v471
      %v875 = vmax.bf16 %v424, %v481
      %v876 = vmax.bf16 %v425, %v495
      %v877 = vmax.bf16 %v426, %v505
      %v878 = vmax.bf16 %v427, %v519
      %v879 = vmax.bf16 %v428, %v529
      %v880 = vmax.bf16 %v429, %v543
      %v881 = vmax.bf16 %v430, %v553
      %v882 = vmax.bf16 %v431, %v567
      %v883 = vmax.bf16 %v432, %v577
      %v884 = vmax.bf16 %v433, %v591
      %v885 = vmax.bf16 %v434, %v601
      %v886 = vmax.bf16 %v435, %v615
      %v887 = vmax.bf16 %v436, %v625
      %v888 = vmax.bf16 %v437, %v639
      %v889 = vmax.bf16 %v438, %v649
      %v890 = vmax.bf16 %v439, %v663
      %v891 = vmax.bf16 %v440, %v673
      %v892 = vmax.bf16 %v441, %v687
      %v893 = vmax.bf16 %v442, %v697
      %v894 = vmax.bf16 %v443, %v711
      %v895 = vmax.bf16 %v444, %v721
      %v896 = vmax.bf16 %v445, %v735
      %v897 = vmax.bf16 %v446, %v745
      %v898 = vmax.bf16 %v447, %v759
      %v899 = vmax.bf16 %v448, %v769
      %v900 = vmax.bf16 %v449, %v783
      %v901 = vmax.bf16 %v450, %v793
      %v902 = vmax.bf16 %v451, %v807
      %v903 = vmax.bf16 %v452, %v817
      %v904 = vmax.bf16 %v453, %v831
      %v905 = vmax.bf16 %v454, %v841
      %v906 = vmax.bf16 %v874, %v343
      %v907 = vmax.bf16 %v875, %v344
      %v908 = vmax.bf16 %v876, %v346
      %v909 = vmax.bf16 %v877, %v347
      %v910 = vmax.bf16 %v878, %v349
      %v911 = vmax.bf16 %v879, %v350
      %v912 = vmax.bf16 %v880, %v352
      %v913 = vmax.bf16 %v881, %v353
      %v914 = vmax.bf16 %v882, %v355
      %v915 = vmax.bf16 %v883, %v356
      %v916 = vmax.bf16 %v884, %v358
      %v917 = vmax.bf16 %v885, %v359
      %v918 = vmax.bf16 %v886, %v361
      %v919 = vmax.bf16 %v887, %v362
      %v920 = vmax.bf16 %v888, %v364
      %v921 = vmax.bf16 %v889, %v365
      %v922 = vmax.bf16 %v890, %v367
      %v923 = vmax.bf16 %v891, %v368
      %v924 = vmax.bf16 %v892, %v370
      %v925 = vmax.bf16 %v893, %v371
      %v926 = vmax.bf16 %v894, %v373
      %v927 = vmax.bf16 %v895, %v374
      %v928 = vmax.bf16 %v896, %v376
      %v929 = vmax.bf16 %v897, %v377
      %v930 = vmax.bf16 %v898, %v379
      %v931 = vmax.bf16 %v899, %v380
      %v932 = vmax.bf16 %v900, %v382
      %v933 = vmax.bf16 %v901, %v383
      %v934 = vmax.bf16 %v902, %v385
      %v935 = vmax.bf16 %v903, %v386
      %v936 = vmax.bf16 %v904, %v388
      %v937 = vmax.bf16 %v905, %v389
      %v938 = vmax.bf16 %v906, %v391
      %v939 = vmax.bf16 %v907, %v392
      %v940 = vmax.bf16 %v908, %v393
      %v941 = vmax.bf16 %v909, %v394
      %v942 = vmax.bf16 %v910, %v395
      %v943 = vmax.bf16 %v911, %v396
      %v944 = vmax.bf16 %v912, %v397
      %v945 = vmax.bf16 %v913, %v398
      %v946 = vmax.bf16 %v914, %v399
      %v947 = vmax.bf16 %v915, %v400
      %v948 = vmax.bf16 %v916, %v401
      %v949 = vmax.bf16 %v917, %v402
      %v950 = vmax.bf16 %v918, %v403
      %v951 = vmax.bf16 %v919, %v404
      %v952 = vmax.bf16 %v920, %v405
      %v953 = vmax.bf16 %v921, %v406
      %v954 = vmax.bf16 %v922, %v407
      %v955 = vmax.bf16 %v923, %v408
      %v956 = vmax.bf16 %v924, %v409
      %v957 = vmax.bf16 %v925, %v410
      %v958 = vmax.bf16 %v926, %v411
      %v959 = vmax.bf16 %v927, %v412
      %v960 = vmax.bf16 %v928, %v413
      %v961 = vmax.bf16 %v929, %v414
      %v962 = vmax.bf16 %v930, %v415
      %v963 = vmax.bf16 %v931, %v416
      %v964 = vmax.bf16 %v932, %v417
      %v965 = vmax.bf16 %v933, %v418
      %v966 = vmax.bf16 %v934, %v419
      %v967 = vmax.bf16 %v935, %v420
      %v968 = vmax.bf16 %v936, %v421
      %v969 = vmax.bf16 %v937, %v422
      %v971 = vshrl.u32 %v343, 16
      %v973 = vrot.slane %v971, 4
      %v974 = vshll.u32 %v343, 16
      %v976 = vrot.slane %v974, 5
      %v977 = vor.u32 %v973, %v976
      %v978 = vrot.slane %v977, 4
      %v980 = vshll.u32 %v344, 16
      %v982 = vrot.slane %v980, 5
      %v983 = vsel %vm457, %v978, %v982
      %v984 = vshrl.u32 %v344, 16
      %v986 = vrot.slane %v984, 4
      %v987 = vor.u32 %v986, %v982
      %v988 = vrot.slane %v987, 4
      %v990 = vshll.u32 %v345, 16
      %v992 = vrot.slane %v990, 5
      %v993 = vsel %vm457, %v988, %v992
      %v995 = vshrl.u32 %v346, 16
      %v997 = vrot.slane %v995, 4
      %v998 = vshll.u32 %v346, 16
      %v1000 = vrot.slane %v998, 5
      %v1001 = vor.u32 %v997, %v1000
      %v1002 = vrot.slane %v1001, 4
      %v1004 = vshll.u32 %v347, 16
      %v1006 = vrot.slane %v1004, 5
      %v1007 = vsel %vm457, %v1002, %v1006
      %v1008 = vshrl.u32 %v347, 16
      %v1010 = vrot.slane %v1008, 4
      %v1011 = vor.u32 %v1010, %v1006
      %v1012 = vrot.slane %v1011, 4
      %v1014 = vshll.u32 %v348, 16
      %v1016 = vrot.slane %v1014, 5
      %v1017 = vsel %vm457, %v1012, %v1016
      %v1019 = vshrl.u32 %v349, 16
      %v1021 = vrot.slane %v1019, 4
      %v1022 = vshll.u32 %v349, 16
      %v1024 = vrot.slane %v1022, 5
      %v1025 = vor.u32 %v1021, %v1024
      %v1026 = vrot.slane %v1025, 4
      %v1028 = vshll.u32 %v350, 16
      %v1030 = vrot.slane %v1028, 5
      %v1031 = vsel %vm457, %v1026, %v1030
      %v1032 = vshrl.u32 %v350, 16
      %v1034 = vrot.slane %v1032, 4
      %v1035 = vor.u32 %v1034, %v1030
      %v1036 = vrot.slane %v1035, 4
      %v1038 = vshll.u32 %v351, 16
      %v1040 = vrot.slane %v1038, 5
      %v1041 = vsel %vm457, %v1036, %v1040
      %v1043 = vshrl.u32 %v352, 16
      %v1045 = vrot.slane %v1043, 4
      %v1046 = vshll.u32 %v352, 16
      %v1048 = vrot.slane %v1046, 5
      %v1049 = vor.u32 %v1045, %v1048
      %v1050 = vrot.slane %v1049, 4
      %v1052 = vshll.u32 %v353, 16
      %v1054 = vrot.slane %v1052, 5
      %v1055 = vsel %vm457, %v1050, %v1054
      %v1056 = vshrl.u32 %v353, 16
      %v1058 = vrot.slane %v1056, 4
      %v1059 = vor.u32 %v1058, %v1054
      %v1060 = vrot.slane %v1059, 4
      %v1062 = vshll.u32 %v354, 16
      %v1064 = vrot.slane %v1062, 5
      %v1065 = vsel %vm457, %v1060, %v1064
      %v1067 = vshrl.u32 %v355, 16
      %v1069 = vrot.slane %v1067, 4
      %v1070 = vshll.u32 %v355, 16
      %v1072 = vrot.slane %v1070, 5
      %v1073 = vor.u32 %v1069, %v1072
      %v1074 = vrot.slane %v1073, 4
      %v1076 = vshll.u32 %v356, 16
      %v1078 = vrot.slane %v1076, 5
      %v1079 = vsel %vm457, %v1074, %v1078
      %v1080 = vshrl.u32 %v356, 16
      %v1082 = vrot.slane %v1080, 4
      %v1083 = vor.u32 %v1082, %v1078
      %v1084 = vrot.slane %v1083, 4
      %v1086 = vshll.u32 %v357, 16
      %v1088 = vrot.slane %v1086, 5
      %v1089 = vsel %vm457, %v1084, %v1088
      %v1091 = vshrl.u32 %v358, 16
      %v1093 = vrot.slane %v1091, 4
      %v1094 = vshll.u32 %v358, 16
      %v1096 = vrot.slane %v1094, 5
      %v1097 = vor.u32 %v1093, %v1096
      %v1098 = vrot.slane %v1097, 4
      %v1100 = vshll.u32 %v359, 16
      %v1102 = vrot.slane %v1100, 5
      %v1103 = vsel %vm457, %v1098, %v1102
      %v1104 = vshrl.u32 %v359, 16
      %v1106 = vrot.slane %v1104, 4
      %v1107 = vor.u32 %v1106, %v1102
      %v1108 = vrot.slane %v1107, 4
      %v1110 = vshll.u32 %v360, 16
      %v1112 = vrot.slane %v1110, 5
      %v1113 = vsel %vm457, %v1108, %v1112
      %v1115 = vshrl.u32 %v361, 16
      %v1117 = vrot.slane %v1115, 4
      %v1118 = vshll.u32 %v361, 16
      %v1120 = vrot.slane %v1118, 5
      %v1121 = vor.u32 %v1117, %v1120
      %v1122 = vrot.slane %v1121, 4
      %v1124 = vshll.u32 %v362, 16
      %v1126 = vrot.slane %v1124, 5
      %v1127 = vsel %vm457, %v1122, %v1126
      %v1128 = vshrl.u32 %v362, 16
      %v1130 = vrot.slane %v1128, 4
      %v1131 = vor.u32 %v1130, %v1126
      %v1132 = vrot.slane %v1131, 4
      %v1134 = vshll.u32 %v363, 16
      %v1136 = vrot.slane %v1134, 5
      %v1137 = vsel %vm457, %v1132, %v1136
      %v1139 = vshrl.u32 %v364, 16
      %v1141 = vrot.slane %v1139, 4
      %v1142 = vshll.u32 %v364, 16
      %v1144 = vrot.slane %v1142, 5
      %v1145 = vor.u32 %v1141, %v1144
      %v1146 = vrot.slane %v1145, 4
      %v1148 = vshll.u32 %v365, 16
      %v1150 = vrot.slane %v1148, 5
      %v1151 = vsel %vm457, %v1146, %v1150
      %v1152 = vshrl.u32 %v365, 16
      %v1154 = vrot.slane %v1152, 4
      %v1155 = vor.u32 %v1154, %v1150
      %v1156 = vrot.slane %v1155, 4
      %v1158 = vshll.u32 %v366, 16
      %v1160 = vrot.slane %v1158, 5
      %v1161 = vsel %vm457, %v1156, %v1160
      %v1163 = vshrl.u32 %v367, 16
      %v1165 = vrot.slane %v1163, 4
      %v1166 = vshll.u32 %v367, 16
      %v1168 = vrot.slane %v1166, 5
      %v1169 = vor.u32 %v1165, %v1168
      %v1170 = vrot.slane %v1169, 4
      %v1172 = vshll.u32 %v368, 16
      %v1174 = vrot.slane %v1172, 5
      %v1175 = vsel %vm457, %v1170, %v1174
      %v1176 = vshrl.u32 %v368, 16
      %v1178 = vrot.slane %v1176, 4
      %v1179 = vor.u32 %v1178, %v1174
      %v1180 = vrot.slane %v1179, 4
      %v1182 = vshll.u32 %v369, 16
      %v1184 = vrot.slane %v1182, 5
      %v1185 = vsel %vm457, %v1180, %v1184
      %v1187 = vshrl.u32 %v370, 16
      %v1189 = vrot.slane %v1187, 4
      %v1190 = vshll.u32 %v370, 16
      %v1192 = vrot.slane %v1190, 5
      %v1193 = vor.u32 %v1189, %v1192
      %v1194 = vrot.slane %v1193, 4
      %v1196 = vshll.u32 %v371, 16
      %v1198 = vrot.slane %v1196, 5
      %v1199 = vsel %vm457, %v1194, %v1198
      %v1200 = vshrl.u32 %v371, 16
      %v1202 = vrot.slane %v1200, 4
      %v1203 = vor.u32 %v1202, %v1198
      %v1204 = vrot.slane %v1203, 4
      %v1206 = vshll.u32 %v372, 16
      %v1208 = vrot.slane %v1206, 5
      %v1209 = vsel %vm457, %v1204, %v1208
      %v1211 = vshrl.u32 %v373, 16
      %v1213 = vrot.slane %v1211, 4
      %v1214 = vshll.u32 %v373, 16
      %v1216 = vrot.slane %v1214, 5
      %v1217 = vor.u32 %v1213, %v1216
      %v1218 = vrot.slane %v1217, 4
      %v1220 = vshll.u32 %v374, 16
      %v1222 = vrot.slane %v1220, 5
      %v1223 = vsel %vm457, %v1218, %v1222
      %v1224 = vshrl.u32 %v374, 16
      %v1226 = vrot.slane %v1224, 4
      %v1227 = vor.u32 %v1226, %v1222
      %v1228 = vrot.slane %v1227, 4
      %v1230 = vshll.u32 %v375, 16
      %v1232 = vrot.slane %v1230, 5
      %v1233 = vsel %vm457, %v1228, %v1232
      %v1235 = vshrl.u32 %v376, 16
      %v1237 = vrot.slane %v1235, 4
      %v1238 = vshll.u32 %v376, 16
      %v1240 = vrot.slane %v1238, 5
      %v1241 = vor.u32 %v1237, %v1240
      %v1242 = vrot.slane %v1241, 4
      %v1244 = vshll.u32 %v377, 16
      %v1246 = vrot.slane %v1244, 5
      %v1247 = vsel %vm457, %v1242, %v1246
      %v1248 = vshrl.u32 %v377, 16
      %v1250 = vrot.slane %v1248, 4
      %v1251 = vor.u32 %v1250, %v1246
      %v1252 = vrot.slane %v1251, 4
      %v1254 = vshll.u32 %v378, 16
      %v1256 = vrot.slane %v1254, 5
      %v1257 = vsel %vm457, %v1252, %v1256
      %v1259 = vshrl.u32 %v379, 16
      %v1261 = vrot.slane %v1259, 4
      %v1262 = vshll.u32 %v379, 16
      %v1264 = vrot.slane %v1262, 5
      %v1265 = vor.u32 %v1261, %v1264
      %v1266 = vrot.slane %v1265, 4
      %v1268 = vshll.u32 %v380, 16
      %v1270 = vrot.slane %v1268, 5
      %v1271 = vsel %vm457, %v1266, %v1270
      %v1272 = vshrl.u32 %v380, 16
      %v1274 = vrot.slane %v1272, 4
      %v1275 = vor.u32 %v1274, %v1270
      %v1276 = vrot.slane %v1275, 4
      %v1278 = vshll.u32 %v381, 16
      %v1280 = vrot.slane %v1278, 5
      %v1281 = vsel %vm457, %v1276, %v1280
      %v1283 = vshrl.u32 %v382, 16
      %v1285 = vrot.slane %v1283, 4
      %v1286 = vshll.u32 %v382, 16
      %v1288 = vrot.slane %v1286, 5
      %v1289 = vor.u32 %v1285, %v1288
      %v1290 = vrot.slane %v1289, 4
      %v1292 = vshll.u32 %v383, 16
      %v1294 = vrot.slane %v1292, 5
      %v1295 = vsel %vm457, %v1290, %v1294
      %v1296 = vshrl.u32 %v383, 16
      %v1298 = vrot.slane %v1296, 4
      %v1299 = vor.u32 %v1298, %v1294
      %v1300 = vrot.slane %v1299, 4
      %v1302 = vshll.u32 %v384, 16
      %v1304 = vrot.slane %v1302, 5
      %v1305 = vsel %vm457, %v1300, %v1304
      %v1307 = vshrl.u32 %v385, 16
      %v1309 = vrot.slane %v1307, 4
      %v1310 = vshll.u32 %v385, 16
      %v1312 = vrot.slane %v1310, 5
      %v1313 = vor.u32 %v1309, %v1312
      %v1314 = vrot.slane %v1313, 4
      %v1316 = vshll.u32 %v386, 16
      %v1318 = vrot.slane %v1316, 5
      %v1319 = vsel %vm457, %v1314, %v1318
      %v1320 = vshrl.u32 %v386, 16
      %v1322 = vrot.slane %v1320, 4
      %v1323 = vor.u32 %v1322, %v1318
      %v1324 = vrot.slane %v1323, 4
      %v1326 = vshll.u32 %v387, 16
      %v1328 = vrot.slane %v1326, 5
      %v1329 = vsel %vm457, %v1324, %v1328
      %v1331 = vshrl.u32 %v388, 16
      %v1333 = vrot.slane %v1331, 4
      %v1334 = vshll.u32 %v388, 16
      %v1336 = vrot.slane %v1334, 5
      %v1337 = vor.u32 %v1333, %v1336
      %v1338 = vrot.slane %v1337, 4
      %v1340 = vshll.u32 %v389, 16
      %v1342 = vrot.slane %v1340, 5
      %v1343 = vsel %vm457, %v1338, %v1342
      %v1344 = vshrl.u32 %v389, 16
      %v1346 = vrot.slane %v1344, 4
      %v1347 = vor.u32 %v1346, %v1342
      %v1348 = vrot.slane %v1347, 4
      %v1350 = vshll.u32 %v390, 16
      %v1352 = vrot.slane %v1350, 5
      %v1353 = vsel %vm457, %v1348, %v1352
      %v1386 = vmax.bf16 %v938, %v983
      %v1387 = vmax.bf16 %v939, %v993
      %v1388 = vmax.bf16 %v940, %v1007
      %v1389 = vmax.bf16 %v941, %v1017
      %v1390 = vmax.bf16 %v942, %v1031
      %v1391 = vmax.bf16 %v943, %v1041
      %v1392 = vmax.bf16 %v944, %v1055
      %v1393 = vmax.bf16 %v945, %v1065
      %v1394 = vmax.bf16 %v946, %v1079
      %v1395 = vmax.bf16 %v947, %v1089
      %v1396 = vmax.bf16 %v948, %v1103
      %v1397 = vmax.bf16 %v949, %v1113
      %v1398 = vmax.bf16 %v950, %v1127
      %v1399 = vmax.bf16 %v951, %v1137
      %v1400 = vmax.bf16 %v952, %v1151
      %v1401 = vmax.bf16 %v953, %v1161
      %v1402 = vmax.bf16 %v954, %v1175
      %v1403 = vmax.bf16 %v955, %v1185
      %v1404 = vmax.bf16 %v956, %v1199
      %v1405 = vmax.bf16 %v957, %v1209
      %v1406 = vmax.bf16 %v958, %v1223
      %v1407 = vmax.bf16 %v959, %v1233
      %v1408 = vmax.bf16 %v960, %v1247
      %v1409 = vmax.bf16 %v961, %v1257
      %v1410 = vmax.bf16 %v962, %v1271
      %v1411 = vmax.bf16 %v963, %v1281
      %v1412 = vmax.bf16 %v964, %v1295
      %v1413 = vmax.bf16 %v965, %v1305
      %v1414 = vmax.bf16 %v966, %v1319
      %v1415 = vmax.bf16 %v967, %v1329
      %v1416 = vmax.bf16 %v968, %v1343
      %v1417 = vmax.bf16 %v969, %v1353
      %v1418 = vmax.bf16 %v1386, %v261
      %v1419 = vmax.bf16 %v1387, %v262
      %v1420 = vmax.bf16 %v1388, %v264
      %v1421 = vmax.bf16 %v1389, %v265
      %v1422 = vmax.bf16 %v1390, %v267
      %v1423 = vmax.bf16 %v1391, %v268
      %v1424 = vmax.bf16 %v1392, %v270
      %v1425 = vmax.bf16 %v1393, %v271
      %v1426 = vmax.bf16 %v1394, %v273
      %v1427 = vmax.bf16 %v1395, %v274
      %v1428 = vmax.bf16 %v1396, %v276
      %v1429 = vmax.bf16 %v1397, %v277
      %v1430 = vmax.bf16 %v1398, %v279
      %v1431 = vmax.bf16 %v1399, %v280
      %v1432 = vmax.bf16 %v1400, %v282
      %v1433 = vmax.bf16 %v1401, %v283
      %v1434 = vmax.bf16 %v1402, %v285
      %v1435 = vmax.bf16 %v1403, %v286
      %v1436 = vmax.bf16 %v1404, %v288
      %v1437 = vmax.bf16 %v1405, %v289
      %v1438 = vmax.bf16 %v1406, %v291
      %v1439 = vmax.bf16 %v1407, %v292
      %v1440 = vmax.bf16 %v1408, %v294
      %v1441 = vmax.bf16 %v1409, %v295
      %v1442 = vmax.bf16 %v1410, %v297
      %v1443 = vmax.bf16 %v1411, %v298
      %v1444 = vmax.bf16 %v1412, %v300
      %v1445 = vmax.bf16 %v1413, %v301
      %v1446 = vmax.bf16 %v1414, %v303
      %v1447 = vmax.bf16 %v1415, %v304
      %v1448 = vmax.bf16 %v1416, %v306
      %v1449 = vmax.bf16 %v1417, %v307
      %v1450 = vmax.bf16 %v1418, %v311
      %v1451 = vmax.bf16 %v1419, %v312
      %v1452 = vmax.bf16 %v1420, %v313
      %v1453 = vmax.bf16 %v1421, %v314
      %v1454 = vmax.bf16 %v1422, %v315
      %v1455 = vmax.bf16 %v1423, %v316
      %v1456 = vmax.bf16 %v1424, %v317
      %v1457 = vmax.bf16 %v1425, %v318
      %v1458 = vmax.bf16 %v1426, %v319
      %v1459 = vmax.bf16 %v1427, %v320
      %v1460 = vmax.bf16 %v1428, %v321
      %v1461 = vmax.bf16 %v1429, %v322
      %v1462 = vmax.bf16 %v1430, %v323
      %v1463 = vmax.bf16 %v1431, %v324
      %v1464 = vmax.bf16 %v1432, %v325
      %v1465 = vmax.bf16 %v1433, %v326
      %v1466 = vmax.bf16 %v1434, %v327
      %v1467 = vmax.bf16 %v1435, %v328
      %v1468 = vmax.bf16 %v1436, %v329
      %v1469 = vmax.bf16 %v1437, %v330
      %v1470 = vmax.bf16 %v1438, %v331
      %v1471 = vmax.bf16 %v1439, %v332
      %v1472 = vmax.bf16 %v1440, %v333
      %v1473 = vmax.bf16 %v1441, %v334
      %v1474 = vmax.bf16 %v1442, %v335
      %v1475 = vmax.bf16 %v1443, %v336
      %v1476 = vmax.bf16 %v1444, %v337
      %v1477 = vmax.bf16 %v1445, %v338
      %v1478 = vmax.bf16 %v1446, %v339
      %v1479 = vmax.bf16 %v1447, %v340
      %v1480 = vmax.bf16 %v1448, %v341
      %v1481 = vmax.bf16 %v1449, %v342
      %v1483 = vshrl.u32 %v306, 16
      %v1485 = vrot.slane %v1483, 4
      %v1486 = vshll.u32 %v306, 16
      %v1488 = vrot.slane %v1486, 5
      %v1489 = vor.u32 %v1485, %v1488
      %v1490 = vrot.slane %v1489, 4
      %v1492 = vshll.u32 %v307, 16
      %v1494 = vrot.slane %v1492, 5
      %v1495 = vsel %vm457, %v1490, %v1494
      %v1496 = vshrl.u32 %v307, 16
      %v1498 = vrot.slane %v1496, 4
      %v1499 = vor.u32 %v1498, %v1494
      %v1500 = vrot.slane %v1499, 4
      %v1502 = vshll.u32 %v308, 16
      %v1504 = vrot.slane %v1502, 5
      %v1505 = vsel %vm457, %v1500, %v1504
      %v1508 = vmax.bf16 %v1450, %v495
      %v1509 = vmax.bf16 %v1451, %v505
      %v1510 = vmax.bf16 %v1452, %v519
      %v1511 = vmax.bf16 %v1453, %v529
      %v1512 = vmax.bf16 %v1454, %v543
      %v1513 = vmax.bf16 %v1455, %v553
      %v1514 = vmax.bf16 %v1456, %v567
      %v1515 = vmax.bf16 %v1457, %v577
      %v1516 = vmax.bf16 %v1458, %v591
      %v1517 = vmax.bf16 %v1459, %v601
      %v1518 = vmax.bf16 %v1460, %v615
      %v1519 = vmax.bf16 %v1461, %v625
      %v1520 = vmax.bf16 %v1462, %v639
      %v1521 = vmax.bf16 %v1463, %v649
      %v1522 = vmax.bf16 %v1464, %v663
      %v1523 = vmax.bf16 %v1465, %v673
      %v1524 = vmax.bf16 %v1466, %v687
      %v1525 = vmax.bf16 %v1467, %v697
      %v1526 = vmax.bf16 %v1468, %v711
      %v1527 = vmax.bf16 %v1469, %v721
      %v1528 = vmax.bf16 %v1470, %v735
      %v1529 = vmax.bf16 %v1471, %v745
      %v1530 = vmax.bf16 %v1472, %v759
      %v1531 = vmax.bf16 %v1473, %v769
      %v1532 = vmax.bf16 %v1474, %v783
      %v1533 = vmax.bf16 %v1475, %v793
      %v1534 = vmax.bf16 %v1476, %v807
      %v1535 = vmax.bf16 %v1477, %v817
      %v1536 = vmax.bf16 %v1478, %v831
      %v1537 = vmax.bf16 %v1479, %v841
      %v1538 = vmax.bf16 %v1480, %v1495
      %v1539 = vmax.bf16 %v1481, %v1505
      %vm1540 = vcmask 191488
      %1541 = vst.msk [vmem:[%s257] sm:$0xf] %vm1540, %v1508
      %1542 = vst.msk [vmem:[%s257 + $0x4] sm:$0xf] %vm1540, %v1509
      %1543 = vst.msk [vmem:[%s257 + $0x8] sm:$0xf] %vm1540, %v1510
      %1544 = vst.msk [vmem:[%s257 + $0xc] sm:$0xf] %vm1540, %v1511
      %1545 = vst.msk [vmem:[%s257 + $0x10] sm:$0xf] %vm1540, %v1512
      %1546 = vst.msk [vmem:[%s257 + $0x14] sm:$0xf] %vm1540, %v1513
      %1547 = vst.msk [vmem:[%s257 + $0x18] sm:$0xf] %vm1540, %v1514
      %1548 = vst.msk [vmem:[%s257 + $0x1c] sm:$0xf] %vm1540, %v1515
      %1549 = vst.msk [vmem:[%s257 + $0x20] sm:$0xf] %vm1540, %v1516
      %1550 = vst.msk [vmem:[%s257 + $0x24] sm:$0xf] %vm1540, %v1517
      %1551 = vst.msk [vmem:[%s257 + $0x28] sm:$0xf] %vm1540, %v1518
      %1552 = vst.msk [vmem:[%s257 + $0x2c] sm:$0xf] %vm1540, %v1519
      %1553 = vst.msk [vmem:[%s257 + $0x30] sm:$0xf] %vm1540, %v1520
      %1554 = vst.msk [vmem:[%s257 + $0x34] sm:$0xf] %vm1540, %v1521
      %1555 = vst.msk [vmem:[%s257 + $0x38] sm:$0xf] %vm1540, %v1522
      %1556 = vst.msk [vmem:[%s257 + $0x3c] sm:$0xf] %vm1540, %v1523
      %1557 = vst.msk [vmem:[%s257 + $0x40] sm:$0xf] %vm1540, %v1524
      %1558 = vst.msk [vmem:[%s257 + $0x44] sm:$0xf] %vm1540, %v1525
      %1559 = vst.msk [vmem:[%s257 + $0x48] sm:$0xf] %vm1540, %v1526
      %1560 = vst.msk [vmem:[%s257 + $0x4c] sm:$0xf] %vm1540, %v1527
      %1561 = vst.msk [vmem:[%s257 + $0x50] sm:$0xf] %vm1540, %v1528
      %1562 = vst.msk [vmem:[%s257 + $0x54] sm:$0xf] %vm1540, %v1529
      %1563 = vst.msk [vmem:[%s257 + $0x58] sm:$0xf] %vm1540, %v1530
      %1564 = vst.msk [vmem:[%s257 + $0x5c] sm:$0xf] %vm1540, %v1531
      %1565 = vst.msk [vmem:[%s257 + $0x60] sm:$0xf] %vm1540, %v1532
      %1566 = vst.msk [vmem:[%s257 + $0x64] sm:$0xf] %vm1540, %v1533
      %1567 = vst.msk [vmem:[%s257 + $0x68] sm:$0xf] %vm1540, %v1534
      %1568 = vst.msk [vmem:[%s257 + $0x6c] sm:$0xf] %vm1540, %v1535
      %1569 = vst.msk [vmem:[%s257 + $0x70] sm:$0xf] %vm1540, %v1536
      %1570 = vst.msk [vmem:[%s257 + $0x74] sm:$0xf] %vm1540, %v1537
      %1571 = vst.msk [vmem:[%s257 + $0x78] sm:$0xf] %vm1540, %v1538
      %1572 = vst.msk [vmem:[%s257 + $0x7c] sm:$0xf] %vm1540, %v1539
      %p1573 = scmp.lt.s32.totalorder %s15, 1
      %s1574 = scalar_select %p1573, %s15, 1
      %s1575 = smul.addr %s1574, 32
      %s1576 = smul.addr %s1575, 4
      %s1577 = scalar_lea.vmem %s4, %s1576
      // Predicated region
      $region37: #{_lambda_.31} parent=35 // pred_check
        %p1578 = pneg %p137
      $region38: #{_lambda_.31} parent=35 // pred_check_branch
        %1580 = sbr.rel (%p1578) target = $region40
      $region39: #{_lambda_.31} parent=35 // pred_region
        _
      $region40: #{_lambda_.31} parent=35 // pred_fallthru
        _
    $region36: #{_lambda_.31} parent=5 // pred_fallthru
      _
    %p1581 = scmp.le.s32.totalorder 2, %s10
    // Predicated region
    $region41: #{_lambda_.31} parent=5 // pred_check
      %p1582 = pneg %p1581
    $region42: #{_lambda_.31} parent=5 // pred_check_branch
      %1584 = sbr.rel (%p1582) target = $region44
    $region43: #{_lambda_.31} parent=5 // pred_region
      %s1585 = ssub.s32 %s10, 2
      // Predicated region
      $region45: #{_lambda_.31} parent=43 // pred_check
        %p1586 = pneg %p143
      $region46: #{_lambda_.31} parent=43 // pred_check_branch
        %1588 = sbr.rel (%p1586) target = $region48
      $region47: #{_lambda_.31} parent=43 // pred_region
        %p1589 = scmp.lt.s32.totalorder %s16, 1
        %s1590 = scalar_select %p1589, %s16, 1
        %s1591 = smul.addr %s1590, 32
        %s1592 = smul.addr %s1591, 4
        %s1593 = scalar_lea.vmem %s4, %s1592
      $region48: #{_lambda_.31} parent=43 // pred_fallthru
        _
    $region44: #{_lambda_.31} parent=5 // pred_fallthru
      _
  $region6: #{_lambda_.31} parent=0 // loop_footer
    %s14 = sadd.s32 1, %s10
  $region7: #{_lambda_.31} parent=0 // loop_footer_branch
    %9 = sbr.rel target = $region3
  $region8: #{_lambda_.31} parent=0 // loop_exit
    _

// kernel: _lambda_.36
$region0: #{_lambda_.36}
  #allocation0 [shape = 'u32[]', space=smem, size = 0x4, offset = 0x4, fixed_abs, tag = 'smem constant byte address 0x4 - core index']
  #allocation1 [shape = 'u32[144,128]{1,0:T(1,128)}', space=vmem, size = 0x12000, scoped, tag = 'internal scratch']
  %s0 = inlined_call_operand.vmem [shape: bf16[128,24], index: 0, kind: input, shape index: {}]
  %s1 = inlined_call_operand.vmem [shape: bf16[24,24], index: 1, kind: input, shape index: {}]
  %s2 = inlined_call_operand.vmem [shape: f32[1,24], index: 2, kind: input, shape index: {}]
  %s3 = inlined_call_operand.vmem [shape: bf16[128,24], index: 3, kind: output, shape index: {}]
  %s4 = sld [smem:[#allocation0]]
  $region45: #{_lambda_.36} parent=0
    _
  %s6 = ssub.s32 1, %s4
  %s7 = scalar_select 0, %s6, %s4
  loop: start=0, step=1, limit=4
  $region2: #{_lambda_.36} parent=0 // loop_pre_header
    _
  $region3: #{_lambda_.36} parent=0 // loop_header
    %s9 = sphi 0, %s13
    %p10 = scmp.ge.s32.totalorder %s9, 4
    %s19 = sphi 0, %s21
    %s22 = sphi 0, %s19
    %s23 = sphi 0, %s22
    %s39 = sphi 0, %s23
    %s43 = sphi 0, %s43
    %s45 = sphi 0, %s43
    %s46 = sphi 0, %s45
    %s60 = sphi 0, %s46
    %s64 = sphi 0, %s64
    %s66 = sphi 0, %s64
    %s67 = sphi 0, %s66
    %s81 = sphi 0, %s67
    %s87 = sphi 0, %s89
    %s90 = sphi 0, %s87
    %s91 = sphi 0, %s90
    %s107 = sphi 0, %s91
  $region4: #{_lambda_.36} parent=0 // loop_header_branch
    %12 = sbr.rel (%p10) target = $region8
  $region5: #{_lambda_.36} parent=0 // loop_body
    %s14 = ssub.s32 %s9, 1
    %s15 = ssub.s32 %s9, 2
    %s16 = sadd.s32 %s9, 1
    %s17 = ssub.s32 %s9, %s16
    %p18 = scmp.eq.s32.totalorder %s17, 0
    %s20 = sadd.s32 %s19, 1
    %s21 = scalar_select %p18, %s19, %s20
    %p24 = pneg %p18
    %p25 = scmp.eq.s32.totalorder %s9, 1
    %p26 = por %p24, %p25
    %p27 = scmp.ne.s32.totalorder %s19, %s22
    %p28 = scmp.eq.s32.totalorder %s9, 0
    %p29 = por %p27, %p28
    %p30 = scmp.ne.s32.totalorder %s19, %s22
    %p31 = scmp.eq.s32.totalorder %s14, 1
    %p32 = por %p30, %p31
    %p33 = scmp.ne.s32.totalorder %s22, %s23
    %p34 = scmp.eq.s32.totalorder %s14, 0
    %p35 = por %p33, %p34
    %p36 = scmp.ne.s32.totalorder %s22, %s23
    %p37 = scmp.eq.s32.totalorder %s15, 1
    %p38 = por %p36, %p37
    %p40 = scmp.ne.s32.totalorder %s23, %s39
    %p41 = scmp.eq.s32.totalorder %s15, 0
    %p42 = por %p40, %p41
    %s44 = sadd.s32 %s43, 1
    %p47 = scmp.eq.s32.totalorder %s9, 1
    %p48 = scmp.ne.s32.totalorder %s43, %s45
    %p49 = scmp.eq.s32.totalorder %s9, 0
    %p50 = por %p48, %p49
    %p51 = scmp.ne.s32.totalorder %s43, %s45
    %p52 = scmp.eq.s32.totalorder %s14, 1
    %p53 = por %p51, %p52
    %p54 = scmp.ne.s32.totalorder %s45, %s46
    %p55 = scmp.eq.s32.totalorder %s14, 0
    %p56 = por %p54, %p55
    %p57 = scmp.ne.s32.totalorder %s45, %s46
    %p58 = scmp.eq.s32.totalorder %s15, 1
    %p59 = por %p57, %p58
    %p61 = scmp.ne.s32.totalorder %s46, %s60
    %p62 = scmp.eq.s32.totalorder %s15, 0
    %p63 = por %p61, %p62
    %s65 = sadd.s32 %s64, 1
    %p68 = scmp.eq.s32.totalorder %s9, 1
    %p69 = scmp.ne.s32.totalorder %s64, %s66
    %p70 = scmp.eq.s32.totalorder %s9, 0
    %p71 = por %p69, %p70
    %p72 = scmp.ne.s32.totalorder %s64, %s66
    %p73 = scmp.eq.s32.totalorder %s14, 1
    %p74 = por %p72, %p73
    %p75 = scmp.ne.s32.totalorder %s66, %s67
    %p76 = scmp.eq.s32.totalorder %s14, 0
    %p77 = por %p75, %p76
    %p78 = scmp.ne.s32.totalorder %s66, %s67
    %p79 = scmp.eq.s32.totalorder %s15, 1
    %p80 = por %p78, %p79
    %p82 = scmp.ne.s32.totalorder %s67, %s81
    %p83 = scmp.eq.s32.totalorder %s15, 0
    %p84 = por %p82, %p83
    %s85 = ssub.s32 %s9, %s16
    %p86 = scmp.eq.s32.totalorder %s85, 0
    %s88 = sadd.s32 %s87, 1
    %s89 = scalar_select %p86, %s87, %s88
    %p92 = pneg %p86
    %p93 = scmp.eq.s32.totalorder %s9, 1
    %p94 = por %p92, %p93
    %p95 = scmp.ne.s32.totalorder %s87, %s90
    %p96 = scmp.eq.s32.totalorder %s9, 0
    %p97 = por %p95, %p96
    %p98 = scmp.ne.s32.totalorder %s87, %s90
    %p99 = scmp.eq.s32.totalorder %s14, 1
    %p100 = por %p98, %p99
    %p101 = scmp.ne.s32.totalorder %s90, %s91
    %p102 = scmp.eq.s32.totalorder %s14, 0
    %p103 = por %p101, %p102
    %p104 = scmp.ne.s32.totalorder %s90, %s91
    %p105 = scmp.eq.s32.totalorder %s15, 1
    %p106 = por %p104, %p105
    %p108 = scmp.ne.s32.totalorder %s91, %s107
    %p109 = scmp.eq.s32.totalorder %s15, 0
    %p110 = por %p108, %p109
    %p111 = scmp.le.s32.totalorder 1, %s9
    %p112 = scmp.lt.s32.totalorder %s9, 3
    %p113 = pnand %p111, %p112
    %p114 = pneg %p113
    // Predicated region
    $region9: #{_lambda_.36} parent=5 // pred_check
      _
    $region10: #{_lambda_.36} parent=5 // pred_check_branch
      %116 = sbr.rel (%p113) target = $region12
    $region11: #{_lambda_.36} parent=5 // pred_region
      %s117 = ssub.s32 %s9, 1
      // Predicated region
      $region13: #{_lambda_.36} parent=11 // pred_check
        %p118 = pneg %p56
      $region14: #{_lambda_.36} parent=11 // pred_check_branch
        %120 = sbr.rel (%p118) target = $region16
      $region15: #{_lambda_.36} parent=11 // pred_region
        _
      $region16: #{_lambda_.36} parent=11 // pred_fallthru
        _
      // Predicated region
      $region17: #{_lambda_.36} parent=11 // pred_check
        %p121 = pneg %p77
      $region18: #{_lambda_.36} parent=11 // pred_check_branch
        %123 = sbr.rel (%p121) target = $region20
      $region19: #{_lambda_.36} parent=11 // pred_region
        _
      $region20: #{_lambda_.36} parent=11 // pred_fallthru
        _
    $region12: #{_lambda_.36} parent=5 // pred_fallthru
      _
    %p124 = scmp.lt.s32.totalorder %s9, 2
    // Predicated region
    $region21: #{_lambda_.36} parent=5 // pred_check
      %p125 = pneg %p124
    $region22: #{_lambda_.36} parent=5 // pred_check_branch
      %127 = sbr.rel (%p125) target = $region24
    $region23: #{_lambda_.36} parent=5 // pred_region
      // Predicated region
      $region25: #{_lambda_.36} parent=23 // pred_check
        %p128 = pneg %p29
      $region26: #{_lambda_.36} parent=23 // pred_check_branch
        %130 = sbr.rel (%p128) target = $region28
      $region27: #{_lambda_.36} parent=23 // pred_region
        %s131 = smul.u32 8, %s9
        %p132 = scmp.lt.s32.totalorder %s131, 15
        %s133 = scalar_select %p132, %s131, 15
        %s134 = smul.addr %s133, 4
        %s135 = scalar_lea.vmem %s0, %s134
        %s136 = smul.u32 8, %s9
      $region28: #{_lambda_.36} parent=23 // pred_fallthru
        _
    $region24: #{_lambda_.36} parent=5 // pred_fallthru
      _
    %p137 = scmp.le.s32.totalorder 1, %s9
    %p138 = scmp.lt.s32.totalorder %s9, 3
    %p139 = pnand %p137, %p138
    %p140 = pneg %p139
    // Predicated region
    $region29: #{_lambda_.36} parent=5 // pred_check
      _
    $region30: #{_lambda_.36} parent=5 // pred_check_branch
      %142 = sbr.rel (%p139) target = $region32
    $region31: #{_lambda_.36} parent=5 // pred_region
      %s143 = ssub.s32 %s9, 1
      %s144 = smul.u32 8, %s14
      %p145 = scmp.lt.s32.totalorder %s144, 15
      %s146 = scalar_select %p145, %s144, 15
      %s147 = smul.addr %s146, 4
      %s148 = scalar_lea.vmem %s0, %s147
      %p149 = pneg %p35
      %p150 = pneg %p32
      %p151 = pneg %p56
      %p152 = pneg %p53
      %p153 = pneg %p77
      %p154 = pneg %p74
      %p155 = pneg %p103
      %p156 = pneg %p100
      %s157 = smul.u32 8, %s14
      %p158 = scmp.lt.s32.totalorder %s157, 15
      %s159 = scalar_select %p158, %s157, 15
      %s160 = smul.addr %s159, 4
      %s161 = scalar_lea.vmem %s3, %s160
      %s162 = smul.u32 8, %s14
      %p163 = scmp.lt.s32.totalorder %s162, 15
      %s164 = scalar_select %p163, %s162, 15
      %s165 = smul.addr %s164, 4
      %s166 = scalar_lea.vmem %s0, %s165
      %s167 = smul.u32 8, %s14
      %s168 = smul.u32 8, %s14
      %p169 = scmp.lt.s32.totalorder %s168, 15
      %s170 = scalar_select %p169, %s168, 15
      %s171 = smul.addr %s170, 4
      %s172 = scalar_lea.vmem %s3, %s171
      %s173 = smul.u32 8, %s14
      %v175 = vld [vmem:[%s166] sm:$0xf]
      %v176 = vld [vmem:[%s166 + $0x4] sm:$0xf]
      %v177 = vld [vmem:[%s166 + $0x8] sm:$0xf]
      %v178 = vld [vmem:[%s166 + $0xc] sm:$0xf]
      %v179 = vld [vmem:[%s166 + $0x10] sm:$0xf]
      %v180 = vld [vmem:[%s166 + $0x14] sm:$0xf]
      %v181 = vld [vmem:[%s166 + $0x18] sm:$0xf]
      %v182 = vld [vmem:[%s166 + $0x1c] sm:$0xf]
      %v183 = vld [vmem:[%s1] sm:$0xf]
      %v184 = vld [vmem:[%s1 + $0x4] sm:$0xf]
      %v185 = vld [vmem:[%s1 + $0x8] sm:$0xf]
      %v186 = vld [vmem:[%s2] sm:$0x1]
      %v188 = vlaneseq
      %v189 = vshrl.u32 %v188, 7
      %v190 = vsub.s32 0, %v189
      %v191 = vrot.slane %v186, %v190
      %v201 = vunpack.c.l.b16 %v175
      %v202 = vunpack.c.l.b16 %v176
      %v203 = vunpack.c.l.b16 %v177
      %v204 = vunpack.c.l.b16 %v178
      %v205 = vunpack.c.l.b16 %v179
      %v206 = vunpack.c.l.b16 %v180
      %v207 = vunpack.c.l.b16 %v181
      %v208 = vunpack.c.l.b16 %v182
      %v209 = vpack.c.b16 %v202, %v201
      %v210 = vpack.c.b16 %v204, %v203
      %v211 = vpack.c.b16 %v206, %v205
      %v212 = vpack.c.b16 %v208, %v207
      %v216 = vunpack.c.l.b16 %v183
      %v217 = vunpack.c.l.b16 %v184
      %v218 = vunpack.c.l.b16 %v185
      %v219 = vpack.c.b16 %v217, %v216
      %v220 = vpack.c.b16 %v218, %v218
      %vm222 = vcmask 195584
      %v224 = vsel %vm222, %v209, 0
      %v227 = vsel %vm222, %v210, 0
      %v230 = vsel %vm222, %v211, 0
      %v233 = vsel %vm222, %v212, 0
      %vm235 = vcmask 1043456
      %v237 = vsel %vm235, %v220, 0
      %239 = vmatprep.subr.bf16.mxu0 0
      %240 = vmatpush1.bf16.msra.mxu0 0
      %241 = vmatprep.subr.bf16.mxu0 0
      %242 = vmatpush1.bf16.msra.mxu0 0
      %243 = vmatprep.subr.bf16.mxu0 0
      %244 = vmatpush1.bf16.msra.mxu0 0
      %245 = vmatprep.subr.bf16.mxu0 0
      %246 = vmatpush1.bf16.msra.mxu0 0
      %247 = vmatprep.subr.bf16.mxu0 0
      %248 = vmatpush1.bf16.msra.mxu0 0
      %249 = vmatprep.subr.bf16.mxu0 0
      %250 = vmatpush1.bf16.msra.mxu0 0
      %251 = vmatprep.subr.bf16.mxu0 0
      %252 = vmatpush1.bf16.msra.mxu0 %v237
      %253 = vmatprep.subr.bf16.mxu0 0
      %254 = vmatpush1.bf16.msra.mxu0 %v219
      %255 = vmatprep.subr.bf16.mxu0 0
      %256 = vmatpush2.bf16.msra.mxu0 0
      %257 = vmatprep.subr.bf16.mxu0 0
      %258 = vmatpush2.bf16.msra.mxu0 0
      %259 = vmatprep.subr.bf16.mxu0 0
      %260 = vmatpush2.bf16.msra.mxu0 0
      %261 = vmatprep.subr.bf16.mxu0 0
      %262 = vmatpush2.bf16.msra.mxu0 0
      %263 = vmatprep.subr.bf16.mxu0 0
      %264 = vmatpush2.bf16.msra.mxu0 0
      %265 = vmatprep.subr.bf16.mxu0 0
      %266 = vmatpush2.bf16.msra.mxu0 0
      %267 = vmatprep.subr.bf16.mxu0 0
      %268 = vmatpush2.bf16.msra.mxu0 0
      %269 = vmatprep.subr.bf16.mxu0 0
      %270 = vmatpush2.bf16.msra.mxu0 0
      %271 = vmatprep.mubr.bf16.mxu0 0
      %272 = vmatmul.mubr.bf16.gmra.mxu0 %v224
      %v273 = vpop.f32.mrf.mxu0
      %v274 = vadd.f32 %v191, %v273
      %v275 = vpop.f32.mrf.mxu0
      %v276 = vpop.f32.mrf.mxu0
      %v277 = vadd.f32 %v191, %v276
      %v278 = vpop.f32.mrf.mxu0
      %279 = vmatprep.mubr.bf16.mxu0 0
      %280 = vmatmul.mubr.bf16.gmra.mxu0 %v227
      %v281 = vpop.f32.mrf.mxu0
      %v282 = vadd.f32 %v191, %v281
      %v283 = vpop.f32.mrf.mxu0
      %v284 = vpop.f32.mrf.mxu0
      %v285 = vadd.f32 %v191, %v284
      %v286 = vpop.f32.mrf.mxu0
      %287 = vmatprep.mubr.bf16.mxu0 0
      %288 = vmatmul.mubr.bf16.gmra.mxu0 %v230
      %v289 = vpop.f32.mrf.mxu0
      %v290 = vadd.f32 %v191, %v289
      %v291 = vpop.f32.mrf.mxu0
      %v292 = vpop.f32.mrf.mxu0
      %v293 = vadd.f32 %v191, %v292
      %v294 = vpop.f32.mrf.mxu0
      %295 = vmatprep.mubr.bf16.mxu0 0
      %296 = vmatmul.mubr.bf16.gmra.mxu0 %v233
      %v297 = vpop.f32.mrf.mxu0
      %v298 = vadd.f32 %v191, %v297
      %v299 = vpop.f32.mrf.mxu0
      %v300 = vpop.f32.mrf.mxu0
      %v301 = vadd.f32 %v191, %v300
      %v302 = vpop.f32.mrf.mxu0
      %303 = vdwg.mxu0
      %v304 = vmax.f32 %v274, 0.0
      %v305 = vmax.f32 %v277, 0.0
      %v306 = vmax.f32 %v282, 0.0
      %v307 = vmax.f32 %v285, 0.0
      %v308 = vmax.f32 %v290, 0.0
      %v309 = vmax.f32 %v293, 0.0
      %v310 = vmax.f32 %v298, 0.0
      %v311 = vmax.f32 %v301, 0.0
      %v312 = vpack.c.bf16 %v305, %v304
      %v313 = vpack.c.bf16 %v307, %v306
      %v314 = vpack.c.bf16 %v309, %v308
      %v315 = vpack.c.bf16 %v311, %v310
      %v320 = vunpack.c.l.b16 %v312
      %v321 = vunpack.c.h.b16 %v312
      %v322 = vunpack.c.l.b16 %v313
      %v323 = vunpack.c.h.b16 %v313
      %v324 = vunpack.c.l.b16 %v314
      %v325 = vunpack.c.h.b16 %v314
      %v326 = vunpack.c.l.b16 %v315
      %v327 = vunpack.c.h.b16 %v315
      %v328 = vpack.c.b16 %v320, %v320
      %v329 = vpack.c.b16 %v321, %v321
      %v330 = vpack.c.b16 %v322, %v322
      %v331 = vpack.c.b16 %v323, %v323
      %v332 = vpack.c.b16 %v324, %v324
      %v333 = vpack.c.b16 %v325, %v325
      %v334 = vpack.c.b16 %v326, %v326
      %v335 = vpack.c.b16 %v327, %v327
      %vm344 = vcmask 191488
      %345 = vst.msk [vmem:[%s172] sm:$0xf] %vm344, %v328
      %346 = vst.msk [vmem:[%s172 + $0x4] sm:$0xf] %vm344, %v329
      %347 = vst.msk [vmem:[%s172 + $0x8] sm:$0xf] %vm344, %v330
      %348 = vst.msk [vmem:[%s172 + $0xc] sm:$0xf] %vm344, %v331
      %349 = vst.msk [vmem:[%s172 + $0x10] sm:$0xf] %vm344, %v332
      %350 = vst.msk [vmem:[%s172 + $0x14] sm:$0xf] %vm344, %v333
      %351 = vst.msk [vmem:[%s172 + $0x18] sm:$0xf] %vm344, %v334
      %352 = vst.msk [vmem:[%s172 + $0x1c] sm:$0xf] %vm344, %v335
      %s353 = smul.u32 8, %s14
      %p354 = scmp.lt.s32.totalorder %s353, 15
      %s355 = scalar_select %p354, %s353, 15
      %s356 = smul.addr %s355, 4
      %s357 = scalar_lea.vmem %s3, %s356
      // Predicated region
      $region33: #{_lambda_.36} parent=31 // pred_check
        %p358 = pneg %p100
      $region34: #{_lambda_.36} parent=31 // pred_check_branch
        %360 = sbr.rel (%p358) target = $region36
      $region35: #{_lambda_.36} parent=31 // pred_region
        %s361 = smul.u32 8, %s14
      $region36: #{_lambda_.36} parent=31 // pred_fallthru
        _
    $region32: #{_lambda_.36} parent=5 // pred_fallthru
      _
    %p362 = scmp.le.s32.totalorder 2, %s9
    // Predicated region
    $region37: #{_lambda_.36} parent=5 // pred_check
      %p363 = pneg %p362
    $region38: #{_lambda_.36} parent=5 // pred_check_branch
      %365 = sbr.rel (%p363) target = $region40
    $region39: #{_lambda_.36} parent=5 // pred_region
      %s366 = ssub.s32 %s9, 2
      // Predicated region
      $region41: #{_lambda_.36} parent=39 // pred_check
        %p367 = pneg %p106
      $region42: #{_lambda_.36} parent=39 // pred_check_branch
        %369 = sbr.rel (%p367) target = $region44
      $region43: #{_lambda_.36} parent=39 // pred_region
        %s370 = smul.u32 8, %s15
        %p371 = scmp.lt.s32.totalorder %s370, 15
        %s372 = scalar_select %p371, %s370, 15
        %s373 = smul.addr %s372, 4
        %s374 = scalar_lea.vmem %s3, %s373
      $region44: #{_lambda_.36} parent=39 // pred_fallthru
        _
    $region40: #{_lambda_.36} parent=5 // pred_fallthru
      _
  $region6: #{_lambda_.36} parent=0 // loop_footer
    %s13 = sadd.s32 1, %s9
  $region7: #{_lambda_.36} parent=0 // loop_footer_branch
    %8 = sbr.rel target = $region3
  $region8: #{_lambda_.36} parent=0 // loop_exit
    _

// kernel: _lambda_.35
$region0: #{_lambda_.35}
  #allocation0 [shape = 'u32[]', space=smem, size = 0x4, offset = 0x4, fixed_abs, tag = 'smem constant byte address 0x4 - core index']
  #allocation1 [shape = 'u32[144,128]{1,0:T(1,128)}', space=vmem, size = 0x12000, scoped, tag = 'internal scratch']
  %s0 = inlined_call_operand.vmem [shape: bf16[2,9,9,24], index: 0, kind: input, shape index: {}]
  %s1 = inlined_call_operand.vmem [shape: bf16[2,9,9,24], index: 1, kind: input, shape index: {}]
  %s2 = inlined_call_operand.vmem [shape: bf16[2,9,9,24], index: 2, kind: input, shape index: {}]
  %s3 = inlined_call_operand.vmem [shape: bf16[2,9,9,24], index: 3, kind: input, shape index: {}]
  %s4 = inlined_call_operand.vmem [shape: f32[9,1,24], index: 4, kind: input, shape index: {}]
  %s5 = inlined_call_operand.vmem [shape: f32[1,24], index: 5, kind: input, shape index: {}]
  %s6 = inlined_call_operand.vmem [shape: bf16[2,8,8,24], index: 6, kind: output, shape index: {}]
  %s7 = sld [smem:[#allocation0]]
  $region57: #{_lambda_.35} parent=0
    _
  %s9 = ssub.s32 1, %s7
  %s10 = scalar_select 0, %s9, %s7
  loop: start=0, step=1, limit=4
  $region2: #{_lambda_.35} parent=0 // loop_pre_header
    _
  $region3: #{_lambda_.35} parent=0 // loop_header
    %s12 = sphi 0, %s16
    %p13 = scmp.ge.s32.totalorder %s12, 4
    %s22 = sphi 0, %s24
    %s25 = sphi 0, %s22
    %s26 = sphi 0, %s25
    %s42 = sphi 0, %s26
    %s48 = sphi 0, %s50
    %s51 = sphi 0, %s48
    %s52 = sphi 0, %s51
    %s68 = sphi 0, %s52
    %s74 = sphi 0, %s76
    %s77 = sphi 0, %s74
    %s78 = sphi 0, %s77
    %s94 = sphi 0, %s78
    %s100 = sphi 0, %s102
    %s103 = sphi 0, %s100
    %s104 = sphi 0, %s103
    %s120 = sphi 0, %s104
    %s124 = sphi 0, %s124
    %s126 = sphi 0, %s124
    %s127 = sphi 0, %s126
    %s141 = sphi 0, %s127
    %s145 = sphi 0, %s145
    %s147 = sphi 0, %s145
    %s148 = sphi 0, %s147
    %s162 = sphi 0, %s148
    %s168 = sphi 0, %s170
    %s171 = sphi 0, %s168
    %s172 = sphi 0, %s171
    %s188 = sphi 0, %s172
  $region4: #{_lambda_.35} parent=0 // loop_header_branch
    %15 = sbr.rel (%p13) target = $region8
  $region5: #{_lambda_.35} parent=0 // loop_body
    %s17 = ssub.s32 %s12, 1
    %s18 = ssub.s32 %s12, 2
    %s19 = sadd.s32 %s12, 1
    %s20 = ssub.s32 %s12, %s19
    %p21 = scmp.eq.s32.totalorder %s20, 0
    %s23 = sadd.s32 %s22, 1
    %s24 = scalar_select %p21, %s22, %s23
    %p27 = pneg %p21
    %p28 = scmp.eq.s32.totalorder %s12, 1
    %p29 = por %p27, %p28
    %p30 = scmp.ne.s32.totalorder %s22, %s25
    %p31 = scmp.eq.s32.totalorder %s12, 0
    %p32 = por %p30, %p31
    %p33 = scmp.ne.s32.totalorder %s22, %s25
    %p34 = scmp.eq.s32.totalorder %s17, 1
    %p35 = por %p33, %p34
    %p36 = scmp.ne.s32.totalorder %s25, %s26
    %p37 = scmp.eq.s32.totalorder %s17, 0
    %p38 = por %p36, %p37
    %p39 = scmp.ne.s32.totalorder %s25, %s26
    %p40 = scmp.eq.s32.totalorder %s18, 1
    %p41 = por %p39, %p40
    %p43 = scmp.ne.s32.totalorder %s26, %s42
    %p44 = scmp.eq.s32.totalorder %s18, 0
    %p45 = por %p43, %p44
    %s46 = ssub.s32 %s12, %s19
    %p47 = scmp.eq.s32.totalorder %s46, 0
    %s49 = sadd.s32 %s48, 1
    %s50 = scalar_select %p47, %s48, %s49
    %p53 = pneg %p47
    %p54 = scmp.eq.s32.totalorder %s12, 1
    %p55 = por %p53, %p54
    %p56 = scmp.ne.s32.totalorder %s48, %s51
    %p57 = scmp.eq.s32.totalorder %s12, 0
    %p58 = por %p56, %p57
    %p59 = scmp.ne.s32.totalorder %s48, %s51
    %p60 = scmp.eq.s32.totalorder %s17, 1
    %p61 = por %p59, %p60
    %p62 = scmp.ne.s32.totalorder %s51, %s52
    %p63 = scmp.eq.s32.totalorder %s17, 0
    %p64 = por %p62, %p63
    %p65 = scmp.ne.s32.totalorder %s51, %s52
    %p66 = scmp.eq.s32.totalorder %s18, 1
    %p67 = por %p65, %p66
    %p69 = scmp.ne.s32.totalorder %s52, %s68
    %p70 = scmp.eq.s32.totalorder %s18, 0
    %p71 = por %p69, %p70
    %s72 = ssub.s32 %s12, %s19
    %p73 = scmp.eq.s32.totalorder %s72, 0
    %s75 = sadd.s32 %s74, 1
    %s76 = scalar_select %p73, %s74, %s75
    %p79 = pneg %p73
    %p80 = scmp.eq.s32.totalorder %s12, 1
    %p81 = por %p79, %p80
    %p82 = scmp.ne.s32.totalorder %s74, %s77
    %p83 = scmp.eq.s32.totalorder %s12, 0
    %p84 = por %p82, %p83
    %p85 = scmp.ne.s32.totalorder %s74, %s77
    %p86 = scmp.eq.s32.totalorder %s17, 1
    %p87 = por %p85, %p86
    %p88 = scmp.ne.s32.totalorder %s77, %s78
    %p89 = scmp.eq.s32.totalorder %s17, 0
    %p90 = por %p88, %p89
    %p91 = scmp.ne.s32.totalorder %s77, %s78
    %p92 = scmp.eq.s32.totalorder %s18, 1
    %p93 = por %p91, %p92
    %p95 = scmp.ne.s32.totalorder %s78, %s94
    %p96 = scmp.eq.s32.totalorder %s18, 0
    %p97 = por %p95, %p96
    %s98 = ssub.s32 %s12, %s19
    %p99 = scmp.eq.s32.totalorder %s98, 0
    %s101 = sadd.s32 %s100, 1
    %s102 = scalar_select %p99, %s100, %s101
    %p105 = pneg %p99
    %p106 = scmp.eq.s32.totalorder %s12, 1
    %p107 = por %p105, %p106
    %p108 = scmp.ne.s32.totalorder %s100, %s103
    %p109 = scmp.eq.s32.totalorder %s12, 0
    %p110 = por %p108, %p109
    %p111 = scmp.ne.s32.totalorder %s100, %s103
    %p112 = scmp.eq.s32.totalorder %s17, 1
    %p113 = por %p111, %p112
    %p114 = scmp.ne.s32.totalorder %s103, %s104
    %p115 = scmp.eq.s32.totalorder %s17, 0
    %p116 = por %p114, %p115
    %p117 = scmp.ne.s32.totalorder %s103, %s104
    %p118 = scmp.eq.s32.totalorder %s18, 1
    %p119 = por %p117, %p118
    %p121 = scmp.ne.s32.totalorder %s104, %s120
    %p122 = scmp.eq.s32.totalorder %s18, 0
    %p123 = por %p121, %p122
    %s125 = sadd.s32 %s124, 1
    %p128 = scmp.eq.s32.totalorder %s12, 1
    %p129 = scmp.ne.s32.totalorder %s124, %s126
    %p130 = scmp.eq.s32.totalorder %s12, 0
    %p131 = por %p129, %p130
    %p132 = scmp.ne.s32.totalorder %s124, %s126
    %p133 = scmp.eq.s32.totalorder %s17, 1
    %p134 = por %p132, %p133
    %p135 = scmp.ne.s32.totalorder %s126, %s127
    %p136 = scmp.eq.s32.totalorder %s17, 0
    %p137 = por %p135, %p136
    %p138 = scmp.ne.s32.totalorder %s126, %s127
    %p139 = scmp.eq.s32.totalorder %s18, 1
    %p140 = por %p138, %p139
    %p142 = scmp.ne.s32.totalorder %s127, %s141
    %p143 = scmp.eq.s32.totalorder %s18, 0
    %p144 = por %p142, %p143
    %s146 = sadd.s32 %s145, 1
    %p149 = scmp.eq.s32.totalorder %s12, 1
    %p150 = scmp.ne.s32.totalorder %s145, %s147
    %p151 = scmp.eq.s32.totalorder %s12, 0
    %p152 = por %p150, %p151
    %p153 = scmp.ne.s32.totalorder %s145, %s147
    %p154 = scmp.eq.s32.totalorder %s17, 1
    %p155 = por %p153, %p154
    %p156 = scmp.ne.s32.totalorder %s147, %s148
    %p157 = scmp.eq.s32.totalorder %s17, 0
    %p158 = por %p156, %p157
    %p159 = scmp.ne.s32.totalorder %s147, %s148
    %p160 = scmp.eq.s32.totalorder %s18, 1
    %p161 = por %p159, %p160
    %p163 = scmp.ne.s32.totalorder %s148, %s162
    %p164 = scmp.eq.s32.totalorder %s18, 0
    %p165 = por %p163, %p164
    %s166 = ssub.s32 %s12, %s19
    %p167 = scmp.eq.s32.totalorder %s166, 0
    %s169 = sadd.s32 %s168, 1
    %s170 = scalar_select %p167, %s168, %s169
    %p173 = pneg %p167
    %p174 = scmp.eq.s32.totalorder %s12, 1
    %p175 = por %p173, %p174
    %p176 = scmp.ne.s32.totalorder %s168, %s171
    %p177 = scmp.eq.s32.totalorder %s12, 0
    %p178 = por %p176, %p177
    %p179 = scmp.ne.s32.totalorder %s168, %s171
    %p180 = scmp.eq.s32.totalorder %s17, 1
    %p181 = por %p179, %p180
    %p182 = scmp.ne.s32.totalorder %s171, %s172
    %p183 = scmp.eq.s32.totalorder %s17, 0
    %p184 = por %p182, %p183
    %p185 = scmp.ne.s32.totalorder %s171, %s172
    %p186 = scmp.eq.s32.totalorder %s18, 1
    %p187 = por %p185, %p186
    %p189 = scmp.ne.s32.totalorder %s172, %s188
    %p190 = scmp.eq.s32.totalorder %s18, 0
    %p191 = por %p189, %p190
    %p192 = scmp.le.s32.totalorder 1, %s12
    %p193 = scmp.lt.s32.totalorder %s12, 3
    %p194 = pnand %p192, %p193
    %p195 = pneg %p194
    // Predicated region
    $region9: #{_lambda_.35} parent=5 // pred_check
      _
    $region10: #{_lambda_.35} parent=5 // pred_check_branch
      %197 = sbr.rel (%p194) target = $region12
    $region11: #{_lambda_.35} parent=5 // pred_region
      %s198 = ssub.s32 %s12, 1
      // Predicated region
      $region13: #{_lambda_.35} parent=11 // pred_check
        %p199 = pneg %p137
      $region14: #{_lambda_.35} parent=11 // pred_check_branch
        %201 = sbr.rel (%p199) target = $region16
      $region15: #{_lambda_.35} parent=11 // pred_region
        _
      $region16: #{_lambda_.35} parent=11 // pred_fallthru
        _
      // Predicated region
      $region17: #{_lambda_.35} parent=11 // pred_check
        %p202 = pneg %p158
      $region18: #{_lambda_.35} parent=11 // pred_check_branch
        %204 = sbr.rel (%p202) target = $region20
      $region19: #{_lambda_.35} parent=11 // pred_region
        _
      $region20: #{_lambda_.35} parent=11 // pred_fallthru
        _
    $region12: #{_lambda_.35} parent=5 // pred_fallthru
      _
    %p205 = scmp.lt.s32.totalorder %s12, 2
    // Predicated region
    $region21: #{_lambda_.35} parent=5 // pred_check
      %p206 = pneg %p205
    $region22: #{_lambda_.35} parent=5 // pred_check_branch
      %208 = sbr.rel (%p206) target = $region24
    $region23: #{_lambda_.35} parent=5 // pred_region
      // Predicated region
      $region25: #{_lambda_.35} parent=23 // pred_check
        %p209 = pneg %p32
      $region26: #{_lambda_.35} parent=23 // pred_check_branch
        %211 = sbr.rel (%p209) target = $region28
      $region27: #{_lambda_.35} parent=23 // pred_region
        %p212 = scmp.lt.s32.totalorder %s12, 1
        %s213 = scalar_select %p212, %s12, 1
        %s214 = smul.addr %s213, 18
        %s215 = smul.addr %s214, 4
        %s216 = scalar_lea.vmem %s0, %s215
      $region28: #{_lambda_.35} parent=23 // pred_fallthru
        _
      // Predicated region
      $region29: #{_lambda_.35} parent=23 // pred_check
        %p217 = pneg %p58
      $region30: #{_lambda_.35} parent=23 // pred_check_branch
        %219 = sbr.rel (%p217) target = $region32
      $region31: #{_lambda_.35} parent=23 // pred_region
        %p220 = scmp.lt.s32.totalorder %s12, 1
        %s221 = scalar_select %p220, %s12, 1
        %s222 = smul.addr %s221, 18
        %s223 = smul.addr %s222, 4
        %s224 = scalar_lea.vmem %s1, %s223
      $region32: #{_lambda_.35} parent=23 // pred_fallthru
        _
      // Predicated region
      $region33: #{_lambda_.35} parent=23 // pred_check
        %p225 = pneg %p84
      $region34: #{_lambda_.35} parent=23 // pred_check_branch
        %227 = sbr.rel (%p225) target = $region36
      $region35: #{_lambda_.35} parent=23 // pred_region
        %p228 = scmp.lt.s32.totalorder %s12, 1
        %s229 = scalar_select %p228, %s12, 1
        %s230 = smul.addr %s229, 18
        %s231 = smul.addr %s230, 4
        %s232 = scalar_lea.vmem %s2, %s231
      $region36: #{_lambda_.35} parent=23 // pred_fallthru
        _
      // Predicated region
      $region37: #{_lambda_.35} parent=23 // pred_check
        %p233 = pneg %p110
      $region38: #{_lambda_.35} parent=23 // pred_check_branch
        %235 = sbr.rel (%p233) target = $region40
      $region39: #{_lambda_.35} parent=23 // pred_region
        %p236 = scmp.lt.s32.totalorder %s12, 1
        %s237 = scalar_select %p236, %s12, 1
        %s238 = smul.addr %s237, 18
        %s239 = smul.addr %s238, 4
        %s240 = scalar_lea.vmem %s3, %s239
      $region40: #{_lambda_.35} parent=23 // pred_fallthru
        _
    $region24: #{_lambda_.35} parent=5 // pred_fallthru
      _
    %p241 = scmp.le.s32.totalorder 1, %s12
    %p242 = scmp.lt.s32.totalorder %s12, 3
    %p243 = pnand %p241, %p242
    %p244 = pneg %p243
    // Predicated region
    $region41: #{_lambda_.35} parent=5 // pred_check
      _
    $region42: #{_lambda_.35} parent=5 // pred_check_branch
      %246 = sbr.rel (%p243) target = $region44
    $region43: #{_lambda_.35} parent=5 // pred_region
      %s247 = ssub.s32 %s12, 1
      %p248 = scmp.lt.s32.totalorder %s17, 1
      %s249 = scalar_select %p248, %s17, 1
      %s250 = smul.addr %s249, 18
      %s251 = smul.addr %s250, 4
      %s252 = scalar_lea.vmem %s0, %s251
      %p253 = pneg %p38
      %p254 = pneg %p35
      %p255 = scmp.lt.s32.totalorder %s17, 1
      %s256 = scalar_select %p255, %s17, 1
      %s257 = smul.addr %s256, 18
      %s258 = smul.addr %s257, 4
      %s259 = scalar_lea.vmem %s1, %s258
      %p260 = pneg %p64
      %p261 = pneg %p61
      %p262 = scmp.lt.s32.totalorder %s17, 1
      %s263 = scalar_select %p262, %s17, 1
      %s264 = smul.addr %s263, 18
      %s265 = smul.addr %s264, 4
      %s266 = scalar_lea.vmem %s2, %s265
      %p267 = pneg %p90
      %p268 = pneg %p87
      %p269 = scmp.lt.s32.totalorder %s17, 1
      %s270 = scalar_select %p269, %s17, 1
      %s271 = smul.addr %s270, 18
      %s272 = smul.addr %s271, 4
      %s273 = scalar_lea.vmem %s3, %s272
      %p274 = pneg %p116
      %p275 = pneg %p113
      %p276 = pneg %p137
      %p277 = pneg %p134
      %p278 = pneg %p158
      %p279 = pneg %p155
      %p280 = pneg %p184
      %p281 = pneg %p181
      %p282 = scmp.lt.s32.totalorder %s17, 1
      %s283 = scalar_select %p282, %s17, 1
      %s284 = smul.addr %s283, 8
      %s285 = smul.addr %s284, 4
      %s286 = scalar_lea.vmem %s6, %s285
      %p287 = scmp.lt.s32.totalorder %s17, 1
      %s288 = scalar_select %p287, %s17, 1
      %s289 = smul.addr %s288, 18
      %s290 = smul.addr %s289, 4
      %s291 = scalar_lea.vmem %s0, %s290
      %p292 = scmp.lt.s32.totalorder %s17, 1
      %s293 = scalar_select %p292, %s17, 1
      %s294 = smul.addr %s293, 18
      %s295 = smul.addr %s294, 4
      %s296 = scalar_lea.vmem %s1, %s295
      %p297 = scmp.lt.s32.totalorder %s17, 1
      %s298 = scalar_select %p297, %s17, 1
      %s299 = smul.addr %s298, 18
      %s300 = smul.addr %s299, 4
      %s301 = scalar_lea.vmem %s2, %s300
      %p302 = scmp.lt.s32.totalorder %s17, 1
      %s303 = scalar_select %p302, %s17, 1
      %s304 = smul.addr %s303, 18
      %s305 = smul.addr %s304, 4
      %s306 = scalar_lea.vmem %s3, %s305
      %p307 = scmp.lt.s32.totalorder %s17, 1
      %s308 = scalar_select %p307, %s17, 1
      %s309 = smul.addr %s308, 8
      %s310 = smul.addr %s309, 4
      %s311 = scalar_lea.vmem %s6, %s310
      %v312 = vld [vmem:[%s291] sm:$0xf]
      %v313 = vld [vmem:[%s291 + $0x4] sm:$0x1]
      %v314 = vld [vmem:[%s291 + $0x8] sm:$0xf]
      %v315 = vld [vmem:[%s291 + $0xc] sm:$0x1]
      %v316 = vld [vmem:[%s291 + $0x10] sm:$0xf]
      %v317 = vld [vmem:[%s291 + $0x14] sm:$0x1]
      %v318 = vld [vmem:[%s291 + $0x18] sm:$0xf]
      %v319 = vld [vmem:[%s291 + $0x1c] sm:$0x1]
      %v320 = vld [vmem:[%s291 + $0x20] sm:$0xf]
      %v321 = vld [vmem:[%s291 + $0x24] sm:$0x1]
      %v322 = vld [vmem:[%s291 + $0x28] sm:$0xf]
      %v323 = vld [vmem:[%s291 + $0x2c] sm:$0x1]
      %v324 = vld [vmem:[%s291 + $0x30] sm:$0xf]
      %v325 = vld [vmem:[%s291 + $0x34] sm:$0x1]
      %v326 = vld [vmem:[%s291 + $0x38] sm:$0xf]
      %v327 = vld [vmem:[%s291 + $0x3c] sm:$0x1]
      %v328 = vld [vmem:[%s291 + $0x40] sm:$0xf]
      %v329 = vld [vmem:[%s291 + $0x44] sm:$0x1]
      %v330 = vld [vmem:[%s296] sm:$0xf]
      %v331 = vld [vmem:[%s296 + $0x8] sm:$0xf]
      %v332 = vld [vmem:[%s296 + $0x10] sm:$0xf]
      %v333 = vld [vmem:[%s296 + $0x18] sm:$0xf]
      %v334 = vld [vmem:[%s296 + $0x20] sm:$0xf]
      %v335 = vld [vmem:[%s296 + $0x28] sm:$0xf]
      %v336 = vld [vmem:[%s296 + $0x30] sm:$0xf]
      %v337 = vld [vmem:[%s296 + $0x38] sm:$0xf]
      %v338 = vld [vmem:[%s296 + $0x40] sm:$0xf]
      %v339 = vld [vmem:[%s301] sm:$0xf]
      %v340 = vld [vmem:[%s301 + $0x4] sm:$0x1]
      %v341 = vld [vmem:[%s301 + $0x8] sm:$0xf]
      %v342 = vld [vmem:[%s301 + $0xc] sm:$0x1]
      %v343 = vld [vmem:[%s301 + $0x10] sm:$0xf]
      %v344 = vld [vmem:[%s301 + $0x14] sm:$0x1]
      %v345 = vld [vmem:[%s301 + $0x18] sm:$0xf]
      %v346 = vld [vmem:[%s301 + $0x1c] sm:$0x1]
      %v347 = vld [vmem:[%s301 + $0x20] sm:$0xf]
      %v348 = vld [vmem:[%s301 + $0x24] sm:$0x1]
      %v349 = vld [vmem:[%s301 + $0x28] sm:$0xf]
      %v350 = vld [vmem:[%s301 + $0x2c] sm:$0x1]
      %v351 = vld [vmem:[%s301 + $0x30] sm:$0xf]
      %v352 = vld [vmem:[%s301 + $0x34] sm:$0x1]
      %v353 = vld [vmem:[%s301 + $0x38] sm:$0xf]
      %v354 = vld [vmem:[%s301 + $0x3c] sm:$0x1]
      %v355 = vld [vmem:[%s306] sm:$0xf]
      %v356 = vld [vmem:[%s306 + $0x8] sm:$0xf]
      %v357 = vld [vmem:[%s306 + $0x10] sm:$0xf]
      %v358 = vld [vmem:[%s306 + $0x18] sm:$0xf]
      %v359 = vld [vmem:[%s306 + $0x20] sm:$0xf]
      %v360 = vld [vmem:[%s306 + $0x28] sm:$0xf]
      %v361 = vld [vmem:[%s306 + $0x30] sm:$0xf]
      %v362 = vld [vmem:[%s306 + $0x38] sm:$0xf]
      %v363 = vunpack.c.l.bf16 %v312
      %v364 = vunpack.c.l.bf16 %v314
      %v365 = vunpack.c.l.bf16 %v316
      %v366 = vunpack.c.l.bf16 %v318
      %v367 = vunpack.c.l.bf16 %v320
      %v368 = vunpack.c.l.bf16 %v322
      %v369 = vunpack.c.l.bf16 %v324
      %v370 = vunpack.c.l.bf16 %v326
      %v371 = vld [vmem:[%s4] sm:$0x1]
      %v373 = vlaneseq
      %v374 = vshrl.u32 %v373, 7
      %v375 = vsub.s32 0, %v374
      %v376 = vrot.slane %v371, %v375
      %v378 = vmul.f32 %v363, %v376
      %v379 = vmul.f32 %v364, %v376
      %v380 = vmul.f32 %v365, %v376
      %v381 = vmul.f32 %v366, %v376
      %v382 = vmul.f32 %v367, %v376
      %v383 = vmul.f32 %v368, %v376
      %v384 = vmul.f32 %v369, %v376
      %v385 = vmul.f32 %v370, %v376
      %v386 = vadd.f32 %v378, 0.0
      %v387 = vadd.f32 %v379, 0.0
      %v388 = vadd.f32 %v380, 0.0
      %v389 = vadd.f32 %v381, 0.0
      %v390 = vadd.f32 %v382, 0.0
      %v391 = vadd.f32 %v383, 0.0
      %v392 = vadd.f32 %v384, 0.0
      %v393 = vadd.f32 %v385, 0.0
      %v394 = vunpack.c.l.bf16 %v330
      %v395 = vunpack.c.l.bf16 %v331
      %v396 = vunpack.c.l.bf16 %v332
      %v397 = vunpack.c.l.bf16 %v333
      %v398 = vunpack.c.l.bf16 %v334
      %v399 = vunpack.c.l.bf16 %v335
      %v400 = vunpack.c.l.bf16 %v336
      %v401 = vunpack.c.l.bf16 %v337
      %s402 = scalar_lea.vmem %s4, 1
      %v403 = vld [vmem:[%s402] sm:$0x1]
      %v405 = vlaneseq
      %v406 = vshrl.u32 %v405, 7
      %v407 = vsub.s32 0, %v406
      %v408 = vrot.slane %v403, %v407
      %v410 = vmul.f32 %v394, %v408
      %v411 = vmul.f32 %v395, %v408
      %v412 = vmul.f32 %v396, %v408
      %v413 = vmul.f32 %v397, %v408
      %v414 = vmul.f32 %v398, %v408
      %v415 = vmul.f32 %v399, %v408
      %v416 = vmul.f32 %v400, %v408
      %v417 = vmul.f32 %v401, %v408
      %v418 = vadd.f32 %v386, %v410
      %v419 = vadd.f32 %v387, %v411
      %v420 = vadd.f32 %v388, %v412
      %v421 = vadd.f32 %v389, %v413
      %v422 = vadd.f32 %v390, %v414
      %v423 = vadd.f32 %v391, %v415
      %v424 = vadd.f32 %v392, %v416
      %v425 = vadd.f32 %v393, %v417
      %v426 = vunpack.c.l.bf16 %v313
      %v427 = vunpack.c.l.bf16 %v315
      %v428 = vunpack.c.l.bf16 %v317
      %v429 = vunpack.c.l.bf16 %v319
      %v430 = vunpack.c.l.bf16 %v321
      %v431 = vunpack.c.l.bf16 %v323
      %v432 = vunpack.c.l.bf16 %v325
      %v433 = vunpack.c.l.bf16 %v327
      %s434 = scalar_lea.vmem %s4, 2
      %v435 = vld [vmem:[%s434] sm:$0x1]
      %v437 = vlaneseq
      %v438 = vshrl.u32 %v437, 7
      %v439 = vsub.s32 0, %v438
      %v440 = vrot.slane %v435, %v439
      %v442 = vmul.f32 %v363, %v440
      %v443 = vmul.f32 %v426, %v440
      %v444 = vmul.f32 %v364, %v440
      %v445 = vmul.f32 %v427, %v440
      %v446 = vmul.f32 %v365, %v440
      %v447 = vmul.f32 %v428, %v440
      %v448 = vmul.f32 %v366, %v440
      %v449 = vmul.f32 %v429, %v440
      %v450 = vmul.f32 %v367, %v440
      %v451 = vmul.f32 %v430, %v440
      %v452 = vmul.f32 %v368, %v440
      %v453 = vmul.f32 %v431, %v440
      %v454 = vmul.f32 %v369, %v440
      %v455 = vmul.f32 %v432, %v440
      %v456 = vmul.f32 %v370, %v440
      %v457 = vmul.f32 %v433, %v440
      %vm474 = vcmask 1046528
      %v475 = vrot.slane %v442, 1
      %v476 = vrot.slane %v443, 1
      %v477 = vsel %vm474, %v475, %v476
      %v478 = vrot.slane %v444, 1
      %v479 = vrot.slane %v445, 1
      %v480 = vsel %vm474, %v478, %v479
      %v481 = vrot.slane %v446, 1
      %v482 = vrot.slane %v447, 1
      %v483 = vsel %vm474, %v481, %v482
      %v484 = vrot.slane %v448, 1
      %v485 = vrot.slane %v449, 1
      %v486 = vsel %vm474, %v484, %v485
      %v487 = vrot.slane %v450, 1
      %v488 = vrot.slane %v451, 1
      %v489 = vsel %vm474, %v487, %v488
      %v490 = vrot.slane %v452, 1
      %v491 = vrot.slane %v453, 1
      %v492 = vsel %vm474, %v490, %v491
      %v493 = vrot.slane %v454, 1
      %v494 = vrot.slane %v455, 1
      %v495 = vsel %vm474, %v493, %v494
      %v496 = vrot.slane %v456, 1
      %v497 = vrot.slane %v457, 1
      %v498 = vsel %vm474, %v496, %v497
      %v507 = vadd.f32 %v418, %v477
      %v508 = vadd.f32 %v419, %v480
      %v509 = vadd.f32 %v420, %v483
      %v510 = vadd.f32 %v421, %v486
      %v511 = vadd.f32 %v422, %v489
      %v512 = vadd.f32 %v423, %v492
      %v513 = vadd.f32 %v424, %v495
      %v514 = vadd.f32 %v425, %v498
      %v515 = vunpack.c.l.bf16 %v339
      %v516 = vunpack.c.l.bf16 %v341
      %v517 = vunpack.c.l.bf16 %v343
      %v518 = vunpack.c.l.bf16 %v345
      %v519 = vunpack.c.l.bf16 %v347
      %v520 = vunpack.c.l.bf16 %v349
      %v521 = vunpack.c.l.bf16 %v351
      %v522 = vunpack.c.l.bf16 %v353
      %s523 = scalar_lea.vmem %s4, 3
      %v524 = vld [vmem:[%s523] sm:$0x1]
      %v526 = vlaneseq
      %v527 = vshrl.u32 %v526, 7
      %v528 = vsub.s32 0, %v527
      %v529 = vrot.slane %v524, %v528
      %v531 = vmul.f32 %v515, %v529
      %v532 = vmul.f32 %v516, %v529
      %v533 = vmul.f32 %v517, %v529
      %v534 = vmul.f32 %v518, %v529
      %v535 = vmul.f32 %v519, %v529
      %v536 = vmul.f32 %v520, %v529
      %v537 = vmul.f32 %v521, %v529
      %v538 = vmul.f32 %v522, %v529
      %v539 = vadd.f32 %v507, %v531
      %v540 = vadd.f32 %v508, %v532
      %v541 = vadd.f32 %v509, %v533
      %v542 = vadd.f32 %v510, %v534
      %v543 = vadd.f32 %v511, %v535
      %v544 = vadd.f32 %v512, %v536
      %v545 = vadd.f32 %v513, %v537
      %v546 = vadd.f32 %v514, %v538
      %v547 = vunpack.c.l.bf16 %v355
      %v548 = vunpack.c.l.bf16 %v356
      %v549 = vunpack.c.l.bf16 %v357
      %v550 = vunpack.c.l.bf16 %v358
      %v551 = vunpack.c.l.bf16 %v359
      %v552 = vunpack.c.l.bf16 %v360
      %v553 = vunpack.c.l.bf16 %v361
      %v554 = vunpack.c.l.bf16 %v362
      %s555 = scalar_lea.vmem %s4, 4
      %v556 = vld [vmem:[%s555] sm:$0x1]
      %v558 = vlaneseq
      %v559 = vshrl.u32 %v558, 7
      %v560 = vsub.s32 0, %v559
      %v561 = vrot.slane %v556, %v560
      %v563 = vmul.f32 %v547, %v561
      %v564 = vmul.f32 %v548, %v561
      %v565 = vmul.f32 %v549, %v561
      %v566 = vmul.f32 %v550, %v561
      %v567 = vmul.f32 %v551, %v561
      %v568 = vmul.f32 %v552, %v561
      %v569 = vmul.f32 %v553, %v561
      %v570 = vmul.f32 %v554, %v561
      %v571 = vadd.f32 %v539, %v563
      %v572 = vadd.f32 %v540, %v564
      %v573 = vadd.f32 %v541, %v565
      %v574 = vadd.f32 %v542, %v566
      %v575 = vadd.f32 %v543, %v567
      %v576 = vadd.f32 %v544, %v568
      %v577 = vadd.f32 %v545, %v569
      %v578 = vadd.f32 %v546, %v570
      %v579 = vunpack.c.l.bf16 %v340
      %v580 = vunpack.c.l.bf16 %v342
      %v581 = vunpack.c.l.bf16 %v344
      %v582 = vunpack.c.l.bf16 %v346
      %v583 = vunpack.c.l.bf16 %v348
      %v584 = vunpack.c.l.bf16 %v350
      %v585 = vunpack.c.l.bf16 %v352
      %v586 = vunpack.c.l.bf16 %v354
      %s587 = scalar_lea.vmem %s4, 5
      %v588 = vld [vmem:[%s587] sm:$0x1]
      %v590 = vlaneseq
      %v591 = vshrl.u32 %v590, 7
      %v592 = vsub.s32 0, %v591
      %v593 = vrot.slane %v588, %v592
      %v595 = vmul.f32 %v515, %v593
      %v596 = vmul.f32 %v579, %v593
      %v597 = vmul.f32 %v516, %v593
      %v598 = vmul.f32 %v580, %v593
      %v599 = vmul.f32 %v517, %v593
      %v600 = vmul.f32 %v581, %v593
      %v601 = vmul.f32 %v518, %v593
      %v602 = vmul.f32 %v582, %v593
      %v603 = vmul.f32 %v519, %v593
      %v604 = vmul.f32 %v583, %v593
      %v605 = vmul.f32 %v520, %v593
      %v606 = vmul.f32 %v584, %v593
      %v607 = vmul.f32 %v521, %v593
      %v608 = vmul.f32 %v585, %v593
      %v609 = vmul.f32 %v522, %v593
      %v610 = vmul.f32 %v586, %v593
      %v627 = vrot.slane %v595, 1
      %v628 = vrot.slane %v596, 1
      %v629 = vsel %vm474, %v627, %v628
      %v630 = vrot.slane %v597, 1
      %v631 = vrot.slane %v598, 1
      %v632 = vsel %vm474, %v630, %v631
      %v633 = vrot.slane %v599, 1
      %v634 = vrot.slane %v600, 1
      %v635 = vsel %vm474, %v633, %v634
      %v636 = vrot.slane %v601, 1
      %v637 = vrot.slane %v602, 1
      %v638 = vsel %vm474, %v636, %v637
      %v639 = vrot.slane %v603, 1
      %v640 = vrot.slane %v604, 1
      %v641 = vsel %vm474, %v639, %v640
      %v642 = vrot.slane %v605, 1
      %v643 = vrot.slane %v606, 1
      %v644 = vsel %vm474, %v642, %v643
      %v645 = vrot.slane %v607, 1
      %v646 = vrot.slane %v608, 1
      %v647 = vsel %vm474, %v645, %v646
      %v648 = vrot.slane %v609, 1
      %v649 = vrot.slane %v610, 1
      %v650 = vsel %vm474, %v648, %v649
      %v659 = vadd.f32 %v571, %v629
      %v660 = vadd.f32 %v572, %v632
      %v661 = vadd.f32 %v573, %v635
      %v662 = vadd.f32 %v574, %v638
      %v663 = vadd.f32 %v575, %v641
      %v664 = vadd.f32 %v576, %v644
      %v665 = vadd.f32 %v577, %v647
      %v666 = vadd.f32 %v578, %v650
      %v667 = vunpack.c.l.bf16 %v328
      %s668 = scalar_lea.vmem %s4, 6
      %v669 = vld [vmem:[%s668] sm:$0x1]
      %v671 = vlaneseq
      %v672 = vshrl.u32 %v671, 7
      %v673 = vsub.s32 0, %v672
      %v674 = vrot.slane %v669, %v673
      %v676 = vmul.f32 %v364, %v674
      %v677 = vmul.f32 %v365, %v674
      %v678 = vmul.f32 %v366, %v674
      %v679 = vmul.f32 %v367, %v674
      %v680 = vmul.f32 %v368, %v674
      %v681 = vmul.f32 %v369, %v674
      %v682 = vmul.f32 %v370, %v674
      %v683 = vmul.f32 %v667, %v674
      %v684 = vadd.f32 %v659, %v676
      %v685 = vadd.f32 %v660, %v677
      %v686 = vadd.f32 %v661, %v678
      %v687 = vadd.f32 %v662, %v679
      %v688 = vadd.f32 %v663, %v680
      %v689 = vadd.f32 %v664, %v681
      %v690 = vadd.f32 %v665, %v682
      %v691 = vadd.f32 %v666, %v683
      %v692 = vunpack.c.l.bf16 %v338
      %s693 = scalar_lea.vmem %s4, 7
      %v694 = vld [vmem:[%s693] sm:$0x1]
      %v696 = vlaneseq
      %v697 = vshrl.u32 %v696, 7
      %v698 = vsub.s32 0, %v697
      %v699 = vrot.slane %v694, %v698
      %v701 = vmul.f32 %v395, %v699
      %v702 = vmul.f32 %v396, %v699
      %v703 = vmul.f32 %v397, %v699
      %v704 = vmul.f32 %v398, %v699
      %v705 = vmul.f32 %v399, %v699
      %v706 = vmul.f32 %v400, %v699
      %v707 = vmul.f32 %v401, %v699
      %v708 = vmul.f32 %v692, %v699
      %v709 = vadd.f32 %v684, %v701
      %v710 = vadd.f32 %v685, %v702
      %v711 = vadd.f32 %v686, %v703
      %v712 = vadd.f32 %v687, %v704
      %v713 = vadd.f32 %v688, %v705
      %v714 = vadd.f32 %v689, %v706
      %v715 = vadd.f32 %v690, %v707
      %v716 = vadd.f32 %v691, %v708
      %v717 = vunpack.c.l.bf16 %v329
      %s718 = scalar_lea.vmem %s4, 8
      %v719 = vld [vmem:[%s718] sm:$0x1]
      %v721 = vlaneseq
      %v722 = vshrl.u32 %v721, 7
      %v723 = vsub.s32 0, %v722
      %v724 = vrot.slane %v719, %v723
      %v726 = vmul.f32 %v364, %v724
      %v727 = vmul.f32 %v427, %v724
      %v728 = vmul.f32 %v365, %v724
      %v729 = vmul.f32 %v428, %v724
      %v730 = vmul.f32 %v366, %v724
      %v731 = vmul.f32 %v429, %v724
      %v732 = vmul.f32 %v367, %v724
      %v733 = vmul.f32 %v430, %v724
      %v734 = vmul.f32 %v368, %v724
      %v735 = vmul.f32 %v431, %v724
      %v736 = vmul.f32 %v369, %v724
      %v737 = vmul.f32 %v432, %v724
      %v738 = vmul.f32 %v370, %v724
      %v739 = vmul.f32 %v433, %v724
      %v740 = vmul.f32 %v667, %v724
      %v741 = vmul.f32 %v717, %v724
      %v758 = vrot.slane %v726, 1
      %v759 = vrot.slane %v727, 1
      %v760 = vsel %vm474, %v758, %v759
      %v761 = vrot.slane %v728, 1
      %v762 = vrot.slane %v729, 1
      %v763 = vsel %vm474, %v761, %v762
      %v764 = vrot.slane %v730, 1
      %v765 = vrot.slane %v731, 1
      %v766 = vsel %vm474, %v764, %v765
      %v767 = vrot.slane %v732, 1
      %v768 = vrot.slane %v733, 1
      %v769 = vsel %vm474, %v767, %v768
      %v770 = vrot.slane %v734, 1
      %v771 = vrot.slane %v735, 1
      %v772 = vsel %vm474, %v770, %v771
      %v773 = vrot.slane %v736, 1
      %v774 = vrot.slane %v737, 1
      %v775 = vsel %vm474, %v773, %v774
      %v776 = vrot.slane %v738, 1
      %v777 = vrot.slane %v739, 1
      %v778 = vsel %vm474, %v776, %v777
      %v779 = vrot.slane %v740, 1
      %v780 = vrot.slane %v741, 1
      %v781 = vsel %vm474, %v779, %v780
      %v790 = vadd.f32 %v709, %v760
      %v791 = vadd.f32 %v710, %v763
      %v792 = vadd.f32 %v711, %v766
      %v793 = vadd.f32 %v712, %v769
      %v794 = vadd.f32 %v713, %v772
      %v795 = vadd.f32 %v714, %v775
      %v796 = vadd.f32 %v715, %v778
      %v797 = vadd.f32 %v716, %v781
      %v798 = vld [vmem:[%s5] sm:$0x1]
      %v800 = vlaneseq
      %v801 = vshrl.u32 %v800, 7
      %v802 = vsub.s32 0, %v801
      %v803 = vrot.slane %v798, %v802
      %v805 = vadd.f32 %v790, %v803
      %v806 = vadd.f32 %v791, %v803
      %v807 = vadd.f32 %v792, %v803
      %v808 = vadd.f32 %v793, %v803
      %v809 = vadd.f32 %v794, %v803
      %v810 = vadd.f32 %v795, %v803
      %v811 = vadd.f32 %v796, %v803
      %v812 = vadd.f32 %v797, %v803
      %v813 = vpack.c.bf16 %v805, %v805
      %v814 = vpack.c.bf16 %v806, %v806
      %v815 = vpack.c.bf16 %v807, %v807
      %v816 = vpack.c.bf16 %v808, %v808
      %v817 = vpack.c.bf16 %v809, %v809
      %v818 = vpack.c.bf16 %v810, %v810
      %v819 = vpack.c.bf16 %v811, %v811
      %v820 = vpack.c.bf16 %v812, %v812
      %vm821 = vcmask 191488
      %822 = vst.msk [vmem:[%s311] sm:$0xf] %vm821, %v813
      %823 = vst.msk [vmem:[%s311 + $0x4] sm:$0xf] %vm821, %v814
      %824 = vst.msk [vmem:[%s311 + $0x8] sm:$0xf] %vm821, %v815
      %825 = vst.msk [vmem:[%s311 + $0xc] sm:$0xf] %vm821, %v816
      %826 = vst.msk [vmem:[%s311 + $0x10] sm:$0xf] %vm821, %v817
      %827 = vst.msk [vmem:[%s311 + $0x14] sm:$0xf] %vm821, %v818
      %828 = vst.msk [vmem:[%s311 + $0x18] sm:$0xf] %vm821, %v819
      %829 = vst.msk [vmem:[%s311 + $0x1c] sm:$0xf] %vm821, %v820
      %p830 = scmp.lt.s32.totalorder %s17, 1
      %s831 = scalar_select %p830, %s17, 1
      %s832 = smul.addr %s831, 8
      %s833 = smul.addr %s832, 4
      %s834 = scalar_lea.vmem %s6, %s833
      // Predicated region
      $region45: #{_lambda_.35} parent=43 // pred_check
        %p835 = pneg %p181
      $region46: #{_lambda_.35} parent=43 // pred_check_branch
        %837 = sbr.rel (%p835) target = $region48
      $region47: #{_lambda_.35} parent=43 // pred_region
        _
      $region48: #{_lambda_.35} parent=43 // pred_fallthru
        _
    $region44: #{_lambda_.35} parent=5 // pred_fallthru
      _
    %p838 = scmp.le.s32.totalorder 2, %s12
    // Predicated region
    $region49: #{_lambda_.35} parent=5 // pred_check
      %p839 = pneg %p838
    $region50: #{_lambda_.35} parent=5 // pred_check_branch
      %841 = sbr.rel (%p839) target = $region52
    $region51: #{_lambda_.35} parent=5 // pred_region
      %s842 = ssub.s32 %s12, 2
      // Predicated region
      $region53: #{_lambda_.35} parent=51 // pred_check
        %p843 = pneg %p187
      $region54: #{_lambda_.35} parent=51 // pred_check_branch
        %845 = sbr.rel (%p843) target = $region56
      $region55: #{_lambda_.35} parent=51 // pred_region
        %p846 = scmp.lt.s32.totalorder %s18, 1
        %s847 = scalar_select %p846, %s18, 1
        %s848 = smul.addr %s847, 8
        %s849 = smul.addr %s848, 4
        %s850 = scalar_lea.vmem %s6, %s849
      $region56: #{_lambda_.35} parent=51 // pred_fallthru
        _
    $region52: #{_lambda_.35} parent=5 // pred_fallthru
      _
  $region6: #{_lambda_.35} parent=0 // loop_footer
    %s16 = sadd.s32 1, %s12
  $region7: #{_lambda_.35} parent=0 // loop_footer_branch
    %11 = sbr.rel target = $region3
  $region8: #{_lambda_.35} parent=0 // loop_exit
    _

// kernel: _lambda_.38
$region0: #{_lambda_.38}
  #allocation0 [shape = 'u32[]', space=smem, size = 0x4, offset = 0x4, fixed_abs, tag = 'smem constant byte address 0x4 - core index']
  #allocation1 [shape = 'u32[144,128]{1,0:T(1,128)}', space=vmem, size = 0x12000, scoped, tag = 'internal scratch']
  %s0 = inlined_call_operand.vmem [shape: bf16[2,10,10,24], index: 0, kind: input, shape index: {}]
  %s1 = inlined_call_operand.vmem [shape: f32[9,1,24], index: 1, kind: input, shape index: {}]
  %s2 = inlined_call_operand.vmem [shape: f32[1,24], index: 2, kind: input, shape index: {}]
  %s3 = inlined_call_operand.vmem [shape: bf16[2,8,8,24], index: 3, kind: output, shape index: {}]
  %s4 = sld [smem:[#allocation0]]
  $region45: #{_lambda_.38} parent=0
    _
  %s6 = ssub.s32 1, %s4
  %s7 = scalar_select 0, %s6, %s4
  loop: start=0, step=1, limit=4
  $region2: #{_lambda_.38} parent=0 // loop_pre_header
    _
  $region3: #{_lambda_.38} parent=0 // loop_header
    %s9 = sphi 0, %s13
    %p10 = scmp.ge.s32.totalorder %s9, 4
    %s19 = sphi 0, %s21
    %s22 = sphi 0, %s19
    %s23 = sphi 0, %s22
    %s39 = sphi 0, %s23
    %s43 = sphi 0, %s43
    %s45 = sphi 0, %s43
    %s46 = sphi 0, %s45
    %s60 = sphi 0, %s46
    %s64 = sphi 0, %s64
    %s66 = sphi 0, %s64
    %s67 = sphi 0, %s66
    %s81 = sphi 0, %s67
    %s87 = sphi 0, %s89
    %s90 = sphi 0, %s87
    %s91 = sphi 0, %s90
    %s107 = sphi 0, %s91
  $region4: #{_lambda_.38} parent=0 // loop_header_branch
    %12 = sbr.rel (%p10) target = $region8
  $region5: #{_lambda_.38} parent=0 // loop_body
    %s14 = ssub.s32 %s9, 1
    %s15 = ssub.s32 %s9, 2
    %s16 = sadd.s32 %s9, 1
    %s17 = ssub.s32 %s9, %s16
    %p18 = scmp.eq.s32.totalorder %s17, 0
    %s20 = sadd.s32 %s19, 1
    %s21 = scalar_select %p18, %s19, %s20
    %p24 = pneg %p18
    %p25 = scmp.eq.s32.totalorder %s9, 1
    %p26 = por %p24, %p25
    %p27 = scmp.ne.s32.totalorder %s19, %s22
    %p28 = scmp.eq.s32.totalorder %s9, 0
    %p29 = por %p27, %p28
    %p30 = scmp.ne.s32.totalorder %s19, %s22
    %p31 = scmp.eq.s32.totalorder %s14, 1
    %p32 = por %p30, %p31
    %p33 = scmp.ne.s32.totalorder %s22, %s23
    %p34 = scmp.eq.s32.totalorder %s14, 0
    %p35 = por %p33, %p34
    %p36 = scmp.ne.s32.totalorder %s22, %s23
    %p37 = scmp.eq.s32.totalorder %s15, 1
    %p38 = por %p36, %p37
    %p40 = scmp.ne.s32.totalorder %s23, %s39
    %p41 = scmp.eq.s32.totalorder %s15, 0
    %p42 = por %p40, %p41
    %s44 = sadd.s32 %s43, 1
    %p47 = scmp.eq.s32.totalorder %s9, 1
    %p48 = scmp.ne.s32.totalorder %s43, %s45
    %p49 = scmp.eq.s32.totalorder %s9, 0
    %p50 = por %p48, %p49
    %p51 = scmp.ne.s32.totalorder %s43, %s45
    %p52 = scmp.eq.s32.totalorder %s14, 1
    %p53 = por %p51, %p52
    %p54 = scmp.ne.s32.totalorder %s45, %s46
    %p55 = scmp.eq.s32.totalorder %s14, 0
    %p56 = por %p54, %p55
    %p57 = scmp.ne.s32.totalorder %s45, %s46
    %p58 = scmp.eq.s32.totalorder %s15, 1
    %p59 = por %p57, %p58
    %p61 = scmp.ne.s32.totalorder %s46, %s60
    %p62 = scmp.eq.s32.totalorder %s15, 0
    %p63 = por %p61, %p62
    %s65 = sadd.s32 %s64, 1
    %p68 = scmp.eq.s32.totalorder %s9, 1
    %p69 = scmp.ne.s32.totalorder %s64, %s66
    %p70 = scmp.eq.s32.totalorder %s9, 0
    %p71 = por %p69, %p70
    %p72 = scmp.ne.s32.totalorder %s64, %s66
    %p73 = scmp.eq.s32.totalorder %s14, 1
    %p74 = por %p72, %p73
    %p75 = scmp.ne.s32.totalorder %s66, %s67
    %p76 = scmp.eq.s32.totalorder %s14, 0
    %p77 = por %p75, %p76
    %p78 = scmp.ne.s32.totalorder %s66, %s67
    %p79 = scmp.eq.s32.totalorder %s15, 1
    %p80 = por %p78, %p79
    %p82 = scmp.ne.s32.totalorder %s67, %s81
    %p83 = scmp.eq.s32.totalorder %s15, 0
    %p84 = por %p82, %p83
    %s85 = ssub.s32 %s9, %s16
    %p86 = scmp.eq.s32.totalorder %s85, 0
    %s88 = sadd.s32 %s87, 1
    %s89 = scalar_select %p86, %s87, %s88
    %p92 = pneg %p86
    %p93 = scmp.eq.s32.totalorder %s9, 1
    %p94 = por %p92, %p93
    %p95 = scmp.ne.s32.totalorder %s87, %s90
    %p96 = scmp.eq.s32.totalorder %s9, 0
    %p97 = por %p95, %p96
    %p98 = scmp.ne.s32.totalorder %s87, %s90
    %p99 = scmp.eq.s32.totalorder %s14, 1
    %p100 = por %p98, %p99
    %p101 = scmp.ne.s32.totalorder %s90, %s91
    %p102 = scmp.eq.s32.totalorder %s14, 0
    %p103 = por %p101, %p102
    %p104 = scmp.ne.s32.totalorder %s90, %s91
    %p105 = scmp.eq.s32.totalorder %s15, 1
    %p106 = por %p104, %p105
    %p108 = scmp.ne.s32.totalorder %s91, %s107
    %p109 = scmp.eq.s32.totalorder %s15, 0
    %p110 = por %p108, %p109
    %p111 = scmp.le.s32.totalorder 1, %s9
    %p112 = scmp.lt.s32.totalorder %s9, 3
    %p113 = pnand %p111, %p112
    %p114 = pneg %p113
    // Predicated region
    $region9: #{_lambda_.38} parent=5 // pred_check
      _
    $region10: #{_lambda_.38} parent=5 // pred_check_branch
      %116 = sbr.rel (%p113) target = $region12
    $region11: #{_lambda_.38} parent=5 // pred_region
      %s117 = ssub.s32 %s9, 1
      // Predicated region
      $region13: #{_lambda_.38} parent=11 // pred_check
        %p118 = pneg %p56
      $region14: #{_lambda_.38} parent=11 // pred_check_branch
        %120 = sbr.rel (%p118) target = $region16
      $region15: #{_lambda_.38} parent=11 // pred_region
        _
      $region16: #{_lambda_.38} parent=11 // pred_fallthru
        _
      // Predicated region
      $region17: #{_lambda_.38} parent=11 // pred_check
        %p121 = pneg %p77
      $region18: #{_lambda_.38} parent=11 // pred_check_branch
        %123 = sbr.rel (%p121) target = $region20
      $region19: #{_lambda_.38} parent=11 // pred_region
        _
      $region20: #{_lambda_.38} parent=11 // pred_fallthru
        _
    $region12: #{_lambda_.38} parent=5 // pred_fallthru
      _
    %p124 = scmp.lt.s32.totalorder %s9, 2
    // Predicated region
    $region21: #{_lambda_.38} parent=5 // pred_check
      %p125 = pneg %p124
    $region22: #{_lambda_.38} parent=5 // pred_check_branch
      %127 = sbr.rel (%p125) target = $region24
    $region23: #{_lambda_.38} parent=5 // pred_region
      // Predicated region
      $region25: #{_lambda_.38} parent=23 // pred_check
        %p128 = pneg %p29
      $region26: #{_lambda_.38} parent=23 // pred_check_branch
        %130 = sbr.rel (%p128) target = $region28
      $region27: #{_lambda_.38} parent=23 // pred_region
        %p131 = scmp.lt.s32.totalorder %s9, 1
        %s132 = scalar_select %p131, %s9, 1
        %s133 = smul.addr %s132, 20
        %s134 = smul.addr %s133, 4
        %s135 = scalar_lea.vmem %s0, %s134
      $region28: #{_lambda_.38} parent=23 // pred_fallthru
        _
    $region24: #{_lambda_.38} parent=5 // pred_fallthru
      _
    %p136 = scmp.le.s32.totalorder 1, %s9
    %p137 = scmp.lt.s32.totalorder %s9, 3
    %p138 = pnand %p136, %p137
    %p139 = pneg %p138
    // Predicated region
    $region29: #{_lambda_.38} parent=5 // pred_check
      _
    $region30: #{_lambda_.38} parent=5 // pred_check_branch
      %141 = sbr.rel (%p138) target = $region32
    $region31: #{_lambda_.38} parent=5 // pred_region
      %s142 = ssub.s32 %s9, 1
      %p143 = scmp.lt.s32.totalorder %s14, 1
      %s144 = scalar_select %p143, %s14, 1
      %s145 = smul.addr %s144, 20
      %s146 = smul.addr %s145, 4
      %s147 = scalar_lea.vmem %s0, %s146
      %p148 = pneg %p35
      %p149 = pneg %p32
      %p150 = pneg %p56
      %p151 = pneg %p53
      %p152 = pneg %p77
      %p153 = pneg %p74
      %p154 = pneg %p103
      %p155 = pneg %p100
      %p156 = scmp.lt.s32.totalorder %s14, 1
      %s157 = scalar_select %p156, %s14, 1
      %s158 = smul.addr %s157, 8
      %s159 = smul.addr %s158, 4
      %s160 = scalar_lea.vmem %s3, %s159
      %p161 = scmp.lt.s32.totalorder %s14, 1
      %s162 = scalar_select %p161, %s14, 1
      %s163 = smul.addr %s162, 20
      %s164 = smul.addr %s163, 4
      %s165 = scalar_lea.vmem %s0, %s164
      %p166 = scmp.lt.s32.totalorder %s14, 1
      %s167 = scalar_select %p166, %s14, 1
      %s168 = smul.addr %s167, 8
      %s169 = smul.addr %s168, 4
      %s170 = scalar_lea.vmem %s3, %s169
      %v171 = vld [vmem:[%s165] sm:$0xf]
      %v172 = vld [vmem:[%s165 + $0x4] sm:$0x1]
      %v173 = vld [vmem:[%s165 + $0x8] sm:$0xf]
      %v174 = vld [vmem:[%s165 + $0xc] sm:$0x1]
      %v175 = vld [vmem:[%s165 + $0x10] sm:$0xf]
      %v176 = vld [vmem:[%s165 + $0x14] sm:$0x1]
      %v177 = vld [vmem:[%s165 + $0x18] sm:$0xf]
      %v178 = vld [vmem:[%s165 + $0x1c] sm:$0x1]
      %v179 = vld [vmem:[%s165 + $0x20] sm:$0xf]
      %v180 = vld [vmem:[%s165 + $0x24] sm:$0x1]
      %v181 = vld [vmem:[%s165 + $0x28] sm:$0xf]
      %v182 = vld [vmem:[%s165 + $0x2c] sm:$0x1]
      %v183 = vld [vmem:[%s165 + $0x30] sm:$0xf]
      %v184 = vld [vmem:[%s165 + $0x34] sm:$0x1]
      %v185 = vld [vmem:[%s165 + $0x38] sm:$0xf]
      %v186 = vld [vmem:[%s165 + $0x3c] sm:$0x1]
      %v187 = vld [vmem:[%s165 + $0x40] sm:$0xf]
      %v188 = vld [vmem:[%s165 + $0x44] sm:$0x1]
      %v189 = vld [vmem:[%s165 + $0x48] sm:$0xf]
      %v190 = vld [vmem:[%s165 + $0x4c] sm:$0x1]
      %v191 = vunpack.c.l.bf16 %v171
      %v192 = vunpack.c.l.bf16 %v173
      %v193 = vunpack.c.l.bf16 %v175
      %v194 = vunpack.c.l.bf16 %v177
      %v195 = vunpack.c.l.bf16 %v179
      %v196 = vunpack.c.l.bf16 %v181
      %v197 = vunpack.c.l.bf16 %v183
      %v198 = vunpack.c.l.bf16 %v185
      %v199 = vld [vmem:[%s1] sm:$0x1]
      %v201 = vlaneseq
      %v202 = vshrl.u32 %v201, 7
      %v203 = vsub.s32 0, %v202
      %v204 = vrot.slane %v199, %v203
      %v206 = vmul.f32 %v191, %v204
      %v207 = vmul.f32 %v192, %v204
      %v208 = vmul.f32 %v193, %v204
      %v209 = vmul.f32 %v194, %v204
      %v210 = vmul.f32 %v195, %v204
      %v211 = vmul.f32 %v196, %v204
      %v212 = vmul.f32 %v197, %v204
      %v213 = vmul.f32 %v198, %v204
      %v214 = vadd.f32 %v206, 0.0
      %v215 = vadd.f32 %v207, 0.0
      %v216 = vadd.f32 %v208, 0.0
      %v217 = vadd.f32 %v209, 0.0
      %v218 = vadd.f32 %v210, 0.0
      %v219 = vadd.f32 %v211, 0.0
      %v220 = vadd.f32 %v212, 0.0
      %v221 = vadd.f32 %v213, 0.0
      %v222 = vunpack.c.l.bf16 %v172
      %v223 = vunpack.c.l.bf16 %v174
      %v224 = vunpack.c.l.bf16 %v176
      %v225 = vunpack.c.l.bf16 %v178
      %v226 = vunpack.c.l.bf16 %v180
      %v227 = vunpack.c.l.bf16 %v182
      %v228 = vunpack.c.l.bf16 %v184
      %v229 = vunpack.c.l.bf16 %v186
      %s230 = scalar_lea.vmem %s1, 1
      %v231 = vld [vmem:[%s230] sm:$0x1]
      %v233 = vlaneseq
      %v234 = vshrl.u32 %v233, 7
      %v235 = vsub.s32 0, %v234
      %v236 = vrot.slane %v231, %v235
      %v238 = vmul.f32 %v191, %v236
      %v239 = vmul.f32 %v222, %v236
      %v240 = vmul.f32 %v192, %v236
      %v241 = vmul.f32 %v223, %v236
      %v242 = vmul.f32 %v193, %v236
      %v243 = vmul.f32 %v224, %v236
      %v244 = vmul.f32 %v194, %v236
      %v245 = vmul.f32 %v225, %v236
      %v246 = vmul.f32 %v195, %v236
      %v247 = vmul.f32 %v226, %v236
      %v248 = vmul.f32 %v196, %v236
      %v249 = vmul.f32 %v227, %v236
      %v250 = vmul.f32 %v197, %v236
      %v251 = vmul.f32 %v228, %v236
      %v252 = vmul.f32 %v198, %v236
      %v253 = vmul.f32 %v229, %v236
      %vm270 = vcmask 1046528
      %v271 = vrot.slane %v238, 1
      %v272 = vrot.slane %v239, 1
      %v273 = vsel %vm270, %v271, %v272
      %v274 = vrot.slane %v240, 1
      %v275 = vrot.slane %v241, 1
      %v276 = vsel %vm270, %v274, %v275
      %v277 = vrot.slane %v242, 1
      %v278 = vrot.slane %v243, 1
      %v279 = vsel %vm270, %v277, %v278
      %v280 = vrot.slane %v244, 1
      %v281 = vrot.slane %v245, 1
      %v282 = vsel %vm270, %v280, %v281
      %v283 = vrot.slane %v246, 1
      %v284 = vrot.slane %v247, 1
      %v285 = vsel %vm270, %v283, %v284
      %v286 = vrot.slane %v248, 1
      %v287 = vrot.slane %v249, 1
      %v288 = vsel %vm270, %v286, %v287
      %v289 = vrot.slane %v250, 1
      %v290 = vrot.slane %v251, 1
      %v291 = vsel %vm270, %v289, %v290
      %v292 = vrot.slane %v252, 1
      %v293 = vrot.slane %v253, 1
      %v294 = vsel %vm270, %v292, %v293
      %v303 = vadd.f32 %v214, %v273
      %v304 = vadd.f32 %v215, %v276
      %v305 = vadd.f32 %v216, %v279
      %v306 = vadd.f32 %v217, %v282
      %v307 = vadd.f32 %v218, %v285
      %v308 = vadd.f32 %v219, %v288
      %v309 = vadd.f32 %v220, %v291
      %v310 = vadd.f32 %v221, %v294
      %s311 = scalar_lea.vmem %s1, 2
      %v312 = vld [vmem:[%s311] sm:$0x1]
      %v314 = vlaneseq
      %v315 = vshrl.u32 %v314, 7
      %v316 = vsub.s32 0, %v315
      %v317 = vrot.slane %v312, %v316
      %v319 = vmul.f32 %v191, %v317
      %v320 = vmul.f32 %v222, %v317
      %v321 = vmul.f32 %v192, %v317
      %v322 = vmul.f32 %v223, %v317
      %v323 = vmul.f32 %v193, %v317
      %v324 = vmul.f32 %v224, %v317
      %v325 = vmul.f32 %v194, %v317
      %v326 = vmul.f32 %v225, %v317
      %v327 = vmul.f32 %v195, %v317
      %v328 = vmul.f32 %v226, %v317
      %v329 = vmul.f32 %v196, %v317
      %v330 = vmul.f32 %v227, %v317
      %v331 = vmul.f32 %v197, %v317
      %v332 = vmul.f32 %v228, %v317
      %v333 = vmul.f32 %v198, %v317
      %v334 = vmul.f32 %v229, %v317
      %vm351 = vcmask 1045504
      %v352 = vrot.slane %v319, 2
      %v353 = vrot.slane %v320, 2
      %v354 = vsel %vm351, %v352, %v353
      %v355 = vrot.slane %v321, 2
      %v356 = vrot.slane %v322, 2
      %v357 = vsel %vm351, %v355, %v356
      %v358 = vrot.slane %v323, 2
      %v359 = vrot.slane %v324, 2
      %v360 = vsel %vm351, %v358, %v359
      %v361 = vrot.slane %v325, 2
      %v362 = vrot.slane %v326, 2
      %v363 = vsel %vm351, %v361, %v362
      %v364 = vrot.slane %v327, 2
      %v365 = vrot.slane %v328, 2
      %v366 = vsel %vm351, %v364, %v365
      %v367 = vrot.slane %v329, 2
      %v368 = vrot.slane %v330, 2
      %v369 = vsel %vm351, %v367, %v368
      %v370 = vrot.slane %v331, 2
      %v371 = vrot.slane %v332, 2
      %v372 = vsel %vm351, %v370, %v371
      %v373 = vrot.slane %v333, 2
      %v374 = vrot.slane %v334, 2
      %v375 = vsel %vm351, %v373, %v374
      %v384 = vadd.f32 %v303, %v354
      %v385 = vadd.f32 %v304, %v357
      %v386 = vadd.f32 %v305, %v360
      %v387 = vadd.f32 %v306, %v363
      %v388 = vadd.f32 %v307, %v366
      %v389 = vadd.f32 %v308, %v369
      %v390 = vadd.f32 %v309, %v372
      %v391 = vadd.f32 %v310, %v375
      %v392 = vunpack.c.l.bf16 %v187
      %s393 = scalar_lea.vmem %s1, 3
      %v394 = vld [vmem:[%s393] sm:$0x1]
      %v396 = vlaneseq
      %v397 = vshrl.u32 %v396, 7
      %v398 = vsub.s32 0, %v397
      %v399 = vrot.slane %v394, %v398
      %v401 = vmul.f32 %v192, %v399
      %v402 = vmul.f32 %v193, %v399
      %v403 = vmul.f32 %v194, %v399
      %v404 = vmul.f32 %v195, %v399
      %v405 = vmul.f32 %v196, %v399
      %v406 = vmul.f32 %v197, %v399
      %v407 = vmul.f32 %v198, %v399
      %v408 = vmul.f32 %v392, %v399
      %v409 = vadd.f32 %v384, %v401
      %v410 = vadd.f32 %v385, %v402
      %v411 = vadd.f32 %v386, %v403
      %v412 = vadd.f32 %v387, %v404
      %v413 = vadd.f32 %v388, %v405
      %v414 = vadd.f32 %v389, %v406
      %v415 = vadd.f32 %v390, %v407
      %v416 = vadd.f32 %v391, %v408
      %v417 = vunpack.c.l.bf16 %v188
      %s418 = scalar_lea.vmem %s1, 4
      %v419 = vld [vmem:[%s418] sm:$0x1]
      %v421 = vlaneseq
      %v422 = vshrl.u32 %v421, 7
      %v423 = vsub.s32 0, %v422
      %v424 = vrot.slane %v419, %v423
      %v426 = vmul.f32 %v192, %v424
      %v427 = vmul.f32 %v223, %v424
      %v428 = vmul.f32 %v193, %v424
      %v429 = vmul.f32 %v224, %v424
      %v430 = vmul.f32 %v194, %v424
      %v431 = vmul.f32 %v225, %v424
      %v432 = vmul.f32 %v195, %v424
      %v433 = vmul.f32 %v226, %v424
      %v434 = vmul.f32 %v196, %v424
      %v435 = vmul.f32 %v227, %v424
      %v436 = vmul.f32 %v197, %v424
      %v437 = vmul.f32 %v228, %v424
      %v438 = vmul.f32 %v198, %v424
      %v439 = vmul.f32 %v229, %v424
      %v440 = vmul.f32 %v392, %v424
      %v441 = vmul.f32 %v417, %v424
      %v458 = vrot.slane %v426, 1
      %v459 = vrot.slane %v427, 1
      %v460 = vsel %vm270, %v458, %v459
      %v461 = vrot.slane %v428, 1
      %v462 = vrot.slane %v429, 1
      %v463 = vsel %vm270, %v461, %v462
      %v464 = vrot.slane %v430, 1
      %v465 = vrot.slane %v431, 1
      %v466 = vsel %vm270, %v464, %v465
      %v467 = vrot.slane %v432, 1
      %v468 = vrot.slane %v433, 1
      %v469 = vsel %vm270, %v467, %v468
      %v470 = vrot.slane %v434, 1
      %v471 = vrot.slane %v435, 1
      %v472 = vsel %vm270, %v470, %v471
      %v473 = vrot.slane %v436, 1
      %v474 = vrot.slane %v437, 1
      %v475 = vsel %vm270, %v473, %v474
      %v476 = vrot.slane %v438, 1
      %v477 = vrot.slane %v439, 1
      %v478 = vsel %vm270, %v476, %v477
      %v479 = vrot.slane %v440, 1
      %v480 = vrot.slane %v441, 1
      %v481 = vsel %vm270, %v479, %v480
      %v490 = vadd.f32 %v409, %v460
      %v491 = vadd.f32 %v410, %v463
      %v492 = vadd.f32 %v411, %v466
      %v493 = vadd.f32 %v412, %v469
      %v494 = vadd.f32 %v413, %v472
      %v495 = vadd.f32 %v414, %v475
      %v496 = vadd.f32 %v415, %v478
      %v497 = vadd.f32 %v416, %v481
      %s498 = scalar_lea.vmem %s1, 5
      %v499 = vld [vmem:[%s498] sm:$0x1]
      %v501 = vlaneseq
      %v502 = vshrl.u32 %v501, 7
      %v503 = vsub.s32 0, %v502
      %v504 = vrot.slane %v499, %v503
      %v506 = vmul.f32 %v192, %v504
      %v507 = vmul.f32 %v223, %v504
      %v508 = vmul.f32 %v193, %v504
      %v509 = vmul.f32 %v224, %v504
      %v510 = vmul.f32 %v194, %v504
      %v511 = vmul.f32 %v225, %v504
      %v512 = vmul.f32 %v195, %v504
      %v513 = vmul.f32 %v226, %v504
      %v514 = vmul.f32 %v196, %v504
      %v515 = vmul.f32 %v227, %v504
      %v516 = vmul.f32 %v197, %v504
      %v517 = vmul.f32 %v228, %v504
      %v518 = vmul.f32 %v198, %v504
      %v519 = vmul.f32 %v229, %v504
      %v520 = vmul.f32 %v392, %v504
      %v521 = vmul.f32 %v417, %v504
      %v538 = vrot.slane %v506, 2
      %v539 = vrot.slane %v507, 2
      %v540 = vsel %vm351, %v538, %v539
      %v541 = vrot.slane %v508, 2
      %v542 = vrot.slane %v509, 2
      %v543 = vsel %vm351, %v541, %v542
      %v544 = vrot.slane %v510, 2
      %v545 = vrot.slane %v511, 2
      %v546 = vsel %vm351, %v544, %v545
      %v547 = vrot.slane %v512, 2
      %v548 = vrot.slane %v513, 2
      %v549 = vsel %vm351, %v547, %v548
      %v550 = vrot.slane %v514, 2
      %v551 = vrot.slane %v515, 2
      %v552 = vsel %vm351, %v550, %v551
      %v553 = vrot.slane %v516, 2
      %v554 = vrot.slane %v517, 2
      %v555 = vsel %vm351, %v553, %v554
      %v556 = vrot.slane %v518, 2
      %v557 = vrot.slane %v519, 2
      %v558 = vsel %vm351, %v556, %v557
      %v559 = vrot.slane %v520, 2
      %v560 = vrot.slane %v521, 2
      %v561 = vsel %vm351, %v559, %v560
      %v570 = vadd.f32 %v490, %v540
      %v571 = vadd.f32 %v491, %v543
      %v572 = vadd.f32 %v492, %v546
      %v573 = vadd.f32 %v493, %v549
      %v574 = vadd.f32 %v494, %v552
      %v575 = vadd.f32 %v495, %v555
      %v576 = vadd.f32 %v496, %v558
      %v577 = vadd.f32 %v497, %v561
      %v578 = vunpack.c.l.bf16 %v189
      %s579 = scalar_lea.vmem %s1, 6
      %v580 = vld [vmem:[%s579] sm:$0x1]
      %v582 = vlaneseq
      %v583 = vshrl.u32 %v582, 7
      %v584 = vsub.s32 0, %v583
      %v585 = vrot.slane %v580, %v584
      %v587 = vmul.f32 %v193, %v585
      %v588 = vmul.f32 %v194, %v585
      %v589 = vmul.f32 %v195, %v585
      %v590 = vmul.f32 %v196, %v585
      %v591 = vmul.f32 %v197, %v585
      %v592 = vmul.f32 %v198, %v585
      %v593 = vmul.f32 %v392, %v585
      %v594 = vmul.f32 %v578, %v585
      %v595 = vadd.f32 %v570, %v587
      %v596 = vadd.f32 %v571, %v588
      %v597 = vadd.f32 %v572, %v589
      %v598 = vadd.f32 %v573, %v590
      %v599 = vadd.f32 %v574, %v591
      %v600 = vadd.f32 %v575, %v592
      %v601 = vadd.f32 %v576, %v593
      %v602 = vadd.f32 %v577, %v594
      %v603 = vunpack.c.l.bf16 %v190
      %s604 = scalar_lea.vmem %s1, 7
      %v605 = vld [vmem:[%s604] sm:$0x1]
      %v607 = vlaneseq
      %v608 = vshrl.u32 %v607, 7
      %v609 = vsub.s32 0, %v608
      %v610 = vrot.slane %v605, %v609
      %v612 = vmul.f32 %v193, %v610
      %v613 = vmul.f32 %v224, %v610
      %v614 = vmul.f32 %v194, %v610
      %v615 = vmul.f32 %v225, %v610
      %v616 = vmul.f32 %v195, %v610
      %v617 = vmul.f32 %v226, %v610
      %v618 = vmul.f32 %v196, %v610
      %v619 = vmul.f32 %v227, %v610
      %v620 = vmul.f32 %v197, %v610
      %v621 = vmul.f32 %v228, %v610
      %v622 = vmul.f32 %v198, %v610
      %v623 = vmul.f32 %v229, %v610
      %v624 = vmul.f32 %v392, %v610
      %v625 = vmul.f32 %v417, %v610
      %v626 = vmul.f32 %v578, %v610
      %v627 = vmul.f32 %v603, %v610
      %v644 = vrot.slane %v612, 1
      %v645 = vrot.slane %v613, 1
      %v646 = vsel %vm270, %v644, %v645
      %v647 = vrot.slane %v614, 1
      %v648 = vrot.slane %v615, 1
      %v649 = vsel %vm270, %v647, %v648
      %v650 = vrot.slane %v616, 1
      %v651 = vrot.slane %v617, 1
      %v652 = vsel %vm270, %v650, %v651
      %v653 = vrot.slane %v618, 1
      %v654 = vrot.slane %v619, 1
      %v655 = vsel %vm270, %v653, %v654
      %v656 = vrot.slane %v620, 1
      %v657 = vrot.slane %v621, 1
      %v658 = vsel %vm270, %v656, %v657
      %v659 = vrot.slane %v622, 1
      %v660 = vrot.slane %v623, 1
      %v661 = vsel %vm270, %v659, %v660
      %v662 = vrot.slane %v624, 1
      %v663 = vrot.slane %v625, 1
      %v664 = vsel %vm270, %v662, %v663
      %v665 = vrot.slane %v626, 1
      %v666 = vrot.slane %v627, 1
      %v667 = vsel %vm270, %v665, %v666
      %v676 = vadd.f32 %v595, %v646
      %v677 = vadd.f32 %v596, %v649
      %v678 = vadd.f32 %v597, %v652
      %v679 = vadd.f32 %v598, %v655
      %v680 = vadd.f32 %v599, %v658
      %v681 = vadd.f32 %v600, %v661
      %v682 = vadd.f32 %v601, %v664
      %v683 = vadd.f32 %v602, %v667
      %s684 = scalar_lea.vmem %s1, 8
      %v685 = vld [vmem:[%s684] sm:$0x1]
      %v687 = vlaneseq
      %v688 = vshrl.u32 %v687, 7
      %v689 = vsub.s32 0, %v688
      %v690 = vrot.slane %v685, %v689
      %v692 = vmul.f32 %v193, %v690
      %v693 = vmul.f32 %v224, %v690
      %v694 = vmul.f32 %v194, %v690
      %v695 = vmul.f32 %v225, %v690
      %v696 = vmul.f32 %v195, %v690
      %v697 = vmul.f32 %v226, %v690
      %v698 = vmul.f32 %v196, %v690
      %v699 = vmul.f32 %v227, %v690
      %v700 = vmul.f32 %v197, %v690
      %v701 = vmul.f32 %v228, %v690
      %v702 = vmul.f32 %v198, %v690
      %v703 = vmul.f32 %v229, %v690
      %v704 = vmul.f32 %v392, %v690
      %v705 = vmul.f32 %v417, %v690
      %v706 = vmul.f32 %v578, %v690
      %v707 = vmul.f32 %v603, %v690
      %v724 = vrot.slane %v692, 2
      %v725 = vrot.slane %v693, 2
      %v726 = vsel %vm351, %v724, %v725
      %v727 = vrot.slane %v694, 2
      %v728 = vrot.slane %v695, 2
      %v729 = vsel %vm351, %v727, %v728
      %v730 = vrot.slane %v696, 2
      %v731 = vrot.slane %v697, 2
      %v732 = vsel %vm351, %v730, %v731
      %v733 = vrot.slane %v698, 2
      %v734 = vrot.slane %v699, 2
      %v735 = vsel %vm351, %v733, %v734
      %v736 = vrot.slane %v700, 2
      %v737 = vrot.slane %v701, 2
      %v738 = vsel %vm351, %v736, %v737
      %v739 = vrot.slane %v702, 2
      %v740 = vrot.slane %v703, 2
      %v741 = vsel %vm351, %v739, %v740
      %v742 = vrot.slane %v704, 2
      %v743 = vrot.slane %v705, 2
      %v744 = vsel %vm351, %v742, %v743
      %v745 = vrot.slane %v706, 2
      %v746 = vrot.slane %v707, 2
      %v747 = vsel %vm351, %v745, %v746
      %v756 = vadd.f32 %v676, %v726
      %v757 = vadd.f32 %v677, %v729
      %v758 = vadd.f32 %v678, %v732
      %v759 = vadd.f32 %v679, %v735
      %v760 = vadd.f32 %v680, %v738
      %v761 = vadd.f32 %v681, %v741
      %v762 = vadd.f32 %v682, %v744
      %v763 = vadd.f32 %v683, %v747
      %v764 = vld [vmem:[%s2] sm:$0x1]
      %v766 = vlaneseq
      %v767 = vshrl.u32 %v766, 7
      %v768 = vsub.s32 0, %v767
      %v769 = vrot.slane %v764, %v768
      %v771 = vadd.f32 %v756, %v769
      %v772 = vadd.f32 %v757, %v769
      %v773 = vadd.f32 %v758, %v769
      %v774 = vadd.f32 %v759, %v769
      %v775 = vadd.f32 %v760, %v769
      %v776 = vadd.f32 %v761, %v769
      %v777 = vadd.f32 %v762, %v769
      %v778 = vadd.f32 %v763, %v769
      %v779 = vpack.c.bf16 %v771, %v771
      %v780 = vpack.c.bf16 %v772, %v772
      %v781 = vpack.c.bf16 %v773, %v773
      %v782 = vpack.c.bf16 %v774, %v774
      %v783 = vpack.c.bf16 %v775, %v775
      %v784 = vpack.c.bf16 %v776, %v776
      %v785 = vpack.c.bf16 %v777, %v777
      %v786 = vpack.c.bf16 %v778, %v778
      %vm787 = vcmask 191488
      %788 = vst.msk [vmem:[%s170] sm:$0xf] %vm787, %v779
      %789 = vst.msk [vmem:[%s170 + $0x4] sm:$0xf] %vm787, %v780
      %790 = vst.msk [vmem:[%s170 + $0x8] sm:$0xf] %vm787, %v781
      %791 = vst.msk [vmem:[%s170 + $0xc] sm:$0xf] %vm787, %v782
      %792 = vst.msk [vmem:[%s170 + $0x10] sm:$0xf] %vm787, %v783
      %793 = vst.msk [vmem:[%s170 + $0x14] sm:$0xf] %vm787, %v784
      %794 = vst.msk [vmem:[%s170 + $0x18] sm:$0xf] %vm787, %v785
      %795 = vst.msk [vmem:[%s170 + $0x1c] sm:$0xf] %vm787, %v786
      %p796 = scmp.lt.s32.totalorder %s14, 1
      %s797 = scalar_select %p796, %s14, 1
      %s798 = smul.addr %s797, 8
      %s799 = smul.addr %s798, 4
      %s800 = scalar_lea.vmem %s3, %s799
      // Predicated region
      $region33: #{_lambda_.38} parent=31 // pred_check
        %p801 = pneg %p100
      $region34: #{_lambda_.38} parent=31 // pred_check_branch
        %803 = sbr.rel (%p801) target = $region36
      $region35: #{_lambda_.38} parent=31 // pred_region
        _
      $region36: #{_lambda_.38} parent=31 // pred_fallthru
        _
    $region32: #{_lambda_.38} parent=5 // pred_fallthru
      _
    %p804 = scmp.le.s32.totalorder 2, %s9
    // Predicated region
    $region37: #{_lambda_.38} parent=5 // pred_check
      %p805 = pneg %p804
    $region38: #{_lambda_.38} parent=5 // pred_check_branch
      %807 = sbr.rel (%p805) target = $region40
    $region39: #{_lambda_.38} parent=5 // pred_region
      %s808 = ssub.s32 %s9, 2
      // Predicated region
      $region41: #{_lambda_.38} parent=39 // pred_check
        %p809 = pneg %p106
      $region42: #{_lambda_.38} parent=39 // pred_check_branch
        %811 = sbr.rel (%p809) target = $region44
      $region43: #{_lambda_.38} parent=39 // pred_region
        %p812 = scmp.lt.s32.totalorder %s15, 1
        %s813 = scalar_select %p812, %s15, 1
        %s814 = smul.addr %s813, 8
        %s815 = smul.addr %s814, 4
        %s816 = scalar_lea.vmem %s3, %s815
      $region44: #{_lambda_.38} parent=39 // pred_fallthru
        _
    $region40: #{_lambda_.38} parent=5 // pred_fallthru
      _
  $region6: #{_lambda_.38} parent=0 // loop_footer
    %s13 = sadd.s32 1, %s9
  $region7: #{_lambda_.38} parent=0 // loop_footer_branch
    %8 = sbr.rel target = $region3
  $region8: #{_lambda_.38} parent=0 // loop_exit
    _

// kernel: _lambda_.42
$region0: #{_lambda_.42}
  #allocation0 [shape = 'u32[]', space=smem, size = 0x4, offset = 0x4, fixed_abs, tag = 'smem constant byte address 0x4 - core index']
  #allocation1 [shape = 'u32[144,128]{1,0:T(1,128)}', space=vmem, size = 0x12000, scoped, tag = 'internal scratch']
  %s0 = inlined_call_operand.vmem [shape: bf16[128,48], index: 0, kind: input, shape index: {}]
  %s1 = inlined_call_operand.vmem [shape: bf16[48,48], index: 1, kind: input, shape index: {}]
  %s2 = inlined_call_operand.vmem [shape: f32[1,48], index: 2, kind: input, shape index: {}]
  %s3 = inlined_call_operand.vmem [shape: bf16[128,48], index: 3, kind: output, shape index: {}]
  %s4 = sld [smem:[#allocation0]]
  $region45: #{_lambda_.42} parent=0
    _
  %s6 = ssub.s32 1, %s4
  %s7 = scalar_select 0, %s6, %s4
  loop: start=0, step=1, limit=4
  $region2: #{_lambda_.42} parent=0 // loop_pre_header
    _
  $region3: #{_lambda_.42} parent=0 // loop_header
    %s9 = sphi 0, %s13
    %p10 = scmp.ge.s32.totalorder %s9, 4
    %s19 = sphi 0, %s21
    %s22 = sphi 0, %s19
    %s23 = sphi 0, %s22
    %s39 = sphi 0, %s23
    %s43 = sphi 0, %s43
    %s45 = sphi 0, %s43
    %s46 = sphi 0, %s45
    %s60 = sphi 0, %s46
    %s64 = sphi 0, %s64
    %s66 = sphi 0, %s64
    %s67 = sphi 0, %s66
    %s81 = sphi 0, %s67
    %s87 = sphi 0, %s89
    %s90 = sphi 0, %s87
    %s91 = sphi 0, %s90
    %s107 = sphi 0, %s91
  $region4: #{_lambda_.42} parent=0 // loop_header_branch
    %12 = sbr.rel (%p10) target = $region8
  $region5: #{_lambda_.42} parent=0 // loop_body
    %s14 = ssub.s32 %s9, 1
    %s15 = ssub.s32 %s9, 2
    %s16 = sadd.s32 %s9, 1
    %s17 = ssub.s32 %s9, %s16
    %p18 = scmp.eq.s32.totalorder %s17, 0
    %s20 = sadd.s32 %s19, 1
    %s21 = scalar_select %p18, %s19, %s20
    %p24 = pneg %p18
    %p25 = scmp.eq.s32.totalorder %s9, 1
    %p26 = por %p24, %p25
    %p27 = scmp.ne.s32.totalorder %s19, %s22
    %p28 = scmp.eq.s32.totalorder %s9, 0
    %p29 = por %p27, %p28
    %p30 = scmp.ne.s32.totalorder %s19, %s22
    %p31 = scmp.eq.s32.totalorder %s14, 1
    %p32 = por %p30, %p31
    %p33 = scmp.ne.s32.totalorder %s22, %s23
    %p34 = scmp.eq.s32.totalorder %s14, 0
    %p35 = por %p33, %p34
    %p36 = scmp.ne.s32.totalorder %s22, %s23
    %p37 = scmp.eq.s32.totalorder %s15, 1
    %p38 = por %p36, %p37
    %p40 = scmp.ne.s32.totalorder %s23, %s39
    %p41 = scmp.eq.s32.totalorder %s15, 0
    %p42 = por %p40, %p41
    %s44 = sadd.s32 %s43, 1
    %p47 = scmp.eq.s32.totalorder %s9, 1
    %p48 = scmp.ne.s32.totalorder %s43, %s45
    %p49 = scmp.eq.s32.totalorder %s9, 0
    %p50 = por %p48, %p49
    %p51 = scmp.ne.s32.totalorder %s43, %s45
    %p52 = scmp.eq.s32.totalorder %s14, 1
    %p53 = por %p51, %p52
    %p54 = scmp.ne.s32.totalorder %s45, %s46
    %p55 = scmp.eq.s32.totalorder %s14, 0
    %p56 = por %p54, %p55
    %p57 = scmp.ne.s32.totalorder %s45, %s46
    %p58 = scmp.eq.s32.totalorder %s15, 1
    %p59 = por %p57, %p58
    %p61 = scmp.ne.s32.totalorder %s46, %s60
    %p62 = scmp.eq.s32.totalorder %s15, 0
    %p63 = por %p61, %p62
    %s65 = sadd.s32 %s64, 1
    %p68 = scmp.eq.s32.totalorder %s9, 1
    %p69 = scmp.ne.s32.totalorder %s64, %s66
    %p70 = scmp.eq.s32.totalorder %s9, 0
    %p71 = por %p69, %p70
    %p72 = scmp.ne.s32.totalorder %s64, %s66
    %p73 = scmp.eq.s32.totalorder %s14, 1
    %p74 = por %p72, %p73
    %p75 = scmp.ne.s32.totalorder %s66, %s67
    %p76 = scmp.eq.s32.totalorder %s14, 0
    %p77 = por %p75, %p76
    %p78 = scmp.ne.s32.totalorder %s66, %s67
    %p79 = scmp.eq.s32.totalorder %s15, 1
    %p80 = por %p78, %p79
    %p82 = scmp.ne.s32.totalorder %s67, %s81
    %p83 = scmp.eq.s32.totalorder %s15, 0
    %p84 = por %p82, %p83
    %s85 = ssub.s32 %s9, %s16
    %p86 = scmp.eq.s32.totalorder %s85, 0
    %s88 = sadd.s32 %s87, 1
    %s89 = scalar_select %p86, %s87, %s88
    %p92 = pneg %p86
    %p93 = scmp.eq.s32.totalorder %s9, 1
    %p94 = por %p92, %p93
    %p95 = scmp.ne.s32.totalorder %s87, %s90
    %p96 = scmp.eq.s32.totalorder %s9, 0
    %p97 = por %p95, %p96
    %p98 = scmp.ne.s32.totalorder %s87, %s90
    %p99 = scmp.eq.s32.totalorder %s14, 1
    %p100 = por %p98, %p99
    %p101 = scmp.ne.s32.totalorder %s90, %s91
    %p102 = scmp.eq.s32.totalorder %s14, 0
    %p103 = por %p101, %p102
    %p104 = scmp.ne.s32.totalorder %s90, %s91
    %p105 = scmp.eq.s32.totalorder %s15, 1
    %p106 = por %p104, %p105
    %p108 = scmp.ne.s32.totalorder %s91, %s107
    %p109 = scmp.eq.s32.totalorder %s15, 0
    %p110 = por %p108, %p109
    %p111 = scmp.le.s32.totalorder 1, %s9
    %p112 = scmp.lt.s32.totalorder %s9, 3
    %p113 = pnand %p111, %p112
    %p114 = pneg %p113
    // Predicated region
    $region9: #{_lambda_.42} parent=5 // pred_check
      _
    $region10: #{_lambda_.42} parent=5 // pred_check_branch
      %116 = sbr.rel (%p113) target = $region12
    $region11: #{_lambda_.42} parent=5 // pred_region
      %s117 = ssub.s32 %s9, 1
      // Predicated region
      $region13: #{_lambda_.42} parent=11 // pred_check
        %p118 = pneg %p56
      $region14: #{_lambda_.42} parent=11 // pred_check_branch
        %120 = sbr.rel (%p118) target = $region16
      $region15: #{_lambda_.42} parent=11 // pred_region
        _
      $region16: #{_lambda_.42} parent=11 // pred_fallthru
        _
      // Predicated region
      $region17: #{_lambda_.42} parent=11 // pred_check
        %p121 = pneg %p77
      $region18: #{_lambda_.42} parent=11 // pred_check_branch
        %123 = sbr.rel (%p121) target = $region20
      $region19: #{_lambda_.42} parent=11 // pred_region
        _
      $region20: #{_lambda_.42} parent=11 // pred_fallthru
        _
    $region12: #{_lambda_.42} parent=5 // pred_fallthru
      _
    %p124 = scmp.lt.s32.totalorder %s9, 2
    // Predicated region
    $region21: #{_lambda_.42} parent=5 // pred_check
      %p125 = pneg %p124
    $region22: #{_lambda_.42} parent=5 // pred_check_branch
      %127 = sbr.rel (%p125) target = $region24
    $region23: #{_lambda_.42} parent=5 // pred_region
      // Predicated region
      $region25: #{_lambda_.42} parent=23 // pred_check
        %p128 = pneg %p29
      $region26: #{_lambda_.42} parent=23 // pred_check_branch
        %130 = sbr.rel (%p128) target = $region28
      $region27: #{_lambda_.42} parent=23 // pred_region
        %s131 = smul.u32 8, %s9
        %p132 = scmp.lt.s32.totalorder %s131, 15
        %s133 = scalar_select %p132, %s131, 15
        %s134 = smul.addr %s133, 4
        %s135 = scalar_lea.vmem %s0, %s134
        %s136 = smul.u32 8, %s9
      $region28: #{_lambda_.42} parent=23 // pred_fallthru
        _
    $region24: #{_lambda_.42} parent=5 // pred_fallthru
      _
    %p137 = scmp.le.s32.totalorder 1, %s9
    %p138 = scmp.lt.s32.totalorder %s9, 3
    %p139 = pnand %p137, %p138
    %p140 = pneg %p139
    // Predicated region
    $region29: #{_lambda_.42} parent=5 // pred_check
      _
    $region30: #{_lambda_.42} parent=5 // pred_check_branch
      %142 = sbr.rel (%p139) target = $region32
    $region31: #{_lambda_.42} parent=5 // pred_region
      %s143 = ssub.s32 %s9, 1
      %s144 = smul.u32 8, %s14
      %p145 = scmp.lt.s32.totalorder %s144, 15
      %s146 = scalar_select %p145, %s144, 15
      %s147 = smul.addr %s146, 4
      %s148 = scalar_lea.vmem %s0, %s147
      %p149 = pneg %p35
      %p150 = pneg %p32
      %p151 = pneg %p56
      %p152 = pneg %p53
      %p153 = pneg %p77
      %p154 = pneg %p74
      %p155 = pneg %p103
      %p156 = pneg %p100
      %s157 = smul.u32 8, %s14
      %p158 = scmp.lt.s32.totalorder %s157, 15
      %s159 = scalar_select %p158, %s157, 15
      %s160 = smul.addr %s159, 4
      %s161 = scalar_lea.vmem %s3, %s160
      %s162 = smul.u32 8, %s14
      %p163 = scmp.lt.s32.totalorder %s162, 15
      %s164 = scalar_select %p163, %s162, 15
      %s165 = smul.addr %s164, 4
      %s166 = scalar_lea.vmem %s0, %s165
      %s167 = smul.u32 8, %s14
      %s168 = smul.u32 8, %s14
      %p169 = scmp.lt.s32.totalorder %s168, 15
      %s170 = scalar_select %p169, %s168, 15
      %s171 = smul.addr %s170, 4
      %s172 = scalar_lea.vmem %s3, %s171
      %s173 = smul.u32 8, %s14
      %v175 = vld [vmem:[%s166] sm:$0xf]
      %v176 = vld [vmem:[%s166 + $0x4] sm:$0xf]
      %v177 = vld [vmem:[%s166 + $0x8] sm:$0xf]
      %v178 = vld [vmem:[%s166 + $0xc] sm:$0xf]
      %v179 = vld [vmem:[%s166 + $0x10] sm:$0xf]
      %v180 = vld [vmem:[%s166 + $0x14] sm:$0xf]
      %v181 = vld [vmem:[%s166 + $0x18] sm:$0xf]
      %v182 = vld [vmem:[%s166 + $0x1c] sm:$0xf]
      %v183 = vld [vmem:[%s1] sm:$0xf]
      %v184 = vld [vmem:[%s1 + $0x4] sm:$0xf]
      %v185 = vld [vmem:[%s1 + $0x8] sm:$0xf]
      %v186 = vld [vmem:[%s1 + $0xc] sm:$0xf]
      %v187 = vld [vmem:[%s1 + $0x10] sm:$0xf]
      %v188 = vld [vmem:[%s1 + $0x14] sm:$0xf]
      %v189 = vld [vmem:[%s2] sm:$0x1]
      %v191 = vlaneseq
      %v192 = vshrl.u32 %v191, 7
      %v193 = vsub.s32 0, %v192
      %v194 = vrot.slane %v189, %v193
      %v204 = vunpack.c.l.b16 %v175
      %v205 = vunpack.c.l.b16 %v176
      %v206 = vunpack.c.l.b16 %v177
      %v207 = vunpack.c.l.b16 %v178
      %v208 = vunpack.c.l.b16 %v179
      %v209 = vunpack.c.l.b16 %v180
      %v210 = vunpack.c.l.b16 %v181
      %v211 = vunpack.c.l.b16 %v182
      %v212 = vpack.c.b16 %v205, %v204
      %v213 = vpack.c.b16 %v207, %v206
      %v214 = vpack.c.b16 %v209, %v208
      %v215 = vpack.c.b16 %v211, %v210
      %v222 = vunpack.c.l.b16 %v183
      %v223 = vunpack.c.l.b16 %v184
      %v224 = vunpack.c.l.b16 %v185
      %v225 = vunpack.c.l.b16 %v186
      %v226 = vunpack.c.l.b16 %v187
      %v227 = vunpack.c.l.b16 %v188
      %v228 = vpack.c.b16 %v223, %v222
      %v229 = vpack.c.b16 %v225, %v224
      %v230 = vpack.c.b16 %v227, %v226
      %vm234 = vcmask 392192
      %v236 = vsel %vm234, %v212, 0
      %v239 = vsel %vm234, %v213, 0
      %v242 = vsel %vm234, %v214, 0
      %v245 = vsel %vm234, %v215, 0
      %247 = vmatprep.subr.bf16.mxu0 0
      %248 = vmatpush1.bf16.msra.mxu0 0
      %249 = vmatprep.subr.bf16.mxu0 0
      %250 = vmatpush1.bf16.msra.mxu0 0
      %251 = vmatprep.subr.bf16.mxu0 0
      %252 = vmatpush1.bf16.msra.mxu0 0
      %253 = vmatprep.subr.bf16.mxu0 0
      %254 = vmatpush1.bf16.msra.mxu0 0
      %255 = vmatprep.subr.bf16.mxu0 0
      %256 = vmatpush1.bf16.msra.mxu0 0
      %257 = vmatprep.subr.bf16.mxu0 0
      %258 = vmatpush1.bf16.msra.mxu0 %v230
      %259 = vmatprep.subr.bf16.mxu0 0
      %260 = vmatpush1.bf16.msra.mxu0 %v229
      %261 = vmatprep.subr.bf16.mxu0 0
      %262 = vmatpush1.bf16.msra.mxu0 %v228
      %263 = vmatprep.subr.bf16.mxu0 0
      %264 = vmatpush2.bf16.msra.mxu0 0
      %265 = vmatprep.subr.bf16.mxu0 0
      %266 = vmatpush2.bf16.msra.mxu0 0
      %267 = vmatprep.subr.bf16.mxu0 0
      %268 = vmatpush2.bf16.msra.mxu0 0
      %269 = vmatprep.subr.bf16.mxu0 0
      %270 = vmatpush2.bf16.msra.mxu0 0
      %271 = vmatprep.subr.bf16.mxu0 0
      %272 = vmatpush2.bf16.msra.mxu0 0
      %273 = vmatprep.subr.bf16.mxu0 0
      %274 = vmatpush2.bf16.msra.mxu0 0
      %275 = vmatprep.subr.bf16.mxu0 0
      %276 = vmatpush2.bf16.msra.mxu0 0
      %277 = vmatprep.subr.bf16.mxu0 0
      %278 = vmatpush2.bf16.msra.mxu0 0
      %279 = vmatprep.mubr.bf16.mxu0 0
      %280 = vmatmul.mubr.bf16.gmra.mxu0 %v236
      %v281 = vpop.f32.mrf.mxu0
      %v282 = vadd.f32 %v194, %v281
      %v283 = vpop.f32.mrf.mxu0
      %v284 = vpop.f32.mrf.mxu0
      %v285 = vadd.f32 %v194, %v284
      %v286 = vpop.f32.mrf.mxu0
      %287 = vmatprep.mubr.bf16.mxu0 0
      %288 = vmatmul.mubr.bf16.gmra.mxu0 %v239
      %v289 = vpop.f32.mrf.mxu0
      %v290 = vadd.f32 %v194, %v289
      %v291 = vpop.f32.mrf.mxu0
      %v292 = vpop.f32.mrf.mxu0
      %v293 = vadd.f32 %v194, %v292
      %v294 = vpop.f32.mrf.mxu0
      %295 = vmatprep.mubr.bf16.mxu0 0
      %296 = vmatmul.mubr.bf16.gmra.mxu0 %v242
      %v297 = vpop.f32.mrf.mxu0
      %v298 = vadd.f32 %v194, %v297
      %v299 = vpop.f32.mrf.mxu0
      %v300 = vpop.f32.mrf.mxu0
      %v301 = vadd.f32 %v194, %v300
      %v302 = vpop.f32.mrf.mxu0
      %303 = vmatprep.mubr.bf16.mxu0 0
      %304 = vmatmul.mubr.bf16.gmra.mxu0 %v245
      %v305 = vpop.f32.mrf.mxu0
      %v306 = vadd.f32 %v194, %v305
      %v307 = vpop.f32.mrf.mxu0
      %v308 = vpop.f32.mrf.mxu0
      %v309 = vadd.f32 %v194, %v308
      %v310 = vpop.f32.mrf.mxu0
      %311 = vdwg.mxu0
      %v312 = vmax.f32 %v282, 0.0
      %v313 = vmax.f32 %v285, 0.0
      %v314 = vmax.f32 %v290, 0.0
      %v315 = vmax.f32 %v293, 0.0
      %v316 = vmax.f32 %v298, 0.0
      %v317 = vmax.f32 %v301, 0.0
      %v318 = vmax.f32 %v306, 0.0
      %v319 = vmax.f32 %v309, 0.0
      %v320 = vpack.c.bf16 %v313, %v312
      %v321 = vpack.c.bf16 %v315, %v314
      %v322 = vpack.c.bf16 %v317, %v316
      %v323 = vpack.c.bf16 %v319, %v318
      %v328 = vunpack.c.l.b16 %v320
      %v329 = vunpack.c.h.b16 %v320
      %v330 = vunpack.c.l.b16 %v321
      %v331 = vunpack.c.h.b16 %v321
      %v332 = vunpack.c.l.b16 %v322
      %v333 = vunpack.c.h.b16 %v322
      %v334 = vunpack.c.l.b16 %v323
      %v335 = vunpack.c.h.b16 %v323
      %v336 = vpack.c.b16 %v328, %v328
      %v337 = vpack.c.b16 %v329, %v329
      %v338 = vpack.c.b16 %v330, %v330
      %v339 = vpack.c.b16 %v331, %v331
      %v340 = vpack.c.b16 %v332, %v332
      %v341 = vpack.c.b16 %v333, %v333
      %v342 = vpack.c.b16 %v334, %v334
      %v343 = vpack.c.b16 %v335, %v335
      %vm352 = vcmask 388096
      %353 = vst.msk [vmem:[%s172] sm:$0xf] %vm352, %v336
      %354 = vst.msk [vmem:[%s172 + $0x4] sm:$0xf] %vm352, %v337
      %355 = vst.msk [vmem:[%s172 + $0x8] sm:$0xf] %vm352, %v338
      %356 = vst.msk [vmem:[%s172 + $0xc] sm:$0xf] %vm352, %v339
      %357 = vst.msk [vmem:[%s172 + $0x10] sm:$0xf] %vm352, %v340
      %358 = vst.msk [vmem:[%s172 + $0x14] sm:$0xf] %vm352, %v341
      %359 = vst.msk [vmem:[%s172 + $0x18] sm:$0xf] %vm352, %v342
      %360 = vst.msk [vmem:[%s172 + $0x1c] sm:$0xf] %vm352, %v343
      %s361 = smul.u32 8, %s14
      %p362 = scmp.lt.s32.totalorder %s361, 15
      %s363 = scalar_select %p362, %s361, 15
      %s364 = smul.addr %s363, 4
      %s365 = scalar_lea.vmem %s3, %s364
      // Predicated region
      $region33: #{_lambda_.42} parent=31 // pred_check
        %p366 = pneg %p100
      $region34: #{_lambda_.42} parent=31 // pred_check_branch
        %368 = sbr.rel (%p366) target = $region36
      $region35: #{_lambda_.42} parent=31 // pred_region
        %s369 = smul.u32 8, %s14
      $region36: #{_lambda_.42} parent=31 // pred_fallthru
        _
    $region32: #{_lambda_.42} parent=5 // pred_fallthru
      _
    %p370 = scmp.le.s32.totalorder 2, %s9
    // Predicated region
    $region37: #{_lambda_.42} parent=5 // pred_check
      %p371 = pneg %p370
    $region38: #{_lambda_.42} parent=5 // pred_check_branch
      %373 = sbr.rel (%p371) target = $region40
    $region39: #{_lambda_.42} parent=5 // pred_region
      %s374 = ssub.s32 %s9, 2
      // Predicated region
      $region41: #{_lambda_.42} parent=39 // pred_check
        %p375 = pneg %p106
      $region42: #{_lambda_.42} parent=39 // pred_check_branch
        %377 = sbr.rel (%p375) target = $region44
      $region43: #{_lambda_.42} parent=39 // pred_region
        %s378 = smul.u32 8, %s15
        %p379 = scmp.lt.s32.totalorder %s378, 15
        %s380 = scalar_select %p379, %s378, 15
        %s381 = smul.addr %s380, 4
        %s382 = scalar_lea.vmem %s3, %s381
      $region44: #{_lambda_.42} parent=39 // pred_fallthru
        _
    $region40: #{_lambda_.42} parent=5 // pred_fallthru
      _
  $region6: #{_lambda_.42} parent=0 // loop_footer
    %s13 = sadd.s32 1, %s9
  $region7: #{_lambda_.42} parent=0 // loop_footer_branch
    %8 = sbr.rel target = $region3
  $region8: #{_lambda_.42} parent=0 // loop_exit
    _

// kernel: _lambda_.43
$region0: #{_lambda_.43}
  #allocation0 [shape = 'u32[]', space=smem, size = 0x4, offset = 0x4, fixed_abs, tag = 'smem constant byte address 0x4 - core index']
  #allocation1 [shape = 'u32[144,128]{1,0:T(1,128)}', space=vmem, size = 0x12000, scoped, tag = 'internal scratch']
  %s0 = inlined_call_operand.vmem [shape: bf16[2,5,5,48], index: 0, kind: input, shape index: {}]
  %s1 = inlined_call_operand.vmem [shape: bf16[2,5,5,48], index: 1, kind: input, shape index: {}]
  %s2 = inlined_call_operand.vmem [shape: bf16[2,5,5,48], index: 2, kind: input, shape index: {}]
  %s3 = inlined_call_operand.vmem [shape: bf16[2,5,5,48], index: 3, kind: input, shape index: {}]
  %s4 = inlined_call_operand.vmem [shape: f32[9,1,48], index: 4, kind: input, shape index: {}]
  %s5 = inlined_call_operand.vmem [shape: f32[1,48], index: 5, kind: input, shape index: {}]
  %s6 = inlined_call_operand.vmem [shape: bf16[2,4,4,48], index: 6, kind: output, shape index: {}]
  %s7 = sld [smem:[#allocation0]]
  $region57: #{_lambda_.43} parent=0
    _
  %s9 = ssub.s32 1, %s7
  %s10 = scalar_select 0, %s9, %s7
  loop: start=0, step=1, limit=4
  $region2: #{_lambda_.43} parent=0 // loop_pre_header
    _
  $region3: #{_lambda_.43} parent=0 // loop_header
    %s12 = sphi 0, %s16
    %p13 = scmp.ge.s32.totalorder %s12, 4
    %s22 = sphi 0, %s24
    %s25 = sphi 0, %s22
    %s26 = sphi 0, %s25
    %s42 = sphi 0, %s26
    %s48 = sphi 0, %s50
    %s51 = sphi 0, %s48
    %s52 = sphi 0, %s51
    %s68 = sphi 0, %s52
    %s74 = sphi 0, %s76
    %s77 = sphi 0, %s74
    %s78 = sphi 0, %s77
    %s94 = sphi 0, %s78
    %s100 = sphi 0, %s102
    %s103 = sphi 0, %s100
    %s104 = sphi 0, %s103
    %s120 = sphi 0, %s104
    %s124 = sphi 0, %s124
    %s126 = sphi 0, %s124
    %s127 = sphi 0, %s126
    %s141 = sphi 0, %s127
    %s145 = sphi 0, %s145
    %s147 = sphi 0, %s145
    %s148 = sphi 0, %s147
    %s162 = sphi 0, %s148
    %s168 = sphi 0, %s170
    %s171 = sphi 0, %s168
    %s172 = sphi 0, %s171
    %s188 = sphi 0, %s172
  $region4: #{_lambda_.43} parent=0 // loop_header_branch
    %15 = sbr.rel (%p13) target = $region8
  $region5: #{_lambda_.43} parent=0 // loop_body
    %s17 = ssub.s32 %s12, 1
    %s18 = ssub.s32 %s12, 2
    %s19 = sadd.s32 %s12, 1
    %s20 = ssub.s32 %s12, %s19
    %p21 = scmp.eq.s32.totalorder %s20, 0
    %s23 = sadd.s32 %s22, 1
    %s24 = scalar_select %p21, %s22, %s23
    %p27 = pneg %p21
    %p28 = scmp.eq.s32.totalorder %s12, 1
    %p29 = por %p27, %p28
    %p30 = scmp.ne.s32.totalorder %s22, %s25
    %p31 = scmp.eq.s32.totalorder %s12, 0
    %p32 = por %p30, %p31
    %p33 = scmp.ne.s32.totalorder %s22, %s25
    %p34 = scmp.eq.s32.totalorder %s17, 1
    %p35 = por %p33, %p34
    %p36 = scmp.ne.s32.totalorder %s25, %s26
    %p37 = scmp.eq.s32.totalorder %s17, 0
    %p38 = por %p36, %p37
    %p39 = scmp.ne.s32.totalorder %s25, %s26
    %p40 = scmp.eq.s32.totalorder %s18, 1
    %p41 = por %p39, %p40
    %p43 = scmp.ne.s32.totalorder %s26, %s42
    %p44 = scmp.eq.s32.totalorder %s18, 0
    %p45 = por %p43, %p44
    %s46 = ssub.s32 %s12, %s19
    %p47 = scmp.eq.s32.totalorder %s46, 0
    %s49 = sadd.s32 %s48, 1
    %s50 = scalar_select %p47, %s48, %s49
    %p53 = pneg %p47
    %p54 = scmp.eq.s32.totalorder %s12, 1
    %p55 = por %p53, %p54
    %p56 = scmp.ne.s32.totalorder %s48, %s51
    %p57 = scmp.eq.s32.totalorder %s12, 0
    %p58 = por %p56, %p57
    %p59 = scmp.ne.s32.totalorder %s48, %s51
    %p60 = scmp.eq.s32.totalorder %s17, 1
    %p61 = por %p59, %p60
    %p62 = scmp.ne.s32.totalorder %s51, %s52
    %p63 = scmp.eq.s32.totalorder %s17, 0
    %p64 = por %p62, %p63
    %p65 = scmp.ne.s32.totalorder %s51, %s52
    %p66 = scmp.eq.s32.totalorder %s18, 1
    %p67 = por %p65, %p66
    %p69 = scmp.ne.s32.totalorder %s52, %s68
    %p70 = scmp.eq.s32.totalorder %s18, 0
    %p71 = por %p69, %p70
    %s72 = ssub.s32 %s12, %s19
    %p73 = scmp.eq.s32.totalorder %s72, 0
    %s75 = sadd.s32 %s74, 1
    %s76 = scalar_select %p73, %s74, %s75
    %p79 = pneg %p73
    %p80 = scmp.eq.s32.totalorder %s12, 1
    %p81 = por %p79, %p80
    %p82 = scmp.ne.s32.totalorder %s74, %s77
    %p83 = scmp.eq.s32.totalorder %s12, 0
    %p84 = por %p82, %p83
    %p85 = scmp.ne.s32.totalorder %s74, %s77
    %p86 = scmp.eq.s32.totalorder %s17, 1
    %p87 = por %p85, %p86
    %p88 = scmp.ne.s32.totalorder %s77, %s78
    %p89 = scmp.eq.s32.totalorder %s17, 0
    %p90 = por %p88, %p89
    %p91 = scmp.ne.s32.totalorder %s77, %s78
    %p92 = scmp.eq.s32.totalorder %s18, 1
    %p93 = por %p91, %p92
    %p95 = scmp.ne.s32.totalorder %s78, %s94
    %p96 = scmp.eq.s32.totalorder %s18, 0
    %p97 = por %p95, %p96
    %s98 = ssub.s32 %s12, %s19
    %p99 = scmp.eq.s32.totalorder %s98, 0
    %s101 = sadd.s32 %s100, 1
    %s102 = scalar_select %p99, %s100, %s101
    %p105 = pneg %p99
    %p106 = scmp.eq.s32.totalorder %s12, 1
    %p107 = por %p105, %p106
    %p108 = scmp.ne.s32.totalorder %s100, %s103
    %p109 = scmp.eq.s32.totalorder %s12, 0
    %p110 = por %p108, %p109
    %p111 = scmp.ne.s32.totalorder %s100, %s103
    %p112 = scmp.eq.s32.totalorder %s17, 1
    %p113 = por %p111, %p112
    %p114 = scmp.ne.s32.totalorder %s103, %s104
    %p115 = scmp.eq.s32.totalorder %s17, 0
    %p116 = por %p114, %p115
    %p117 = scmp.ne.s32.totalorder %s103, %s104
    %p118 = scmp.eq.s32.totalorder %s18, 1
    %p119 = por %p117, %p118
    %p121 = scmp.ne.s32.totalorder %s104, %s120
    %p122 = scmp.eq.s32.totalorder %s18, 0
    %p123 = por %p121, %p122
    %s125 = sadd.s32 %s124, 1
    %p128 = scmp.eq.s32.totalorder %s12, 1
    %p129 = scmp.ne.s32.totalorder %s124, %s126
    %p130 = scmp.eq.s32.totalorder %s12, 0
    %p131 = por %p129, %p130
    %p132 = scmp.ne.s32.totalorder %s124, %s126
    %p133 = scmp.eq.s32.totalorder %s17, 1
    %p134 = por %p132, %p133
    %p135 = scmp.ne.s32.totalorder %s126, %s127
    %p136 = scmp.eq.s32.totalorder %s17, 0
    %p137 = por %p135, %p136
    %p138 = scmp.ne.s32.totalorder %s126, %s127
    %p139 = scmp.eq.s32.totalorder %s18, 1
    %p140 = por %p138, %p139
    %p142 = scmp.ne.s32.totalorder %s127, %s141
    %p143 = scmp.eq.s32.totalorder %s18, 0
    %p144 = por %p142, %p143
    %s146 = sadd.s32 %s145, 1
    %p149 = scmp.eq.s32.totalorder %s12, 1
    %p150 = scmp.ne.s32.totalorder %s145, %s147
    %p151 = scmp.eq.s32.totalorder %s12, 0
    %p152 = por %p150, %p151
    %p153 = scmp.ne.s32.totalorder %s145, %s147
    %p154 = scmp.eq.s32.totalorder %s17, 1
    %p155 = por %p153, %p154
    %p156 = scmp.ne.s32.totalorder %s147, %s148
    %p157 = scmp.eq.s32.totalorder %s17, 0
    %p158 = por %p156, %p157
    %p159 = scmp.ne.s32.totalorder %s147, %s148
    %p160 = scmp.eq.s32.totalorder %s18, 1
    %p161 = por %p159, %p160
    %p163 = scmp.ne.s32.totalorder %s148, %s162
    %p164 = scmp.eq.s32.totalorder %s18, 0
    %p165 = por %p163, %p164
    %s166 = ssub.s32 %s12, %s19
    %p167 = scmp.eq.s32.totalorder %s166, 0
    %s169 = sadd.s32 %s168, 1
    %s170 = scalar_select %p167, %s168, %s169
    %p173 = pneg %p167
    %p174 = scmp.eq.s32.totalorder %s12, 1
    %p175 = por %p173, %p174
    %p176 = scmp.ne.s32.totalorder %s168, %s171
    %p177 = scmp.eq.s32.totalorder %s12, 0
    %p178 = por %p176, %p177
    %p179 = scmp.ne.s32.totalorder %s168, %s171
    %p180 = scmp.eq.s32.totalorder %s17, 1
    %p181 = por %p179, %p180
    %p182 = scmp.ne.s32.totalorder %s171, %s172
    %p183 = scmp.eq.s32.totalorder %s17, 0
    %p184 = por %p182, %p183
    %p185 = scmp.ne.s32.totalorder %s171, %s172
    %p186 = scmp.eq.s32.totalorder %s18, 1
    %p187 = por %p185, %p186
    %p189 = scmp.ne.s32.totalorder %s172, %s188
    %p190 = scmp.eq.s32.totalorder %s18, 0
    %p191 = por %p189, %p190
    %p192 = scmp.le.s32.totalorder 1, %s12
    %p193 = scmp.lt.s32.totalorder %s12, 3
    %p194 = pnand %p192, %p193
    %p195 = pneg %p194
    // Predicated region
    $region9: #{_lambda_.43} parent=5 // pred_check
      _
    $region10: #{_lambda_.43} parent=5 // pred_check_branch
      %197 = sbr.rel (%p194) target = $region12
    $region11: #{_lambda_.43} parent=5 // pred_region
      %s198 = ssub.s32 %s12, 1
      // Predicated region
      $region13: #{_lambda_.43} parent=11 // pred_check
        %p199 = pneg %p137
      $region14: #{_lambda_.43} parent=11 // pred_check_branch
        %201 = sbr.rel (%p199) target = $region16
      $region15: #{_lambda_.43} parent=11 // pred_region
        _
      $region16: #{_lambda_.43} parent=11 // pred_fallthru
        _
      // Predicated region
      $region17: #{_lambda_.43} parent=11 // pred_check
        %p202 = pneg %p158
      $region18: #{_lambda_.43} parent=11 // pred_check_branch
        %204 = sbr.rel (%p202) target = $region20
      $region19: #{_lambda_.43} parent=11 // pred_region
        _
      $region20: #{_lambda_.43} parent=11 // pred_fallthru
        _
    $region12: #{_lambda_.43} parent=5 // pred_fallthru
      _
    %p205 = scmp.lt.s32.totalorder %s12, 2
    // Predicated region
    $region21: #{_lambda_.43} parent=5 // pred_check
      %p206 = pneg %p205
    $region22: #{_lambda_.43} parent=5 // pred_check_branch
      %208 = sbr.rel (%p206) target = $region24
    $region23: #{_lambda_.43} parent=5 // pred_region
      // Predicated region
      $region25: #{_lambda_.43} parent=23 // pred_check
        %p209 = pneg %p32
      $region26: #{_lambda_.43} parent=23 // pred_check_branch
        %211 = sbr.rel (%p209) target = $region28
      $region27: #{_lambda_.43} parent=23 // pred_region
        %p212 = scmp.lt.s32.totalorder %s12, 1
        %s213 = scalar_select %p212, %s12, 1
        %s214 = smul.addr %s213, 5
        %s215 = smul.addr %s214, 4
        %s216 = scalar_lea.vmem %s0, %s215
      $region28: #{_lambda_.43} parent=23 // pred_fallthru
        _
      // Predicated region
      $region29: #{_lambda_.43} parent=23 // pred_check
        %p217 = pneg %p58
      $region30: #{_lambda_.43} parent=23 // pred_check_branch
        %219 = sbr.rel (%p217) target = $region32
      $region31: #{_lambda_.43} parent=23 // pred_region
        %p220 = scmp.lt.s32.totalorder %s12, 1
        %s221 = scalar_select %p220, %s12, 1
        %s222 = smul.addr %s221, 5
        %s223 = smul.addr %s222, 4
        %s224 = scalar_lea.vmem %s1, %s223
      $region32: #{_lambda_.43} parent=23 // pred_fallthru
        _
      // Predicated region
      $region33: #{_lambda_.43} parent=23 // pred_check
        %p225 = pneg %p84
      $region34: #{_lambda_.43} parent=23 // pred_check_branch
        %227 = sbr.rel (%p225) target = $region36
      $region35: #{_lambda_.43} parent=23 // pred_region
        %p228 = scmp.lt.s32.totalorder %s12, 1
        %s229 = scalar_select %p228, %s12, 1
        %s230 = smul.addr %s229, 5
        %s231 = smul.addr %s230, 4
        %s232 = scalar_lea.vmem %s2, %s231
      $region36: #{_lambda_.43} parent=23 // pred_fallthru
        _
      // Predicated region
      $region37: #{_lambda_.43} parent=23 // pred_check
        %p233 = pneg %p110
      $region38: #{_lambda_.43} parent=23 // pred_check_branch
        %235 = sbr.rel (%p233) target = $region40
      $region39: #{_lambda_.43} parent=23 // pred_region
        %p236 = scmp.lt.s32.totalorder %s12, 1
        %s237 = scalar_select %p236, %s12, 1
        %s238 = smul.addr %s237, 5
        %s239 = smul.addr %s238, 4
        %s240 = scalar_lea.vmem %s3, %s239
      $region40: #{_lambda_.43} parent=23 // pred_fallthru
        _
    $region24: #{_lambda_.43} parent=5 // pred_fallthru
      _
    %p241 = scmp.le.s32.totalorder 1, %s12
    %p242 = scmp.lt.s32.totalorder %s12, 3
    %p243 = pnand %p241, %p242
    %p244 = pneg %p243
    // Predicated region
    $region41: #{_lambda_.43} parent=5 // pred_check
      _
    $region42: #{_lambda_.43} parent=5 // pred_check_branch
      %246 = sbr.rel (%p243) target = $region44
    $region43: #{_lambda_.43} parent=5 // pred_region
      %s247 = ssub.s32 %s12, 1
      %p248 = scmp.lt.s32.totalorder %s17, 1
      %s249 = scalar_select %p248, %s17, 1
      %s250 = smul.addr %s249, 5
      %s251 = smul.addr %s250, 4
      %s252 = scalar_lea.vmem %s0, %s251
      %p253 = pneg %p38
      %p254 = pneg %p35
      %p255 = scmp.lt.s32.totalorder %s17, 1
      %s256 = scalar_select %p255, %s17, 1
      %s257 = smul.addr %s256, 5
      %s258 = smul.addr %s257, 4
      %s259 = scalar_lea.vmem %s1, %s258
      %p260 = pneg %p64
      %p261 = pneg %p61
      %p262 = scmp.lt.s32.totalorder %s17, 1
      %s263 = scalar_select %p262, %s17, 1
      %s264 = smul.addr %s263, 5
      %s265 = smul.addr %s264, 4
      %s266 = scalar_lea.vmem %s2, %s265
      %p267 = pneg %p90
      %p268 = pneg %p87
      %p269 = scmp.lt.s32.totalorder %s17, 1
      %s270 = scalar_select %p269, %s17, 1
      %s271 = smul.addr %s270, 5
      %s272 = smul.addr %s271, 4
      %s273 = scalar_lea.vmem %s3, %s272
      %p274 = pneg %p116
      %p275 = pneg %p113
      %p276 = pneg %p137
      %p277 = pneg %p134
      %p278 = pneg %p158
      %p279 = pneg %p155
      %p280 = pneg %p184
      %p281 = pneg %p181
      %p282 = scmp.lt.s32.totalorder %s17, 1
      %s283 = scalar_select %p282, %s17, 1
      %s284 = smul.addr %s283, 4
      %s285 = smul.addr %s284, 2
      %s286 = scalar_lea.vmem %s6, %s285
      %p287 = scmp.lt.s32.totalorder %s17, 1
      %s288 = scalar_select %p287, %s17, 1
      %s289 = smul.addr %s288, 5
      %s290 = smul.addr %s289, 4
      %s291 = scalar_lea.vmem %s0, %s290
      %p292 = scmp.lt.s32.totalorder %s17, 1
      %s293 = scalar_select %p292, %s17, 1
      %s294 = smul.addr %s293, 5
      %s295 = smul.addr %s294, 4
      %s296 = scalar_lea.vmem %s1, %s295
      %p297 = scmp.lt.s32.totalorder %s17, 1
      %s298 = scalar_select %p297, %s17, 1
      %s299 = smul.addr %s298, 5
      %s300 = smul.addr %s299, 4
      %s301 = scalar_lea.vmem %s2, %s300
      %p302 = scmp.lt.s32.totalorder %s17, 1
      %s303 = scalar_select %p302, %s17, 1
      %s304 = smul.addr %s303, 5
      %s305 = smul.addr %s304, 4
      %s306 = scalar_lea.vmem %s3, %s305
      %p307 = scmp.lt.s32.totalorder %s17, 1
      %s308 = scalar_select %p307, %s17, 1
      %s309 = smul.addr %s308, 4
      %s310 = smul.addr %s309, 2
      %s311 = scalar_lea.vmem %s6, %s310
      %v312 = vld [vmem:[%s291] sm:$0x7]
      %v313 = vld [vmem:[%s291 + $0x4] sm:$0x7]
      %v314 = vld [vmem:[%s291 + $0x8] sm:$0x7]
      %v315 = vld [vmem:[%s291 + $0xc] sm:$0x7]
      %v316 = vld [vmem:[%s291 + $0x10] sm:$0x7]
      %v317 = vld [vmem:[%s296] sm:$0x7]
      %v318 = vld [vmem:[%s296 + $0x4] sm:$0x7]
      %v319 = vld [vmem:[%s296 + $0x8] sm:$0x7]
      %v320 = vld [vmem:[%s296 + $0xc] sm:$0x7]
      %v321 = vld [vmem:[%s296 + $0x10] sm:$0x7]
      %v322 = vld [vmem:[%s301] sm:$0x7]
      %v323 = vld [vmem:[%s301 + $0x4] sm:$0x7]
      %v324 = vld [vmem:[%s301 + $0x8] sm:$0x7]
      %v325 = vld [vmem:[%s301 + $0xc] sm:$0x7]
      %v326 = vld [vmem:[%s306] sm:$0x7]
      %v327 = vld [vmem:[%s306 + $0x4] sm:$0x7]
      %v328 = vld [vmem:[%s306 + $0x8] sm:$0x7]
      %v329 = vld [vmem:[%s306 + $0xc] sm:$0x7]
      %v330 = vunpack.c.l.bf16 %v312
      %v331 = vunpack.c.l.bf16 %v313
      %v332 = vunpack.c.l.bf16 %v314
      %v333 = vunpack.c.l.bf16 %v315
      %v334 = vld [vmem:[%s4] sm:$0x1]
      %v336 = vlaneseq
      %v337 = vshrl.u32 %v336, 7
      %v338 = vsub.s32 0, %v337
      %v339 = vrot.slane %v334, %v338
      %v341 = vmul.f32 %v330, %v339
      %v342 = vmul.f32 %v331, %v339
      %v343 = vmul.f32 %v332, %v339
      %v344 = vmul.f32 %v333, %v339
      %v345 = vadd.f32 %v341, 0.0
      %v346 = vadd.f32 %v342, 0.0
      %v347 = vadd.f32 %v343, 0.0
      %v348 = vadd.f32 %v344, 0.0
      %v349 = vunpack.c.l.bf16 %v317
      %v350 = vunpack.c.l.bf16 %v318
      %v351 = vunpack.c.l.bf16 %v319
      %v352 = vunpack.c.l.bf16 %v320
      %s353 = scalar_lea.vmem %s4, 1
      %v354 = vld [vmem:[%s353] sm:$0x1]
      %v356 = vlaneseq
      %v357 = vshrl.u32 %v356, 7
      %v358 = vsub.s32 0, %v357
      %v359 = vrot.slane %v354, %v358
      %v361 = vmul.f32 %v349, %v359
      %v362 = vmul.f32 %v350, %v359
      %v363 = vmul.f32 %v351, %v359
      %v364 = vmul.f32 %v352, %v359
      %v365 = vadd.f32 %v345, %v361
      %v366 = vadd.f32 %v346, %v362
      %v367 = vadd.f32 %v347, %v363
      %v368 = vadd.f32 %v348, %v364
      %s369 = scalar_lea.vmem %s4, 2
      %v370 = vld [vmem:[%s369] sm:$0x1]
      %v372 = vlaneseq
      %v373 = vshrl.u32 %v372, 7
      %v374 = vsub.s32 0, %v373
      %v375 = vrot.slane %v370, %v374
      %v377 = vmul.f32 %v330, %v375
      %v378 = vmul.f32 %v331, %v375
      %v379 = vmul.f32 %v332, %v375
      %v380 = vmul.f32 %v333, %v375
      %v385 = vrot.slane %v377, 1
      %v386 = vrot.slane %v378, 1
      %v387 = vrot.slane %v379, 1
      %v388 = vrot.slane %v380, 1
      %v393 = vadd.f32 %v365, %v385
      %v394 = vadd.f32 %v366, %v386
      %v395 = vadd.f32 %v367, %v387
      %v396 = vadd.f32 %v368, %v388
      %v397 = vunpack.c.l.bf16 %v322
      %v398 = vunpack.c.l.bf16 %v323
      %v399 = vunpack.c.l.bf16 %v324
      %v400 = vunpack.c.l.bf16 %v325
      %s401 = scalar_lea.vmem %s4, 3
      %v402 = vld [vmem:[%s401] sm:$0x1]
      %v404 = vlaneseq
      %v405 = vshrl.u32 %v404, 7
      %v406 = vsub.s32 0, %v405
      %v407 = vrot.slane %v402, %v406
      %v409 = vmul.f32 %v397, %v407
      %v410 = vmul.f32 %v398, %v407
      %v411 = vmul.f32 %v399, %v407
      %v412 = vmul.f32 %v400, %v407
      %v413 = vadd.f32 %v393, %v409
      %v414 = vadd.f32 %v394, %v410
      %v415 = vadd.f32 %v395, %v411
      %v416 = vadd.f32 %v396, %v412
      %v417 = vunpack.c.l.bf16 %v326
      %v418 = vunpack.c.l.bf16 %v327
      %v419 = vunpack.c.l.bf16 %v328
      %v420 = vunpack.c.l.bf16 %v329
      %s421 = scalar_lea.vmem %s4, 4
      %v422 = vld [vmem:[%s421] sm:$0x1]
      %v424 = vlaneseq
      %v425 = vshrl.u32 %v424, 7
      %v426 = vsub.s32 0, %v425
      %v427 = vrot.slane %v422, %v426
      %v429 = vmul.f32 %v417, %v427
      %v430 = vmul.f32 %v418, %v427
      %v431 = vmul.f32 %v419, %v427
      %v432 = vmul.f32 %v420, %v427
      %v433 = vadd.f32 %v413, %v429
      %v434 = vadd.f32 %v414, %v430
      %v435 = vadd.f32 %v415, %v431
      %v436 = vadd.f32 %v416, %v432
      %s437 = scalar_lea.vmem %s4, 5
      %v438 = vld [vmem:[%s437] sm:$0x1]
      %v440 = vlaneseq
      %v441 = vshrl.u32 %v440, 7
      %v442 = vsub.s32 0, %v441
      %v443 = vrot.slane %v438, %v442
      %v445 = vmul.f32 %v397, %v443
      %v446 = vmul.f32 %v398, %v443
      %v447 = vmul.f32 %v399, %v443
      %v448 = vmul.f32 %v400, %v443
      %v453 = vrot.slane %v445, 1
      %v454 = vrot.slane %v446, 1
      %v455 = vrot.slane %v447, 1
      %v456 = vrot.slane %v448, 1
      %v461 = vadd.f32 %v433, %v453
      %v462 = vadd.f32 %v434, %v454
      %v463 = vadd.f32 %v435, %v455
      %v464 = vadd.f32 %v436, %v456
      %v465 = vunpack.c.l.bf16 %v316
      %s466 = scalar_lea.vmem %s4, 6
      %v467 = vld [vmem:[%s466] sm:$0x1]
      %v469 = vlaneseq
      %v470 = vshrl.u32 %v469, 7
      %v471 = vsub.s32 0, %v470
      %v472 = vrot.slane %v467, %v471
      %v474 = vmul.f32 %v331, %v472
      %v475 = vmul.f32 %v332, %v472
      %v476 = vmul.f32 %v333, %v472
      %v477 = vmul.f32 %v465, %v472
      %v478 = vadd.f32 %v461, %v474
      %v479 = vadd.f32 %v462, %v475
      %v480 = vadd.f32 %v463, %v476
      %v481 = vadd.f32 %v464, %v477
      %v482 = vunpack.c.l.bf16 %v321
      %s483 = scalar_lea.vmem %s4, 7
      %v484 = vld [vmem:[%s483] sm:$0x1]
      %v486 = vlaneseq
      %v487 = vshrl.u32 %v486, 7
      %v488 = vsub.s32 0, %v487
      %v489 = vrot.slane %v484, %v488
      %v491 = vmul.f32 %v350, %v489
      %v492 = vmul.f32 %v351, %v489
      %v493 = vmul.f32 %v352, %v489
      %v494 = vmul.f32 %v482, %v489
      %v495 = vadd.f32 %v478, %v491
      %v496 = vadd.f32 %v479, %v492
      %v497 = vadd.f32 %v480, %v493
      %v498 = vadd.f32 %v481, %v494
      %s499 = scalar_lea.vmem %s4, 8
      %v500 = vld [vmem:[%s499] sm:$0x1]
      %v502 = vlaneseq
      %v503 = vshrl.u32 %v502, 7
      %v504 = vsub.s32 0, %v503
      %v505 = vrot.slane %v500, %v504
      %v507 = vmul.f32 %v331, %v505
      %v508 = vmul.f32 %v332, %v505
      %v509 = vmul.f32 %v333, %v505
      %v510 = vmul.f32 %v465, %v505
      %v515 = vrot.slane %v507, 1
      %v516 = vrot.slane %v508, 1
      %v517 = vrot.slane %v509, 1
      %v518 = vrot.slane %v510, 1
      %v523 = vadd.f32 %v495, %v515
      %v524 = vadd.f32 %v496, %v516
      %v525 = vadd.f32 %v497, %v517
      %v526 = vadd.f32 %v498, %v518
      %v527 = vld [vmem:[%s5] sm:$0x1]
      %v529 = vlaneseq
      %v530 = vshrl.u32 %v529, 7
      %v531 = vsub.s32 0, %v530
      %v532 = vrot.slane %v527, %v531
      %v534 = vadd.f32 %v523, %v532
      %v535 = vadd.f32 %v524, %v532
      %v536 = vadd.f32 %v525, %v532
      %v537 = vadd.f32 %v526, %v532
      %v538 = vpack.c.bf16 %v534, %v534
      %v539 = vpack.c.bf16 %v535, %v535
      %v540 = vpack.c.bf16 %v536, %v536
      %v541 = vpack.c.bf16 %v537, %v537
      %vm542 = vcmask 386048
      %543 = vst.msk [vmem:[%s311] sm:$0x3] %vm542, %v538
      %544 = vst.msk [vmem:[%s311 + $0x2] sm:$0x3] %vm542, %v539
      %545 = vst.msk [vmem:[%s311 + $0x4] sm:$0x3] %vm542, %v540
      %546 = vst.msk [vmem:[%s311 + $0x6] sm:$0x3] %vm542, %v541
      %p547 = scmp.lt.s32.totalorder %s17, 1
      %s548 = scalar_select %p547, %s17, 1
      %s549 = smul.addr %s548, 4
      %s550 = smul.addr %s549, 2
      %s551 = scalar_lea.vmem %s6, %s550
      // Predicated region
      $region45: #{_lambda_.43} parent=43 // pred_check
        %p552 = pneg %p181
      $region46: #{_lambda_.43} parent=43 // pred_check_branch
        %554 = sbr.rel (%p552) target = $region48
      $region47: #{_lambda_.43} parent=43 // pred_region
        _
      $region48: #{_lambda_.43} parent=43 // pred_fallthru
        _
    $region44: #{_lambda_.43} parent=5 // pred_fallthru
      _
    %p555 = scmp.le.s32.totalorder 2, %s12
    // Predicated region
    $region49: #{_lambda_.43} parent=5 // pred_check
      %p556 = pneg %p555
    $region50: #{_lambda_.43} parent=5 // pred_check_branch
      %558 = sbr.rel (%p556) target = $region52
    $region51: #{_lambda_.43} parent=5 // pred_region
      %s559 = ssub.s32 %s12, 2
      // Predicated region
      $region53: #{_lambda_.43} parent=51 // pred_check
        %p560 = pneg %p187
      $region54: #{_lambda_.43} parent=51 // pred_check_branch
        %562 = sbr.rel (%p560) target = $region56
      $region55: #{_lambda_.43} parent=51 // pred_region
        %p563 = scmp.lt.s32.totalorder %s18, 1
        %s564 = scalar_select %p563, %s18, 1
        %s565 = smul.addr %s564, 4
        %s566 = smul.addr %s565, 2
        %s567 = scalar_lea.vmem %s6, %s566
      $region56: #{_lambda_.43} parent=51 // pred_fallthru
        _
    $region52: #{_lambda_.43} parent=5 // pred_fallthru
      _
  $region6: #{_lambda_.43} parent=0 // loop_footer
    %s16 = sadd.s32 1, %s12
  $region7: #{_lambda_.43} parent=0 // loop_footer_branch
    %11 = sbr.rel target = $region3
  $region8: #{_lambda_.43} parent=0 // loop_exit
    _

// kernel: _lambda_.44
$region0: #{_lambda_.44}
  #allocation0 [shape = 'u32[]', space=smem, size = 0x4, offset = 0x4, fixed_abs, tag = 'smem constant byte address 0x4 - core index']
  #allocation1 [shape = 'u32[144,128]{1,0:T(1,128)}', space=vmem, size = 0x12000, scoped, tag = 'internal scratch']
  %s0 = inlined_call_operand.vmem [shape: bf16[32,48], index: 0, kind: input, shape index: {}]
  %s1 = inlined_call_operand.vmem [shape: bf16[48,48], index: 1, kind: input, shape index: {}]
  %s2 = inlined_call_operand.vmem [shape: f32[1,48], index: 2, kind: input, shape index: {}]
  %s3 = inlined_call_operand.vmem [shape: bf16[32,48], index: 3, kind: output, shape index: {}]
  %s4 = sld [smem:[#allocation0]]
  $region45: #{_lambda_.44} parent=0
    _
  %s6 = ssub.s32 1, %s4
  %s7 = scalar_select 0, %s6, %s4
  loop: start=0, step=1, limit=4
  $region2: #{_lambda_.44} parent=0 // loop_pre_header
    _
  $region3: #{_lambda_.44} parent=0 // loop_header
    %s9 = sphi 0, %s13
    %p10 = scmp.ge.s32.totalorder %s9, 4
    %s19 = sphi 0, %s21
    %s22 = sphi 0, %s19
    %s23 = sphi 0, %s22
    %s39 = sphi 0, %s23
    %s43 = sphi 0, %s43
    %s45 = sphi 0, %s43
    %s46 = sphi 0, %s45
    %s60 = sphi 0, %s46
    %s64 = sphi 0, %s64
    %s66 = sphi 0, %s64
    %s67 = sphi 0, %s66
    %s81 = sphi 0, %s67
    %s87 = sphi 0, %s89
    %s90 = sphi 0, %s87
    %s91 = sphi 0, %s90
    %s107 = sphi 0, %s91
  $region4: #{_lambda_.44} parent=0 // loop_header_branch
    %12 = sbr.rel (%p10) target = $region8
  $region5: #{_lambda_.44} parent=0 // loop_body
    %s14 = ssub.s32 %s9, 1
    %s15 = ssub.s32 %s9, 2
    %s16 = sadd.s32 %s9, 1
    %s17 = ssub.s32 %s9, %s16
    %p18 = scmp.eq.s32.totalorder %s17, 0
    %s20 = sadd.s32 %s19, 1
    %s21 = scalar_select %p18, %s19, %s20
    %p24 = pneg %p18
    %p25 = scmp.eq.s32.totalorder %s9, 1
    %p26 = por %p24, %p25
    %p27 = scmp.ne.s32.totalorder %s19, %s22
    %p28 = scmp.eq.s32.totalorder %s9, 0
    %p29 = por %p27, %p28
    %p30 = scmp.ne.s32.totalorder %s19, %s22
    %p31 = scmp.eq.s32.totalorder %s14, 1
    %p32 = por %p30, %p31
    %p33 = scmp.ne.s32.totalorder %s22, %s23
    %p34 = scmp.eq.s32.totalorder %s14, 0
    %p35 = por %p33, %p34
    %p36 = scmp.ne.s32.totalorder %s22, %s23
    %p37 = scmp.eq.s32.totalorder %s15, 1
    %p38 = por %p36, %p37
    %p40 = scmp.ne.s32.totalorder %s23, %s39
    %p41 = scmp.eq.s32.totalorder %s15, 0
    %p42 = por %p40, %p41
    %s44 = sadd.s32 %s43, 1
    %p47 = scmp.eq.s32.totalorder %s9, 1
    %p48 = scmp.ne.s32.totalorder %s43, %s45
    %p49 = scmp.eq.s32.totalorder %s9, 0
    %p50 = por %p48, %p49
    %p51 = scmp.ne.s32.totalorder %s43, %s45
    %p52 = scmp.eq.s32.totalorder %s14, 1
    %p53 = por %p51, %p52
    %p54 = scmp.ne.s32.totalorder %s45, %s46
    %p55 = scmp.eq.s32.totalorder %s14, 0
    %p56 = por %p54, %p55
    %p57 = scmp.ne.s32.totalorder %s45, %s46
    %p58 = scmp.eq.s32.totalorder %s15, 1
    %p59 = por %p57, %p58
    %p61 = scmp.ne.s32.totalorder %s46, %s60
    %p62 = scmp.eq.s32.totalorder %s15, 0
    %p63 = por %p61, %p62
    %s65 = sadd.s32 %s64, 1
    %p68 = scmp.eq.s32.totalorder %s9, 1
    %p69 = scmp.ne.s32.totalorder %s64, %s66
    %p70 = scmp.eq.s32.totalorder %s9, 0
    %p71 = por %p69, %p70
    %p72 = scmp.ne.s32.totalorder %s64, %s66
    %p73 = scmp.eq.s32.totalorder %s14, 1
    %p74 = por %p72, %p73
    %p75 = scmp.ne.s32.totalorder %s66, %s67
    %p76 = scmp.eq.s32.totalorder %s14, 0
    %p77 = por %p75, %p76
    %p78 = scmp.ne.s32.totalorder %s66, %s67
    %p79 = scmp.eq.s32.totalorder %s15, 1
    %p80 = por %p78, %p79
    %p82 = scmp.ne.s32.totalorder %s67, %s81
    %p83 = scmp.eq.s32.totalorder %s15, 0
    %p84 = por %p82, %p83
    %s85 = ssub.s32 %s9, %s16
    %p86 = scmp.eq.s32.totalorder %s85, 0
    %s88 = sadd.s32 %s87, 1
    %s89 = scalar_select %p86, %s87, %s88
    %p92 = pneg %p86
    %p93 = scmp.eq.s32.totalorder %s9, 1
    %p94 = por %p92, %p93
    %p95 = scmp.ne.s32.totalorder %s87, %s90
    %p96 = scmp.eq.s32.totalorder %s9, 0
    %p97 = por %p95, %p96
    %p98 = scmp.ne.s32.totalorder %s87, %s90
    %p99 = scmp.eq.s32.totalorder %s14, 1
    %p100 = por %p98, %p99
    %p101 = scmp.ne.s32.totalorder %s90, %s91
    %p102 = scmp.eq.s32.totalorder %s14, 0
    %p103 = por %p101, %p102
    %p104 = scmp.ne.s32.totalorder %s90, %s91
    %p105 = scmp.eq.s32.totalorder %s15, 1
    %p106 = por %p104, %p105
    %p108 = scmp.ne.s32.totalorder %s91, %s107
    %p109 = scmp.eq.s32.totalorder %s15, 0
    %p110 = por %p108, %p109
    %p111 = scmp.le.s32.totalorder 1, %s9
    %p112 = scmp.lt.s32.totalorder %s9, 3
    %p113 = pnand %p111, %p112
    %p114 = pneg %p113
    // Predicated region
    $region9: #{_lambda_.44} parent=5 // pred_check
      _
    $region10: #{_lambda_.44} parent=5 // pred_check_branch
      %116 = sbr.rel (%p113) target = $region12
    $region11: #{_lambda_.44} parent=5 // pred_region
      %s117 = ssub.s32 %s9, 1
      // Predicated region
      $region13: #{_lambda_.44} parent=11 // pred_check
        %p118 = pneg %p56
      $region14: #{_lambda_.44} parent=11 // pred_check_branch
        %120 = sbr.rel (%p118) target = $region16
      $region15: #{_lambda_.44} parent=11 // pred_region
        _
      $region16: #{_lambda_.44} parent=11 // pred_fallthru
        _
      // Predicated region
      $region17: #{_lambda_.44} parent=11 // pred_check
        %p121 = pneg %p77
      $region18: #{_lambda_.44} parent=11 // pred_check_branch
        %123 = sbr.rel (%p121) target = $region20
      $region19: #{_lambda_.44} parent=11 // pred_region
        _
      $region20: #{_lambda_.44} parent=11 // pred_fallthru
        _
    $region12: #{_lambda_.44} parent=5 // pred_fallthru
      _
    %p124 = scmp.lt.s32.totalorder %s9, 2
    // Predicated region
    $region21: #{_lambda_.44} parent=5 // pred_check
      %p125 = pneg %p124
    $region22: #{_lambda_.44} parent=5 // pred_check_branch
      %127 = sbr.rel (%p125) target = $region24
    $region23: #{_lambda_.44} parent=5 // pred_region
      // Predicated region
      $region25: #{_lambda_.44} parent=23 // pred_check
        %p128 = pneg %p29
      $region26: #{_lambda_.44} parent=23 // pred_check_branch
        %130 = sbr.rel (%p128) target = $region28
      $region27: #{_lambda_.44} parent=23 // pred_region
        %s131 = smul.u32 2, %s9
        %p132 = scmp.lt.s32.totalorder %s131, 3
        %s133 = scalar_select %p132, %s131, 3
        %s134 = smul.addr %s133, 4
        %s135 = scalar_lea.vmem %s0, %s134
        %s136 = smul.u32 2, %s9
      $region28: #{_lambda_.44} parent=23 // pred_fallthru
        _
    $region24: #{_lambda_.44} parent=5 // pred_fallthru
      _
    %p137 = scmp.le.s32.totalorder 1, %s9
    %p138 = scmp.lt.s32.totalorder %s9, 3
    %p139 = pnand %p137, %p138
    %p140 = pneg %p139
    // Predicated region
    $region29: #{_lambda_.44} parent=5 // pred_check
      _
    $region30: #{_lambda_.44} parent=5 // pred_check_branch
      %142 = sbr.rel (%p139) target = $region32
    $region31: #{_lambda_.44} parent=5 // pred_region
      %s143 = ssub.s32 %s9, 1
      %s144 = smul.u32 2, %s14
      %p145 = scmp.lt.s32.totalorder %s144, 3
      %s146 = scalar_select %p145, %s144, 3
      %s147 = smul.addr %s146, 4
      %s148 = scalar_lea.vmem %s0, %s147
      %p149 = pneg %p35
      %p150 = pneg %p32
      %p151 = pneg %p56
      %p152 = pneg %p53
      %p153 = pneg %p77
      %p154 = pneg %p74
      %p155 = pneg %p103
      %p156 = pneg %p100
      %s157 = smul.u32 2, %s14
      %p158 = scmp.lt.s32.totalorder %s157, 3
      %s159 = scalar_select %p158, %s157, 3
      %s160 = smul.addr %s159, 4
      %s161 = scalar_lea.vmem %s3, %s160
      %s162 = smul.u32 2, %s14
      %p163 = scmp.lt.s32.totalorder %s162, 3
      %s164 = scalar_select %p163, %s162, 3
      %s165 = smul.addr %s164, 4
      %s166 = scalar_lea.vmem %s0, %s165
      %s167 = smul.u32 2, %s14
      %s168 = smul.u32 2, %s14
      %p169 = scmp.lt.s32.totalorder %s168, 3
      %s170 = scalar_select %p169, %s168, 3
      %s171 = smul.addr %s170, 4
      %s172 = scalar_lea.vmem %s3, %s171
      %s173 = smul.u32 2, %s14
      %v175 = vld [vmem:[%s166] sm:$0xf]
      %v176 = vld [vmem:[%s166 + $0x4] sm:$0xf]
      %v177 = vld [vmem:[%s1] sm:$0xf]
      %v178 = vld [vmem:[%s1 + $0x4] sm:$0xf]
      %v179 = vld [vmem:[%s1 + $0x8] sm:$0xf]
      %v180 = vld [vmem:[%s1 + $0xc] sm:$0xf]
      %v181 = vld [vmem:[%s1 + $0x10] sm:$0xf]
      %v182 = vld [vmem:[%s1 + $0x14] sm:$0xf]
      %v183 = vld [vmem:[%s2] sm:$0x1]
      %v185 = vlaneseq
      %v186 = vshrl.u32 %v185, 7
      %v187 = vsub.s32 0, %v186
      %v188 = vrot.slane %v183, %v187
      %v192 = vunpack.c.l.b16 %v175
      %v193 = vunpack.c.l.b16 %v176
      %v194 = vpack.c.b16 %v193, %v192
      %v201 = vunpack.c.l.b16 %v177
      %v202 = vunpack.c.l.b16 %v178
      %v203 = vunpack.c.l.b16 %v179
      %v204 = vunpack.c.l.b16 %v180
      %v205 = vunpack.c.l.b16 %v181
      %v206 = vunpack.c.l.b16 %v182
      %v207 = vpack.c.b16 %v202, %v201
      %v208 = vpack.c.b16 %v204, %v203
      %v209 = vpack.c.b16 %v206, %v205
      %vm213 = vcmask 392192
      %v215 = vsel %vm213, %v194, 0
      %217 = vmatprep.subr.bf16.mxu0 0
      %218 = vmatpush1.bf16.msra.mxu0 0
      %219 = vmatprep.subr.bf16.mxu0 0
      %220 = vmatpush1.bf16.msra.mxu0 0
      %221 = vmatprep.subr.bf16.mxu0 0
      %222 = vmatpush1.bf16.msra.mxu0 0
      %223 = vmatprep.subr.bf16.mxu0 0
      %224 = vmatpush1.bf16.msra.mxu0 0
      %225 = vmatprep.subr.bf16.mxu0 0
      %226 = vmatpush1.bf16.msra.mxu0 0
      %227 = vmatprep.subr.bf16.mxu0 0
      %228 = vmatpush1.bf16.msra.mxu0 %v209
      %229 = vmatprep.subr.bf16.mxu0 0
      %230 = vmatpush1.bf16.msra.mxu0 %v208
      %231 = vmatprep.subr.bf16.mxu0 0
      %232 = vmatpush1.bf16.msra.mxu0 %v207
      %233 = vmatprep.subr.bf16.mxu0 0
      %234 = vmatpush2.bf16.msra.mxu0 0
      %235 = vmatprep.subr.bf16.mxu0 0
      %236 = vmatpush2.bf16.msra.mxu0 0
      %237 = vmatprep.subr.bf16.mxu0 0
      %238 = vmatpush2.bf16.msra.mxu0 0
      %239 = vmatprep.subr.bf16.mxu0 0
      %240 = vmatpush2.bf16.msra.mxu0 0
      %241 = vmatprep.subr.bf16.mxu0 0
      %242 = vmatpush2.bf16.msra.mxu0 0
      %243 = vmatprep.subr.bf16.mxu0 0
      %244 = vmatpush2.bf16.msra.mxu0 0
      %245 = vmatprep.subr.bf16.mxu0 0
      %246 = vmatpush2.bf16.msra.mxu0 0
      %247 = vmatprep.subr.bf16.mxu0 0
      %248 = vmatpush2.bf16.msra.mxu0 0
      %249 = vmatprep.mubr.bf16.mxu0 0
      %250 = vmatmul.mubr.bf16.gmra.mxu0 %v215
      %v251 = vpop.f32.mrf.mxu0
      %v252 = vadd.f32 %v188, %v251
      %v253 = vpop.f32.mrf.mxu0
      %v254 = vpop.f32.mrf.mxu0
      %v255 = vadd.f32 %v188, %v254
      %v256 = vpop.f32.mrf.mxu0
      %257 = vdwg.mxu0
      %v258 = vmax.f32 %v252, 0.0
      %v259 = vmax.f32 %v255, 0.0
      %v260 = vpack.c.bf16 %v259, %v258
      %v262 = vunpack.c.l.b16 %v260
      %v263 = vunpack.c.h.b16 %v260
      %v264 = vpack.c.b16 %v262, %v262
      %v265 = vpack.c.b16 %v263, %v263
      %vm268 = vcmask 388096
      %269 = vst.msk [vmem:[%s172] sm:$0xf] %vm268, %v264
      %270 = vst.msk [vmem:[%s172 + $0x4] sm:$0xf] %vm268, %v265
      %s271 = smul.u32 2, %s14
      %p272 = scmp.lt.s32.totalorder %s271, 3
      %s273 = scalar_select %p272, %s271, 3
      %s274 = smul.addr %s273, 4
      %s275 = scalar_lea.vmem %s3, %s274
      // Predicated region
      $region33: #{_lambda_.44} parent=31 // pred_check
        %p276 = pneg %p100
      $region34: #{_lambda_.44} parent=31 // pred_check_branch
        %278 = sbr.rel (%p276) target = $region36
      $region35: #{_lambda_.44} parent=31 // pred_region
        %s279 = smul.u32 2, %s14
      $region36: #{_lambda_.44} parent=31 // pred_fallthru
        _
    $region32: #{_lambda_.44} parent=5 // pred_fallthru
      _
    %p280 = scmp.le.s32.totalorder 2, %s9
    // Predicated region
    $region37: #{_lambda_.44} parent=5 // pred_check
      %p281 = pneg %p280
    $region38: #{_lambda_.44} parent=5 // pred_check_branch
      %283 = sbr.rel (%p281) target = $region40
    $region39: #{_lambda_.44} parent=5 // pred_region
      %s284 = ssub.s32 %s9, 2
      // Predicated region
      $region41: #{_lambda_.44} parent=39 // pred_check
        %p285 = pneg %p106
      $region42: #{_lambda_.44} parent=39 // pred_check_branch
        %287 = sbr.rel (%p285) target = $region44
      $region43: #{_lambda_.44} parent=39 // pred_region
        %s288 = smul.u32 2, %s15
        %p289 = scmp.lt.s32.totalorder %s288, 3
        %s290 = scalar_select %p289, %s288, 3
        %s291 = smul.addr %s290, 4
        %s292 = scalar_lea.vmem %s3, %s291
      $region44: #{_lambda_.44} parent=39 // pred_fallthru
        _
    $region40: #{_lambda_.44} parent=5 // pred_fallthru
      _
  $region6: #{_lambda_.44} parent=0 // loop_footer
    %s13 = sadd.s32 1, %s9
  $region7: #{_lambda_.44} parent=0 // loop_footer_branch
    %8 = sbr.rel target = $region3
  $region8: #{_lambda_.44} parent=0 // loop_exit
    _

// kernel: _lambda_.46
$region0: #{_lambda_.46}
  #allocation0 [shape = 'u32[]', space=smem, size = 0x4, offset = 0x4, fixed_abs, tag = 'smem constant byte address 0x4 - core index']
  #allocation1 [shape = 'u32[144,128]{1,0:T(1,128)}', space=vmem, size = 0x12000, scoped, tag = 'internal scratch']
  %s0 = inlined_call_operand.vmem [shape: bf16[2,6,6,48], index: 0, kind: input, shape index: {}]
  %s1 = inlined_call_operand.vmem [shape: f32[9,1,48], index: 1, kind: input, shape index: {}]
  %s2 = inlined_call_operand.vmem [shape: f32[1,48], index: 2, kind: input, shape index: {}]
  %s3 = inlined_call_operand.vmem [shape: bf16[2,4,4,48], index: 3, kind: output, shape index: {}]
  %s4 = sld [smem:[#allocation0]]
  $region45: #{_lambda_.46} parent=0
    _
  %s6 = ssub.s32 1, %s4
  %s7 = scalar_select 0, %s6, %s4
  loop: start=0, step=1, limit=4
  $region2: #{_lambda_.46} parent=0 // loop_pre_header
    _
  $region3: #{_lambda_.46} parent=0 // loop_header
    %s9 = sphi 0, %s13
    %p10 = scmp.ge.s32.totalorder %s9, 4
    %s19 = sphi 0, %s21
    %s22 = sphi 0, %s19
    %s23 = sphi 0, %s22
    %s39 = sphi 0, %s23
    %s43 = sphi 0, %s43
    %s45 = sphi 0, %s43
    %s46 = sphi 0, %s45
    %s60 = sphi 0, %s46
    %s64 = sphi 0, %s64
    %s66 = sphi 0, %s64
    %s67 = sphi 0, %s66
    %s81 = sphi 0, %s67
    %s87 = sphi 0, %s89
    %s90 = sphi 0, %s87
    %s91 = sphi 0, %s90
    %s107 = sphi 0, %s91
  $region4: #{_lambda_.46} parent=0 // loop_header_branch
    %12 = sbr.rel (%p10) target = $region8
  $region5: #{_lambda_.46} parent=0 // loop_body
    %s14 = ssub.s32 %s9, 1
    %s15 = ssub.s32 %s9, 2
    %s16 = sadd.s32 %s9, 1
    %s17 = ssub.s32 %s9, %s16
    %p18 = scmp.eq.s32.totalorder %s17, 0
    %s20 = sadd.s32 %s19, 1
    %s21 = scalar_select %p18, %s19, %s20
    %p24 = pneg %p18
    %p25 = scmp.eq.s32.totalorder %s9, 1
    %p26 = por %p24, %p25
    %p27 = scmp.ne.s32.totalorder %s19, %s22
    %p28 = scmp.eq.s32.totalorder %s9, 0
    %p29 = por %p27, %p28
    %p30 = scmp.ne.s32.totalorder %s19, %s22
    %p31 = scmp.eq.s32.totalorder %s14, 1
    %p32 = por %p30, %p31
    %p33 = scmp.ne.s32.totalorder %s22, %s23
    %p34 = scmp.eq.s32.totalorder %s14, 0
    %p35 = por %p33, %p34
    %p36 = scmp.ne.s32.totalorder %s22, %s23
    %p37 = scmp.eq.s32.totalorder %s15, 1
    %p38 = por %p36, %p37
    %p40 = scmp.ne.s32.totalorder %s23, %s39
    %p41 = scmp.eq.s32.totalorder %s15, 0
    %p42 = por %p40, %p41
    %s44 = sadd.s32 %s43, 1
    %p47 = scmp.eq.s32.totalorder %s9, 1
    %p48 = scmp.ne.s32.totalorder %s43, %s45
    %p49 = scmp.eq.s32.totalorder %s9, 0
    %p50 = por %p48, %p49
    %p51 = scmp.ne.s32.totalorder %s43, %s45
    %p52 = scmp.eq.s32.totalorder %s14, 1
    %p53 = por %p51, %p52
    %p54 = scmp.ne.s32.totalorder %s45, %s46
    %p55 = scmp.eq.s32.totalorder %s14, 0
    %p56 = por %p54, %p55
    %p57 = scmp.ne.s32.totalorder %s45, %s46
    %p58 = scmp.eq.s32.totalorder %s15, 1
    %p59 = por %p57, %p58
    %p61 = scmp.ne.s32.totalorder %s46, %s60
    %p62 = scmp.eq.s32.totalorder %s15, 0
    %p63 = por %p61, %p62
    %s65 = sadd.s32 %s64, 1
    %p68 = scmp.eq.s32.totalorder %s9, 1
    %p69 = scmp.ne.s32.totalorder %s64, %s66
    %p70 = scmp.eq.s32.totalorder %s9, 0
    %p71 = por %p69, %p70
    %p72 = scmp.ne.s32.totalorder %s64, %s66
    %p73 = scmp.eq.s32.totalorder %s14, 1
    %p74 = por %p72, %p73
    %p75 = scmp.ne.s32.totalorder %s66, %s67
    %p76 = scmp.eq.s32.totalorder %s14, 0
    %p77 = por %p75, %p76
    %p78 = scmp.ne.s32.totalorder %s66, %s67
    %p79 = scmp.eq.s32.totalorder %s15, 1
    %p80 = por %p78, %p79
    %p82 = scmp.ne.s32.totalorder %s67, %s81
    %p83 = scmp.eq.s32.totalorder %s15, 0
    %p84 = por %p82, %p83
    %s85 = ssub.s32 %s9, %s16
    %p86 = scmp.eq.s32.totalorder %s85, 0
    %s88 = sadd.s32 %s87, 1
    %s89 = scalar_select %p86, %s87, %s88
    %p92 = pneg %p86
    %p93 = scmp.eq.s32.totalorder %s9, 1
    %p94 = por %p92, %p93
    %p95 = scmp.ne.s32.totalorder %s87, %s90
    %p96 = scmp.eq.s32.totalorder %s9, 0
    %p97 = por %p95, %p96
    %p98 = scmp.ne.s32.totalorder %s87, %s90
    %p99 = scmp.eq.s32.totalorder %s14, 1
    %p100 = por %p98, %p99
    %p101 = scmp.ne.s32.totalorder %s90, %s91
    %p102 = scmp.eq.s32.totalorder %s14, 0
    %p103 = por %p101, %p102
    %p104 = scmp.ne.s32.totalorder %s90, %s91
    %p105 = scmp.eq.s32.totalorder %s15, 1
    %p106 = por %p104, %p105
    %p108 = scmp.ne.s32.totalorder %s91, %s107
    %p109 = scmp.eq.s32.totalorder %s15, 0
    %p110 = por %p108, %p109
    %p111 = scmp.le.s32.totalorder 1, %s9
    %p112 = scmp.lt.s32.totalorder %s9, 3
    %p113 = pnand %p111, %p112
    %p114 = pneg %p113
    // Predicated region
    $region9: #{_lambda_.46} parent=5 // pred_check
      _
    $region10: #{_lambda_.46} parent=5 // pred_check_branch
      %116 = sbr.rel (%p113) target = $region12
    $region11: #{_lambda_.46} parent=5 // pred_region
      %s117 = ssub.s32 %s9, 1
      // Predicated region
      $region13: #{_lambda_.46} parent=11 // pred_check
        %p118 = pneg %p56
      $region14: #{_lambda_.46} parent=11 // pred_check_branch
        %120 = sbr.rel (%p118) target = $region16
      $region15: #{_lambda_.46} parent=11 // pred_region
        _
      $region16: #{_lambda_.46} parent=11 // pred_fallthru
        _
      // Predicated region
      $region17: #{_lambda_.46} parent=11 // pred_check
        %p121 = pneg %p77
      $region18: #{_lambda_.46} parent=11 // pred_check_branch
        %123 = sbr.rel (%p121) target = $region20
      $region19: #{_lambda_.46} parent=11 // pred_region
        _
      $region20: #{_lambda_.46} parent=11 // pred_fallthru
        _
    $region12: #{_lambda_.46} parent=5 // pred_fallthru
      _
    %p124 = scmp.lt.s32.totalorder %s9, 2
    // Predicated region
    $region21: #{_lambda_.46} parent=5 // pred_check
      %p125 = pneg %p124
    $region22: #{_lambda_.46} parent=5 // pred_check_branch
      %127 = sbr.rel (%p125) target = $region24
    $region23: #{_lambda_.46} parent=5 // pred_region
      // Predicated region
      $region25: #{_lambda_.46} parent=23 // pred_check
        %p128 = pneg %p29
      $region26: #{_lambda_.46} parent=23 // pred_check_branch
        %130 = sbr.rel (%p128) target = $region28
      $region27: #{_lambda_.46} parent=23 // pred_region
        %p131 = scmp.lt.s32.totalorder %s9, 1
        %s132 = scalar_select %p131, %s9, 1
        %s133 = smul.addr %s132, 6
        %s134 = smul.addr %s133, 4
        %s135 = scalar_lea.vmem %s0, %s134
      $region28: #{_lambda_.46} parent=23 // pred_fallthru
        _
    $region24: #{_lambda_.46} parent=5 // pred_fallthru
      _
    %p136 = scmp.le.s32.totalorder 1, %s9
    %p137 = scmp.lt.s32.totalorder %s9, 3
    %p138 = pnand %p136, %p137
    %p139 = pneg %p138
    // Predicated region
    $region29: #{_lambda_.46} parent=5 // pred_check
      _
    $region30: #{_lambda_.46} parent=5 // pred_check_branch
      %141 = sbr.rel (%p138) target = $region32
    $region31: #{_lambda_.46} parent=5 // pred_region
      %s142 = ssub.s32 %s9, 1
      %p143 = scmp.lt.s32.totalorder %s14, 1
      %s144 = scalar_select %p143, %s14, 1
      %s145 = smul.addr %s144, 6
      %s146 = smul.addr %s145, 4
      %s147 = scalar_lea.vmem %s0, %s146
      %p148 = pneg %p35
      %p149 = pneg %p32
      %p150 = pneg %p56
      %p151 = pneg %p53
      %p152 = pneg %p77
      %p153 = pneg %p74
      %p154 = pneg %p103
      %p155 = pneg %p100
      %p156 = scmp.lt.s32.totalorder %s14, 1
      %s157 = scalar_select %p156, %s14, 1
      %s158 = smul.addr %s157, 4
      %s159 = smul.addr %s158, 2
      %s160 = scalar_lea.vmem %s3, %s159
      %p161 = scmp.lt.s32.totalorder %s14, 1
      %s162 = scalar_select %p161, %s14, 1
      %s163 = smul.addr %s162, 6
      %s164 = smul.addr %s163, 4
      %s165 = scalar_lea.vmem %s0, %s164
      %p166 = scmp.lt.s32.totalorder %s14, 1
      %s167 = scalar_select %p166, %s14, 1
      %s168 = smul.addr %s167, 4
      %s169 = smul.addr %s168, 2
      %s170 = scalar_lea.vmem %s3, %s169
      %v171 = vld [vmem:[%s165] sm:$0x7]
      %v172 = vld [vmem:[%s165 + $0x4] sm:$0x7]
      %v173 = vld [vmem:[%s165 + $0x8] sm:$0x7]
      %v174 = vld [vmem:[%s165 + $0xc] sm:$0x7]
      %v175 = vld [vmem:[%s165 + $0x10] sm:$0x7]
      %v176 = vld [vmem:[%s165 + $0x14] sm:$0x7]
      %v177 = vunpack.c.l.bf16 %v171
      %v178 = vunpack.c.l.bf16 %v172
      %v179 = vunpack.c.l.bf16 %v173
      %v180 = vunpack.c.l.bf16 %v174
      %v181 = vld [vmem:[%s1] sm:$0x1]
      %v183 = vlaneseq
      %v184 = vshrl.u32 %v183, 7
      %v185 = vsub.s32 0, %v184
      %v186 = vrot.slane %v181, %v185
      %v188 = vmul.f32 %v177, %v186
      %v189 = vmul.f32 %v178, %v186
      %v190 = vmul.f32 %v179, %v186
      %v191 = vmul.f32 %v180, %v186
      %v192 = vadd.f32 %v188, 0.0
      %v193 = vadd.f32 %v189, 0.0
      %v194 = vadd.f32 %v190, 0.0
      %v195 = vadd.f32 %v191, 0.0
      %s196 = scalar_lea.vmem %s1, 1
      %v197 = vld [vmem:[%s196] sm:$0x1]
      %v199 = vlaneseq
      %v200 = vshrl.u32 %v199, 7
      %v201 = vsub.s32 0, %v200
      %v202 = vrot.slane %v197, %v201
      %v204 = vmul.f32 %v177, %v202
      %v205 = vmul.f32 %v178, %v202
      %v206 = vmul.f32 %v179, %v202
      %v207 = vmul.f32 %v180, %v202
      %v212 = vrot.slane %v204, 1
      %v213 = vrot.slane %v205, 1
      %v214 = vrot.slane %v206, 1
      %v215 = vrot.slane %v207, 1
      %v220 = vadd.f32 %v192, %v212
      %v221 = vadd.f32 %v193, %v213
      %v222 = vadd.f32 %v194, %v214
      %v223 = vadd.f32 %v195, %v215
      %s224 = scalar_lea.vmem %s1, 2
      %v225 = vld [vmem:[%s224] sm:$0x1]
      %v227 = vlaneseq
      %v228 = vshrl.u32 %v227, 7
      %v229 = vsub.s32 0, %v228
      %v230 = vrot.slane %v225, %v229
      %v232 = vmul.f32 %v177, %v230
      %v233 = vmul.f32 %v178, %v230
      %v234 = vmul.f32 %v179, %v230
      %v235 = vmul.f32 %v180, %v230
      %v240 = vrot.slane %v232, 2
      %v241 = vrot.slane %v233, 2
      %v242 = vrot.slane %v234, 2
      %v243 = vrot.slane %v235, 2
      %v248 = vadd.f32 %v220, %v240
      %v249 = vadd.f32 %v221, %v241
      %v250 = vadd.f32 %v222, %v242
      %v251 = vadd.f32 %v223, %v243
      %v252 = vunpack.c.l.bf16 %v175
      %s253 = scalar_lea.vmem %s1, 3
      %v254 = vld [vmem:[%s253] sm:$0x1]
      %v256 = vlaneseq
      %v257 = vshrl.u32 %v256, 7
      %v258 = vsub.s32 0, %v257
      %v259 = vrot.slane %v254, %v258
      %v261 = vmul.f32 %v178, %v259
      %v262 = vmul.f32 %v179, %v259
      %v263 = vmul.f32 %v180, %v259
      %v264 = vmul.f32 %v252, %v259
      %v265 = vadd.f32 %v248, %v261
      %v266 = vadd.f32 %v249, %v262
      %v267 = vadd.f32 %v250, %v263
      %v268 = vadd.f32 %v251, %v264
      %s269 = scalar_lea.vmem %s1, 4
      %v270 = vld [vmem:[%s269] sm:$0x1]
      %v272 = vlaneseq
      %v273 = vshrl.u32 %v272, 7
      %v274 = vsub.s32 0, %v273
      %v275 = vrot.slane %v270, %v274
      %v277 = vmul.f32 %v178, %v275
      %v278 = vmul.f32 %v179, %v275
      %v279 = vmul.f32 %v180, %v275
      %v280 = vmul.f32 %v252, %v275
      %v285 = vrot.slane %v277, 1
      %v286 = vrot.slane %v278, 1
      %v287 = vrot.slane %v279, 1
      %v288 = vrot.slane %v280, 1
      %v293 = vadd.f32 %v265, %v285
      %v294 = vadd.f32 %v266, %v286
      %v295 = vadd.f32 %v267, %v287
      %v296 = vadd.f32 %v268, %v288
      %s297 = scalar_lea.vmem %s1, 5
      %v298 = vld [vmem:[%s297] sm:$0x1]
      %v300 = vlaneseq
      %v301 = vshrl.u32 %v300, 7
      %v302 = vsub.s32 0, %v301
      %v303 = vrot.slane %v298, %v302
      %v305 = vmul.f32 %v178, %v303
      %v306 = vmul.f32 %v179, %v303
      %v307 = vmul.f32 %v180, %v303
      %v308 = vmul.f32 %v252, %v303
      %v313 = vrot.slane %v305, 2
      %v314 = vrot.slane %v306, 2
      %v315 = vrot.slane %v307, 2
      %v316 = vrot.slane %v308, 2
      %v321 = vadd.f32 %v293, %v313
      %v322 = vadd.f32 %v294, %v314
      %v323 = vadd.f32 %v295, %v315
      %v324 = vadd.f32 %v296, %v316
      %v325 = vunpack.c.l.bf16 %v176
      %s326 = scalar_lea.vmem %s1, 6
      %v327 = vld [vmem:[%s326] sm:$0x1]
      %v329 = vlaneseq
      %v330 = vshrl.u32 %v329, 7
      %v331 = vsub.s32 0, %v330
      %v332 = vrot.slane %v327, %v331
      %v334 = vmul.f32 %v179, %v332
      %v335 = vmul.f32 %v180, %v332
      %v336 = vmul.f32 %v252, %v332
      %v337 = vmul.f32 %v325, %v332
      %v338 = vadd.f32 %v321, %v334
      %v339 = vadd.f32 %v322, %v335
      %v340 = vadd.f32 %v323, %v336
      %v341 = vadd.f32 %v324, %v337
      %s342 = scalar_lea.vmem %s1, 7
      %v343 = vld [vmem:[%s342] sm:$0x1]
      %v345 = vlaneseq
      %v346 = vshrl.u32 %v345, 7
      %v347 = vsub.s32 0, %v346
      %v348 = vrot.slane %v343, %v347
      %v350 = vmul.f32 %v179, %v348
      %v351 = vmul.f32 %v180, %v348
      %v352 = vmul.f32 %v252, %v348
      %v353 = vmul.f32 %v325, %v348
      %v358 = vrot.slane %v350, 1
      %v359 = vrot.slane %v351, 1
      %v360 = vrot.slane %v352, 1
      %v361 = vrot.slane %v353, 1
      %v366 = vadd.f32 %v338, %v358
      %v367 = vadd.f32 %v339, %v359
      %v368 = vadd.f32 %v340, %v360
      %v369 = vadd.f32 %v341, %v361
      %s370 = scalar_lea.vmem %s1, 8
      %v371 = vld [vmem:[%s370] sm:$0x1]
      %v373 = vlaneseq
      %v374 = vshrl.u32 %v373, 7
      %v375 = vsub.s32 0, %v374
      %v376 = vrot.slane %v371, %v375
      %v378 = vmul.f32 %v179, %v376
      %v379 = vmul.f32 %v180, %v376
      %v380 = vmul.f32 %v252, %v376
      %v381 = vmul.f32 %v325, %v376
      %v386 = vrot.slane %v378, 2
      %v387 = vrot.slane %v379, 2
      %v388 = vrot.slane %v380, 2
      %v389 = vrot.slane %v381, 2
      %v394 = vadd.f32 %v366, %v386
      %v395 = vadd.f32 %v367, %v387
      %v396 = vadd.f32 %v368, %v388
      %v397 = vadd.f32 %v369, %v389
      %v398 = vld [vmem:[%s2] sm:$0x1]
      %v400 = vlaneseq
      %v401 = vshrl.u32 %v400, 7
      %v402 = vsub.s32 0, %v401
      %v403 = vrot.slane %v398, %v402
      %v405 = vadd.f32 %v394, %v403
      %v406 = vadd.f32 %v395, %v403
      %v407 = vadd.f32 %v396, %v403
      %v408 = vadd.f32 %v397, %v403
      %v409 = vpack.c.bf16 %v405, %v405
      %v410 = vpack.c.bf16 %v406, %v406
      %v411 = vpack.c.bf16 %v407, %v407
      %v412 = vpack.c.bf16 %v408, %v408
      %vm413 = vcmask 386048
      %414 = vst.msk [vmem:[%s170] sm:$0x3] %vm413, %v409
      %415 = vst.msk [vmem:[%s170 + $0x2] sm:$0x3] %vm413, %v410
      %416 = vst.msk [vmem:[%s170 + $0x4] sm:$0x3] %vm413, %v411
      %417 = vst.msk [vmem:[%s170 + $0x6] sm:$0x3] %vm413, %v412
      %p418 = scmp.lt.s32.totalorder %s14, 1
      %s419 = scalar_select %p418, %s14, 1
      %s420 = smul.addr %s419, 4
      %s421 = smul.addr %s420, 2
      %s422 = scalar_lea.vmem %s3, %s421
      // Predicated region
      $region33: #{_lambda_.46} parent=31 // pred_check
        %p423 = pneg %p100
      $region34: #{_lambda_.46} parent=31 // pred_check_branch
        %425 = sbr.rel (%p423) target = $region36
      $region35: #{_lambda_.46} parent=31 // pred_region
        _
      $region36: #{_lambda_.46} parent=31 // pred_fallthru
        _
    $region32: #{_lambda_.46} parent=5 // pred_fallthru
      _
    %p426 = scmp.le.s32.totalorder 2, %s9
    // Predicated region
    $region37: #{_lambda_.46} parent=5 // pred_check
      %p427 = pneg %p426
    $region38: #{_lambda_.46} parent=5 // pred_check_branch
      %429 = sbr.rel (%p427) target = $region40
    $region39: #{_lambda_.46} parent=5 // pred_region
      %s430 = ssub.s32 %s9, 2
      // Predicated region
      $region41: #{_lambda_.46} parent=39 // pred_check
        %p431 = pneg %p106
      $region42: #{_lambda_.46} parent=39 // pred_check_branch
        %433 = sbr.rel (%p431) target = $region44
      $region43: #{_lambda_.46} parent=39 // pred_region
        %p434 = scmp.lt.s32.totalorder %s15, 1
        %s435 = scalar_select %p434, %s15, 1
        %s436 = smul.addr %s435, 4
        %s437 = smul.addr %s436, 2
        %s438 = scalar_lea.vmem %s3, %s437
      $region44: #{_lambda_.46} parent=39 // pred_fallthru
        _
    $region40: #{_lambda_.46} parent=5 // pred_fallthru
      _
  $region6: #{_lambda_.46} parent=0 // loop_footer
    %s13 = sadd.s32 1, %s9
  $region7: #{_lambda_.46} parent=0 // loop_footer_branch
    %8 = sbr.rel target = $region3
  $region8: #{_lambda_.46} parent=0 // loop_exit
    _

// kernel: _lambda_.53
$region0: #{_lambda_.53}
  #allocation0 [shape = 'u32[]', space=smem, size = 0x4, offset = 0x4, fixed_abs, tag = 'smem constant byte address 0x4 - core index']
  #allocation1 [shape = 'u32[144,128]{1,0:T(1,128)}', space=vmem, size = 0x12000, scoped, tag = 'internal scratch']
  %s0 = inlined_call_operand.vmem [shape: bf16[32,96], index: 0, kind: input, shape index: {}]
  %s1 = inlined_call_operand.vmem [shape: bf16[96,96], index: 1, kind: input, shape index: {}]
  %s2 = inlined_call_operand.vmem [shape: f32[1,96], index: 2, kind: input, shape index: {}]
  %s3 = inlined_call_operand.vmem [shape: bf16[32,96], index: 3, kind: output, shape index: {}]
  %s4 = sld [smem:[#allocation0]]
  $region45: #{_lambda_.53} parent=0
    _
  %s6 = ssub.s32 1, %s4
  %s7 = scalar_select 0, %s6, %s4
  loop: start=0, step=1, limit=4
  $region2: #{_lambda_.53} parent=0 // loop_pre_header
    _
  $region3: #{_lambda_.53} parent=0 // loop_header
    %s9 = sphi 0, %s13
    %p10 = scmp.ge.s32.totalorder %s9, 4
    %s19 = sphi 0, %s21
    %s22 = sphi 0, %s19
    %s23 = sphi 0, %s22
    %s39 = sphi 0, %s23
    %s43 = sphi 0, %s43
    %s45 = sphi 0, %s43
    %s46 = sphi 0, %s45
    %s60 = sphi 0, %s46
    %s64 = sphi 0, %s64
    %s66 = sphi 0, %s64
    %s67 = sphi 0, %s66
    %s81 = sphi 0, %s67
    %s87 = sphi 0, %s89
    %s90 = sphi 0, %s87
    %s91 = sphi 0, %s90
    %s107 = sphi 0, %s91
  $region4: #{_lambda_.53} parent=0 // loop_header_branch
    %12 = sbr.rel (%p10) target = $region8
  $region5: #{_lambda_.53} parent=0 // loop_body
    %s14 = ssub.s32 %s9, 1
    %s15 = ssub.s32 %s9, 2
    %s16 = sadd.s32 %s9, 1
    %s17 = ssub.s32 %s9, %s16
    %p18 = scmp.eq.s32.totalorder %s17, 0
    %s20 = sadd.s32 %s19, 1
    %s21 = scalar_select %p18, %s19, %s20
    %p24 = pneg %p18
    %p25 = scmp.eq.s32.totalorder %s9, 1
    %p26 = por %p24, %p25
    %p27 = scmp.ne.s32.totalorder %s19, %s22
    %p28 = scmp.eq.s32.totalorder %s9, 0
    %p29 = por %p27, %p28
    %p30 = scmp.ne.s32.totalorder %s19, %s22
    %p31 = scmp.eq.s32.totalorder %s14, 1
    %p32 = por %p30, %p31
    %p33 = scmp.ne.s32.totalorder %s22, %s23
    %p34 = scmp.eq.s32.totalorder %s14, 0
    %p35 = por %p33, %p34
    %p36 = scmp.ne.s32.totalorder %s22, %s23
    %p37 = scmp.eq.s32.totalorder %s15, 1
    %p38 = por %p36, %p37
    %p40 = scmp.ne.s32.totalorder %s23, %s39
    %p41 = scmp.eq.s32.totalorder %s15, 0
    %p42 = por %p40, %p41
    %s44 = sadd.s32 %s43, 1
    %p47 = scmp.eq.s32.totalorder %s9, 1
    %p48 = scmp.ne.s32.totalorder %s43, %s45
    %p49 = scmp.eq.s32.totalorder %s9, 0
    %p50 = por %p48, %p49
    %p51 = scmp.ne.s32.totalorder %s43, %s45
    %p52 = scmp.eq.s32.totalorder %s14, 1
    %p53 = por %p51, %p52
    %p54 = scmp.ne.s32.totalorder %s45, %s46
    %p55 = scmp.eq.s32.totalorder %s14, 0
    %p56 = por %p54, %p55
    %p57 = scmp.ne.s32.totalorder %s45, %s46
    %p58 = scmp.eq.s32.totalorder %s15, 1
    %p59 = por %p57, %p58
    %p61 = scmp.ne.s32.totalorder %s46, %s60
    %p62 = scmp.eq.s32.totalorder %s15, 0
    %p63 = por %p61, %p62
    %s65 = sadd.s32 %s64, 1
    %p68 = scmp.eq.s32.totalorder %s9, 1
    %p69 = scmp.ne.s32.totalorder %s64, %s66
    %p70 = scmp.eq.s32.totalorder %s9, 0
    %p71 = por %p69, %p70
    %p72 = scmp.ne.s32.totalorder %s64, %s66
    %p73 = scmp.eq.s32.totalorder %s14, 1
    %p74 = por %p72, %p73
    %p75 = scmp.ne.s32.totalorder %s66, %s67
    %p76 = scmp.eq.s32.totalorder %s14, 0
    %p77 = por %p75, %p76
    %p78 = scmp.ne.s32.totalorder %s66, %s67
    %p79 = scmp.eq.s32.totalorder %s15, 1
    %p80 = por %p78, %p79
    %p82 = scmp.ne.s32.totalorder %s67, %s81
    %p83 = scmp.eq.s32.totalorder %s15, 0
    %p84 = por %p82, %p83
    %s85 = ssub.s32 %s9, %s16
    %p86 = scmp.eq.s32.totalorder %s85, 0
    %s88 = sadd.s32 %s87, 1
    %s89 = scalar_select %p86, %s87, %s88
    %p92 = pneg %p86
    %p93 = scmp.eq.s32.totalorder %s9, 1
    %p94 = por %p92, %p93
    %p95 = scmp.ne.s32.totalorder %s87, %s90
    %p96 = scmp.eq.s32.totalorder %s9, 0
    %p97 = por %p95, %p96
    %p98 = scmp.ne.s32.totalorder %s87, %s90
    %p99 = scmp.eq.s32.totalorder %s14, 1
    %p100 = por %p98, %p99
    %p101 = scmp.ne.s32.totalorder %s90, %s91
    %p102 = scmp.eq.s32.totalorder %s14, 0
    %p103 = por %p101, %p102
    %p104 = scmp.ne.s32.totalorder %s90, %s91
    %p105 = scmp.eq.s32.totalorder %s15, 1
    %p106 = por %p104, %p105
    %p108 = scmp.ne.s32.totalorder %s91, %s107
    %p109 = scmp.eq.s32.totalorder %s15, 0
    %p110 = por %p108, %p109
    %p111 = scmp.le.s32.totalorder 1, %s9
    %p112 = scmp.lt.s32.totalorder %s9, 3
    %p113 = pnand %p111, %p112
    %p114 = pneg %p113
    // Predicated region
    $region9: #{_lambda_.53} parent=5 // pred_check
      _
    $region10: #{_lambda_.53} parent=5 // pred_check_branch
      %116 = sbr.rel (%p113) target = $region12
    $region11: #{_lambda_.53} parent=5 // pred_region
      %s117 = ssub.s32 %s9, 1
      // Predicated region
      $region13: #{_lambda_.53} parent=11 // pred_check
        %p118 = pneg %p56
      $region14: #{_lambda_.53} parent=11 // pred_check_branch
        %120 = sbr.rel (%p118) target = $region16
      $region15: #{_lambda_.53} parent=11 // pred_region
        _
      $region16: #{_lambda_.53} parent=11 // pred_fallthru
        _
      // Predicated region
      $region17: #{_lambda_.53} parent=11 // pred_check
        %p121 = pneg %p77
      $region18: #{_lambda_.53} parent=11 // pred_check_branch
        %123 = sbr.rel (%p121) target = $region20
      $region19: #{_lambda_.53} parent=11 // pred_region
        _
      $region20: #{_lambda_.53} parent=11 // pred_fallthru
        _
    $region12: #{_lambda_.53} parent=5 // pred_fallthru
      _
    %p124 = scmp.lt.s32.totalorder %s9, 2
    // Predicated region
    $region21: #{_lambda_.53} parent=5 // pred_check
      %p125 = pneg %p124
    $region22: #{_lambda_.53} parent=5 // pred_check_branch
      %127 = sbr.rel (%p125) target = $region24
    $region23: #{_lambda_.53} parent=5 // pred_region
      // Predicated region
      $region25: #{_lambda_.53} parent=23 // pred_check
        %p128 = pneg %p29
      $region26: #{_lambda_.53} parent=23 // pred_check_branch
        %130 = sbr.rel (%p128) target = $region28
      $region27: #{_lambda_.53} parent=23 // pred_region
        %s131 = smul.u32 2, %s9
        %p132 = scmp.lt.s32.totalorder %s131, 3
        %s133 = scalar_select %p132, %s131, 3
        %s134 = smul.addr %s133, 4
        %s135 = scalar_lea.vmem %s0, %s134
        %s136 = smul.u32 2, %s9
      $region28: #{_lambda_.53} parent=23 // pred_fallthru
        _
    $region24: #{_lambda_.53} parent=5 // pred_fallthru
      _
    %p137 = scmp.le.s32.totalorder 1, %s9
    %p138 = scmp.lt.s32.totalorder %s9, 3
    %p139 = pnand %p137, %p138
    %p140 = pneg %p139
    // Predicated region
    $region29: #{_lambda_.53} parent=5 // pred_check
      _
    $region30: #{_lambda_.53} parent=5 // pred_check_branch
      %142 = sbr.rel (%p139) target = $region32
    $region31: #{_lambda_.53} parent=5 // pred_region
      %s143 = ssub.s32 %s9, 1
      %s144 = smul.u32 2, %s14
      %p145 = scmp.lt.s32.totalorder %s144, 3
      %s146 = scalar_select %p145, %s144, 3
      %s147 = smul.addr %s146, 4
      %s148 = scalar_lea.vmem %s0, %s147
      %p149 = pneg %p35
      %p150 = pneg %p32
      %p151 = pneg %p56
      %p152 = pneg %p53
      %p153 = pneg %p77
      %p154 = pneg %p74
      %p155 = pneg %p103
      %p156 = pneg %p100
      %s157 = smul.u32 2, %s14
      %p158 = scmp.lt.s32.totalorder %s157, 3
      %s159 = scalar_select %p158, %s157, 3
      %s160 = smul.addr %s159, 4
      %s161 = scalar_lea.vmem %s3, %s160
      %s162 = smul.u32 2, %s14
      %p163 = scmp.lt.s32.totalorder %s162, 3
      %s164 = scalar_select %p163, %s162, 3
      %s165 = smul.addr %s164, 4
      %s166 = scalar_lea.vmem %s0, %s165
      %s167 = smul.u32 2, %s14
      %s168 = smul.u32 2, %s14
      %p169 = scmp.lt.s32.totalorder %s168, 3
      %s170 = scalar_select %p169, %s168, 3
      %s171 = smul.addr %s170, 4
      %s172 = scalar_lea.vmem %s3, %s171
      %s173 = smul.u32 2, %s14
      %v175 = vld [vmem:[%s166] sm:$0xf]
      %v176 = vld [vmem:[%s166 + $0x4] sm:$0xf]
      %v177 = vld [vmem:[%s1] sm:$0xf]
      %v178 = vld [vmem:[%s1 + $0x4] sm:$0xf]
      %v179 = vld [vmem:[%s1 + $0x8] sm:$0xf]
      %v180 = vld [vmem:[%s1 + $0xc] sm:$0xf]
      %v181 = vld [vmem:[%s1 + $0x10] sm:$0xf]
      %v182 = vld [vmem:[%s1 + $0x14] sm:$0xf]
      %v183 = vld [vmem:[%s1 + $0x18] sm:$0xf]
      %v184 = vld [vmem:[%s1 + $0x1c] sm:$0xf]
      %v185 = vld [vmem:[%s1 + $0x20] sm:$0xf]
      %v186 = vld [vmem:[%s1 + $0x24] sm:$0xf]
      %v187 = vld [vmem:[%s1 + $0x28] sm:$0xf]
      %v188 = vld [vmem:[%s1 + $0x2c] sm:$0xf]
      %v189 = vld [vmem:[%s2] sm:$0x1]
      %v191 = vlaneseq
      %v192 = vshrl.u32 %v191, 7
      %v193 = vsub.s32 0, %v192
      %v194 = vrot.slane %v189, %v193
      %v198 = vunpack.c.l.b16 %v175
      %v199 = vunpack.c.l.b16 %v176
      %v200 = vpack.c.b16 %v199, %v198
      %v213 = vunpack.c.l.b16 %v177
      %v214 = vunpack.c.l.b16 %v178
      %v215 = vunpack.c.l.b16 %v179
      %v216 = vunpack.c.l.b16 %v180
      %v217 = vunpack.c.l.b16 %v181
      %v218 = vunpack.c.l.b16 %v182
      %v219 = vunpack.c.l.b16 %v183
      %v220 = vunpack.c.l.b16 %v184
      %v221 = vunpack.c.l.b16 %v185
      %v222 = vunpack.c.l.b16 %v186
      %v223 = vunpack.c.l.b16 %v187
      %v224 = vunpack.c.l.b16 %v188
      %v225 = vpack.c.b16 %v214, %v213
      %v226 = vpack.c.b16 %v216, %v215
      %v227 = vpack.c.b16 %v218, %v217
      %v228 = vpack.c.b16 %v220, %v219
      %v229 = vpack.c.b16 %v222, %v221
      %v230 = vpack.c.b16 %v224, %v223
      %vm237 = vcmask 785408
      %v239 = vsel %vm237, %v200, 0
      %241 = vmatprep.subr.bf16.mxu0 0
      %242 = vmatpush1.bf16.msra.mxu0 0
      %243 = vmatprep.subr.bf16.mxu0 0
      %244 = vmatpush1.bf16.msra.mxu0 0
      %245 = vmatprep.subr.bf16.mxu0 0
      %246 = vmatpush1.bf16.msra.mxu0 %v230
      %247 = vmatprep.subr.bf16.mxu0 0
      %248 = vmatpush1.bf16.msra.mxu0 %v229
      %249 = vmatprep.subr.bf16.mxu0 0
      %250 = vmatpush1.bf16.msra.mxu0 %v228
      %251 = vmatprep.subr.bf16.mxu0 0
      %252 = vmatpush1.bf16.msra.mxu0 %v227
      %253 = vmatprep.subr.bf16.mxu0 0
      %254 = vmatpush1.bf16.msra.mxu0 %v226
      %255 = vmatprep.subr.bf16.mxu0 0
      %256 = vmatpush1.bf16.msra.mxu0 %v225
      %257 = vmatprep.subr.bf16.mxu0 0
      %258 = vmatpush2.bf16.msra.mxu0 0
      %259 = vmatprep.subr.bf16.mxu0 0
      %260 = vmatpush2.bf16.msra.mxu0 0
      %261 = vmatprep.subr.bf16.mxu0 0
      %262 = vmatpush2.bf16.msra.mxu0 0
      %263 = vmatprep.subr.bf16.mxu0 0
      %264 = vmatpush2.bf16.msra.mxu0 0
      %265 = vmatprep.subr.bf16.mxu0 0
      %266 = vmatpush2.bf16.msra.mxu0 0
      %267 = vmatprep.subr.bf16.mxu0 0
      %268 = vmatpush2.bf16.msra.mxu0 0
      %269 = vmatprep.subr.bf16.mxu0 0
      %270 = vmatpush2.bf16.msra.mxu0 0
      %271 = vmatprep.subr.bf16.mxu0 0
      %272 = vmatpush2.bf16.msra.mxu0 0
      %273 = vmatprep.mubr.bf16.mxu0 0
      %274 = vmatmul.mubr.bf16.gmra.mxu0 %v239
      %v275 = vpop.f32.mrf.mxu0
      %v276 = vadd.f32 %v194, %v275
      %v277 = vpop.f32.mrf.mxu0
      %v278 = vpop.f32.mrf.mxu0
      %v279 = vadd.f32 %v194, %v278
      %v280 = vpop.f32.mrf.mxu0
      %281 = vdwg.mxu0
      %v282 = vmax.f32 %v276, 0.0
      %v283 = vmax.f32 %v279, 0.0
      %v284 = vpack.c.bf16 %v283, %v282
      %v286 = vunpack.c.l.b16 %v284
      %v287 = vunpack.c.h.b16 %v284
      %v288 = vpack.c.b16 %v286, %v286
      %v289 = vpack.c.b16 %v287, %v287
      %vm292 = vcmask 781312
      %293 = vst.msk [vmem:[%s172] sm:$0xf] %vm292, %v288
      %294 = vst.msk [vmem:[%s172 + $0x4] sm:$0xf] %vm292, %v289
      %s295 = smul.u32 2, %s14
      %p296 = scmp.lt.s32.totalorder %s295, 3
      %s297 = scalar_select %p296, %s295, 3
      %s298 = smul.addr %s297, 4
      %s299 = scalar_lea.vmem %s3, %s298
      // Predicated region
      $region33: #{_lambda_.53} parent=31 // pred_check
        %p300 = pneg %p100
      $region34: #{_lambda_.53} parent=31 // pred_check_branch
        %302 = sbr.rel (%p300) target = $region36
      $region35: #{_lambda_.53} parent=31 // pred_region
        %s303 = smul.u32 2, %s14
      $region36: #{_lambda_.53} parent=31 // pred_fallthru
        _
    $region32: #{_lambda_.53} parent=5 // pred_fallthru
      _
    %p304 = scmp.le.s32.totalorder 2, %s9
    // Predicated region
    $region37: #{_lambda_.53} parent=5 // pred_check
      %p305 = pneg %p304
    $region38: #{_lambda_.53} parent=5 // pred_check_branch
      %307 = sbr.rel (%p305) target = $region40
    $region39: #{_lambda_.53} parent=5 // pred_region
      %s308 = ssub.s32 %s9, 2
      // Predicated region
      $region41: #{_lambda_.53} parent=39 // pred_check
        %p309 = pneg %p106
      $region42: #{_lambda_.53} parent=39 // pred_check_branch
        %311 = sbr.rel (%p309) target = $region44
      $region43: #{_lambda_.53} parent=39 // pred_region
        %s312 = smul.u32 2, %s15
        %p313 = scmp.lt.s32.totalorder %s312, 3
        %s314 = scalar_select %p313, %s312, 3
        %s315 = smul.addr %s314, 4
        %s316 = scalar_lea.vmem %s3, %s315
      $region44: #{_lambda_.53} parent=39 // pred_fallthru
        _
    $region40: #{_lambda_.53} parent=5 // pred_fallthru
      _
  $region6: #{_lambda_.53} parent=0 // loop_footer
    %s13 = sadd.s32 1, %s9
  $region7: #{_lambda_.53} parent=0 // loop_footer_branch
    %8 = sbr.rel target = $region3
  $region8: #{_lambda_.53} parent=0 // loop_exit
    _

// kernel: _lambda_.54
$region0: #{_lambda_.54}
  #allocation0 [shape = 'u32[]', space=smem, size = 0x4, offset = 0x4, fixed_abs, tag = 'smem constant byte address 0x4 - core index']
  #allocation1 [shape = 'u32[144,128]{1,0:T(1,128)}', space=vmem, size = 0x12000, scoped, tag = 'internal scratch']
  %s0 = inlined_call_operand.vmem [shape: bf16[2,8,8,96], index: 0, kind: input, shape index: {}]
  %s1 = inlined_call_operand.vmem [shape: f32[9,1,96], index: 1, kind: input, shape index: {}]
  %s2 = inlined_call_operand.vmem [shape: f32[1,96], index: 2, kind: input, shape index: {}]
  %s3 = inlined_call_operand.vmem [shape: bf16[2,4,4,96], index: 3, kind: output, shape index: {}]
  %s4 = sld [smem:[#allocation0]]
  $region45: #{_lambda_.54} parent=0
    _
  %s6 = ssub.s32 1, %s4
  %s7 = scalar_select 0, %s6, %s4
  loop: start=0, step=1, limit=4
  $region2: #{_lambda_.54} parent=0 // loop_pre_header
    _
  $region3: #{_lambda_.54} parent=0 // loop_header
    %s9 = sphi 0, %s13
    %p10 = scmp.ge.s32.totalorder %s9, 4
    %s19 = sphi 0, %s21
    %s22 = sphi 0, %s19
    %s23 = sphi 0, %s22
    %s39 = sphi 0, %s23
    %s43 = sphi 0, %s43
    %s45 = sphi 0, %s43
    %s46 = sphi 0, %s45
    %s60 = sphi 0, %s46
    %s64 = sphi 0, %s64
    %s66 = sphi 0, %s64
    %s67 = sphi 0, %s66
    %s81 = sphi 0, %s67
    %s87 = sphi 0, %s89
    %s90 = sphi 0, %s87
    %s91 = sphi 0, %s90
    %s107 = sphi 0, %s91
  $region4: #{_lambda_.54} parent=0 // loop_header_branch
    %12 = sbr.rel (%p10) target = $region8
  $region5: #{_lambda_.54} parent=0 // loop_body
    %s14 = ssub.s32 %s9, 1
    %s15 = ssub.s32 %s9, 2
    %s16 = sadd.s32 %s9, 1
    %s17 = ssub.s32 %s9, %s16
    %p18 = scmp.eq.s32.totalorder %s17, 0
    %s20 = sadd.s32 %s19, 1
    %s21 = scalar_select %p18, %s19, %s20
    %p24 = pneg %p18
    %p25 = scmp.eq.s32.totalorder %s9, 1
    %p26 = por %p24, %p25
    %p27 = scmp.ne.s32.totalorder %s19, %s22
    %p28 = scmp.eq.s32.totalorder %s9, 0
    %p29 = por %p27, %p28
    %p30 = scmp.ne.s32.totalorder %s19, %s22
    %p31 = scmp.eq.s32.totalorder %s14, 1
    %p32 = por %p30, %p31
    %p33 = scmp.ne.s32.totalorder %s22, %s23
    %p34 = scmp.eq.s32.totalorder %s14, 0
    %p35 = por %p33, %p34
    %p36 = scmp.ne.s32.totalorder %s22, %s23
    %p37 = scmp.eq.s32.totalorder %s15, 1
    %p38 = por %p36, %p37
    %p40 = scmp.ne.s32.totalorder %s23, %s39
    %p41 = scmp.eq.s32.totalorder %s15, 0
    %p42 = por %p40, %p41
    %s44 = sadd.s32 %s43, 1
    %p47 = scmp.eq.s32.totalorder %s9, 1
    %p48 = scmp.ne.s32.totalorder %s43, %s45
    %p49 = scmp.eq.s32.totalorder %s9, 0
    %p50 = por %p48, %p49
    %p51 = scmp.ne.s32.totalorder %s43, %s45
    %p52 = scmp.eq.s32.totalorder %s14, 1
    %p53 = por %p51, %p52
    %p54 = scmp.ne.s32.totalorder %s45, %s46
    %p55 = scmp.eq.s32.totalorder %s14, 0
    %p56 = por %p54, %p55
    %p57 = scmp.ne.s32.totalorder %s45, %s46
    %p58 = scmp.eq.s32.totalorder %s15, 1
    %p59 = por %p57, %p58
    %p61 = scmp.ne.s32.totalorder %s46, %s60
    %p62 = scmp.eq.s32.totalorder %s15, 0
    %p63 = por %p61, %p62
    %s65 = sadd.s32 %s64, 1
    %p68 = scmp.eq.s32.totalorder %s9, 1
    %p69 = scmp.ne.s32.totalorder %s64, %s66
    %p70 = scmp.eq.s32.totalorder %s9, 0
    %p71 = por %p69, %p70
    %p72 = scmp.ne.s32.totalorder %s64, %s66
    %p73 = scmp.eq.s32.totalorder %s14, 1
    %p74 = por %p72, %p73
    %p75 = scmp.ne.s32.totalorder %s66, %s67
    %p76 = scmp.eq.s32.totalorder %s14, 0
    %p77 = por %p75, %p76
    %p78 = scmp.ne.s32.totalorder %s66, %s67
    %p79 = scmp.eq.s32.totalorder %s15, 1
    %p80 = por %p78, %p79
    %p82 = scmp.ne.s32.totalorder %s67, %s81
    %p83 = scmp.eq.s32.totalorder %s15, 0
    %p84 = por %p82, %p83
    %s85 = ssub.s32 %s9, %s16
    %p86 = scmp.eq.s32.totalorder %s85, 0
    %s88 = sadd.s32 %s87, 1
    %s89 = scalar_select %p86, %s87, %s88
    %p92 = pneg %p86
    %p93 = scmp.eq.s32.totalorder %s9, 1
    %p94 = por %p92, %p93
    %p95 = scmp.ne.s32.totalorder %s87, %s90
    %p96 = scmp.eq.s32.totalorder %s9, 0
    %p97 = por %p95, %p96
    %p98 = scmp.ne.s32.totalorder %s87, %s90
    %p99 = scmp.eq.s32.totalorder %s14, 1
    %p100 = por %p98, %p99
    %p101 = scmp.ne.s32.totalorder %s90, %s91
    %p102 = scmp.eq.s32.totalorder %s14, 0
    %p103 = por %p101, %p102
    %p104 = scmp.ne.s32.totalorder %s90, %s91
    %p105 = scmp.eq.s32.totalorder %s15, 1
    %p106 = por %p104, %p105
    %p108 = scmp.ne.s32.totalorder %s91, %s107
    %p109 = scmp.eq.s32.totalorder %s15, 0
    %p110 = por %p108, %p109
    %p111 = scmp.le.s32.totalorder 1, %s9
    %p112 = scmp.lt.s32.totalorder %s9, 3
    %p113 = pnand %p111, %p112
    %p114 = pneg %p113
    // Predicated region
    $region9: #{_lambda_.54} parent=5 // pred_check
      _
    $region10: #{_lambda_.54} parent=5 // pred_check_branch
      %116 = sbr.rel (%p113) target = $region12
    $region11: #{_lambda_.54} parent=5 // pred_region
      %s117 = ssub.s32 %s9, 1
      // Predicated region
      $region13: #{_lambda_.54} parent=11 // pred_check
        %p118 = pneg %p56
      $region14: #{_lambda_.54} parent=11 // pred_check_branch
        %120 = sbr.rel (%p118) target = $region16
      $region15: #{_lambda_.54} parent=11 // pred_region
        _
      $region16: #{_lambda_.54} parent=11 // pred_fallthru
        _
      // Predicated region
      $region17: #{_lambda_.54} parent=11 // pred_check
        %p121 = pneg %p77
      $region18: #{_lambda_.54} parent=11 // pred_check_branch
        %123 = sbr.rel (%p121) target = $region20
      $region19: #{_lambda_.54} parent=11 // pred_region
        _
      $region20: #{_lambda_.54} parent=11 // pred_fallthru
        _
    $region12: #{_lambda_.54} parent=5 // pred_fallthru
      _
    %p124 = scmp.lt.s32.totalorder %s9, 2
    // Predicated region
    $region21: #{_lambda_.54} parent=5 // pred_check
      %p125 = pneg %p124
    $region22: #{_lambda_.54} parent=5 // pred_check_branch
      %127 = sbr.rel (%p125) target = $region24
    $region23: #{_lambda_.54} parent=5 // pred_region
      // Predicated region
      $region25: #{_lambda_.54} parent=23 // pred_check
        %p128 = pneg %p29
      $region26: #{_lambda_.54} parent=23 // pred_check_branch
        %130 = sbr.rel (%p128) target = $region28
      $region27: #{_lambda_.54} parent=23 // pred_region
        %p131 = scmp.lt.s32.totalorder %s9, 1
        %s132 = scalar_select %p131, %s9, 1
        %s133 = smul.addr %s132, 8
        %s134 = smul.addr %s133, 4
        %s135 = scalar_lea.vmem %s0, %s134
      $region28: #{_lambda_.54} parent=23 // pred_fallthru
        _
    $region24: #{_lambda_.54} parent=5 // pred_fallthru
      _
    %p136 = scmp.le.s32.totalorder 1, %s9
    %p137 = scmp.lt.s32.totalorder %s9, 3
    %p138 = pnand %p136, %p137
    %p139 = pneg %p138
    // Predicated region
    $region29: #{_lambda_.54} parent=5 // pred_check
      _
    $region30: #{_lambda_.54} parent=5 // pred_check_branch
      %141 = sbr.rel (%p138) target = $region32
    $region31: #{_lambda_.54} parent=5 // pred_region
      %s142 = ssub.s32 %s9, 1
      %p143 = scmp.lt.s32.totalorder %s14, 1
      %s144 = scalar_select %p143, %s14, 1
      %s145 = smul.addr %s144, 8
      %s146 = smul.addr %s145, 4
      %s147 = scalar_lea.vmem %s0, %s146
      %p148 = pneg %p35
      %p149 = pneg %p32
      %p150 = pneg %p56
      %p151 = pneg %p53
      %p152 = pneg %p77
      %p153 = pneg %p74
      %p154 = pneg %p103
      %p155 = pneg %p100
      %p156 = scmp.lt.s32.totalorder %s14, 1
      %s157 = scalar_select %p156, %s14, 1
      %s158 = smul.addr %s157, 4
      %s159 = smul.addr %s158, 2
      %s160 = scalar_lea.vmem %s3, %s159
      %p161 = scmp.lt.s32.totalorder %s14, 1
      %s162 = scalar_select %p161, %s14, 1
      %s163 = smul.addr %s162, 8
      %s164 = smul.addr %s163, 4
      %s165 = scalar_lea.vmem %s0, %s164
      %p166 = scmp.lt.s32.totalorder %s14, 1
      %s167 = scalar_select %p166, %s14, 1
      %s168 = smul.addr %s167, 4
      %s169 = smul.addr %s168, 2
      %s170 = scalar_lea.vmem %s3, %s169
      %v171 = vld [vmem:[%s165] sm:$0xf]
      %v172 = vld [vmem:[%s165 + $0x4] sm:$0xf]
      %v173 = vld [vmem:[%s165 + $0x8] sm:$0xf]
      %v174 = vld [vmem:[%s165 + $0xc] sm:$0xf]
      %v175 = vld [vmem:[%s165 + $0x10] sm:$0xf]
      %v176 = vld [vmem:[%s165 + $0x14] sm:$0xf]
      %v177 = vld [vmem:[%s165 + $0x18] sm:$0xf]
      %v178 = vld [vmem:[%s165 + $0x1c] sm:$0xf]
      %v179 = vunpack.c.l.bf16 %v171
      %v180 = vunpack.c.l.bf16 %v172
      %v181 = vunpack.c.l.bf16 %v173
      %v182 = vunpack.c.l.bf16 %v174
      %v183 = vld [vmem:[%s1] sm:$0x1]
      %v185 = vlaneseq
      %v186 = vshrl.u32 %v185, 7
      %v187 = vsub.s32 0, %v186
      %v188 = vrot.slane %v183, %v187
      %v190 = vmul.f32 %v179, %v188
      %v191 = vmul.f32 %v180, %v188
      %v192 = vmul.f32 %v181, %v188
      %v193 = vmul.f32 %v182, %v188
      %v194 = vadd.f32 %v190, 0.0
      %v195 = vadd.f32 %v191, 0.0
      %v196 = vadd.f32 %v192, 0.0
      %v197 = vadd.f32 %v193, 0.0
      %s198 = scalar_lea.vmem %s1, 1
      %v199 = vld [vmem:[%s198] sm:$0x1]
      %v201 = vlaneseq
      %v202 = vshrl.u32 %v201, 7
      %v203 = vsub.s32 0, %v202
      %v204 = vrot.slane %v199, %v203
      %v206 = vmul.f32 %v179, %v204
      %v207 = vmul.f32 %v180, %v204
      %v208 = vmul.f32 %v181, %v204
      %v209 = vmul.f32 %v182, %v204
      %v214 = vrot.slane %v206, 2
      %v215 = vrot.slane %v207, 2
      %v216 = vrot.slane %v208, 2
      %v217 = vrot.slane %v209, 2
      %v222 = vadd.f32 %v194, %v214
      %v223 = vadd.f32 %v195, %v215
      %v224 = vadd.f32 %v196, %v216
      %v225 = vadd.f32 %v197, %v217
      %s226 = scalar_lea.vmem %s1, 2
      %v227 = vld [vmem:[%s226] sm:$0x1]
      %v229 = vlaneseq
      %v230 = vshrl.u32 %v229, 7
      %v231 = vsub.s32 0, %v230
      %v232 = vrot.slane %v227, %v231
      %v234 = vmul.f32 %v179, %v232
      %v235 = vmul.f32 %v180, %v232
      %v236 = vmul.f32 %v181, %v232
      %v237 = vmul.f32 %v182, %v232
      %v242 = vrot.slane %v234, 4
      %v243 = vrot.slane %v235, 4
      %v244 = vrot.slane %v236, 4
      %v245 = vrot.slane %v237, 4
      %v250 = vadd.f32 %v222, %v242
      %v251 = vadd.f32 %v223, %v243
      %v252 = vadd.f32 %v224, %v244
      %v253 = vadd.f32 %v225, %v245
      %v254 = vunpack.c.l.bf16 %v175
      %v255 = vunpack.c.l.bf16 %v176
      %s256 = scalar_lea.vmem %s1, 3
      %v257 = vld [vmem:[%s256] sm:$0x1]
      %v259 = vlaneseq
      %v260 = vshrl.u32 %v259, 7
      %v261 = vsub.s32 0, %v260
      %v262 = vrot.slane %v257, %v261
      %v264 = vmul.f32 %v181, %v262
      %v265 = vmul.f32 %v182, %v262
      %v266 = vmul.f32 %v254, %v262
      %v267 = vmul.f32 %v255, %v262
      %v268 = vadd.f32 %v250, %v264
      %v269 = vadd.f32 %v251, %v265
      %v270 = vadd.f32 %v252, %v266
      %v271 = vadd.f32 %v253, %v267
      %s272 = scalar_lea.vmem %s1, 4
      %v273 = vld [vmem:[%s272] sm:$0x1]
      %v275 = vlaneseq
      %v276 = vshrl.u32 %v275, 7
      %v277 = vsub.s32 0, %v276
      %v278 = vrot.slane %v273, %v277
      %v280 = vmul.f32 %v181, %v278
      %v281 = vmul.f32 %v182, %v278
      %v282 = vmul.f32 %v254, %v278
      %v283 = vmul.f32 %v255, %v278
      %v288 = vrot.slane %v280, 2
      %v289 = vrot.slane %v281, 2
      %v290 = vrot.slane %v282, 2
      %v291 = vrot.slane %v283, 2
      %v296 = vadd.f32 %v268, %v288
      %v297 = vadd.f32 %v269, %v289
      %v298 = vadd.f32 %v270, %v290
      %v299 = vadd.f32 %v271, %v291
      %s300 = scalar_lea.vmem %s1, 5
      %v301 = vld [vmem:[%s300] sm:$0x1]
      %v303 = vlaneseq
      %v304 = vshrl.u32 %v303, 7
      %v305 = vsub.s32 0, %v304
      %v306 = vrot.slane %v301, %v305
      %v308 = vmul.f32 %v181, %v306
      %v309 = vmul.f32 %v182, %v306
      %v310 = vmul.f32 %v254, %v306
      %v311 = vmul.f32 %v255, %v306
      %v316 = vrot.slane %v308, 4
      %v317 = vrot.slane %v309, 4
      %v318 = vrot.slane %v310, 4
      %v319 = vrot.slane %v311, 4
      %v324 = vadd.f32 %v296, %v316
      %v325 = vadd.f32 %v297, %v317
      %v326 = vadd.f32 %v298, %v318
      %v327 = vadd.f32 %v299, %v319
      %v328 = vunpack.c.l.bf16 %v177
      %v329 = vunpack.c.l.bf16 %v178
      %s330 = scalar_lea.vmem %s1, 6
      %v331 = vld [vmem:[%s330] sm:$0x1]
      %v333 = vlaneseq
      %v334 = vshrl.u32 %v333, 7
      %v335 = vsub.s32 0, %v334
      %v336 = vrot.slane %v331, %v335
      %v338 = vmul.f32 %v254, %v336
      %v339 = vmul.f32 %v255, %v336
      %v340 = vmul.f32 %v328, %v336
      %v341 = vmul.f32 %v329, %v336
      %v342 = vadd.f32 %v324, %v338
      %v343 = vadd.f32 %v325, %v339
      %v344 = vadd.f32 %v326, %v340
      %v345 = vadd.f32 %v327, %v341
      %s346 = scalar_lea.vmem %s1, 7
      %v347 = vld [vmem:[%s346] sm:$0x1]
      %v349 = vlaneseq
      %v350 = vshrl.u32 %v349, 7
      %v351 = vsub.s32 0, %v350
      %v352 = vrot.slane %v347, %v351
      %v354 = vmul.f32 %v254, %v352
      %v355 = vmul.f32 %v255, %v352
      %v356 = vmul.f32 %v328, %v352
      %v357 = vmul.f32 %v329, %v352
      %v362 = vrot.slane %v354, 2
      %v363 = vrot.slane %v355, 2
      %v364 = vrot.slane %v356, 2
      %v365 = vrot.slane %v357, 2
      %v370 = vadd.f32 %v342, %v362
      %v371 = vadd.f32 %v343, %v363
      %v372 = vadd.f32 %v344, %v364
      %v373 = vadd.f32 %v345, %v365
      %s374 = scalar_lea.vmem %s1, 8
      %v375 = vld [vmem:[%s374] sm:$0x1]
      %v377 = vlaneseq
      %v378 = vshrl.u32 %v377, 7
      %v379 = vsub.s32 0, %v378
      %v380 = vrot.slane %v375, %v379
      %v382 = vmul.f32 %v254, %v380
      %v383 = vmul.f32 %v255, %v380
      %v384 = vmul.f32 %v328, %v380
      %v385 = vmul.f32 %v329, %v380
      %v390 = vrot.slane %v382, 4
      %v391 = vrot.slane %v383, 4
      %v392 = vrot.slane %v384, 4
      %v393 = vrot.slane %v385, 4
      %v398 = vadd.f32 %v370, %v390
      %v399 = vadd.f32 %v371, %v391
      %v400 = vadd.f32 %v372, %v392
      %v401 = vadd.f32 %v373, %v393
      %v402 = vld [vmem:[%s2] sm:$0x1]
      %v404 = vlaneseq
      %v405 = vshrl.u32 %v404, 7
      %v406 = vsub.s32 0, %v405
      %v407 = vrot.slane %v402, %v406
      %v409 = vadd.f32 %v398, %v407
      %v410 = vadd.f32 %v399, %v407
      %v411 = vadd.f32 %v400, %v407
      %v412 = vadd.f32 %v401, %v407
      %v413 = vpack.c.bf16 %v409, %v409
      %v414 = vpack.c.bf16 %v410, %v410
      %v415 = vpack.c.bf16 %v411, %v411
      %v416 = vpack.c.bf16 %v412, %v412
      %vm417 = vcmask 779264
      %418 = vst.msk [vmem:[%s170] sm:$0x3] %vm417, %v413
      %419 = vst.msk [vmem:[%s170 + $0x2] sm:$0x3] %vm417, %v414
      %420 = vst.msk [vmem:[%s170 + $0x4] sm:$0x3] %vm417, %v415
      %421 = vst.msk [vmem:[%s170 + $0x6] sm:$0x3] %vm417, %v416
      %p422 = scmp.lt.s32.totalorder %s14, 1
      %s423 = scalar_select %p422, %s14, 1
      %s424 = smul.addr %s423, 4
      %s425 = smul.addr %s424, 2
      %s426 = scalar_lea.vmem %s3, %s425
      // Predicated region
      $region33: #{_lambda_.54} parent=31 // pred_check
        %p427 = pneg %p100
      $region34: #{_lambda_.54} parent=31 // pred_check_branch
        %429 = sbr.rel (%p427) target = $region36
      $region35: #{_lambda_.54} parent=31 // pred_region
        _
      $region36: #{_lambda_.54} parent=31 // pred_fallthru
        _
    $region32: #{_lambda_.54} parent=5 // pred_fallthru
      _
    %p430 = scmp.le.s32.totalorder 2, %s9
    // Predicated region
    $region37: #{_lambda_.54} parent=5 // pred_check
      %p431 = pneg %p430
    $region38: #{_lambda_.54} parent=5 // pred_check_branch
      %433 = sbr.rel (%p431) target = $region40
    $region39: #{_lambda_.54} parent=5 // pred_region
      %s434 = ssub.s32 %s9, 2
      // Predicated region
      $region41: #{_lambda_.54} parent=39 // pred_check
        %p435 = pneg %p106
      $region42: #{_lambda_.54} parent=39 // pred_check_branch
        %437 = sbr.rel (%p435) target = $region44
      $region43: #{_lambda_.54} parent=39 // pred_region
        %p438 = scmp.lt.s32.totalorder %s15, 1
        %s439 = scalar_select %p438, %s15, 1
        %s440 = smul.addr %s439, 4
        %s441 = smul.addr %s440, 2
        %s442 = scalar_lea.vmem %s3, %s441
      $region44: #{_lambda_.54} parent=39 // pred_fallthru
        _
    $region40: #{_lambda_.54} parent=5 // pred_fallthru
      _
  $region6: #{_lambda_.54} parent=0 // loop_footer
    %s13 = sadd.s32 1, %s9
  $region7: #{_lambda_.54} parent=0 // loop_footer_branch
    %8 = sbr.rel target = $region3
  $region8: #{_lambda_.54} parent=0 // loop_exit
    _

// kernel: _lambda_.59
$region0: #{_lambda_.59}
  #allocation0 [shape = 'u32[]', space=smem, size = 0x4, offset = 0x4, fixed_abs, tag = 'smem constant byte address 0x4 - core index']
  #allocation1 [shape = 'u32[144,128]{1,0:T(1,128)}', space=vmem, size = 0x12000, scoped, tag = 'internal scratch']
  %s0 = inlined_call_operand.vmem [shape: bf16[32,192], index: 0, kind: input, shape index: {}]
  %s1 = inlined_call_operand.vmem [shape: bf16[192,1024], index: 1, kind: input, shape index: {}]
  %s2 = inlined_call_operand.vmem [shape: f32[1,1024], index: 2, kind: input, shape index: {}]
  %s3 = inlined_call_operand.vmem [shape: bf16[32,1024], index: 3, kind: output, shape index: {}]
  %s4 = sld [smem:[#allocation0]]
  $region45: #{_lambda_.59} parent=0
    _
  %s6 = ssub.s32 1, %s4
  %s7 = scalar_select 0, %s6, %s4
  loop: start=0, step=1, limit=4
  $region2: #{_lambda_.59} parent=0 // loop_pre_header
    _
  $region3: #{_lambda_.59} parent=0 // loop_header
    %s9 = sphi 0, %s13
    %p10 = scmp.ge.s32.totalorder %s9, 4
    %s19 = sphi 0, %s21
    %s22 = sphi 0, %s19
    %s23 = sphi 0, %s22
    %s39 = sphi 0, %s23
    %s43 = sphi 0, %s43
    %s45 = sphi 0, %s43
    %s46 = sphi 0, %s45
    %s60 = sphi 0, %s46
    %s64 = sphi 0, %s64
    %s66 = sphi 0, %s64
    %s67 = sphi 0, %s66
    %s81 = sphi 0, %s67
    %s87 = sphi 0, %s89
    %s90 = sphi 0, %s87
    %s91 = sphi 0, %s90
    %s107 = sphi 0, %s91
  $region4: #{_lambda_.59} parent=0 // loop_header_branch
    %12 = sbr.rel (%p10) target = $region8
  $region5: #{_lambda_.59} parent=0 // loop_body
    %s14 = ssub.s32 %s9, 1
    %s15 = ssub.s32 %s9, 2
    %s16 = sadd.s32 %s9, 1
    %s17 = ssub.s32 %s9, %s16
    %p18 = scmp.eq.s32.totalorder %s17, 0
    %s20 = sadd.s32 %s19, 1
    %s21 = scalar_select %p18, %s19, %s20
    %p24 = pneg %p18
    %p25 = scmp.eq.s32.totalorder %s9, 1
    %p26 = por %p24, %p25
    %p27 = scmp.ne.s32.totalorder %s19, %s22
    %p28 = scmp.eq.s32.totalorder %s9, 0
    %p29 = por %p27, %p28
    %p30 = scmp.ne.s32.totalorder %s19, %s22
    %p31 = scmp.eq.s32.totalorder %s14, 1
    %p32 = por %p30, %p31
    %p33 = scmp.ne.s32.totalorder %s22, %s23
    %p34 = scmp.eq.s32.totalorder %s14, 0
    %p35 = por %p33, %p34
    %p36 = scmp.ne.s32.totalorder %s22, %s23
    %p37 = scmp.eq.s32.totalorder %s15, 1
    %p38 = por %p36, %p37
    %p40 = scmp.ne.s32.totalorder %s23, %s39
    %p41 = scmp.eq.s32.totalorder %s15, 0
    %p42 = por %p40, %p41
    %s44 = sadd.s32 %s43, 1
    %p47 = scmp.eq.s32.totalorder %s9, 1
    %p48 = scmp.ne.s32.totalorder %s43, %s45
    %p49 = scmp.eq.s32.totalorder %s9, 0
    %p50 = por %p48, %p49
    %p51 = scmp.ne.s32.totalorder %s43, %s45
    %p52 = scmp.eq.s32.totalorder %s14, 1
    %p53 = por %p51, %p52
    %p54 = scmp.ne.s32.totalorder %s45, %s46
    %p55 = scmp.eq.s32.totalorder %s14, 0
    %p56 = por %p54, %p55
    %p57 = scmp.ne.s32.totalorder %s45, %s46
    %p58 = scmp.eq.s32.totalorder %s15, 1
    %p59 = por %p57, %p58
    %p61 = scmp.ne.s32.totalorder %s46, %s60
    %p62 = scmp.eq.s32.totalorder %s15, 0
    %p63 = por %p61, %p62
    %s65 = sadd.s32 %s64, 1
    %p68 = scmp.eq.s32.totalorder %s9, 1
    %p69 = scmp.ne.s32.totalorder %s64, %s66
    %p70 = scmp.eq.s32.totalorder %s9, 0
    %p71 = por %p69, %p70
    %p72 = scmp.ne.s32.totalorder %s64, %s66
    %p73 = scmp.eq.s32.totalorder %s14, 1
    %p74 = por %p72, %p73
    %p75 = scmp.ne.s32.totalorder %s66, %s67
    %p76 = scmp.eq.s32.totalorder %s14, 0
    %p77 = por %p75, %p76
    %p78 = scmp.ne.s32.totalorder %s66, %s67
    %p79 = scmp.eq.s32.totalorder %s15, 1
    %p80 = por %p78, %p79
    %p82 = scmp.ne.s32.totalorder %s67, %s81
    %p83 = scmp.eq.s32.totalorder %s15, 0
    %p84 = por %p82, %p83
    %s85 = ssub.s32 %s9, %s16
    %p86 = scmp.eq.s32.totalorder %s85, 0
    %s88 = sadd.s32 %s87, 1
    %s89 = scalar_select %p86, %s87, %s88
    %p92 = pneg %p86
    %p93 = scmp.eq.s32.totalorder %s9, 1
    %p94 = por %p92, %p93
    %p95 = scmp.ne.s32.totalorder %s87, %s90
    %p96 = scmp.eq.s32.totalorder %s9, 0
    %p97 = por %p95, %p96
    %p98 = scmp.ne.s32.totalorder %s87, %s90
    %p99 = scmp.eq.s32.totalorder %s14, 1
    %p100 = por %p98, %p99
    %p101 = scmp.ne.s32.totalorder %s90, %s91
    %p102 = scmp.eq.s32.totalorder %s14, 0
    %p103 = por %p101, %p102
    %p104 = scmp.ne.s32.totalorder %s90, %s91
    %p105 = scmp.eq.s32.totalorder %s15, 1
    %p106 = por %p104, %p105
    %p108 = scmp.ne.s32.totalorder %s91, %s107
    %p109 = scmp.eq.s32.totalorder %s15, 0
    %p110 = por %p108, %p109
    %p111 = scmp.le.s32.totalorder 1, %s9
    %p112 = scmp.lt.s32.totalorder %s9, 3
    %p113 = pnand %p111, %p112
    %p114 = pneg %p113
    // Predicated region
    $region9: #{_lambda_.59} parent=5 // pred_check
      _
    $region10: #{_lambda_.59} parent=5 // pred_check_branch
      %116 = sbr.rel (%p113) target = $region12
    $region11: #{_lambda_.59} parent=5 // pred_region
      %s117 = ssub.s32 %s9, 1
      // Predicated region
      $region13: #{_lambda_.59} parent=11 // pred_check
        %p118 = pneg %p56
      $region14: #{_lambda_.59} parent=11 // pred_check_branch
        %120 = sbr.rel (%p118) target = $region16
      $region15: #{_lambda_.59} parent=11 // pred_region
        _
      $region16: #{_lambda_.59} parent=11 // pred_fallthru
        _
      // Predicated region
      $region17: #{_lambda_.59} parent=11 // pred_check
        %p121 = pneg %p77
      $region18: #{_lambda_.59} parent=11 // pred_check_branch
        %123 = sbr.rel (%p121) target = $region20
      $region19: #{_lambda_.59} parent=11 // pred_region
        _
      $region20: #{_lambda_.59} parent=11 // pred_fallthru
        _
    $region12: #{_lambda_.59} parent=5 // pred_fallthru
      _
    %p124 = scmp.lt.s32.totalorder %s9, 2
    // Predicated region
    $region21: #{_lambda_.59} parent=5 // pred_check
      %p125 = pneg %p124
    $region22: #{_lambda_.59} parent=5 // pred_check_branch
      %127 = sbr.rel (%p125) target = $region24
    $region23: #{_lambda_.59} parent=5 // pred_region
      // Predicated region
      $region25: #{_lambda_.59} parent=23 // pred_check
        %p128 = pneg %p29
      $region26: #{_lambda_.59} parent=23 // pred_check_branch
        %130 = sbr.rel (%p128) target = $region28
      $region27: #{_lambda_.59} parent=23 // pred_region
        %s131 = smul.u32 2, %s9
        %p132 = scmp.lt.s32.totalorder %s131, 3
        %s133 = scalar_select %p132, %s131, 3
        %s134 = smul.addr %s133, 2
        %s135 = smul.addr %s134, 4
        %s136 = scalar_lea.vmem %s0, %s135
        %s137 = smul.u32 2, %s9
      $region28: #{_lambda_.59} parent=23 // pred_fallthru
        _
    $region24: #{_lambda_.59} parent=5 // pred_fallthru
      _
    %p138 = scmp.le.s32.totalorder 1, %s9
    %p139 = scmp.lt.s32.totalorder %s9, 3
    %p140 = pnand %p138, %p139
    %p141 = pneg %p140
    // Predicated region
    $region29: #{_lambda_.59} parent=5 // pred_check
      _
    $region30: #{_lambda_.59} parent=5 // pred_check_branch
      %143 = sbr.rel (%p140) target = $region32
    $region31: #{_lambda_.59} parent=5 // pred_region
      %s144 = ssub.s32 %s9, 1
      %s145 = smul.u32 2, %s14
      %p146 = scmp.lt.s32.totalorder %s145, 3
      %s147 = scalar_select %p146, %s145, 3
      %s148 = smul.addr %s147, 2
      %s149 = smul.addr %s148, 4
      %s150 = scalar_lea.vmem %s0, %s149
      %p151 = pneg %p35
      %p152 = pneg %p32
      %p153 = pneg %p56
      %p154 = pneg %p53
      %p155 = pneg %p77
      %p156 = pneg %p74
      %p157 = pneg %p103
      %p158 = pneg %p100
      %s159 = smul.u32 2, %s14
      %p160 = scmp.lt.s32.totalorder %s159, 3
      %s161 = scalar_select %p160, %s159, 3
      %s162 = smul.addr %s161, 8
      %s163 = smul.addr %s162, 4
      %s164 = scalar_lea.vmem %s3, %s163
      %s165 = smul.u32 2, %s14
      %p166 = scmp.lt.s32.totalorder %s165, 3
      %s167 = scalar_select %p166, %s165, 3
      %s168 = smul.addr %s167, 2
      %s169 = smul.addr %s168, 4
      %s170 = scalar_lea.vmem %s0, %s169
      %s171 = smul.u32 2, %s14
      %s172 = smul.u32 2, %s14
      %p173 = scmp.lt.s32.totalorder %s172, 3
      %s174 = scalar_select %p173, %s172, 3
      %s175 = smul.addr %s174, 8
      %s176 = smul.addr %s175, 4
      %s177 = scalar_lea.vmem %s3, %s176
      %s178 = smul.u32 2, %s14
      %v180 = vld [vmem:[%s170] sm:$0xff]
      %v181 = vld [vmem:[%s170 + $0x8] sm:$0xff]
      %v182 = vld [vmem:[%s1] sm:$0xff]
      %v183 = vld [vmem:[%s1 + $0x8] sm:$0xff]
      %v184 = vld [vmem:[%s1 + $0x10] sm:$0xff]
      %v185 = vld [vmem:[%s1 + $0x18] sm:$0xff]
      %v186 = vld [vmem:[%s1 + $0x20] sm:$0xff]
      %v187 = vld [vmem:[%s1 + $0x28] sm:$0xff]
      %v188 = vld [vmem:[%s1 + $0x30] sm:$0xff]
      %v189 = vld [vmem:[%s1 + $0x38] sm:$0xff]
      %v190 = vld [vmem:[%s1 + $0x40] sm:$0xff]
      %v191 = vld [vmem:[%s1 + $0x48] sm:$0xff]
      %v192 = vld [vmem:[%s1 + $0x50] sm:$0xff]
      %v193 = vld [vmem:[%s1 + $0x58] sm:$0xff]
      %v194 = vld [vmem:[%s1 + $0x60] sm:$0xff]
      %v195 = vld [vmem:[%s1 + $0x68] sm:$0xff]
      %v196 = vld [vmem:[%s1 + $0x70] sm:$0xff]
      %v197 = vld [vmem:[%s1 + $0x78] sm:$0xff]
      %v198 = vld [vmem:[%s1 + $0x80] sm:$0xff]
      %v199 = vld [vmem:[%s1 + $0x88] sm:$0xff]
      %v200 = vld [vmem:[%s1 + $0x90] sm:$0xff]
      %v201 = vld [vmem:[%s1 + $0x98] sm:$0xff]
      %v202 = vld [vmem:[%s1 + $0xa0] sm:$0xff]
      %v203 = vld [vmem:[%s1 + $0xa8] sm:$0xff]
      %v204 = vld [vmem:[%s1 + $0xb0] sm:$0xff]
      %v205 = vld [vmem:[%s1 + $0xb8] sm:$0xff]
      %v206 = vld [vmem:[%s1 + $0xc0] sm:$0xff]
      %v207 = vld [vmem:[%s1 + $0xc8] sm:$0xff]
      %v208 = vld [vmem:[%s1 + $0xd0] sm:$0xff]
      %v209 = vld [vmem:[%s1 + $0xd8] sm:$0xff]
      %v210 = vld [vmem:[%s1 + $0xe0] sm:$0xff]
      %v211 = vld [vmem:[%s1 + $0xe8] sm:$0xff]
      %v212 = vld [vmem:[%s1 + $0xf0] sm:$0xff]
      %v213 = vld [vmem:[%s1 + $0xf8] sm:$0xff]
      %v214 = vld [vmem:[%s1 + $0x100] sm:$0xff]
      %v215 = vld [vmem:[%s1 + $0x108] sm:$0xff]
      %v216 = vld [vmem:[%s1 + $0x110] sm:$0xff]
      %v217 = vld [vmem:[%s1 + $0x118] sm:$0xff]
      %v218 = vld [vmem:[%s1 + $0x120] sm:$0xff]
      %v219 = vld [vmem:[%s1 + $0x128] sm:$0xff]
      %v220 = vld [vmem:[%s1 + $0x130] sm:$0xff]
      %v221 = vld [vmem:[%s1 + $0x138] sm:$0xff]
      %v222 = vld [vmem:[%s1 + $0x140] sm:$0xff]
      %v223 = vld [vmem:[%s1 + $0x148] sm:$0xff]
      %v224 = vld [vmem:[%s1 + $0x150] sm:$0xff]
      %v225 = vld [vmem:[%s1 + $0x158] sm:$0xff]
      %v226 = vld [vmem:[%s1 + $0x160] sm:$0xff]
      %v227 = vld [vmem:[%s1 + $0x168] sm:$0xff]
      %v228 = vld [vmem:[%s1 + $0x170] sm:$0xff]
      %v229 = vld [vmem:[%s1 + $0x178] sm:$0xff]
      %v230 = vld [vmem:[%s1 + $0x180] sm:$0xff]
      %v231 = vld [vmem:[%s1 + $0x188] sm:$0xff]
      %v232 = vld [vmem:[%s1 + $0x190] sm:$0xff]
      %v233 = vld [vmem:[%s1 + $0x198] sm:$0xff]
      %v234 = vld [vmem:[%s1 + $0x1a0] sm:$0xff]
      %v235 = vld [vmem:[%s1 + $0x1a8] sm:$0xff]
      %v236 = vld [vmem:[%s1 + $0x1b0] sm:$0xff]
      %v237 = vld [vmem:[%s1 + $0x1b8] sm:$0xff]
      %v238 = vld [vmem:[%s1 + $0x1c0] sm:$0xff]
      %v239 = vld [vmem:[%s1 + $0x1c8] sm:$0xff]
      %v240 = vld [vmem:[%s1 + $0x1d0] sm:$0xff]
      %v241 = vld [vmem:[%s1 + $0x1d8] sm:$0xff]
      %v242 = vld [vmem:[%s1 + $0x1e0] sm:$0xff]
      %v243 = vld [vmem:[%s1 + $0x1e8] sm:$0xff]
      %v244 = vld [vmem:[%s1 + $0x1f0] sm:$0xff]
      %v245 = vld [vmem:[%s1 + $0x1f8] sm:$0xff]
      %v246 = vld [vmem:[%s1 + $0x200] sm:$0xff]
      %v247 = vld [vmem:[%s1 + $0x208] sm:$0xff]
      %v248 = vld [vmem:[%s1 + $0x210] sm:$0xff]
      %v249 = vld [vmem:[%s1 + $0x218] sm:$0xff]
      %v250 = vld [vmem:[%s1 + $0x220] sm:$0xff]
      %v251 = vld [vmem:[%s1 + $0x228] sm:$0xff]
      %v252 = vld [vmem:[%s1 + $0x230] sm:$0xff]
      %v253 = vld [vmem:[%s1 + $0x238] sm:$0xff]
      %v254 = vld [vmem:[%s1 + $0x240] sm:$0xff]
      %v255 = vld [vmem:[%s1 + $0x248] sm:$0xff]
      %v256 = vld [vmem:[%s1 + $0x250] sm:$0xff]
      %v257 = vld [vmem:[%s1 + $0x258] sm:$0xff]
      %v258 = vld [vmem:[%s1 + $0x260] sm:$0xff]
      %v259 = vld [vmem:[%s1 + $0x268] sm:$0xff]
      %v260 = vld [vmem:[%s1 + $0x270] sm:$0xff]
      %v261 = vld [vmem:[%s1 + $0x278] sm:$0xff]
      %v262 = vld [vmem:[%s1 + $0x280] sm:$0xff]
      %v263 = vld [vmem:[%s1 + $0x288] sm:$0xff]
      %v264 = vld [vmem:[%s1 + $0x290] sm:$0xff]
      %v265 = vld [vmem:[%s1 + $0x298] sm:$0xff]
      %v266 = vld [vmem:[%s1 + $0x2a0] sm:$0xff]
      %v267 = vld [vmem:[%s1 + $0x2a8] sm:$0xff]
      %v268 = vld [vmem:[%s1 + $0x2b0] sm:$0xff]
      %v269 = vld [vmem:[%s1 + $0x2b8] sm:$0xff]
      %v270 = vld [vmem:[%s1 + $0x2c0] sm:$0xff]
      %v271 = vld [vmem:[%s1 + $0x2c8] sm:$0xff]
      %v272 = vld [vmem:[%s1 + $0x2d0] sm:$0xff]
      %v273 = vld [vmem:[%s1 + $0x2d8] sm:$0xff]
      %v274 = vld [vmem:[%s1 + $0x2e0] sm:$0xff]
      %v275 = vld [vmem:[%s1 + $0x2e8] sm:$0xff]
      %v276 = vld [vmem:[%s1 + $0x2f0] sm:$0xff]
      %v277 = vld [vmem:[%s1 + $0x2f8] sm:$0xff]
      %v278 = vld [vmem:[%s2] sm:$0xff]
      %v280 = vlaneseq
      %v281 = vshrl.u32 %v280, 7
      %v282 = vsub.s32 0, %v281
      %v283 = vrot.slane %v278, %v282
      %v284 = vlaneseq
      %v285 = vshrl.u32 %v284, 7
      %v286 = vsub.s32 1, %v285
      %v287 = vrot.slane %v278, %v286
      %v288 = vlaneseq
      %v289 = vshrl.u32 %v288, 7
      %v290 = vsub.s32 2, %v289
      %v291 = vrot.slane %v278, %v290
      %v292 = vlaneseq
      %v293 = vshrl.u32 %v292, 7
      %v294 = vsub.s32 3, %v293
      %v295 = vrot.slane %v278, %v294
      %v296 = vlaneseq
      %v297 = vshrl.u32 %v296, 7
      %v298 = vsub.s32 4, %v297
      %v299 = vrot.slane %v278, %v298
      %v300 = vlaneseq
      %v301 = vshrl.u32 %v300, 7
      %v302 = vsub.s32 5, %v301
      %v303 = vrot.slane %v278, %v302
      %v304 = vlaneseq
      %v305 = vshrl.u32 %v304, 7
      %v306 = vsub.s32 6, %v305
      %v307 = vrot.slane %v278, %v306
      %v308 = vlaneseq
      %v309 = vshrl.u32 %v308, 7
      %v310 = vsub.s32 7, %v309
      %v311 = vrot.slane %v278, %v310
      %v322 = vunpack.c.l.b16 %v180
      %v323 = vunpack.c.h.b16 %v180
      %v324 = vunpack.c.l.b16 %v181
      %v325 = vunpack.c.h.b16 %v181
      %v326 = vpack.c.b16 %v324, %v322
      %v327 = vpack.c.b16 %v325, %v323
      %v425 = vunpack.c.l.b16 %v182
      %v426 = vunpack.c.h.b16 %v182
      %v427 = vunpack.c.l.b16 %v183
      %v428 = vunpack.c.h.b16 %v183
      %v429 = vunpack.c.l.b16 %v184
      %v430 = vunpack.c.h.b16 %v184
      %v431 = vunpack.c.l.b16 %v185
      %v432 = vunpack.c.h.b16 %v185
      %v433 = vunpack.c.l.b16 %v186
      %v434 = vunpack.c.h.b16 %v186
      %v435 = vunpack.c.l.b16 %v187
      %v436 = vunpack.c.h.b16 %v187
      %v437 = vunpack.c.l.b16 %v188
      %v438 = vunpack.c.h.b16 %v188
      %v439 = vunpack.c.l.b16 %v189
      %v440 = vunpack.c.h.b16 %v189
      %v441 = vunpack.c.l.b16 %v190
      %v442 = vunpack.c.h.b16 %v190
      %v443 = vunpack.c.l.b16 %v191
      %v444 = vunpack.c.h.b16 %v191
      %v445 = vunpack.c.l.b16 %v192
      %v446 = vunpack.c.h.b16 %v192
      %v447 = vunpack.c.l.b16 %v193
      %v448 = vunpack.c.h.b16 %v193
      %v449 = vunpack.c.l.b16 %v194
      %v450 = vunpack.c.h.b16 %v194
      %v451 = vunpack.c.l.b16 %v195
      %v452 = vunpack.c.h.b16 %v195
      %v453 = vunpack.c.l.b16 %v196
      %v454 = vunpack.c.h.b16 %v196
      %v455 = vunpack.c.l.b16 %v197
      %v456 = vunpack.c.h.b16 %v197
      %v457 = vunpack.c.l.b16 %v198
      %v458 = vunpack.c.h.b16 %v198
      %v459 = vunpack.c.l.b16 %v199
      %v460 = vunpack.c.h.b16 %v199
      %v461 = vunpack.c.l.b16 %v200
      %v462 = vunpack.c.h.b16 %v200
      %v463 = vunpack.c.l.b16 %v201
      %v464 = vunpack.c.h.b16 %v201
      %v465 = vunpack.c.l.b16 %v202
      %v466 = vunpack.c.h.b16 %v202
      %v467 = vunpack.c.l.b16 %v203
      %v468 = vunpack.c.h.b16 %v203
      %v469 = vunpack.c.l.b16 %v204
      %v470 = vunpack.c.h.b16 %v204
      %v471 = vunpack.c.l.b16 %v205
      %v472 = vunpack.c.h.b16 %v205
      %v473 = vunpack.c.l.b16 %v206
      %v474 = vunpack.c.h.b16 %v206
      %v475 = vunpack.c.l.b16 %v207
      %v476 = vunpack.c.h.b16 %v207
      %v477 = vunpack.c.l.b16 %v208
      %v478 = vunpack.c.h.b16 %v208
      %v479 = vunpack.c.l.b16 %v209
      %v480 = vunpack.c.h.b16 %v209
      %v481 = vunpack.c.l.b16 %v210
      %v482 = vunpack.c.h.b16 %v210
      %v483 = vunpack.c.l.b16 %v211
      %v484 = vunpack.c.h.b16 %v211
      %v485 = vunpack.c.l.b16 %v212
      %v486 = vunpack.c.h.b16 %v212
      %v487 = vunpack.c.l.b16 %v213
      %v488 = vunpack.c.h.b16 %v213
      %v489 = vunpack.c.l.b16 %v214
      %v490 = vunpack.c.h.b16 %v214
      %v491 = vunpack.c.l.b16 %v215
      %v492 = vunpack.c.h.b16 %v215
      %v493 = vunpack.c.l.b16 %v216
      %v494 = vunpack.c.h.b16 %v216
      %v495 = vunpack.c.l.b16 %v217
      %v496 = vunpack.c.h.b16 %v217
      %v497 = vunpack.c.l.b16 %v218
      %v498 = vunpack.c.h.b16 %v218
      %v499 = vunpack.c.l.b16 %v219
      %v500 = vunpack.c.h.b16 %v219
      %v501 = vunpack.c.l.b16 %v220
      %v502 = vunpack.c.h.b16 %v220
      %v503 = vunpack.c.l.b16 %v221
      %v504 = vunpack.c.h.b16 %v221
      %v505 = vunpack.c.l.b16 %v222
      %v506 = vunpack.c.h.b16 %v222
      %v507 = vunpack.c.l.b16 %v223
      %v508 = vunpack.c.h.b16 %v223
      %v509 = vunpack.c.l.b16 %v224
      %v510 = vunpack.c.h.b16 %v224
      %v511 = vunpack.c.l.b16 %v225
      %v512 = vunpack.c.h.b16 %v225
      %v513 = vunpack.c.l.b16 %v226
      %v514 = vunpack.c.h.b16 %v226
      %v515 = vunpack.c.l.b16 %v227
      %v516 = vunpack.c.h.b16 %v227
      %v517 = vunpack.c.l.b16 %v228
      %v518 = vunpack.c.h.b16 %v228
      %v519 = vunpack.c.l.b16 %v229
      %v520 = vunpack.c.h.b16 %v229
      %v521 = vunpack.c.l.b16 %v230
      %v522 = vunpack.c.h.b16 %v230
      %v523 = vunpack.c.l.b16 %v231
      %v524 = vunpack.c.h.b16 %v231
      %v525 = vunpack.c.l.b16 %v232
      %v526 = vunpack.c.h.b16 %v232
      %v527 = vunpack.c.l.b16 %v233
      %v528 = vunpack.c.h.b16 %v233
      %v529 = vunpack.c.l.b16 %v234
      %v530 = vunpack.c.h.b16 %v234
      %v531 = vunpack.c.l.b16 %v235
      %v532 = vunpack.c.h.b16 %v235
      %v533 = vunpack.c.l.b16 %v236
      %v534 = vunpack.c.h.b16 %v236
      %v535 = vunpack.c.l.b16 %v237
      %v536 = vunpack.c.h.b16 %v237
      %v537 = vunpack.c.l.b16 %v238
      %v538 = vunpack.c.h.b16 %v238
      %v539 = vunpack.c.l.b16 %v239
      %v540 = vunpack.c.h.b16 %v239
      %v541 = vunpack.c.l.b16 %v240
      %v542 = vunpack.c.h.b16 %v240
      %v543 = vunpack.c.l.b16 %v241
      %v544 = vunpack.c.h.b16 %v241
      %v545 = vunpack.c.l.b16 %v242
      %v546 = vunpack.c.h.b16 %v242
      %v547 = vunpack.c.l.b16 %v243
      %v548 = vunpack.c.h.b16 %v243
      %v549 = vunpack.c.l.b16 %v244
      %v550 = vunpack.c.h.b16 %v244
      %v551 = vunpack.c.l.b16 %v245
      %v552 = vunpack.c.h.b16 %v245
      %v553 = vunpack.c.l.b16 %v246
      %v554 = vunpack.c.h.b16 %v246
      %v555 = vunpack.c.l.b16 %v247
      %v556 = vunpack.c.h.b16 %v247
      %v557 = vunpack.c.l.b16 %v248
      %v558 = vunpack.c.h.b16 %v248
      %v559 = vunpack.c.l.b16 %v249
      %v560 = vunpack.c.h.b16 %v249
      %v561 = vunpack.c.l.b16 %v250
      %v562 = vunpack.c.h.b16 %v250
      %v563 = vunpack.c.l.b16 %v251
      %v564 = vunpack.c.h.b16 %v251
      %v565 = vunpack.c.l.b16 %v252
      %v566 = vunpack.c.h.b16 %v252
      %v567 = vunpack.c.l.b16 %v253
      %v568 = vunpack.c.h.b16 %v253
      %v569 = vunpack.c.l.b16 %v254
      %v570 = vunpack.c.h.b16 %v254
      %v571 = vunpack.c.l.b16 %v255
      %v572 = vunpack.c.h.b16 %v255
      %v573 = vunpack.c.l.b16 %v256
      %v574 = vunpack.c.h.b16 %v256
      %v575 = vunpack.c.l.b16 %v257
      %v576 = vunpack.c.h.b16 %v257
      %v577 = vunpack.c.l.b16 %v258
      %v578 = vunpack.c.h.b16 %v258
      %v579 = vunpack.c.l.b16 %v259
      %v580 = vunpack.c.h.b16 %v259
      %v581 = vunpack.c.l.b16 %v260
      %v582 = vunpack.c.h.b16 %v260
      %v583 = vunpack.c.l.b16 %v261
      %v584 = vunpack.c.h.b16 %v261
      %v585 = vunpack.c.l.b16 %v262
      %v586 = vunpack.c.h.b16 %v262
      %v587 = vunpack.c.l.b16 %v263
      %v588 = vunpack.c.h.b16 %v263
      %v589 = vunpack.c.l.b16 %v264
      %v590 = vunpack.c.h.b16 %v264
      %v591 = vunpack.c.l.b16 %v265
      %v592 = vunpack.c.h.b16 %v265
      %v593 = vunpack.c.l.b16 %v266
      %v594 = vunpack.c.h.b16 %v266
      %v595 = vunpack.c.l.b16 %v267
      %v596 = vunpack.c.h.b16 %v267
      %v597 = vunpack.c.l.b16 %v268
      %v598 = vunpack.c.h.b16 %v268
      %v599 = vunpack.c.l.b16 %v269
      %v600 = vunpack.c.h.b16 %v269
      %v601 = vunpack.c.l.b16 %v270
      %v602 = vunpack.c.h.b16 %v270
      %v603 = vunpack.c.l.b16 %v271
      %v604 = vunpack.c.h.b16 %v271
      %v605 = vunpack.c.l.b16 %v272
      %v606 = vunpack.c.h.b16 %v272
      %v607 = vunpack.c.l.b16 %v273
      %v608 = vunpack.c.h.b16 %v273
      %v609 = vunpack.c.l.b16 %v274
      %v610 = vunpack.c.h.b16 %v274
      %v611 = vunpack.c.l.b16 %v275
      %v612 = vunpack.c.h.b16 %v275
      %v613 = vunpack.c.l.b16 %v276
      %v614 = vunpack.c.h.b16 %v276
      %v615 = vunpack.c.l.b16 %v277
      %v616 = vunpack.c.h.b16 %v277
      %v617 = vpack.c.b16 %v433, %v425
      %v618 = vpack.c.b16 %v434, %v426
      %v619 = vpack.c.b16 %v435, %v427
      %v620 = vpack.c.b16 %v436, %v428
      %v621 = vpack.c.b16 %v437, %v429
      %v622 = vpack.c.b16 %v438, %v430
      %v623 = vpack.c.b16 %v439, %v431
      %v624 = vpack.c.b16 %v440, %v432
      %v625 = vpack.c.b16 %v449, %v441
      %v626 = vpack.c.b16 %v450, %v442
      %v627 = vpack.c.b16 %v451, %v443
      %v628 = vpack.c.b16 %v452, %v444
      %v629 = vpack.c.b16 %v453, %v445
      %v630 = vpack.c.b16 %v454, %v446
      %v631 = vpack.c.b16 %v455, %v447
      %v632 = vpack.c.b16 %v456, %v448
      %v633 = vpack.c.b16 %v465, %v457
      %v634 = vpack.c.b16 %v466, %v458
      %v635 = vpack.c.b16 %v467, %v459
      %v636 = vpack.c.b16 %v468, %v460
      %v637 = vpack.c.b16 %v469, %v461
      %v638 = vpack.c.b16 %v470, %v462
      %v639 = vpack.c.b16 %v471, %v463
      %v640 = vpack.c.b16 %v472, %v464
      %v641 = vpack.c.b16 %v481, %v473
      %v642 = vpack.c.b16 %v482, %v474
      %v643 = vpack.c.b16 %v483, %v475
      %v644 = vpack.c.b16 %v484, %v476
      %v645 = vpack.c.b16 %v485, %v477
      %v646 = vpack.c.b16 %v486, %v478
      %v647 = vpack.c.b16 %v487, %v479
      %v648 = vpack.c.b16 %v488, %v480
      %v649 = vpack.c.b16 %v497, %v489
      %v650 = vpack.c.b16 %v498, %v490
      %v651 = vpack.c.b16 %v499, %v491
      %v652 = vpack.c.b16 %v500, %v492
      %v653 = vpack.c.b16 %v501, %v493
      %v654 = vpack.c.b16 %v502, %v494
      %v655 = vpack.c.b16 %v503, %v495
      %v656 = vpack.c.b16 %v504, %v496
      %v657 = vpack.c.b16 %v513, %v505
      %v658 = vpack.c.b16 %v514, %v506
      %v659 = vpack.c.b16 %v515, %v507
      %v660 = vpack.c.b16 %v516, %v508
      %v661 = vpack.c.b16 %v517, %v509
      %v662 = vpack.c.b16 %v518, %v510
      %v663 = vpack.c.b16 %v519, %v511
      %v664 = vpack.c.b16 %v520, %v512
      %v665 = vpack.c.b16 %v529, %v521
      %v666 = vpack.c.b16 %v530, %v522
      %v667 = vpack.c.b16 %v531, %v523
      %v668 = vpack.c.b16 %v532, %v524
      %v669 = vpack.c.b16 %v533, %v525
      %v670 = vpack.c.b16 %v534, %v526
      %v671 = vpack.c.b16 %v535, %v527
      %v672 = vpack.c.b16 %v536, %v528
      %v673 = vpack.c.b16 %v545, %v537
      %v674 = vpack.c.b16 %v546, %v538
      %v675 = vpack.c.b16 %v547, %v539
      %v676 = vpack.c.b16 %v548, %v540
      %v677 = vpack.c.b16 %v549, %v541
      %v678 = vpack.c.b16 %v550, %v542
      %v679 = vpack.c.b16 %v551, %v543
      %v680 = vpack.c.b16 %v552, %v544
      %v681 = vpack.c.b16 %v561, %v553
      %v682 = vpack.c.b16 %v562, %v554
      %v683 = vpack.c.b16 %v563, %v555
      %v684 = vpack.c.b16 %v564, %v556
      %v685 = vpack.c.b16 %v565, %v557
      %v686 = vpack.c.b16 %v566, %v558
      %v687 = vpack.c.b16 %v567, %v559
      %v688 = vpack.c.b16 %v568, %v560
      %v689 = vpack.c.b16 %v577, %v569
      %v690 = vpack.c.b16 %v578, %v570
      %v691 = vpack.c.b16 %v579, %v571
      %v692 = vpack.c.b16 %v580, %v572
      %v693 = vpack.c.b16 %v581, %v573
      %v694 = vpack.c.b16 %v582, %v574
      %v695 = vpack.c.b16 %v583, %v575
      %v696 = vpack.c.b16 %v584, %v576
      %v697 = vpack.c.b16 %v593, %v585
      %v698 = vpack.c.b16 %v594, %v586
      %v699 = vpack.c.b16 %v595, %v587
      %v700 = vpack.c.b16 %v596, %v588
      %v701 = vpack.c.b16 %v597, %v589
      %v702 = vpack.c.b16 %v598, %v590
      %v703 = vpack.c.b16 %v599, %v591
      %v704 = vpack.c.b16 %v600, %v592
      %v705 = vpack.c.b16 %v609, %v601
      %v706 = vpack.c.b16 %v610, %v602
      %v707 = vpack.c.b16 %v611, %v603
      %v708 = vpack.c.b16 %v612, %v604
      %v709 = vpack.c.b16 %v613, %v605
      %v710 = vpack.c.b16 %v614, %v606
      %v711 = vpack.c.b16 %v615, %v607
      %v712 = vpack.c.b16 %v616, %v608
      %vm809 = vcmask 523264
      %v811 = vsel %vm809, %v327, 0
      %813 = vmatprep.subr.bf16.mxu0 %v674
      %814 = vmatpush1.bf16.msra.mxu0 %v673
      %815 = vmatprep.subr.bf16.mxu0 %v666
      %816 = vmatpush1.bf16.msra.mxu0 %v665
      %817 = vmatprep.subr.bf16.mxu0 %v658
      %818 = vmatpush1.bf16.msra.mxu0 %v657
      %819 = vmatprep.subr.bf16.mxu0 %v650
      %820 = vmatpush1.bf16.msra.mxu0 %v649
      %821 = vmatprep.subr.bf16.mxu0 %v642
      %822 = vmatpush1.bf16.msra.mxu0 %v641
      %823 = vmatprep.subr.bf16.mxu0 %v634
      %824 = vmatpush1.bf16.msra.mxu0 %v633
      %825 = vmatprep.subr.bf16.mxu0 %v626
      %826 = vmatpush1.bf16.msra.mxu0 %v625
      %827 = vmatprep.subr.bf16.mxu0 %v618
      %828 = vmatpush1.bf16.msra.mxu0 %v617
      %829 = vmatprep.subr.bf16.mxu0 0
      %830 = vmatpush2.bf16.msra.mxu0 0
      %831 = vmatprep.subr.bf16.mxu0 0
      %832 = vmatpush2.bf16.msra.mxu0 0
      %833 = vmatprep.subr.bf16.mxu0 0
      %834 = vmatpush2.bf16.msra.mxu0 0
      %835 = vmatprep.subr.bf16.mxu0 0
      %836 = vmatpush2.bf16.msra.mxu0 0
      %837 = vmatprep.subr.bf16.mxu0 %v706
      %838 = vmatpush2.bf16.msra.mxu0 %v705
      %839 = vmatprep.subr.bf16.mxu0 %v698
      %840 = vmatpush2.bf16.msra.mxu0 %v697
      %841 = vmatprep.subr.bf16.mxu0 %v690
      %842 = vmatpush2.bf16.msra.mxu0 %v689
      %843 = vmatprep.subr.bf16.mxu0 %v682
      %844 = vmatpush2.bf16.msra.mxu0 %v681
      %845 = vmatprep.mubr.bf16.mxu0 %v811
      %846 = vmatmul.mubr.bf16.gmra.mxu0 %v326
      %v847 = vpop.f32.mrf.mxu0
      %v848 = vadd.f32 %v283, %v847
      %v849 = vpop.f32.mrf.mxu0
      %v850 = vadd.f32 %v287, %v849
      %v851 = vpop.f32.mrf.mxu0
      %v852 = vadd.f32 %v283, %v851
      %v853 = vpop.f32.mrf.mxu0
      %v854 = vadd.f32 %v287, %v853
      %855 = vdwg.mxu0
      %856 = vmatprep.subr.bf16.mxu0 %v676
      %857 = vmatpush1.bf16.msra.mxu0 %v675
      %858 = vmatprep.subr.bf16.mxu0 %v668
      %859 = vmatpush1.bf16.msra.mxu0 %v667
      %860 = vmatprep.subr.bf16.mxu0 %v660
      %861 = vmatpush1.bf16.msra.mxu0 %v659
      %862 = vmatprep.subr.bf16.mxu0 %v652
      %863 = vmatpush1.bf16.msra.mxu0 %v651
      %864 = vmatprep.subr.bf16.mxu0 %v644
      %865 = vmatpush1.bf16.msra.mxu0 %v643
      %866 = vmatprep.subr.bf16.mxu0 %v636
      %867 = vmatpush1.bf16.msra.mxu0 %v635
      %868 = vmatprep.subr.bf16.mxu0 %v628
      %869 = vmatpush1.bf16.msra.mxu0 %v627
      %870 = vmatprep.subr.bf16.mxu0 %v620
      %871 = vmatpush1.bf16.msra.mxu0 %v619
      %872 = vmatprep.subr.bf16.mxu0 0
      %873 = vmatpush2.bf16.msra.mxu0 0
      %874 = vmatprep.subr.bf16.mxu0 0
      %875 = vmatpush2.bf16.msra.mxu0 0
      %876 = vmatprep.subr.bf16.mxu0 0
      %877 = vmatpush2.bf16.msra.mxu0 0
      %878 = vmatprep.subr.bf16.mxu0 0
      %879 = vmatpush2.bf16.msra.mxu0 0
      %880 = vmatprep.subr.bf16.mxu0 %v708
      %881 = vmatpush2.bf16.msra.mxu0 %v707
      %882 = vmatprep.subr.bf16.mxu0 %v700
      %883 = vmatpush2.bf16.msra.mxu0 %v699
      %884 = vmatprep.subr.bf16.mxu0 %v692
      %885 = vmatpush2.bf16.msra.mxu0 %v691
      %886 = vmatprep.subr.bf16.mxu0 %v684
      %887 = vmatpush2.bf16.msra.mxu0 %v683
      %888 = vmatprep.mubr.bf16.mxu0 %v811
      %889 = vmatmul.mubr.bf16.gmra.mxu0 %v326
      %v890 = vpop.f32.mrf.mxu0
      %v891 = vadd.f32 %v291, %v890
      %v892 = vpop.f32.mrf.mxu0
      %v893 = vadd.f32 %v295, %v892
      %v894 = vpop.f32.mrf.mxu0
      %v895 = vadd.f32 %v291, %v894
      %v896 = vpop.f32.mrf.mxu0
      %v897 = vadd.f32 %v295, %v896
      %898 = vdwg.mxu0
      %899 = vmatprep.subr.bf16.mxu0 %v678
      %900 = vmatpush1.bf16.msra.mxu0 %v677
      %901 = vmatprep.subr.bf16.mxu0 %v670
      %902 = vmatpush1.bf16.msra.mxu0 %v669
      %903 = vmatprep.subr.bf16.mxu0 %v662
      %904 = vmatpush1.bf16.msra.mxu0 %v661
      %905 = vmatprep.subr.bf16.mxu0 %v654
      %906 = vmatpush1.bf16.msra.mxu0 %v653
      %907 = vmatprep.subr.bf16.mxu0 %v646
      %908 = vmatpush1.bf16.msra.mxu0 %v645
      %909 = vmatprep.subr.bf16.mxu0 %v638
      %910 = vmatpush1.bf16.msra.mxu0 %v637
      %911 = vmatprep.subr.bf16.mxu0 %v630
      %912 = vmatpush1.bf16.msra.mxu0 %v629
      %913 = vmatprep.subr.bf16.mxu0 %v622
      %914 = vmatpush1.bf16.msra.mxu0 %v621
      %915 = vmatprep.subr.bf16.mxu0 0
      %916 = vmatpush2.bf16.msra.mxu0 0
      %917 = vmatprep.subr.bf16.mxu0 0
      %918 = vmatpush2.bf16.msra.mxu0 0
      %919 = vmatprep.subr.bf16.mxu0 0
      %920 = vmatpush2.bf16.msra.mxu0 0
      %921 = vmatprep.subr.bf16.mxu0 0
      %922 = vmatpush2.bf16.msra.mxu0 0
      %923 = vmatprep.subr.bf16.mxu0 %v710
      %924 = vmatpush2.bf16.msra.mxu0 %v709
      %925 = vmatprep.subr.bf16.mxu0 %v702
      %926 = vmatpush2.bf16.msra.mxu0 %v701
      %927 = vmatprep.subr.bf16.mxu0 %v694
      %928 = vmatpush2.bf16.msra.mxu0 %v693
      %929 = vmatprep.subr.bf16.mxu0 %v686
      %930 = vmatpush2.bf16.msra.mxu0 %v685
      %931 = vmatprep.mubr.bf16.mxu0 %v811
      %932 = vmatmul.mubr.bf16.gmra.mxu0 %v326
      %v933 = vpop.f32.mrf.mxu0
      %v934 = vadd.f32 %v299, %v933
      %v935 = vpop.f32.mrf.mxu0
      %v936 = vadd.f32 %v303, %v935
      %v937 = vpop.f32.mrf.mxu0
      %v938 = vadd.f32 %v299, %v937
      %v939 = vpop.f32.mrf.mxu0
      %v940 = vadd.f32 %v303, %v939
      %941 = vdwg.mxu0
      %942 = vmatprep.subr.bf16.mxu0 %v680
      %943 = vmatpush1.bf16.msra.mxu0 %v679
      %944 = vmatprep.subr.bf16.mxu0 %v672
      %945 = vmatpush1.bf16.msra.mxu0 %v671
      %946 = vmatprep.subr.bf16.mxu0 %v664
      %947 = vmatpush1.bf16.msra.mxu0 %v663
      %948 = vmatprep.subr.bf16.mxu0 %v656
      %949 = vmatpush1.bf16.msra.mxu0 %v655
      %950 = vmatprep.subr.bf16.mxu0 %v648
      %951 = vmatpush1.bf16.msra.mxu0 %v647
      %952 = vmatprep.subr.bf16.mxu0 %v640
      %953 = vmatpush1.bf16.msra.mxu0 %v639
      %954 = vmatprep.subr.bf16.mxu0 %v632
      %955 = vmatpush1.bf16.msra.mxu0 %v631
      %956 = vmatprep.subr.bf16.mxu0 %v624
      %957 = vmatpush1.bf16.msra.mxu0 %v623
      %958 = vmatprep.subr.bf16.mxu0 0
      %959 = vmatpush2.bf16.msra.mxu0 0
      %960 = vmatprep.subr.bf16.mxu0 0
      %961 = vmatpush2.bf16.msra.mxu0 0
      %962 = vmatprep.subr.bf16.mxu0 0
      %963 = vmatpush2.bf16.msra.mxu0 0
      %964 = vmatprep.subr.bf16.mxu0 0
      %965 = vmatpush2.bf16.msra.mxu0 0
      %966 = vmatprep.subr.bf16.mxu0 %v712
      %967 = vmatpush2.bf16.msra.mxu0 %v711
      %968 = vmatprep.subr.bf16.mxu0 %v704
      %969 = vmatpush2.bf16.msra.mxu0 %v703
      %970 = vmatprep.subr.bf16.mxu0 %v696
      %971 = vmatpush2.bf16.msra.mxu0 %v695
      %972 = vmatprep.subr.bf16.mxu0 %v688
      %973 = vmatpush2.bf16.msra.mxu0 %v687
      %974 = vmatprep.mubr.bf16.mxu0 %v811
      %975 = vmatmul.mubr.bf16.gmra.mxu0 %v326
      %v976 = vpop.f32.mrf.mxu0
      %v977 = vadd.f32 %v307, %v976
      %v978 = vpop.f32.mrf.mxu0
      %v979 = vadd.f32 %v311, %v978
      %v980 = vpop.f32.mrf.mxu0
      %v981 = vadd.f32 %v307, %v980
      %v982 = vpop.f32.mrf.mxu0
      %v983 = vadd.f32 %v311, %v982
      %984 = vdwg.mxu0
      %v985 = vmax.f32 %v848, 0.0
      %v986 = vmax.f32 %v850, 0.0
      %v987 = vmax.f32 %v891, 0.0
      %v988 = vmax.f32 %v893, 0.0
      %v989 = vmax.f32 %v934, 0.0
      %v990 = vmax.f32 %v936, 0.0
      %v991 = vmax.f32 %v977, 0.0
      %v992 = vmax.f32 %v979, 0.0
      %v993 = vmax.f32 %v852, 0.0
      %v994 = vmax.f32 %v854, 0.0
      %v995 = vmax.f32 %v895, 0.0
      %v996 = vmax.f32 %v897, 0.0
      %v997 = vmax.f32 %v938, 0.0
      %v998 = vmax.f32 %v940, 0.0
      %v999 = vmax.f32 %v981, 0.0
      %v1000 = vmax.f32 %v983, 0.0
      %v1001 = vpack.c.bf16 %v993, %v985
      %v1002 = vpack.c.bf16 %v994, %v986
      %v1003 = vpack.c.bf16 %v995, %v987
      %v1004 = vpack.c.bf16 %v996, %v988
      %v1005 = vpack.c.bf16 %v997, %v989
      %v1006 = vpack.c.bf16 %v998, %v990
      %v1007 = vpack.c.bf16 %v999, %v991
      %v1008 = vpack.c.bf16 %v1000, %v992
      %v1017 = vunpack.c.l.b16 %v1001
      %v1018 = vunpack.c.l.b16 %v1002
      %v1019 = vunpack.c.l.b16 %v1003
      %v1020 = vunpack.c.l.b16 %v1004
      %v1021 = vunpack.c.l.b16 %v1005
      %v1022 = vunpack.c.l.b16 %v1006
      %v1023 = vunpack.c.l.b16 %v1007
      %v1024 = vunpack.c.l.b16 %v1008
      %v1025 = vunpack.c.h.b16 %v1001
      %v1026 = vunpack.c.h.b16 %v1002
      %v1027 = vunpack.c.h.b16 %v1003
      %v1028 = vunpack.c.h.b16 %v1004
      %v1029 = vunpack.c.h.b16 %v1005
      %v1030 = vunpack.c.h.b16 %v1006
      %v1031 = vunpack.c.h.b16 %v1007
      %v1032 = vunpack.c.h.b16 %v1008
      %v1033 = vpack.c.b16 %v1018, %v1017
      %v1034 = vpack.c.b16 %v1020, %v1019
      %v1035 = vpack.c.b16 %v1022, %v1021
      %v1036 = vpack.c.b16 %v1024, %v1023
      %v1037 = vpack.c.b16 %v1026, %v1025
      %v1038 = vpack.c.b16 %v1028, %v1027
      %v1039 = vpack.c.b16 %v1030, %v1029
      %v1040 = vpack.c.b16 %v1032, %v1031
      %1049 = vst [vmem:[%s177] sm:$0xff] %v1033
      %1050 = vst [vmem:[%s177 + $0x8] sm:$0xff] %v1034
      %1051 = vst [vmem:[%s177 + $0x10] sm:$0xff] %v1035
      %1052 = vst [vmem:[%s177 + $0x18] sm:$0xff] %v1036
      %1053 = vst [vmem:[%s177 + $0x20] sm:$0xff] %v1037
      %1054 = vst [vmem:[%s177 + $0x28] sm:$0xff] %v1038
      %1055 = vst [vmem:[%s177 + $0x30] sm:$0xff] %v1039
      %1056 = vst [vmem:[%s177 + $0x38] sm:$0xff] %v1040
      %s1057 = smul.u32 2, %s14
      %p1058 = scmp.lt.s32.totalorder %s1057, 3
      %s1059 = scalar_select %p1058, %s1057, 3
      %s1060 = smul.addr %s1059, 8
      %s1061 = smul.addr %s1060, 4
      %s1062 = scalar_lea.vmem %s3, %s1061
      // Predicated region
      $region33: #{_lambda_.59} parent=31 // pred_check
        %p1063 = pneg %p100
      $region34: #{_lambda_.59} parent=31 // pred_check_branch
        %1065 = sbr.rel (%p1063) target = $region36
      $region35: #{_lambda_.59} parent=31 // pred_region
        %s1066 = smul.u32 2, %s14
      $region36: #{_lambda_.59} parent=31 // pred_fallthru
        _
    $region32: #{_lambda_.59} parent=5 // pred_fallthru
      _
    %p1067 = scmp.le.s32.totalorder 2, %s9
    // Predicated region
    $region37: #{_lambda_.59} parent=5 // pred_check
      %p1068 = pneg %p1067
    $region38: #{_lambda_.59} parent=5 // pred_check_branch
      %1070 = sbr.rel (%p1068) target = $region40
    $region39: #{_lambda_.59} parent=5 // pred_region
      %s1071 = ssub.s32 %s9, 2
      // Predicated region
      $region41: #{_lambda_.59} parent=39 // pred_check
        %p1072 = pneg %p106
      $region42: #{_lambda_.59} parent=39 // pred_check_branch
        %1074 = sbr.rel (%p1072) target = $region44
      $region43: #{_lambda_.59} parent=39 // pred_region
        %s1075 = smul.u32 2, %s15
        %p1076 = scmp.lt.s32.totalorder %s1075, 3
        %s1077 = scalar_select %p1076, %s1075, 3
        %s1078 = smul.addr %s1077, 8
        %s1079 = smul.addr %s1078, 4
        %s1080 = scalar_lea.vmem %s3, %s1079
      $region44: #{_lambda_.59} parent=39 // pred_fallthru
        _
    $region40: #{_lambda_.59} parent=5 // pred_fallthru
      _
  $region6: #{_lambda_.59} parent=0 // loop_footer
    %s13 = sadd.s32 1, %s9
  $region7: #{_lambda_.59} parent=0 // loop_footer_branch
    %8 = sbr.rel target = $region3
  $region8: #{_lambda_.59} parent=0 // loop_exit
    _

</llo_original>
